<compile_context>
chip_gen: v5e
topology: v5e:2x2
jax: 0.10.0
libtpu: 0.0.40
codegen_flags: <defaults>
</compile_context>

<pallas_src>
import math

import jax
import jax.numpy as jnp
from jax.experimental import pallas as pl
from jax.experimental.pallas import tpu as pltpu

# Full-f32 matmuls both inside the kernel and in the pure-JAX reference so the
# two stay numerically aligned.
jax.config.update("jax_default_matmul_precision", "highest")

LN_EPS = 1e-5  # PyTorch nn.LayerNorm default


def _layernorm(x, g, b):
    mu = jnp.mean(x, axis=-1, keepdims=True)
    xc = x - mu
    var = jnp.mean(xc * xc, axis=-1, keepdims=True)
    return xc / jnp.sqrt(var + LN_EPS) * g + b


def _gelu(x):
    # TODO(synk): PyTorch nn.GELU() is the exact erf form; the tanh
    # approximation is used for robust TPU lowering (reference uses the same).
    c = math.sqrt(2.0 / math.pi)
    return 0.5 * x * (1.0 + jnp.tanh(c * (x + 0.044715 * x * x * x)))


# ----------------------------------------------------------------------------
# Fused per-layer Pallas kernel
# ----------------------------------------------------------------------------
def _make_layer_kernel(heads, scale, downsample):
    """One fused Transformer layer. `heads`, `scale`, `downsample` are static."""

    def kernel(x_ref, ln1g_ref, ln1b_ref, wq_ref, wk_ref, wv_ref, wo_ref,
               bo_ref, ln2g_ref, ln2b_ref, w1_ref, b1_ref, w2_ref, b2_ref,
               *rest):
        if downsample:
            wd_ref, bd_ref, lndg_ref, lndb_ref, o_ref = rest
        else:
            (o_ref,) = rest

        x = x_ref[0]                                            # (N, D)

        # ---- Residual(PreNorm(Attention)) ----
        xn = _layernorm(x, ln1g_ref[...], ln1b_ref[...])
        proj = None
        for h in range(heads):                                  # static unroll
            q = jnp.dot(xn, wq_ref[h], preferred_element_type=jnp.float32)
            k = jnp.dot(xn, wk_ref[h], preferred_element_type=jnp.float32)
            v = jnp.dot(xn, wv_ref[h], preferred_element_type=jnp.float32)
            # q @ k^T via dot_general (contract last dims) -> no in-kernel
            # transpose needed.
            dots = jax.lax.dot_general(
                q, k, (((1,), (1,)), ((), ())),
                preferred_element_type=jnp.float32) * scale     # (N, N)
            dots = dots - jnp.max(dots, axis=-1, keepdims=True)
            e = jnp.exp(dots)
            attn = e / jnp.sum(e, axis=-1, keepdims=True)
            oh = jnp.dot(attn, v, preferred_element_type=jnp.float32)        # (N, dh)
            ph = jnp.dot(oh, wo_ref[h], preferred_element_type=jnp.float32)  # (N, D)
            proj = ph if proj is None else proj + ph
        x1 = proj + bo_ref[...] + x                             # (N, D)

        # ---- Residual(PreNorm(FeedForward), downsample=...) ----
        xn2 = _layernorm(x1, ln2g_ref[...], ln2b_ref[...])
        h1 = _gelu(jnp.dot(xn2, w1_ref[...],
                           preferred_element_type=jnp.float32) + b1_ref[...])
        h2 = jnp.dot(h1, w2_ref[...],
                     preferred_element_type=jnp.float32) + b2_ref[...]
        if downsample:
            xd = jnp.dot(x1, wd_ref[...],
                         preferred_element_type=jnp.float32) + bd_ref[...]
            xres = _layernorm(xd, lndg_ref[...], lndb_ref[...])
        else:
            xres = x1
        o_ref[0] = (h2 + xres).astype(o_ref.dtype)

    return kernel


# ----------------------------------------------------------------------------
# Wrapper: one pallas_call per layer
# ----------------------------------------------------------------------------
def _layer_forward(x, p, *, dim, heads, dim_head, out_dim):
    B, N, D = x.shape
    assert D == dim, f"layer built for dim={dim}, got input width {D}"
    inner = heads * dim_head
    downsample = out_dim != dim
    scale = float(dim) ** (-0.5)        # NOTE: module uses dim**-0.5 (not dim_head)

    # ---- glue: re-layout the (tiny) weights once; activations untouched ----
    wqkv = p["wqkv"]                                            # (3*inner, dim)
    wq3 = wqkv[:inner].reshape(heads, dim_head, dim).transpose(0, 2, 1)       # (H, D, dh)
    wk3 = wqkv[inner:2 * inner].reshape(heads, dim_head, dim).transpose(0, 2, 1)
    wv3 = wqkv[2 * inner:].reshape(heads, dim_head, dim).transpose(0, 2, 1)
    wo3 = p["wo"].reshape(dim, heads, dim_head).transpose(1, 2, 0)            # (H, dh, D)

    args = [
        x,
        p["ln1_g"].reshape(1, dim), p["ln1_b"].reshape(1, dim),
        wq3, wk3, wv3, wo3, p["bo"].reshape(1, dim),
        p["ln2_g"].reshape(1, dim), p["ln2_b"].reshape(1, dim),
        p["w1"].T, p["b1"].reshape(1, out_dim),
        p["w2"].T, p["b2"].reshape(1, out_dim),
    ]
    in_specs = [
        pl.BlockSpec((1, N, dim), lambda b: (b, 0, 0)),                 # x
        pl.BlockSpec((1, dim), lambda b: (0, 0)),                       # ln1 gamma
        pl.BlockSpec((1, dim), lambda b: (0, 0)),                       # ln1 beta
        pl.BlockSpec((heads, dim, dim_head), lambda b: (0, 0, 0)),      # Wq
        pl.BlockSpec((heads, dim, dim_head), lambda b: (0, 0, 0)),      # Wk
        pl.BlockSpec((heads, dim, dim_head), lambda b: (0, 0, 0)),      # Wv
        pl.BlockSpec((heads, dim_head, dim), lambda b: (0, 0, 0)),      # Wo (per head)
        pl.BlockSpec((1, dim), lambda b: (0, 0)),                       # bo
        pl.BlockSpec((1, dim), lambda b: (0, 0)),                       # ln2 gamma
        pl.BlockSpec((1, dim), lambda b: (0, 0)),                       # ln2 beta
        pl.BlockSpec((dim, out_dim), lambda b: (0, 0)),                 # W1
        pl.BlockSpec((1, out_dim), lambda b: (0, 0)),                   # b1
        pl.BlockSpec((out_dim, out_dim), lambda b: (0, 0)),             # W2
        pl.BlockSpec((1, out_dim), lambda b: (0, 0)),                   # b2
    ]
    if downsample:
        assert out_dim == 2 * dim, "Residual downsample requires out_dim == 2*dim"
        args += [
            p["wd"].T, p["bd"].reshape(1, 2 * dim),
            p["lnd_g"].reshape(1, 2 * dim), p["lnd_b"].reshape(1, 2 * dim),
        ]
        in_specs += [
            pl.BlockSpec((dim, 2 * dim), lambda b: (0, 0)),             # Wd
            pl.BlockSpec((1, 2 * dim), lambda b: (0, 0)),               # bd
            pl.BlockSpec((1, 2 * dim), lambda b: (0, 0)),               # lnd gamma
            pl.BlockSpec((1, 2 * dim), lambda b: (0, 0)),               # lnd beta
        ]

    kernel = _make_layer_kernel(heads, scale, downsample)
    return pl.pallas_call(
        kernel,
        out_shape=jax.ShapeDtypeStruct((B, N, out_dim), jnp.float32),
        grid=(B,),
        in_specs=in_specs,
        out_specs=pl.BlockSpec((1, N, out_dim), lambda b: (b, 0, 0)),
        compiler_params=pltpu.CompilerParams(dimension_semantics=("parallel",)),
    )(*args)


def transformer_forward(x, layers, *, dim, heads, dim_head, out_dim):
    """Faithful port of Transformer.forward (eval mode: dropout = identity)."""
    if out_dim != dim:
        # The PyTorch module only composes in this case with out_dim == 2*dim
        # (the downsample residual produces width 2*dim) and depth == 1
        # (layer 2 was built for width `dim` but would receive `out_dim`).
        assert out_dim == 2 * dim and len(layers) == 1
    for p in layers:
        x = _layer_forward(x, p, dim=dim, heads=heads,
                           dim_head=dim_head, out_dim=out_dim)
    return x


# ----------------------------------------------------------------------------
# Pure-JAX reference (reproduces the PyTorch forward in eval mode)
# ----------------------------------------------------------------------------
def reference(x, layers, *, dim, heads, dim_head, out_dim):
    scale = float(dim) ** (-0.5)
    downsample = out_dim != dim
    for p in layers:
        B, N, _ = x.shape
        xn = _layernorm(x, p["ln1_g"], p["ln1_b"])
        qkv = xn @ p["wqkv"].T
        q, k, v = jnp.split(qkv, 3, axis=-1)
        sh = lambda t: t.reshape(B, N, heads, dim_head).transpose(0, 2, 1, 3)
        q, k, v = sh(q), sh(k), sh(v)
        dots = jnp.einsum("bhid,bhjd->bhij", q, k) * scale
        dots = dots - jnp.max(dots, axis=-1, keepdims=True)
        e = jnp.exp(dots)
        attn = e / jnp.sum(e, axis=-1, keepdims=True)
        out = jnp.einsum("bhij,bhjd->bhid", attn, v)
        out = out.transpose(0, 2, 1, 3).reshape(B, N, heads * dim_head)
        x1 = out @ p["wo"].T + p["bo"] + x
        xn2 = _layernorm(x1, p["ln2_g"], p["ln2_b"])
        h1 = _gelu(xn2 @ p["w1"].T + p["b1"])
        h2 = h1 @ p["w2"].T + p["b2"]
        if downsample:
            xr = _layernorm(x1 @ p["wd"].T + p["bd"], p["lnd_g"], p["lnd_b"])
        else:
            xr = x1
        x = h2 + xr
    return x


# ----------------------------------------------------------------------------
# Deterministic synthetic parameters (PyTorch weight orientation)
# ----------------------------------------------------------------------------
def init_layer_params(key, dim, heads, dim_head, out_dim, downsample):
    inner = heads * dim_head
    ks = jax.random.split(key, 16)
    p = {
        "ln1_g": jax.random.uniform(ks[0], (dim,), jnp.float32, 0.5, 1.5),
        "ln1_b": 0.1 * jax.random.normal(ks[1], (dim,), jnp.float32),
        "wqkv": 0.1 * jax.random.normal(ks[2], (3 * inner, dim), jnp.float32),
        "wo": 0.1 * jax.random.normal(ks[3], (dim, inner), jnp.float32),
        "bo": 0.1 * jax.random.normal(ks[4], (dim,), jnp.float32),
        "ln2_g": jax.random.uniform(ks[5], (dim,), jnp.float32, 0.5, 1.5),
        "ln2_b": 0.1 * jax.random.normal(ks[6], (dim,), jnp.float32),
        "w1": 0.1 * jax.random.normal(ks[7], (out_dim, dim), jnp.float32),
        "b1": 0.1 * jax.random.normal(ks[8], (out_dim,), jnp.float32),
        "w2": 0.1 * jax.random.normal(ks[9], (out_dim, out_dim), jnp.float32),
        "b2": 0.1 * jax.random.normal(ks[10], (out_dim,), jnp.float32),
    }
    if downsample:
        p.update({
            "wd": 0.1 * jax.random.normal(ks[11], (2 * dim, dim), jnp.float32),
            "bd": 0.1 * jax.random.normal(ks[12], (2 * dim,), jnp.float32),
            "lnd_g": jax.random.uniform(ks[13], (2 * dim,), jnp.float32, 0.5, 1.5),
            "lnd_b": 0.1 * jax.random.normal(ks[14], (2 * dim,), jnp.float32),
        })
    return p


if __name__ == "__main__":
    root = jax.random.PRNGKey(0)
    k_a, k_b = jax.random.split(root)

    # ---- Config A: out_dim == dim -> plain residual, depth = 2 -------------
    B, N, dim, heads, dim_head, depth = 2, 16, 64, 4, 16, 2
    out_dim = dim
    ks = jax.random.split(k_a, depth + 1)
    layers = [init_layer_params(ks[i], dim, heads, dim_head, out_dim, False)
              for i in range(depth)]
    x = jax.random.normal(ks[-1], (B, N, dim), jnp.float32)
    out = jax.block_until_ready(
        transformer_forward(x, layers, dim=dim, heads=heads,
                            dim_head=dim_head, out_dim=out_dim))
    ref = reference(x, layers, dim=dim, heads=heads,
                    dim_head=dim_head, out_dim=out_dim)
    assert out.shape == (B, N, out_dim), out.shape
    err_a = float(jnp.max(jnp.abs(out - ref)))
    assert err_a < 1e-3, f"config A max err {err_a}"

    # ---- Config B: out_dim == 2*dim -> downsample residual, depth = 1 ------
    B, N, dim, heads, dim_head, depth = 2, 16, 32, 2, 16, 1
    out_dim = 2 * dim
    ks = jax.random.split(k_b, depth + 1)
    layers = [init_layer_params(ks[i], dim, heads, dim_head, out_dim, True)
              for i in range(depth)]
    x = jax.random.normal(ks[-1], (B, N, dim), jnp.float32)
    out = jax.block_until_ready(
        transformer_forward(x, layers, dim=dim, heads=heads,
                            dim_head=dim_head, out_dim=out_dim))
    ref = reference(x, layers, dim=dim, heads=heads,
                    dim_head=dim_head, out_dim=out_dim)
    assert out.shape == (B, N, out_dim), out.shape
    err_b = float(jnp.max(jnp.abs(out - ref)))
    assert err_b < 1e-3, f"config B max err {err_b}"

    print("KERNEL_OK")
</pallas_src>

<mosaic_0001>
module attributes {stable_mosaic.version = 11 : i64} {
  func.func @kernel(%arg0: i32, %arg1: memref<1x16x64xf32, #tpu.memory_space<vmem>>, %arg2: memref<1x64xf32, #tpu.memory_space<vmem>>, %arg3: memref<1x64xf32, #tpu.memory_space<vmem>>, %arg4: memref<4x64x16xf32, #tpu.memory_space<vmem>>, %arg5: memref<4x64x16xf32, #tpu.memory_space<vmem>>, %arg6: memref<4x64x16xf32, #tpu.memory_space<vmem>>, %arg7: memref<4x16x64xf32, #tpu.memory_space<vmem>>, %arg8: memref<1x64xf32, #tpu.memory_space<vmem>>, %arg9: memref<1x64xf32, #tpu.memory_space<vmem>>, %arg10: memref<1x64xf32, #tpu.memory_space<vmem>>, %arg11: memref<64x64xf32, #tpu.memory_space<vmem>>, %arg12: memref<1x64xf32, #tpu.memory_space<vmem>>, %arg13: memref<64x64xf32, #tpu.memory_space<vmem>>, %arg14: memref<1x64xf32, #tpu.memory_space<vmem>>, %arg15: memref<1x16x64xf32, #tpu.memory_space<vmem>>) attributes {dimension_semantics = [#tpu.dimension_semantics<parallel>], iteration_bounds = array<i64: 2>, scalar_prefetch = 0 : i64, scratch_operands = 0 : i64, tpu.core_type = #tpu.core_type<tc>, window_params = [{transform_indices = @transform_0, window_bounds = array<i64: 1, 16, 64>}, {pipeline_mode = #tpu.pipeline_mode<synchronous>, transform_indices = @transform_1, window_bounds = array<i64: 1, 64>}, {pipeline_mode = #tpu.pipeline_mode<synchronous>, transform_indices = @transform_2, window_bounds = array<i64: 1, 64>}, {pipeline_mode = #tpu.pipeline_mode<synchronous>, transform_indices = @transform_3, window_bounds = array<i64: 4, 64, 16>}, {pipeline_mode = #tpu.pipeline_mode<synchronous>, transform_indices = @transform_4, window_bounds = array<i64: 4, 64, 16>}, {pipeline_mode = #tpu.pipeline_mode<synchronous>, transform_indices = @transform_5, window_bounds = array<i64: 4, 64, 16>}, {pipeline_mode = #tpu.pipeline_mode<synchronous>, transform_indices = @transform_6, window_bounds = array<i64: 4, 16, 64>}, {pipeline_mode = #tpu.pipeline_mode<synchronous>, transform_indices = @transform_7, window_bounds = array<i64: 1, 64>}, {pipeline_mode = #tpu.pipeline_mode<synchronous>, transform_indices = @transform_8, window_bounds = array<i64: 1, 64>}, {pipeline_mode = #tpu.pipeline_mode<synchronous>, transform_indices = @transform_9, window_bounds = array<i64: 1, 64>}, {pipeline_mode = #tpu.pipeline_mode<synchronous>, transform_indices = @transform_10, window_bounds = array<i64: 64, 64>}, {pipeline_mode = #tpu.pipeline_mode<synchronous>, transform_indices = @transform_11, window_bounds = array<i64: 1, 64>}, {pipeline_mode = #tpu.pipeline_mode<synchronous>, transform_indices = @transform_12, window_bounds = array<i64: 64, 64>}, {pipeline_mode = #tpu.pipeline_mode<synchronous>, transform_indices = @transform_13, window_bounds = array<i64: 1, 64>}, {transform_indices = @transform_14, window_bounds = array<i64: 1, 16, 64>}]} {
    %c0 = arith.constant 0 : index
    %c0_0 = arith.constant 0 : index
    %c0_1 = arith.constant 0 : index
    %0 = vector.load %arg1[%c0, %c0_0, %c0_1] : memref<1x16x64xf32, #tpu.memory_space<vmem>>, vector<1x16x64xf32>
    %1 = vector.shape_cast %0 : vector<1x16x64xf32> to vector<16x64xf32>
    %c0_2 = arith.constant 0 : index
    %c0_3 = arith.constant 0 : index
    %2 = vector.load %arg2[%c0_2, %c0_3] : memref<1x64xf32, #tpu.memory_space<vmem>>, vector<1x64xf32>
    %c0_4 = arith.constant 0 : index
    %c0_5 = arith.constant 0 : index
    %3 = vector.load %arg3[%c0_4, %c0_5] : memref<1x64xf32, #tpu.memory_space<vmem>>, vector<1x64xf32>
    %cst = arith.constant dense<0.000000e+00> : vector<16xf32>
    %4 = vector.multi_reduction <add>, %1, %cst [1] : vector<16x64xf32> to vector<16xf32>
    %5 = vector.shape_cast %4 : vector<16xf32> to vector<16x1xf32>
    %cst_6 = arith.constant 6.400000e+01 : f32
    %6 = vector.broadcast %cst_6 : f32 to vector<16x1xf32>
    %7 = arith.divf %5, %6 : vector<16x1xf32>
    %8 = vector.broadcast %7 : vector<16x1xf32> to vector<16x64xf32>
    %9 = arith.subf %1, %8 : vector<16x64xf32>
    %10 = arith.mulf %9, %9 : vector<16x64xf32>
    %cst_7 = arith.constant dense<0.000000e+00> : vector<16xf32>
    %11 = vector.multi_reduction <add>, %10, %cst_7 [1] : vector<16x64xf32> to vector<16xf32>
    %12 = vector.shape_cast %11 : vector<16xf32> to vector<16x1xf32>
    %cst_8 = arith.constant 6.400000e+01 : f32
    %13 = vector.broadcast %cst_8 : f32 to vector<16x1xf32>
    %14 = arith.divf %12, %13 : vector<16x1xf32>
    %cst_9 = arith.constant 9.99999974E-6 : f32
    %15 = vector.broadcast %cst_9 : f32 to vector<16x1xf32>
    %16 = arith.addf %14, %15 : vector<16x1xf32>
    %17 = math.sqrt %16 : vector<16x1xf32>
    %18 = vector.broadcast %17 : vector<16x1xf32> to vector<16x64xf32>
    %19 = arith.divf %9, %18 : vector<16x64xf32>
    %20 = vector.broadcast %2 : vector<1x64xf32> to vector<16x64xf32>
    %21 = arith.mulf %19, %20 : vector<16x64xf32>
    %22 = vector.broadcast %3 : vector<1x64xf32> to vector<16x64xf32>
    %23 = arith.addf %21, %22 : vector<16x64xf32>
    %c0_10 = arith.constant 0 : index
    %c0_11 = arith.constant 0 : index
    %c0_12 = arith.constant 0 : index
    %24 = vector.load %arg4[%c0_10, %c0_11, %c0_12] : memref<4x64x16xf32, #tpu.memory_space<vmem>>, vector<1x64x16xf32>
    %25 = vector.shape_cast %24 : vector<1x64x16xf32> to vector<64x16xf32>
    %cst_13 = arith.constant dense<0.000000e+00> : vector<16x16xf32>
    %26 = tpu.matmul %23, %25, %cst_13 {dimension_numbers = #tpu.dot_dimension_numbers<[1], [0], [0], [1], [0, 0, 1, 1], [], []>, precision = #tpu.contract_precision<fp32>} : vector<16x64xf32>, vector<64x16xf32>, vector<16x16xf32> -> vector<16x16xf32>
    %c0_14 = arith.constant 0 : index
    %c0_15 = arith.constant 0 : index
    %c0_16 = arith.constant 0 : index
    %27 = vector.load %arg5[%c0_14, %c0_15, %c0_16] : memref<4x64x16xf32, #tpu.memory_space<vmem>>, vector<1x64x16xf32>
    %28 = vector.shape_cast %27 : vector<1x64x16xf32> to vector<64x16xf32>
    %cst_17 = arith.constant dense<0.000000e+00> : vector<16x16xf32>
    %29 = tpu.matmul %23, %28, %cst_17 {dimension_numbers = #tpu.dot_dimension_numbers<[1], [0], [0], [1], [0, 0, 1, 1], [], []>, precision = #tpu.contract_precision<fp32>} : vector<16x64xf32>, vector<64x16xf32>, vector<16x16xf32> -> vector<16x16xf32>
    %c0_18 = arith.constant 0 : index
    %c0_19 = arith.constant 0 : index
    %c0_20 = arith.constant 0 : index
    %30 = vector.load %arg6[%c0_18, %c0_19, %c0_20] : memref<4x64x16xf32, #tpu.memory_space<vmem>>, vector<1x64x16xf32>
    %31 = vector.shape_cast %30 : vector<1x64x16xf32> to vector<64x16xf32>
    %cst_21 = arith.constant dense<0.000000e+00> : vector<16x16xf32>
    %32 = tpu.matmul %23, %31, %cst_21 {dimension_numbers = #tpu.dot_dimension_numbers<[1], [0], [0], [1], [0, 0, 1, 1], [], []>, precision = #tpu.contract_precision<fp32>} : vector<16x64xf32>, vector<64x16xf32>, vector<16x16xf32> -> vector<16x16xf32>
    %cst_22 = arith.constant dense<0.000000e+00> : vector<16x16xf32>
    %33 = tpu.matmul %26, %29, %cst_22 {dimension_numbers = #tpu.dot_dimension_numbers<[1], [1], [0], [0], [0, 0, 1, 0], [], []>, precision = #tpu.contract_precision<fp32>} : vector<16x16xf32>, vector<16x16xf32>, vector<16x16xf32> -> vector<16x16xf32>
    %cst_23 = arith.constant 1.250000e-01 : f32
    %34 = vector.broadcast %cst_23 : f32 to vector<16x16xf32>
    %35 = arith.mulf %33, %34 : vector<16x16xf32>
    %cst_24 = arith.constant dense<0xFF800000> : vector<16xf32>
    %36 = vector.multi_reduction <maximumf>, %35, %cst_24 [1] : vector<16x16xf32> to vector<16xf32>
    %37 = vector.shape_cast %36 : vector<16xf32> to vector<16x1xf32>
    %38 = vector.broadcast %37 : vector<16x1xf32> to vector<16x16xf32>
    %39 = arith.subf %35, %38 : vector<16x16xf32>
    %40 = math.exp %39 : vector<16x16xf32>
    %cst_25 = arith.constant dense<0.000000e+00> : vector<16xf32>
    %41 = vector.multi_reduction <add>, %40, %cst_25 [1] : vector<16x16xf32> to vector<16xf32>
    %42 = vector.shape_cast %41 : vector<16xf32> to vector<16x1xf32>
    %43 = vector.broadcast %42 : vector<16x1xf32> to vector<16x16xf32>
    %44 = arith.divf %40, %43 : vector<16x16xf32>
    %cst_26 = arith.constant dense<0.000000e+00> : vector<16x16xf32>
    %45 = tpu.matmul %44, %32, %cst_26 {dimension_numbers = #tpu.dot_dimension_numbers<[1], [0], [0], [1], [0, 0, 1, 1], [], []>, precision = #tpu.contract_precision<fp32>} : vector<16x16xf32>, vector<16x16xf32>, vector<16x16xf32> -> vector<16x16xf32>
    %c0_27 = arith.constant 0 : index
    %c0_28 = arith.constant 0 : index
    %c0_29 = arith.constant 0 : index
    %46 = vector.load %arg7[%c0_27, %c0_28, %c0_29] : memref<4x16x64xf32, #tpu.memory_space<vmem>>, vector<1x16x64xf32>
    %47 = vector.shape_cast %46 : vector<1x16x64xf32> to vector<16x64xf32>
    %cst_30 = arith.constant dense<0.000000e+00> : vector<16x64xf32>
    %48 = tpu.matmul %45, %47, %cst_30 {dimension_numbers = #tpu.dot_dimension_numbers<[1], [0], [0], [1], [0, 0, 1, 1], [], []>, precision = #tpu.contract_precision<fp32>} : vector<16x16xf32>, vector<16x64xf32>, vector<16x64xf32> -> vector<16x64xf32>
    %c1 = arith.constant 1 : index
    %c0_31 = arith.constant 0 : index
    %c0_32 = arith.constant 0 : index
    %49 = vector.load %arg4[%c1, %c0_31, %c0_32] : memref<4x64x16xf32, #tpu.memory_space<vmem>>, vector<1x64x16xf32>
    %50 = vector.shape_cast %49 : vector<1x64x16xf32> to vector<64x16xf32>
    %cst_33 = arith.constant dense<0.000000e+00> : vector<16x16xf32>
    %51 = tpu.matmul %23, %50, %cst_33 {dimension_numbers = #tpu.dot_dimension_numbers<[1], [0], [0], [1], [0, 0, 1, 1], [], []>, precision = #tpu.contract_precision<fp32>} : vector<16x64xf32>, vector<64x16xf32>, vector<16x16xf32> -> vector<16x16xf32>
    %c1_34 = arith.constant 1 : index
    %c0_35 = arith.constant 0 : index
    %c0_36 = arith.constant 0 : index
    %52 = vector.load %arg5[%c1_34, %c0_35, %c0_36] : memref<4x64x16xf32, #tpu.memory_space<vmem>>, vector<1x64x16xf32>
    %53 = vector.shape_cast %52 : vector<1x64x16xf32> to vector<64x16xf32>
    %cst_37 = arith.constant dense<0.000000e+00> : vector<16x16xf32>
    %54 = tpu.matmul %23, %53, %cst_37 {dimension_numbers = #tpu.dot_dimension_numbers<[1], [0], [0], [1], [0, 0, 1, 1], [], []>, precision = #tpu.contract_precision<fp32>} : vector<16x64xf32>, vector<64x16xf32>, vector<16x16xf32> -> vector<16x16xf32>
    %c1_38 = arith.constant 1 : index
    %c0_39 = arith.constant 0 : index
    %c0_40 = arith.constant 0 : index
    %55 = vector.load %arg6[%c1_38, %c0_39, %c0_40] : memref<4x64x16xf32, #tpu.memory_space<vmem>>, vector<1x64x16xf32>
    %56 = vector.shape_cast %55 : vector<1x64x16xf32> to vector<64x16xf32>
    %cst_41 = arith.constant dense<0.000000e+00> : vector<16x16xf32>
    %57 = tpu.matmul %23, %56, %cst_41 {dimension_numbers = #tpu.dot_dimension_numbers<[1], [0], [0], [1], [0, 0, 1, 1], [], []>, precision = #tpu.contract_precision<fp32>} : vector<16x64xf32>, vector<64x16xf32>, vector<16x16xf32> -> vector<16x16xf32>
    %cst_42 = arith.constant dense<0.000000e+00> : vector<16x16xf32>
    %58 = tpu.matmul %51, %54, %cst_42 {dimension_numbers = #tpu.dot_dimension_numbers<[1], [1], [0], [0], [0, 0, 1, 0], [], []>, precision = #tpu.contract_precision<fp32>} : vector<16x16xf32>, vector<16x16xf32>, vector<16x16xf32> -> vector<16x16xf32>
    %cst_43 = arith.constant 1.250000e-01 : f32
    %59 = vector.broadcast %cst_43 : f32 to vector<16x16xf32>
    %60 = arith.mulf %58, %59 : vector<16x16xf32>
    %cst_44 = arith.constant dense<0xFF800000> : vector<16xf32>
    %61 = vector.multi_reduction <maximumf>, %60, %cst_44 [1] : vector<16x16xf32> to vector<16xf32>
    %62 = vector.shape_cast %61 : vector<16xf32> to vector<16x1xf32>
    %63 = vector.broadcast %62 : vector<16x1xf32> to vector<16x16xf32>
    %64 = arith.subf %60, %63 : vector<16x16xf32>
    %65 = math.exp %64 : vector<16x16xf32>
    %cst_45 = arith.constant dense<0.000000e+00> : vector<16xf32>
    %66 = vector.multi_reduction <add>, %65, %cst_45 [1] : vector<16x16xf32> to vector<16xf32>
    %67 = vector.shape_cast %66 : vector<16xf32> to vector<16x1xf32>
    %68 = vector.broadcast %67 : vector<16x1xf32> to vector<16x16xf32>
    %69 = arith.divf %65, %68 : vector<16x16xf32>
    %cst_46 = arith.constant dense<0.000000e+00> : vector<16x16xf32>
    %70 = tpu.matmul %69, %57, %cst_46 {dimension_numbers = #tpu.dot_dimension_numbers<[1], [0], [0], [1], [0, 0, 1, 1], [], []>, precision = #tpu.contract_precision<fp32>} : vector<16x16xf32>, vector<16x16xf32>, vector<16x16xf32> -> vector<16x16xf32>
    %c1_47 = arith.constant 1 : index
    %c0_48 = arith.constant 0 : index
    %c0_49 = arith.constant 0 : index
    %71 = vector.load %arg7[%c1_47, %c0_48, %c0_49] : memref<4x16x64xf32, #tpu.memory_space<vmem>>, vector<1x16x64xf32>
    %72 = vector.shape_cast %71 : vector<1x16x64xf32> to vector<16x64xf32>
    %cst_50 = arith.constant dense<0.000000e+00> : vector<16x64xf32>
    %73 = tpu.matmul %70, %72, %cst_50 {dimension_numbers = #tpu.dot_dimension_numbers<[1], [0], [0], [1], [0, 0, 1, 1], [], []>, precision = #tpu.contract_precision<fp32>} : vector<16x16xf32>, vector<16x64xf32>, vector<16x64xf32> -> vector<16x64xf32>
    %74 = arith.addf %48, %73 : vector<16x64xf32>
    %c2 = arith.constant 2 : index
    %c0_51 = arith.constant 0 : index
    %c0_52 = arith.constant 0 : index
    %75 = vector.load %arg4[%c2, %c0_51, %c0_52] : memref<4x64x16xf32, #tpu.memory_space<vmem>>, vector<1x64x16xf32>
    %76 = vector.shape_cast %75 : vector<1x64x16xf32> to vector<64x16xf32>
    %cst_53 = arith.constant dense<0.000000e+00> : vector<16x16xf32>
    %77 = tpu.matmul %23, %76, %cst_53 {dimension_numbers = #tpu.dot_dimension_numbers<[1], [0], [0], [1], [0, 0, 1, 1], [], []>, precision = #tpu.contract_precision<fp32>} : vector<16x64xf32>, vector<64x16xf32>, vector<16x16xf32> -> vector<16x16xf32>
    %c2_54 = arith.constant 2 : index
    %c0_55 = arith.constant 0 : index
    %c0_56 = arith.constant 0 : index
    %78 = vector.load %arg5[%c2_54, %c0_55, %c0_56] : memref<4x64x16xf32, #tpu.memory_space<vmem>>, vector<1x64x16xf32>
    %79 = vector.shape_cast %78 : vector<1x64x16xf32> to vector<64x16xf32>
    %cst_57 = arith.constant dense<0.000000e+00> : vector<16x16xf32>
    %80 = tpu.matmul %23, %79, %cst_57 {dimension_numbers = #tpu.dot_dimension_numbers<[1], [0], [0], [1], [0, 0, 1, 1], [], []>, precision = #tpu.contract_precision<fp32>} : vector<16x64xf32>, vector<64x16xf32>, vector<16x16xf32> -> vector<16x16xf32>
    %c2_58 = arith.constant 2 : index
    %c0_59 = arith.constant 0 : index
    %c0_60 = arith.constant 0 : index
    %81 = vector.load %arg6[%c2_58, %c0_59, %c0_60] : memref<4x64x16xf32, #tpu.memory_space<vmem>>, vector<1x64x16xf32>
    %82 = vector.shape_cast %81 : vector<1x64x16xf32> to vector<64x16xf32>
    %cst_61 = arith.constant dense<0.000000e+00> : vector<16x16xf32>
    %83 = tpu.matmul %23, %82, %cst_61 {dimension_numbers = #tpu.dot_dimension_numbers<[1], [0], [0], [1], [0, 0, 1, 1], [], []>, precision = #tpu.contract_precision<fp32>} : vector<16x64xf32>, vector<64x16xf32>, vector<16x16xf32> -> vector<16x16xf32>
    %cst_62 = arith.constant dense<0.000000e+00> : vector<16x16xf32>
    %84 = tpu.matmul %77, %80, %cst_62 {dimension_numbers = #tpu.dot_dimension_numbers<[1], [1], [0], [0], [0, 0, 1, 0], [], []>, precision = #tpu.contract_precision<fp32>} : vector<16x16xf32>, vector<16x16xf32>, vector<16x16xf32> -> vector<16x16xf32>
    %cst_63 = arith.constant 1.250000e-01 : f32
    %85 = vector.broadcast %cst_63 : f32 to vector<16x16xf32>
    %86 = arith.mulf %84, %85 : vector<16x16xf32>
    %cst_64 = arith.constant dense<0xFF800000> : vector<16xf32>
    %87 = vector.multi_reduction <maximumf>, %86, %cst_64 [1] : vector<16x16xf32> to vector<16xf32>
    %88 = vector.shape_cast %87 : vector<16xf32> to vector<16x1xf32>
    %89 = vector.broadcast %88 : vector<16x1xf32> to vector<16x16xf32>
    %90 = arith.subf %86, %89 : vector<16x16xf32>
    %91 = math.exp %90 : vector<16x16xf32>
    %cst_65 = arith.constant dense<0.000000e+00> : vector<16xf32>
    %92 = vector.multi_reduction <add>, %91, %cst_65 [1] : vector<16x16xf32> to vector<16xf32>
    %93 = vector.shape_cast %92 : vector<16xf32> to vector<16x1xf32>
    %94 = vector.broadcast %93 : vector<16x1xf32> to vector<16x16xf32>
    %95 = arith.divf %91, %94 : vector<16x16xf32>
    %cst_66 = arith.constant dense<0.000000e+00> : vector<16x16xf32>
    %96 = tpu.matmul %95, %83, %cst_66 {dimension_numbers = #tpu.dot_dimension_numbers<[1], [0], [0], [1], [0, 0, 1, 1], [], []>, precision = #tpu.contract_precision<fp32>} : vector<16x16xf32>, vector<16x16xf32>, vector<16x16xf32> -> vector<16x16xf32>
    %c2_67 = arith.constant 2 : index
    %c0_68 = arith.constant 0 : index
    %c0_69 = arith.constant 0 : index
    %97 = vector.load %arg7[%c2_67, %c0_68, %c0_69] : memref<4x16x64xf32, #tpu.memory_space<vmem>>, vector<1x16x64xf32>
    %98 = vector.shape_cast %97 : vector<1x16x64xf32> to vector<16x64xf32>
    %cst_70 = arith.constant dense<0.000000e+00> : vector<16x64xf32>
    %99 = tpu.matmul %96, %98, %cst_70 {dimension_numbers = #tpu.dot_dimension_numbers<[1], [0], [0], [1], [0, 0, 1, 1], [], []>, precision = #tpu.contract_precision<fp32>} : vector<16x16xf32>, vector<16x64xf32>, vector<16x64xf32> -> vector<16x64xf32>
    %100 = arith.addf %74, %99 : vector<16x64xf32>
    %c3 = arith.constant 3 : index
    %c0_71 = arith.constant 0 : index
    %c0_72 = arith.constant 0 : index
    %101 = vector.load %arg4[%c3, %c0_71, %c0_72] : memref<4x64x16xf32, #tpu.memory_space<vmem>>, vector<1x64x16xf32>
    %102 = vector.shape_cast %101 : vector<1x64x16xf32> to vector<64x16xf32>
    %cst_73 = arith.constant dense<0.000000e+00> : vector<16x16xf32>
    %103 = tpu.matmul %23, %102, %cst_73 {dimension_numbers = #tpu.dot_dimension_numbers<[1], [0], [0], [1], [0, 0, 1, 1], [], []>, precision = #tpu.contract_precision<fp32>} : vector<16x64xf32>, vector<64x16xf32>, vector<16x16xf32> -> vector<16x16xf32>
    %c3_74 = arith.constant 3 : index
    %c0_75 = arith.constant 0 : index
    %c0_76 = arith.constant 0 : index
    %104 = vector.load %arg5[%c3_74, %c0_75, %c0_76] : memref<4x64x16xf32, #tpu.memory_space<vmem>>, vector<1x64x16xf32>
    %105 = vector.shape_cast %104 : vector<1x64x16xf32> to vector<64x16xf32>
    %cst_77 = arith.constant dense<0.000000e+00> : vector<16x16xf32>
    %106 = tpu.matmul %23, %105, %cst_77 {dimension_numbers = #tpu.dot_dimension_numbers<[1], [0], [0], [1], [0, 0, 1, 1], [], []>, precision = #tpu.contract_precision<fp32>} : vector<16x64xf32>, vector<64x16xf32>, vector<16x16xf32> -> vector<16x16xf32>
    %c3_78 = arith.constant 3 : index
    %c0_79 = arith.constant 0 : index
    %c0_80 = arith.constant 0 : index
    %107 = vector.load %arg6[%c3_78, %c0_79, %c0_80] : memref<4x64x16xf32, #tpu.memory_space<vmem>>, vector<1x64x16xf32>
    %108 = vector.shape_cast %107 : vector<1x64x16xf32> to vector<64x16xf32>
    %cst_81 = arith.constant dense<0.000000e+00> : vector<16x16xf32>
    %109 = tpu.matmul %23, %108, %cst_81 {dimension_numbers = #tpu.dot_dimension_numbers<[1], [0], [0], [1], [0, 0, 1, 1], [], []>, precision = #tpu.contract_precision<fp32>} : vector<16x64xf32>, vector<64x16xf32>, vector<16x16xf32> -> vector<16x16xf32>
    %cst_82 = arith.constant dense<0.000000e+00> : vector<16x16xf32>
    %110 = tpu.matmul %103, %106, %cst_82 {dimension_numbers = #tpu.dot_dimension_numbers<[1], [1], [0], [0], [0, 0, 1, 0], [], []>, precision = #tpu.contract_precision<fp32>} : vector<16x16xf32>, vector<16x16xf32>, vector<16x16xf32> -> vector<16x16xf32>
    %cst_83 = arith.constant 1.250000e-01 : f32
    %111 = vector.broadcast %cst_83 : f32 to vector<16x16xf32>
    %112 = arith.mulf %110, %111 : vector<16x16xf32>
    %cst_84 = arith.constant dense<0xFF800000> : vector<16xf32>
    %113 = vector.multi_reduction <maximumf>, %112, %cst_84 [1] : vector<16x16xf32> to vector<16xf32>
    %114 = vector.shape_cast %113 : vector<16xf32> to vector<16x1xf32>
    %115 = vector.broadcast %114 : vector<16x1xf32> to vector<16x16xf32>
    %116 = arith.subf %112, %115 : vector<16x16xf32>
    %117 = math.exp %116 : vector<16x16xf32>
    %cst_85 = arith.constant dense<0.000000e+00> : vector<16xf32>
    %118 = vector.multi_reduction <add>, %117, %cst_85 [1] : vector<16x16xf32> to vector<16xf32>
    %119 = vector.shape_cast %118 : vector<16xf32> to vector<16x1xf32>
    %120 = vector.broadcast %119 : vector<16x1xf32> to vector<16x16xf32>
    %121 = arith.divf %117, %120 : vector<16x16xf32>
    %cst_86 = arith.constant dense<0.000000e+00> : vector<16x16xf32>
    %122 = tpu.matmul %121, %109, %cst_86 {dimension_numbers = #tpu.dot_dimension_numbers<[1], [0], [0], [1], [0, 0, 1, 1], [], []>, precision = #tpu.contract_precision<fp32>} : vector<16x16xf32>, vector<16x16xf32>, vector<16x16xf32> -> vector<16x16xf32>
    %c3_87 = arith.constant 3 : index
    %c0_88 = arith.constant 0 : index
    %c0_89 = arith.constant 0 : index
    %123 = vector.load %arg7[%c3_87, %c0_88, %c0_89] : memref<4x16x64xf32, #tpu.memory_space<vmem>>, vector<1x16x64xf32>
    %124 = vector.shape_cast %123 : vector<1x16x64xf32> to vector<16x64xf32>
    %cst_90 = arith.constant dense<0.000000e+00> : vector<16x64xf32>
    %125 = tpu.matmul %122, %124, %cst_90 {dimension_numbers = #tpu.dot_dimension_numbers<[1], [0], [0], [1], [0, 0, 1, 1], [], []>, precision = #tpu.contract_precision<fp32>} : vector<16x16xf32>, vector<16x64xf32>, vector<16x64xf32> -> vector<16x64xf32>
    %126 = arith.addf %100, %125 : vector<16x64xf32>
    %c0_91 = arith.constant 0 : index
    %c0_92 = arith.constant 0 : index
    %127 = vector.load %arg8[%c0_91, %c0_92] : memref<1x64xf32, #tpu.memory_space<vmem>>, vector<1x64xf32>
    %128 = vector.broadcast %127 : vector<1x64xf32> to vector<16x64xf32>
    %129 = arith.addf %126, %128 : vector<16x64xf32>
    %130 = arith.addf %129, %1 : vector<16x64xf32>
    %c0_93 = arith.constant 0 : index
    %c0_94 = arith.constant 0 : index
    %131 = vector.load %arg9[%c0_93, %c0_94] : memref<1x64xf32, #tpu.memory_space<vmem>>, vector<1x64xf32>
    %c0_95 = arith.constant 0 : index
    %c0_96 = arith.constant 0 : index
    %132 = vector.load %arg10[%c0_95, %c0_96] : memref<1x64xf32, #tpu.memory_space<vmem>>, vector<1x64xf32>
    %cst_97 = arith.constant dense<0.000000e+00> : vector<16xf32>
    %133 = vector.multi_reduction <add>, %130, %cst_97 [1] : vector<16x64xf32> to vector<16xf32>
    %134 = vector.shape_cast %133 : vector<16xf32> to vector<16x1xf32>
    %cst_98 = arith.constant 6.400000e+01 : f32
    %135 = vector.broadcast %cst_98 : f32 to vector<16x1xf32>
    %136 = arith.divf %134, %135 : vector<16x1xf32>
    %137 = vector.broadcast %136 : vector<16x1xf32> to vector<16x64xf32>
    %138 = arith.subf %130, %137 : vector<16x64xf32>
    %139 = arith.mulf %138, %138 : vector<16x64xf32>
    %cst_99 = arith.constant dense<0.000000e+00> : vector<16xf32>
    %140 = vector.multi_reduction <add>, %139, %cst_99 [1] : vector<16x64xf32> to vector<16xf32>
    %141 = vector.shape_cast %140 : vector<16xf32> to vector<16x1xf32>
    %cst_100 = arith.constant 6.400000e+01 : f32
    %142 = vector.broadcast %cst_100 : f32 to vector<16x1xf32>
    %143 = arith.divf %141, %142 : vector<16x1xf32>
    %cst_101 = arith.constant 9.99999974E-6 : f32
    %144 = vector.broadcast %cst_101 : f32 to vector<16x1xf32>
    %145 = arith.addf %143, %144 : vector<16x1xf32>
    %146 = math.sqrt %145 : vector<16x1xf32>
    %147 = vector.broadcast %146 : vector<16x1xf32> to vector<16x64xf32>
    %148 = arith.divf %138, %147 : vector<16x64xf32>
    %149 = vector.broadcast %131 : vector<1x64xf32> to vector<16x64xf32>
    %150 = arith.mulf %148, %149 : vector<16x64xf32>
    %151 = vector.broadcast %132 : vector<1x64xf32> to vector<16x64xf32>
    %152 = arith.addf %150, %151 : vector<16x64xf32>
    %c0_102 = arith.constant 0 : index
    %c0_103 = arith.constant 0 : index
    %153 = vector.load %arg11[%c0_102, %c0_103] : memref<64x64xf32, #tpu.memory_space<vmem>>, vector<64x64xf32>
    %cst_104 = arith.constant dense<0.000000e+00> : vector<16x64xf32>
    %154 = tpu.matmul %152, %153, %cst_104 {dimension_numbers = #tpu.dot_dimension_numbers<[1], [0], [0], [1], [0, 0, 1, 1], [], []>, precision = #tpu.contract_precision<fp32>} : vector<16x64xf32>, vector<64x64xf32>, vector<16x64xf32> -> vector<16x64xf32>
    %c0_105 = arith.constant 0 : index
    %c0_106 = arith.constant 0 : index
    %155 = vector.load %arg12[%c0_105, %c0_106] : memref<1x64xf32, #tpu.memory_space<vmem>>, vector<1x64xf32>
    %156 = vector.broadcast %155 : vector<1x64xf32> to vector<16x64xf32>
    %157 = arith.addf %154, %156 : vector<16x64xf32>
    %cst_107 = arith.constant 5.000000e-01 : f32
    %158 = vector.broadcast %cst_107 : f32 to vector<16x64xf32>
    %159 = arith.mulf %158, %157 : vector<16x64xf32>
    %cst_108 = arith.constant 4.471500e-02 : f32
    %160 = vector.broadcast %cst_108 : f32 to vector<16x64xf32>
    %161 = arith.mulf %160, %157 : vector<16x64xf32>
    %162 = arith.mulf %161, %157 : vector<16x64xf32>
    %163 = arith.mulf %162, %157 : vector<16x64xf32>
    %164 = arith.addf %157, %163 : vector<16x64xf32>
    %cst_109 = arith.constant 0.797884583 : f32
    %165 = vector.broadcast %cst_109 : f32 to vector<16x64xf32>
    %166 = arith.mulf %165, %164 : vector<16x64xf32>
    %167 = math.tanh %166 : vector<16x64xf32>
    %cst_110 = arith.constant 1.000000e+00 : f32
    %168 = vector.broadcast %cst_110 : f32 to vector<16x64xf32>
    %169 = arith.addf %168, %167 : vector<16x64xf32>
    %170 = arith.mulf %159, %169 : vector<16x64xf32>
    %c0_111 = arith.constant 0 : index
    %c0_112 = arith.constant 0 : index
    %171 = vector.load %arg13[%c0_111, %c0_112] : memref<64x64xf32, #tpu.memory_space<vmem>>, vector<64x64xf32>
    %cst_113 = arith.constant dense<0.000000e+00> : vector<16x64xf32>
    %172 = tpu.matmul %170, %171, %cst_113 {dimension_numbers = #tpu.dot_dimension_numbers<[1], [0], [0], [1], [0, 0, 1, 1], [], []>, precision = #tpu.contract_precision<fp32>} : vector<16x64xf32>, vector<64x64xf32>, vector<16x64xf32> -> vector<16x64xf32>
    %c0_114 = arith.constant 0 : index
    %c0_115 = arith.constant 0 : index
    %173 = vector.load %arg14[%c0_114, %c0_115] : memref<1x64xf32, #tpu.memory_space<vmem>>, vector<1x64xf32>
    %174 = vector.broadcast %173 : vector<1x64xf32> to vector<16x64xf32>
    %175 = arith.addf %172, %174 : vector<16x64xf32>
    %176 = arith.addf %175, %130 : vector<16x64xf32>
    %c0_116 = arith.constant 0 : index
    %c0_117 = arith.constant 0 : index
    %c0_118 = arith.constant 0 : index
    %177 = vector.load %arg15[%c0_116, %c0_117, %c0_118] : memref<1x16x64xf32, #tpu.memory_space<vmem>>, vector<1x16x64xf32>
    %178 = vector.shape_cast %177 : vector<1x16x64xf32> to vector<16x64xf32>
    %179 = vector.shape_cast %176 : vector<16x64xf32> to vector<1x16x64xf32>
    tpu.vector_store %arg15[%c0_116, %c0_117, %c0_118], %179 {strides = array<i32>} : memref<1x16x64xf32, #tpu.memory_space<vmem>>, vector<1x16x64xf32>,
    return
  }
  func.func @transform_0(%arg0: i32) -> (i32, i32, i32) {
    %c0_i32 = arith.constant 0 : i32
    %c0_i32_0 = arith.constant 0 : i32
    %c0_i32_1 = arith.constant 0 : i32
    return %arg0, %c0_i32, %c0_i32_0 : i32, i32, i32
  }
  func.func @transform_1(%arg0: i32) -> (i32, i32) {
    %c0_i32 = arith.constant 0 : i32
    %c0_i32_0 = arith.constant 0 : i32
    %c0_i32_1 = arith.constant 0 : i32
    return %c0_i32, %c0_i32_0 : i32, i32
  }
  func.func @transform_2(%arg0: i32) -> (i32, i32) {
    %c0_i32 = arith.constant 0 : i32
    %c0_i32_0 = arith.constant 0 : i32
    %c0_i32_1 = arith.constant 0 : i32
    return %c0_i32, %c0_i32_0 : i32, i32
  }
  func.func @transform_3(%arg0: i32) -> (i32, i32, i32) {
    %c0_i32 = arith.constant 0 : i32
    %c0_i32_0 = arith.constant 0 : i32
    %c0_i32_1 = arith.constant 0 : i32
    %c0_i32_2 = arith.constant 0 : i32
    return %c0_i32, %c0_i32_0, %c0_i32_1 : i32, i32, i32
  }
  func.func @transform_4(%arg0: i32) -> (i32, i32, i32) {
    %c0_i32 = arith.constant 0 : i32
    %c0_i32_0 = arith.constant 0 : i32
    %c0_i32_1 = arith.constant 0 : i32
    %c0_i32_2 = arith.constant 0 : i32
    return %c0_i32, %c0_i32_0, %c0_i32_1 : i32, i32, i32
  }
  func.func @transform_5(%arg0: i32) -> (i32, i32, i32) {
    %c0_i32 = arith.constant 0 : i32
    %c0_i32_0 = arith.constant 0 : i32
    %c0_i32_1 = arith.constant 0 : i32
    %c0_i32_2 = arith.constant 0 : i32
    return %c0_i32, %c0_i32_0, %c0_i32_1 : i32, i32, i32
  }
  func.func @transform_6(%arg0: i32) -> (i32, i32, i32) {
    %c0_i32 = arith.constant 0 : i32
    %c0_i32_0 = arith.constant 0 : i32
    %c0_i32_1 = arith.constant 0 : i32
    %c0_i32_2 = arith.constant 0 : i32
    return %c0_i32, %c0_i32_0, %c0_i32_1 : i32, i32, i32
  }
  func.func @transform_7(%arg0: i32) -> (i32, i32) {
    %c0_i32 = arith.constant 0 : i32
    %c0_i32_0 = arith.constant 0 : i32
    %c0_i32_1 = arith.constant 0 : i32
    return %c0_i32, %c0_i32_0 : i32, i32
  }
  func.func @transform_8(%arg0: i32) -> (i32, i32) {
    %c0_i32 = arith.constant 0 : i32
    %c0_i32_0 = arith.constant 0 : i32
    %c0_i32_1 = arith.constant 0 : i32
    return %c0_i32, %c0_i32_0 : i32, i32
  }
  func.func @transform_9(%arg0: i32) -> (i32, i32) {
    %c0_i32 = arith.constant 0 : i32
    %c0_i32_0 = arith.constant 0 : i32
    %c0_i32_1 = arith.constant 0 : i32
    return %c0_i32, %c0_i32_0 : i32, i32
  }
  func.func @transform_10(%arg0: i32) -> (i32, i32) {
    %c0_i32 = arith.constant 0 : i32
    %c0_i32_0 = arith.constant 0 : i32
    %c0_i32_1 = arith.constant 0 : i32
    return %c0_i32, %c0_i32_0 : i32, i32
  }
  func.func @transform_11(%arg0: i32) -> (i32, i32) {
    %c0_i32 = arith.constant 0 : i32
    %c0_i32_0 = arith.constant 0 : i32
    %c0_i32_1 = arith.constant 0 : i32
    return %c0_i32, %c0_i32_0 : i32, i32
  }
  func.func @transform_12(%arg0: i32) -> (i32, i32) {
    %c0_i32 = arith.constant 0 : i32
    %c0_i32_0 = arith.constant 0 : i32
    %c0_i32_1 = arith.constant 0 : i32
    return %c0_i32, %c0_i32_0 : i32, i32
  }
  func.func @transform_13(%arg0: i32) -> (i32, i32) {
    %c0_i32 = arith.constant 0 : i32
    %c0_i32_0 = arith.constant 0 : i32
    %c0_i32_1 = arith.constant 0 : i32
    return %c0_i32, %c0_i32_0 : i32, i32
  }
  func.func @transform_14(%arg0: i32) -> (i32, i32, i32) {
    %c0_i32 = arith.constant 0 : i32
    %c0_i32_0 = arith.constant 0 : i32
    %c0_i32_1 = arith.constant 0 : i32
    return %arg0, %c0_i32, %c0_i32_0 : i32, i32, i32
  }
}

</mosaic_0001>

<llo_original>
// kernel: tpu_custom_call.1
$region0: #{tpu_custom_call.1}
  #allocation0 [shape = 'u32[]', space=smem, size = 0x4, offset = 0x4, fixed_abs, tag = 'smem constant byte address 0x4 - core index']
  #allocation1 [shape = 'u32[72,128]{1,0:T(1,128)}', space=vmem, size = 0x9000, scoped, tag = 'internal scratch']
  %s0 = inlined_call_operand.vmem [shape: f32[2,16,64], index: 0, kind: input, shape index: {}]
  %s1 = inlined_call_operand.vmem [shape: f32[1,64], index: 1, kind: input, shape index: {}]
  %s2 = inlined_call_operand.vmem [shape: f32[1,64], index: 2, kind: input, shape index: {}]
  %s3 = inlined_call_operand.vmem [shape: f32[4,64,16], index: 3, kind: input, shape index: {}]
  %s4 = inlined_call_operand.vmem [shape: f32[4,64,16], index: 4, kind: input, shape index: {}]
  %s5 = inlined_call_operand.vmem [shape: f32[4,64,16], index: 5, kind: input, shape index: {}]
  %s6 = inlined_call_operand.vmem [shape: f32[4,16,64], index: 6, kind: input, shape index: {}]
  %s7 = inlined_call_operand.vmem [shape: f32[1,64], index: 7, kind: input, shape index: {}]
  %s8 = inlined_call_operand.vmem [shape: f32[1,64], index: 8, kind: input, shape index: {}]
  %s9 = inlined_call_operand.vmem [shape: f32[1,64], index: 9, kind: input, shape index: {}]
  %s10 = inlined_call_operand.vmem [shape: f32[64,64], index: 10, kind: input, shape index: {}]
  %s11 = inlined_call_operand.vmem [shape: f32[1,64], index: 11, kind: input, shape index: {}]
  %s12 = inlined_call_operand.vmem [shape: f32[64,64], index: 12, kind: input, shape index: {}]
  %s13 = inlined_call_operand.vmem [shape: f32[1,64], index: 13, kind: input, shape index: {}]
  %s14 = inlined_call_operand.hbm [shape: f32[2,16,64], index: 14, kind: output, shape index: {}]
  %s15 = sld [smem:[#allocation0]]
  $region89: #{tpu_custom_call.1} parent=0
    _
  %s17 = ssub.s32 1, %s15
  %s18 = scalar_select 0, %s17, %s15
  $region1: #{tpu_custom_call.1} parent=0
    #allocation2 [shape = 'u8[16384]{0}', space=vmem, size = 0x4000, scoped, tag = 'output window, operand 0']
    #allocation3 [shape = 's32[2]{0}', space=sflag, size = 0x8, scoped, tag = 'scoped memory for tpu_custom_call.1']
    %19 = vsyncpa [#allocation3], 0
    %s20 = scalar_lea.sflag [#allocation3], 1
    %21 = vsyncpa %s20, 0
    loop: start=0, step=1, limit=4
    $region2: #{tpu_custom_call.1} parent=1 // loop_pre_header
      _
    $region3: #{tpu_custom_call.1} parent=1 // loop_header
      %s23 = sphi 0, %s27
      %p24 = scmp.ge.s32.totalorder %s23, 4
      %s33 = sphi 0, %s35
      %s36 = sphi 0, %s33
      %s37 = sphi 0, %s36
      %s53 = sphi 0, %s37
      %s57 = sphi 0, %s57
      %s59 = sphi 0, %s57
      %s60 = sphi 0, %s59
      %s74 = sphi 0, %s60
      %s78 = sphi 0, %s78
      %s80 = sphi 0, %s78
      %s81 = sphi 0, %s80
      %s95 = sphi 0, %s81
      %s99 = sphi 0, %s99
      %s101 = sphi 0, %s99
      %s102 = sphi 0, %s101
      %s116 = sphi 0, %s102
      %s120 = sphi 0, %s120
      %s122 = sphi 0, %s120
      %s123 = sphi 0, %s122
      %s137 = sphi 0, %s123
      %s141 = sphi 0, %s141
      %s143 = sphi 0, %s141
      %s144 = sphi 0, %s143
      %s158 = sphi 0, %s144
      %s162 = sphi 0, %s162
      %s164 = sphi 0, %s162
      %s165 = sphi 0, %s164
      %s179 = sphi 0, %s165
      %s183 = sphi 0, %s183
      %s185 = sphi 0, %s183
      %s186 = sphi 0, %s185
      %s200 = sphi 0, %s186
      %s204 = sphi 0, %s204
      %s206 = sphi 0, %s204
      %s207 = sphi 0, %s206
      %s221 = sphi 0, %s207
      %s225 = sphi 0, %s225
      %s227 = sphi 0, %s225
      %s228 = sphi 0, %s227
      %s242 = sphi 0, %s228
      %s246 = sphi 0, %s246
      %s248 = sphi 0, %s246
      %s249 = sphi 0, %s248
      %s263 = sphi 0, %s249
      %s267 = sphi 0, %s267
      %s269 = sphi 0, %s267
      %s270 = sphi 0, %s269
      %s284 = sphi 0, %s270
      %s288 = sphi 0, %s288
      %s290 = sphi 0, %s288
      %s291 = sphi 0, %s290
      %s305 = sphi 0, %s291
      %s309 = sphi 0, %s309
      %s311 = sphi 0, %s309
      %s312 = sphi 0, %s311
      %s326 = sphi 0, %s312
      %s332 = sphi 0, %s334
      %s335 = sphi 0, %s332
      %s336 = sphi 0, %s335
      %s352 = sphi 0, %s336
    $region4: #{tpu_custom_call.1} parent=1 // loop_header_branch
      %26 = sbr.rel (%p24) target = $region8
    $region5: #{tpu_custom_call.1} parent=1 // loop_body
      %s28 = ssub.s32 %s23, 1
      %s29 = ssub.s32 %s23, 2
      %s30 = sadd.s32 %s23, 1
      %s31 = ssub.s32 %s23, %s30
      %p32 = scmp.eq.s32.totalorder %s31, 0
      %s34 = sadd.s32 %s33, 1
      %s35 = scalar_select %p32, %s33, %s34
      %p38 = pneg %p32
      %p39 = scmp.eq.s32.totalorder %s23, 1
      %p40 = por %p38, %p39
      %p41 = scmp.ne.s32.totalorder %s33, %s36
      %p42 = scmp.eq.s32.totalorder %s23, 0
      %p43 = por %p41, %p42
      %p44 = scmp.ne.s32.totalorder %s33, %s36
      %p45 = scmp.eq.s32.totalorder %s28, 1
      %p46 = por %p44, %p45
      %p47 = scmp.ne.s32.totalorder %s36, %s37
      %p48 = scmp.eq.s32.totalorder %s28, 0
      %p49 = por %p47, %p48
      %p50 = scmp.ne.s32.totalorder %s36, %s37
      %p51 = scmp.eq.s32.totalorder %s29, 1
      %p52 = por %p50, %p51
      %p54 = scmp.ne.s32.totalorder %s37, %s53
      %p55 = scmp.eq.s32.totalorder %s29, 0
      %p56 = por %p54, %p55
      %s58 = sadd.s32 %s57, 1
      %p61 = scmp.eq.s32.totalorder %s23, 1
      %p62 = scmp.ne.s32.totalorder %s57, %s59
      %p63 = scmp.eq.s32.totalorder %s23, 0
      %p64 = por %p62, %p63
      %p65 = scmp.ne.s32.totalorder %s57, %s59
      %p66 = scmp.eq.s32.totalorder %s28, 1
      %p67 = por %p65, %p66
      %p68 = scmp.ne.s32.totalorder %s59, %s60
      %p69 = scmp.eq.s32.totalorder %s28, 0
      %p70 = por %p68, %p69
      %p71 = scmp.ne.s32.totalorder %s59, %s60
      %p72 = scmp.eq.s32.totalorder %s29, 1
      %p73 = por %p71, %p72
      %p75 = scmp.ne.s32.totalorder %s60, %s74
      %p76 = scmp.eq.s32.totalorder %s29, 0
      %p77 = por %p75, %p76
      %s79 = sadd.s32 %s78, 1
      %p82 = scmp.eq.s32.totalorder %s23, 1
      %p83 = scmp.ne.s32.totalorder %s78, %s80
      %p84 = scmp.eq.s32.totalorder %s23, 0
      %p85 = por %p83, %p84
      %p86 = scmp.ne.s32.totalorder %s78, %s80
      %p87 = scmp.eq.s32.totalorder %s28, 1
      %p88 = por %p86, %p87
      %p89 = scmp.ne.s32.totalorder %s80, %s81
      %p90 = scmp.eq.s32.totalorder %s28, 0
      %p91 = por %p89, %p90
      %p92 = scmp.ne.s32.totalorder %s80, %s81
      %p93 = scmp.eq.s32.totalorder %s29, 1
      %p94 = por %p92, %p93
      %p96 = scmp.ne.s32.totalorder %s81, %s95
      %p97 = scmp.eq.s32.totalorder %s29, 0
      %p98 = por %p96, %p97
      %s100 = sadd.s32 %s99, 1
      %p103 = scmp.eq.s32.totalorder %s23, 1
      %p104 = scmp.ne.s32.totalorder %s99, %s101
      %p105 = scmp.eq.s32.totalorder %s23, 0
      %p106 = por %p104, %p105
      %p107 = scmp.ne.s32.totalorder %s99, %s101
      %p108 = scmp.eq.s32.totalorder %s28, 1
      %p109 = por %p107, %p108
      %p110 = scmp.ne.s32.totalorder %s101, %s102
      %p111 = scmp.eq.s32.totalorder %s28, 0
      %p112 = por %p110, %p111
      %p113 = scmp.ne.s32.totalorder %s101, %s102
      %p114 = scmp.eq.s32.totalorder %s29, 1
      %p115 = por %p113, %p114
      %p117 = scmp.ne.s32.totalorder %s102, %s116
      %p118 = scmp.eq.s32.totalorder %s29, 0
      %p119 = por %p117, %p118
      %s121 = sadd.s32 %s120, 1
      %p124 = scmp.eq.s32.totalorder %s23, 1
      %p125 = scmp.ne.s32.totalorder %s120, %s122
      %p126 = scmp.eq.s32.totalorder %s23, 0
      %p127 = por %p125, %p126
      %p128 = scmp.ne.s32.totalorder %s120, %s122
      %p129 = scmp.eq.s32.totalorder %s28, 1
      %p130 = por %p128, %p129
      %p131 = scmp.ne.s32.totalorder %s122, %s123
      %p132 = scmp.eq.s32.totalorder %s28, 0
      %p133 = por %p131, %p132
      %p134 = scmp.ne.s32.totalorder %s122, %s123
      %p135 = scmp.eq.s32.totalorder %s29, 1
      %p136 = por %p134, %p135
      %p138 = scmp.ne.s32.totalorder %s123, %s137
      %p139 = scmp.eq.s32.totalorder %s29, 0
      %p140 = por %p138, %p139
      %s142 = sadd.s32 %s141, 1
      %p145 = scmp.eq.s32.totalorder %s23, 1
      %p146 = scmp.ne.s32.totalorder %s141, %s143
      %p147 = scmp.eq.s32.totalorder %s23, 0
      %p148 = por %p146, %p147
      %p149 = scmp.ne.s32.totalorder %s141, %s143
      %p150 = scmp.eq.s32.totalorder %s28, 1
      %p151 = por %p149, %p150
      %p152 = scmp.ne.s32.totalorder %s143, %s144
      %p153 = scmp.eq.s32.totalorder %s28, 0
      %p154 = por %p152, %p153
      %p155 = scmp.ne.s32.totalorder %s143, %s144
      %p156 = scmp.eq.s32.totalorder %s29, 1
      %p157 = por %p155, %p156
      %p159 = scmp.ne.s32.totalorder %s144, %s158
      %p160 = scmp.eq.s32.totalorder %s29, 0
      %p161 = por %p159, %p160
      %s163 = sadd.s32 %s162, 1
      %p166 = scmp.eq.s32.totalorder %s23, 1
      %p167 = scmp.ne.s32.totalorder %s162, %s164
      %p168 = scmp.eq.s32.totalorder %s23, 0
      %p169 = por %p167, %p168
      %p170 = scmp.ne.s32.totalorder %s162, %s164
      %p171 = scmp.eq.s32.totalorder %s28, 1
      %p172 = por %p170, %p171
      %p173 = scmp.ne.s32.totalorder %s164, %s165
      %p174 = scmp.eq.s32.totalorder %s28, 0
      %p175 = por %p173, %p174
      %p176 = scmp.ne.s32.totalorder %s164, %s165
      %p177 = scmp.eq.s32.totalorder %s29, 1
      %p178 = por %p176, %p177
      %p180 = scmp.ne.s32.totalorder %s165, %s179
      %p181 = scmp.eq.s32.totalorder %s29, 0
      %p182 = por %p180, %p181
      %s184 = sadd.s32 %s183, 1
      %p187 = scmp.eq.s32.totalorder %s23, 1
      %p188 = scmp.ne.s32.totalorder %s183, %s185
      %p189 = scmp.eq.s32.totalorder %s23, 0
      %p190 = por %p188, %p189
      %p191 = scmp.ne.s32.totalorder %s183, %s185
      %p192 = scmp.eq.s32.totalorder %s28, 1
      %p193 = por %p191, %p192
      %p194 = scmp.ne.s32.totalorder %s185, %s186
      %p195 = scmp.eq.s32.totalorder %s28, 0
      %p196 = por %p194, %p195
      %p197 = scmp.ne.s32.totalorder %s185, %s186
      %p198 = scmp.eq.s32.totalorder %s29, 1
      %p199 = por %p197, %p198
      %p201 = scmp.ne.s32.totalorder %s186, %s200
      %p202 = scmp.eq.s32.totalorder %s29, 0
      %p203 = por %p201, %p202
      %s205 = sadd.s32 %s204, 1
      %p208 = scmp.eq.s32.totalorder %s23, 1
      %p209 = scmp.ne.s32.totalorder %s204, %s206
      %p210 = scmp.eq.s32.totalorder %s23, 0
      %p211 = por %p209, %p210
      %p212 = scmp.ne.s32.totalorder %s204, %s206
      %p213 = scmp.eq.s32.totalorder %s28, 1
      %p214 = por %p212, %p213
      %p215 = scmp.ne.s32.totalorder %s206, %s207
      %p216 = scmp.eq.s32.totalorder %s28, 0
      %p217 = por %p215, %p216
      %p218 = scmp.ne.s32.totalorder %s206, %s207
      %p219 = scmp.eq.s32.totalorder %s29, 1
      %p220 = por %p218, %p219
      %p222 = scmp.ne.s32.totalorder %s207, %s221
      %p223 = scmp.eq.s32.totalorder %s29, 0
      %p224 = por %p222, %p223
      %s226 = sadd.s32 %s225, 1
      %p229 = scmp.eq.s32.totalorder %s23, 1
      %p230 = scmp.ne.s32.totalorder %s225, %s227
      %p231 = scmp.eq.s32.totalorder %s23, 0
      %p232 = por %p230, %p231
      %p233 = scmp.ne.s32.totalorder %s225, %s227
      %p234 = scmp.eq.s32.totalorder %s28, 1
      %p235 = por %p233, %p234
      %p236 = scmp.ne.s32.totalorder %s227, %s228
      %p237 = scmp.eq.s32.totalorder %s28, 0
      %p238 = por %p236, %p237
      %p239 = scmp.ne.s32.totalorder %s227, %s228
      %p240 = scmp.eq.s32.totalorder %s29, 1
      %p241 = por %p239, %p240
      %p243 = scmp.ne.s32.totalorder %s228, %s242
      %p244 = scmp.eq.s32.totalorder %s29, 0
      %p245 = por %p243, %p244
      %s247 = sadd.s32 %s246, 1
      %p250 = scmp.eq.s32.totalorder %s23, 1
      %p251 = scmp.ne.s32.totalorder %s246, %s248
      %p252 = scmp.eq.s32.totalorder %s23, 0
      %p253 = por %p251, %p252
      %p254 = scmp.ne.s32.totalorder %s246, %s248
      %p255 = scmp.eq.s32.totalorder %s28, 1
      %p256 = por %p254, %p255
      %p257 = scmp.ne.s32.totalorder %s248, %s249
      %p258 = scmp.eq.s32.totalorder %s28, 0
      %p259 = por %p257, %p258
      %p260 = scmp.ne.s32.totalorder %s248, %s249
      %p261 = scmp.eq.s32.totalorder %s29, 1
      %p262 = por %p260, %p261
      %p264 = scmp.ne.s32.totalorder %s249, %s263
      %p265 = scmp.eq.s32.totalorder %s29, 0
      %p266 = por %p264, %p265
      %s268 = sadd.s32 %s267, 1
      %p271 = scmp.eq.s32.totalorder %s23, 1
      %p272 = scmp.ne.s32.totalorder %s267, %s269
      %p273 = scmp.eq.s32.totalorder %s23, 0
      %p274 = por %p272, %p273
      %p275 = scmp.ne.s32.totalorder %s267, %s269
      %p276 = scmp.eq.s32.totalorder %s28, 1
      %p277 = por %p275, %p276
      %p278 = scmp.ne.s32.totalorder %s269, %s270
      %p279 = scmp.eq.s32.totalorder %s28, 0
      %p280 = por %p278, %p279
      %p281 = scmp.ne.s32.totalorder %s269, %s270
      %p282 = scmp.eq.s32.totalorder %s29, 1
      %p283 = por %p281, %p282
      %p285 = scmp.ne.s32.totalorder %s270, %s284
      %p286 = scmp.eq.s32.totalorder %s29, 0
      %p287 = por %p285, %p286
      %s289 = sadd.s32 %s288, 1
      %p292 = scmp.eq.s32.totalorder %s23, 1
      %p293 = scmp.ne.s32.totalorder %s288, %s290
      %p294 = scmp.eq.s32.totalorder %s23, 0
      %p295 = por %p293, %p294
      %p296 = scmp.ne.s32.totalorder %s288, %s290
      %p297 = scmp.eq.s32.totalorder %s28, 1
      %p298 = por %p296, %p297
      %p299 = scmp.ne.s32.totalorder %s290, %s291
      %p300 = scmp.eq.s32.totalorder %s28, 0
      %p301 = por %p299, %p300
      %p302 = scmp.ne.s32.totalorder %s290, %s291
      %p303 = scmp.eq.s32.totalorder %s29, 1
      %p304 = por %p302, %p303
      %p306 = scmp.ne.s32.totalorder %s291, %s305
      %p307 = scmp.eq.s32.totalorder %s29, 0
      %p308 = por %p306, %p307
      %s310 = sadd.s32 %s309, 1
      %p313 = scmp.eq.s32.totalorder %s23, 1
      %p314 = scmp.ne.s32.totalorder %s309, %s311
      %p315 = scmp.eq.s32.totalorder %s23, 0
      %p316 = por %p314, %p315
      %p317 = scmp.ne.s32.totalorder %s309, %s311
      %p318 = scmp.eq.s32.totalorder %s28, 1
      %p319 = por %p317, %p318
      %p320 = scmp.ne.s32.totalorder %s311, %s312
      %p321 = scmp.eq.s32.totalorder %s28, 0
      %p322 = por %p320, %p321
      %p323 = scmp.ne.s32.totalorder %s311, %s312
      %p324 = scmp.eq.s32.totalorder %s29, 1
      %p325 = por %p323, %p324
      %p327 = scmp.ne.s32.totalorder %s312, %s326
      %p328 = scmp.eq.s32.totalorder %s29, 0
      %p329 = por %p327, %p328
      %s330 = ssub.s32 %s23, %s30
      %p331 = scmp.eq.s32.totalorder %s330, 0
      %s333 = sadd.s32 %s332, 1
      %s334 = scalar_select %p331, %s332, %s333
      %p337 = pneg %p331
      %p338 = scmp.eq.s32.totalorder %s23, 1
      %p339 = por %p337, %p338
      %p340 = scmp.ne.s32.totalorder %s332, %s335
      %p341 = scmp.eq.s32.totalorder %s23, 0
      %p342 = por %p340, %p341
      %p343 = scmp.ne.s32.totalorder %s332, %s335
      %p344 = scmp.eq.s32.totalorder %s28, 1
      %p345 = por %p343, %p344
      %p346 = scmp.ne.s32.totalorder %s335, %s336
      %p347 = scmp.eq.s32.totalorder %s28, 0
      %p348 = por %p346, %p347
      %p349 = scmp.ne.s32.totalorder %s335, %s336
      %p350 = scmp.eq.s32.totalorder %s29, 1
      %p351 = por %p349, %p350
      %p353 = scmp.ne.s32.totalorder %s336, %s352
      %p354 = scmp.eq.s32.totalorder %s29, 0
      %p355 = por %p353, %p354
      %p356 = scmp.le.s32.totalorder 1, %s23
      %p357 = scmp.lt.s32.totalorder %s23, 3
      %p358 = pnand %p356, %p357
      %p359 = pneg %p358
      // Predicated region
      $region9: #{tpu_custom_call.1} parent=5 // pred_check
        _
      $region10: #{tpu_custom_call.1} parent=5 // pred_check_branch
        %361 = sbr.rel (%p358) target = $region12
      $region11: #{tpu_custom_call.1} parent=5 // pred_region
        %s362 = ssub.s32 %s23, 1
        // Predicated region
        $region13: #{tpu_custom_call.1} parent=11 // pred_check
          %p363 = pneg %p70
        $region14: #{tpu_custom_call.1} parent=11 // pred_check_branch
          %365 = sbr.rel (%p363) target = $region16
        $region15: #{tpu_custom_call.1} parent=11 // pred_region
          _
        $region16: #{tpu_custom_call.1} parent=11 // pred_fallthru
          _
        // Predicated region
        $region17: #{tpu_custom_call.1} parent=11 // pred_check
          %p366 = pneg %p91
        $region18: #{tpu_custom_call.1} parent=11 // pred_check_branch
          %368 = sbr.rel (%p366) target = $region20
        $region19: #{tpu_custom_call.1} parent=11 // pred_region
          _
        $region20: #{tpu_custom_call.1} parent=11 // pred_fallthru
          _
        // Predicated region
        $region21: #{tpu_custom_call.1} parent=11 // pred_check
          %p369 = pneg %p112
        $region22: #{tpu_custom_call.1} parent=11 // pred_check_branch
          %371 = sbr.rel (%p369) target = $region24
        $region23: #{tpu_custom_call.1} parent=11 // pred_region
          _
        $region24: #{tpu_custom_call.1} parent=11 // pred_fallthru
          _
        // Predicated region
        $region25: #{tpu_custom_call.1} parent=11 // pred_check
          %p372 = pneg %p133
        $region26: #{tpu_custom_call.1} parent=11 // pred_check_branch
          %374 = sbr.rel (%p372) target = $region28
        $region27: #{tpu_custom_call.1} parent=11 // pred_region
          _
        $region28: #{tpu_custom_call.1} parent=11 // pred_fallthru
          _
        // Predicated region
        $region29: #{tpu_custom_call.1} parent=11 // pred_check
          %p375 = pneg %p154
        $region30: #{tpu_custom_call.1} parent=11 // pred_check_branch
          %377 = sbr.rel (%p375) target = $region32
        $region31: #{tpu_custom_call.1} parent=11 // pred_region
          _
        $region32: #{tpu_custom_call.1} parent=11 // pred_fallthru
          _
        // Predicated region
        $region33: #{tpu_custom_call.1} parent=11 // pred_check
          %p378 = pneg %p175
        $region34: #{tpu_custom_call.1} parent=11 // pred_check_branch
          %380 = sbr.rel (%p378) target = $region36
        $region35: #{tpu_custom_call.1} parent=11 // pred_region
          _
        $region36: #{tpu_custom_call.1} parent=11 // pred_fallthru
          _
        // Predicated region
        $region37: #{tpu_custom_call.1} parent=11 // pred_check
          %p381 = pneg %p196
        $region38: #{tpu_custom_call.1} parent=11 // pred_check_branch
          %383 = sbr.rel (%p381) target = $region40
        $region39: #{tpu_custom_call.1} parent=11 // pred_region
          _
        $region40: #{tpu_custom_call.1} parent=11 // pred_fallthru
          _
        // Predicated region
        $region41: #{tpu_custom_call.1} parent=11 // pred_check
          %p384 = pneg %p217
        $region42: #{tpu_custom_call.1} parent=11 // pred_check_branch
          %386 = sbr.rel (%p384) target = $region44
        $region43: #{tpu_custom_call.1} parent=11 // pred_region
          _
        $region44: #{tpu_custom_call.1} parent=11 // pred_fallthru
          _
        // Predicated region
        $region45: #{tpu_custom_call.1} parent=11 // pred_check
          %p387 = pneg %p238
        $region46: #{tpu_custom_call.1} parent=11 // pred_check_branch
          %389 = sbr.rel (%p387) target = $region48
        $region47: #{tpu_custom_call.1} parent=11 // pred_region
          _
        $region48: #{tpu_custom_call.1} parent=11 // pred_fallthru
          _
        // Predicated region
        $region49: #{tpu_custom_call.1} parent=11 // pred_check
          %p390 = pneg %p259
        $region50: #{tpu_custom_call.1} parent=11 // pred_check_branch
          %392 = sbr.rel (%p390) target = $region52
        $region51: #{tpu_custom_call.1} parent=11 // pred_region
          _
        $region52: #{tpu_custom_call.1} parent=11 // pred_fallthru
          _
        // Predicated region
        $region53: #{tpu_custom_call.1} parent=11 // pred_check
          %p393 = pneg %p280
        $region54: #{tpu_custom_call.1} parent=11 // pred_check_branch
          %395 = sbr.rel (%p393) target = $region56
        $region55: #{tpu_custom_call.1} parent=11 // pred_region
          _
        $region56: #{tpu_custom_call.1} parent=11 // pred_fallthru
          _
        // Predicated region
        $region57: #{tpu_custom_call.1} parent=11 // pred_check
          %p396 = pneg %p301
        $region58: #{tpu_custom_call.1} parent=11 // pred_check_branch
          %398 = sbr.rel (%p396) target = $region60
        $region59: #{tpu_custom_call.1} parent=11 // pred_region
          _
        $region60: #{tpu_custom_call.1} parent=11 // pred_fallthru
          _
        // Predicated region
        $region61: #{tpu_custom_call.1} parent=11 // pred_check
          %p399 = pneg %p322
        $region62: #{tpu_custom_call.1} parent=11 // pred_check_branch
          %401 = sbr.rel (%p399) target = $region64
        $region63: #{tpu_custom_call.1} parent=11 // pred_region
          _
        $region64: #{tpu_custom_call.1} parent=11 // pred_fallthru
          _
      $region12: #{tpu_custom_call.1} parent=5 // pred_fallthru
        _
      %p402 = scmp.lt.s32.totalorder %s23, 2
      // Predicated region
      $region65: #{tpu_custom_call.1} parent=5 // pred_check
        %p403 = pneg %p402
      $region66: #{tpu_custom_call.1} parent=5 // pred_check_branch
        %405 = sbr.rel (%p403) target = $region68
      $region67: #{tpu_custom_call.1} parent=5 // pred_region
        // Predicated region
        $region69: #{tpu_custom_call.1} parent=67 // pred_check
          %p406 = pneg %p43
        $region70: #{tpu_custom_call.1} parent=67 // pred_check_branch
          %408 = sbr.rel (%p406) target = $region72
        $region71: #{tpu_custom_call.1} parent=67 // pred_region
          %p409 = scmp.lt.s32.totalorder %s23, 1
          %s410 = scalar_select %p409, %s23, 1
          %s411 = smul.addr %s410, 2
          %s412 = smul.addr %s411, 8
          %s413 = scalar_lea.vmem %s0, %s412
        $region72: #{tpu_custom_call.1} parent=67 // pred_fallthru
          _
      $region68: #{tpu_custom_call.1} parent=5 // pred_fallthru
        _
      %p414 = scmp.le.s32.totalorder 1, %s23
      %p415 = scmp.lt.s32.totalorder %s23, 3
      %p416 = pnand %p414, %p415
      %p417 = pneg %p416
      // Predicated region
      $region73: #{tpu_custom_call.1} parent=5 // pred_check
        _
      $region74: #{tpu_custom_call.1} parent=5 // pred_check_branch
        %419 = sbr.rel (%p416) target = $region76
      $region75: #{tpu_custom_call.1} parent=5 // pred_region
        %s420 = ssub.s32 %s23, 1
        %p421 = scmp.lt.s32.totalorder %s28, 1
        %s422 = scalar_select %p421, %s28, 1
        %s423 = smul.addr %s422, 2
        %s424 = smul.addr %s423, 8
        %s425 = scalar_lea.vmem %s0, %s424
        %p426 = pneg %p49
        %p427 = pneg %p46
        %p428 = pneg %p70
        %p429 = pneg %p67
        %p430 = pneg %p91
        %p431 = pneg %p88
        %p432 = pneg %p112
        %p433 = pneg %p109
        %p434 = pneg %p133
        %p435 = pneg %p130
        %p436 = pneg %p154
        %p437 = pneg %p151
        %p438 = pneg %p175
        %p439 = pneg %p172
        %p440 = pneg %p196
        %p441 = pneg %p193
        %p442 = pneg %p217
        %p443 = pneg %p214
        %p444 = pneg %p238
        %p445 = pneg %p235
        %p446 = pneg %p259
        %p447 = pneg %p256
        %p448 = pneg %p280
        %p449 = pneg %p277
        %p450 = pneg %p301
        %p451 = pneg %p298
        %p452 = pneg %p322
        %p453 = pneg %p319
        %p454 = pneg %p348
        %p455 = pneg %p345
        %s456 = sand.u32 %s335, 1
        %s457 = scalar_lea.sflag [#allocation3], %s456
        %s458 = sand.u32 %s335, 1
        %s459 = smul.addr %s458, 16
        %s460 = scalar_lea.vmem [#allocation2], %s459
        %p461 = scmp.lt.s32.totalorder %s28, 1
        %s462 = scalar_select %p461, %s28, 1
        %s463 = smul.addr %s462, 2
        %s464 = smul.addr %s463, 8
        %s465 = scalar_lea.vmem %s0, %s464
        %v466 = vld [vmem:[%s465] sm:$0xff]
        %v467 = vld [vmem:[%s465 + $0x8] sm:$0xff]
        %v468 = vld [vmem:[%s1] sm:$0x1]
        %v469 = vld [vmem:[%s2] sm:$0x1]
        %vm470 = vcmask 523264
        %v471 = vsel %vm470, %v466, 0.0
        %472 = vadd.xlane.f32.xlu0 %v471
        %v473 = vpop.xlane.xlu0 %472
        %v474 = vsel %vm470, %v467, 0.0
        %475 = vadd.xlane.f32.xlu0 %v474
        %v476 = vpop.xlane.xlu0 %475
        %v477 = vrcp.pop 64.0
        %v478 = vmul.f32 64.0, %v477
        %v479 = vsub.f32 1.0, %v478
        %v480 = vmul.f32 %v477, %v479
        %v481 = vadd.f32 %v477, %v480
        %vm482 = vweird.f32 %v477
        %v483 = vsel %vm482, %v477, %v481
        %v484 = vmul.f32 %v473, %v483
        %v485 = vmul.f32 %v476, %v483
        %v486 = vsub.f32 %v466, %v484
        %v487 = vsub.f32 %v467, %v485
        %v488 = vmul.f32 %v486, %v486
        %v489 = vmul.f32 %v487, %v487
        %v490 = vsel %vm470, %v488, 0.0
        %491 = vadd.xlane.f32.xlu0 %v490
        %v492 = vpop.xlane.xlu0 %491
        %v493 = vsel %vm470, %v489, 0.0
        %494 = vadd.xlane.f32.xlu0 %v493
        %v495 = vpop.xlane.xlu0 %494
        %v496 = vmul.f32 %v492, %v483
        %v497 = vmul.f32 %v495, %v483
        %v498 = vadd.f32 %v496, 1e-05
        %v499 = vadd.f32 %v497, 1e-05
        %v500 = vrsqrt.pop %v498
        %v501 = vmul.f32 %v500, %v498
        %v502 = vmul.f32 %v501, %v500
        %v503 = vmul.f32 0.5, %v502
        %v504 = vsub.f32 1.5, %v503
        %v505 = vmul.f32 %v500, %v504
        %v506 = vmul.f32 %v498, %v505
        %vm507 = vcmp.eq.f32.partialorder %v498, inf
        %v508 = vsel %vm507, %v498, %v506
        %vm509 = vcmp.eq.f32.partialorder %v498, 0.0
        %v510 = vand.u32 %v498, 2147483648
        %v511 = vsel %vm509, %v510, %v508
        %v512 = vrsqrt.pop %v499
        %v513 = vmul.f32 %v512, %v499
        %v514 = vmul.f32 %v513, %v512
        %v515 = vmul.f32 0.5, %v514
        %v516 = vsub.f32 1.5, %v515
        %v517 = vmul.f32 %v512, %v516
        %v518 = vmul.f32 %v499, %v517
        %vm519 = vcmp.eq.f32.partialorder %v499, inf
        %v520 = vsel %vm519, %v499, %v518
        %vm521 = vcmp.eq.f32.partialorder %v499, 0.0
        %v522 = vand.u32 %v499, 2147483648
        %v523 = vsel %vm521, %v522, %v520
        %v524 = vrcp.pop %v511
        %v525 = vmul.f32 %v511, %v524
        %v526 = vsub.f32 1.0, %v525
        %v527 = vmul.f32 %v524, %v526
        %v528 = vadd.f32 %v524, %v527
        %vm529 = vweird.f32 %v511
        %vm530 = vweird.f32 %v524
        %vm531 = vmor %vm529, %vm530
        %v532 = vsel %vm531, %v524, %v528
        %v533 = vand.u32 2147483647, %v511
        %vm534 = vcmp.eq.f32.partialorder %v533, 8.507059e+37
        %v535 = vand.u32 %v511, 2147483648
        %v536 = vor.u32 1.1754944e-38, %v535
        %v537 = vsel %vm534, %v536, %v532
        %v538 = vmul.f32 %v486, %v537
        %v539 = vrcp.pop %v523
        %v540 = vmul.f32 %v523, %v539
        %v541 = vsub.f32 1.0, %v540
        %v542 = vmul.f32 %v539, %v541
        %v543 = vadd.f32 %v539, %v542
        %vm544 = vweird.f32 %v523
        %vm545 = vweird.f32 %v539
        %vm546 = vmor %vm544, %vm545
        %v547 = vsel %vm546, %v539, %v543
        %v548 = vand.u32 2147483647, %v523
        %vm549 = vcmp.eq.f32.partialorder %v548, 8.507059e+37
        %v550 = vand.u32 %v523, 2147483648
        %v551 = vor.u32 1.1754944e-38, %v550
        %v552 = vsel %vm549, %v551, %v547
        %v553 = vmul.f32 %v487, %v552
        %v555 = vperm.slane %v468, 0
        %v557 = vmul.f32 %v538, %v555
        %v558 = vmul.f32 %v553, %v555
        %v560 = vperm.slane %v469, 0
        %v562 = vadd.f32 %v557, %v560
        %v563 = vadd.f32 %v558, %v560
        %v564 = vld [vmem:[%s3] sm:$0xff]
        %v565 = vld [vmem:[%s3 + $0x8] sm:$0xff]
        %v566 = vld [vmem:[%s3 + $0x10] sm:$0xff]
        %v567 = vld [vmem:[%s3 + $0x18] sm:$0xff]
        %v568 = vld [vmem:[%s3 + $0x20] sm:$0xff]
        %v569 = vld [vmem:[%s3 + $0x28] sm:$0xff]
        %v570 = vld [vmem:[%s3 + $0x30] sm:$0xff]
        %v571 = vld [vmem:[%s3 + $0x38] sm:$0xff]
        %v573 = vsel %vm470, %v562, 0
        %v576 = vsel %vm470, %v563, 0
        %578 = vmatpush.msra.mxu0 0.0
        %579 = vmatpush.msra.mxu0 0.0
        %580 = vmatpush.msra.mxu0 0.0
        %581 = vmatpush.msra.mxu0 0.0
        %582 = vmatpush.msra.mxu0 0.0
        %583 = vmatpush.msra.mxu0 0.0
        %584 = vmatpush.msra.mxu0 0.0
        %585 = vmatpush.msra.mxu0 0.0
        %v586 = vand.u32 %v571, 4294901760
        %587 = vmatpush.msra.mxu0 %v586
        %v588 = vand.u32 %v570, 4294901760
        %589 = vmatpush.msra.mxu0 %v588
        %v590 = vand.u32 %v569, 4294901760
        %591 = vmatpush.msra.mxu0 %v590
        %v592 = vand.u32 %v568, 4294901760
        %593 = vmatpush.msra.mxu0 %v592
        %v594 = vand.u32 %v567, 4294901760
        %595 = vmatpush.msra.mxu0 %v594
        %v596 = vand.u32 %v566, 4294901760
        %597 = vmatpush.msra.mxu0 %v596
        %v598 = vand.u32 %v565, 4294901760
        %599 = vmatpush.msra.mxu0 %v598
        %v600 = vand.u32 %v564, 4294901760
        %601 = vmatpush.msra.mxu0 %v600
        %v602 = vand.u32 %v573, 4294901760
        %v603 = vsub.f32 %v573, %v602
        %v604 = vand.u32 %v603, 4294901760
        %v605 = vsub.f32 %v603, %v604
        %v606 = vand.u32 %v605, 4294901760
        %607 = vmatmul.f32.gmra.mxu0 %v606
        %v608 = vpop.f32.mrf.mxu0
        %v609 = vadd.f32 0.0, %v608
        %v610 = vand.u32 %v576, 4294901760
        %v611 = vsub.f32 %v576, %v610
        %v612 = vand.u32 %v611, 4294901760
        %v613 = vsub.f32 %v611, %v612
        %v614 = vand.u32 %v613, 4294901760
        %615 = vmatmul.f32.gmra.mxu0 %v614
        %v616 = vpop.f32.mrf.mxu0
        %v617 = vadd.f32 0.0, %v616
        %618 = vdwg.mxu0
        %619 = vmatpush.msra.mxu0 0.0
        %620 = vmatpush.msra.mxu0 0.0
        %621 = vmatpush.msra.mxu0 0.0
        %622 = vmatpush.msra.mxu0 0.0
        %623 = vmatpush.msra.mxu0 0.0
        %624 = vmatpush.msra.mxu0 0.0
        %625 = vmatpush.msra.mxu0 0.0
        %626 = vmatpush.msra.mxu0 0.0
        %v627 = vand.u32 %v571, 4294901760
        %v628 = vsub.f32 %v571, %v627
        %v629 = vand.u32 %v628, 4294901760
        %v630 = vsub.f32 %v628, %v629
        %v631 = vand.u32 %v630, 4294901760
        %632 = vmatpush.msra.mxu0 %v631
        %v633 = vand.u32 %v570, 4294901760
        %v634 = vsub.f32 %v570, %v633
        %v635 = vand.u32 %v634, 4294901760
        %v636 = vsub.f32 %v634, %v635
        %v637 = vand.u32 %v636, 4294901760
        %638 = vmatpush.msra.mxu0 %v637
        %v639 = vand.u32 %v569, 4294901760
        %v640 = vsub.f32 %v569, %v639
        %v641 = vand.u32 %v640, 4294901760
        %v642 = vsub.f32 %v640, %v641
        %v643 = vand.u32 %v642, 4294901760
        %644 = vmatpush.msra.mxu0 %v643
        %v645 = vand.u32 %v568, 4294901760
        %v646 = vsub.f32 %v568, %v645
        %v647 = vand.u32 %v646, 4294901760
        %v648 = vsub.f32 %v646, %v647
        %v649 = vand.u32 %v648, 4294901760
        %650 = vmatpush.msra.mxu0 %v649
        %v651 = vand.u32 %v567, 4294901760
        %v652 = vsub.f32 %v567, %v651
        %v653 = vand.u32 %v652, 4294901760
        %v654 = vsub.f32 %v652, %v653
        %v655 = vand.u32 %v654, 4294901760
        %656 = vmatpush.msra.mxu0 %v655
        %v657 = vand.u32 %v566, 4294901760
        %v658 = vsub.f32 %v566, %v657
        %v659 = vand.u32 %v658, 4294901760
        %v660 = vsub.f32 %v658, %v659
        %v661 = vand.u32 %v660, 4294901760
        %662 = vmatpush.msra.mxu0 %v661
        %v663 = vand.u32 %v565, 4294901760
        %v664 = vsub.f32 %v565, %v663
        %v665 = vand.u32 %v664, 4294901760
        %v666 = vsub.f32 %v664, %v665
        %v667 = vand.u32 %v666, 4294901760
        %668 = vmatpush.msra.mxu0 %v667
        %v669 = vand.u32 %v564, 4294901760
        %v670 = vsub.f32 %v564, %v669
        %v671 = vand.u32 %v670, 4294901760
        %v672 = vsub.f32 %v670, %v671
        %v673 = vand.u32 %v672, 4294901760
        %674 = vmatpush.msra.mxu0 %v673
        %v675 = vand.u32 %v573, 4294901760
        %676 = vmatmul.f32.gmra.mxu0 %v675
        %v677 = vpop.f32.mrf.mxu0
        %v678 = vadd.f32 %v609, %v677
        %v679 = vand.u32 %v576, 4294901760
        %680 = vmatmul.f32.gmra.mxu0 %v679
        %v681 = vpop.f32.mrf.mxu0
        %v682 = vadd.f32 %v617, %v681
        %683 = vdwg.mxu0
        %684 = vmatpush.msra.mxu0 0.0
        %685 = vmatpush.msra.mxu0 0.0
        %686 = vmatpush.msra.mxu0 0.0
        %687 = vmatpush.msra.mxu0 0.0
        %688 = vmatpush.msra.mxu0 0.0
        %689 = vmatpush.msra.mxu0 0.0
        %690 = vmatpush.msra.mxu0 0.0
        %691 = vmatpush.msra.mxu0 0.0
        %v692 = vand.u32 %v571, 4294901760
        %v693 = vsub.f32 %v571, %v692
        %694 = vmatpush.msra.mxu0 %v693
        %v695 = vand.u32 %v570, 4294901760
        %v696 = vsub.f32 %v570, %v695
        %697 = vmatpush.msra.mxu0 %v696
        %v698 = vand.u32 %v569, 4294901760
        %v699 = vsub.f32 %v569, %v698
        %700 = vmatpush.msra.mxu0 %v699
        %v701 = vand.u32 %v568, 4294901760
        %v702 = vsub.f32 %v568, %v701
        %703 = vmatpush.msra.mxu0 %v702
        %v704 = vand.u32 %v567, 4294901760
        %v705 = vsub.f32 %v567, %v704
        %706 = vmatpush.msra.mxu0 %v705
        %v707 = vand.u32 %v566, 4294901760
        %v708 = vsub.f32 %v566, %v707
        %709 = vmatpush.msra.mxu0 %v708
        %v710 = vand.u32 %v565, 4294901760
        %v711 = vsub.f32 %v565, %v710
        %712 = vmatpush.msra.mxu0 %v711
        %v713 = vand.u32 %v564, 4294901760
        %v714 = vsub.f32 %v564, %v713
        %715 = vmatpush.msra.mxu0 %v714
        %v716 = vand.u32 %v573, 4294901760
        %v717 = vsub.f32 %v573, %v716
        %718 = vmatmul.f32.gmra.mxu0 %v717
        %v719 = vpop.f32.mrf.mxu0
        %v720 = vadd.f32 %v678, %v719
        %v721 = vand.u32 %v576, 4294901760
        %v722 = vsub.f32 %v576, %v721
        %723 = vmatmul.f32.gmra.mxu0 %v722
        %v724 = vpop.f32.mrf.mxu0
        %v725 = vadd.f32 %v682, %v724
        %726 = vdwg.mxu0
        %727 = vmatpush.msra.mxu0 0.0
        %728 = vmatpush.msra.mxu0 0.0
        %729 = vmatpush.msra.mxu0 0.0
        %730 = vmatpush.msra.mxu0 0.0
        %731 = vmatpush.msra.mxu0 0.0
        %732 = vmatpush.msra.mxu0 0.0
        %733 = vmatpush.msra.mxu0 0.0
        %734 = vmatpush.msra.mxu0 0.0
        %v735 = vand.u32 %v571, 4294901760
        %736 = vmatpush.msra.mxu0 %v735
        %v737 = vand.u32 %v570, 4294901760
        %738 = vmatpush.msra.mxu0 %v737
        %v739 = vand.u32 %v569, 4294901760
        %740 = vmatpush.msra.mxu0 %v739
        %v741 = vand.u32 %v568, 4294901760
        %742 = vmatpush.msra.mxu0 %v741
        %v743 = vand.u32 %v567, 4294901760
        %744 = vmatpush.msra.mxu0 %v743
        %v745 = vand.u32 %v566, 4294901760
        %746 = vmatpush.msra.mxu0 %v745
        %v747 = vand.u32 %v565, 4294901760
        %748 = vmatpush.msra.mxu0 %v747
        %v749 = vand.u32 %v564, 4294901760
        %750 = vmatpush.msra.mxu0 %v749
        %v751 = vand.u32 %v573, 4294901760
        %v752 = vsub.f32 %v573, %v751
        %v753 = vand.u32 %v752, 4294901760
        %754 = vmatmul.f32.gmra.mxu0 %v753
        %v755 = vpop.f32.mrf.mxu0
        %v756 = vadd.f32 %v720, %v755
        %v757 = vand.u32 %v576, 4294901760
        %v758 = vsub.f32 %v576, %v757
        %v759 = vand.u32 %v758, 4294901760
        %760 = vmatmul.f32.gmra.mxu0 %v759
        %v761 = vpop.f32.mrf.mxu0
        %v762 = vadd.f32 %v725, %v761
        %763 = vdwg.mxu0
        %764 = vmatpush.msra.mxu0 0.0
        %765 = vmatpush.msra.mxu0 0.0
        %766 = vmatpush.msra.mxu0 0.0
        %767 = vmatpush.msra.mxu0 0.0
        %768 = vmatpush.msra.mxu0 0.0
        %769 = vmatpush.msra.mxu0 0.0
        %770 = vmatpush.msra.mxu0 0.0
        %771 = vmatpush.msra.mxu0 0.0
        %v772 = vand.u32 %v571, 4294901760
        %v773 = vsub.f32 %v571, %v772
        %v774 = vand.u32 %v773, 4294901760
        %775 = vmatpush.msra.mxu0 %v774
        %v776 = vand.u32 %v570, 4294901760
        %v777 = vsub.f32 %v570, %v776
        %v778 = vand.u32 %v777, 4294901760
        %779 = vmatpush.msra.mxu0 %v778
        %v780 = vand.u32 %v569, 4294901760
        %v781 = vsub.f32 %v569, %v780
        %v782 = vand.u32 %v781, 4294901760
        %783 = vmatpush.msra.mxu0 %v782
        %v784 = vand.u32 %v568, 4294901760
        %v785 = vsub.f32 %v568, %v784
        %v786 = vand.u32 %v785, 4294901760
        %787 = vmatpush.msra.mxu0 %v786
        %v788 = vand.u32 %v567, 4294901760
        %v789 = vsub.f32 %v567, %v788
        %v790 = vand.u32 %v789, 4294901760
        %791 = vmatpush.msra.mxu0 %v790
        %v792 = vand.u32 %v566, 4294901760
        %v793 = vsub.f32 %v566, %v792
        %v794 = vand.u32 %v793, 4294901760
        %795 = vmatpush.msra.mxu0 %v794
        %v796 = vand.u32 %v565, 4294901760
        %v797 = vsub.f32 %v565, %v796
        %v798 = vand.u32 %v797, 4294901760
        %799 = vmatpush.msra.mxu0 %v798
        %v800 = vand.u32 %v564, 4294901760
        %v801 = vsub.f32 %v564, %v800
        %v802 = vand.u32 %v801, 4294901760
        %803 = vmatpush.msra.mxu0 %v802
        %v804 = vand.u32 %v573, 4294901760
        %805 = vmatmul.f32.gmra.mxu0 %v804
        %v806 = vpop.f32.mrf.mxu0
        %v807 = vadd.f32 %v756, %v806
        %v808 = vand.u32 %v576, 4294901760
        %809 = vmatmul.f32.gmra.mxu0 %v808
        %v810 = vpop.f32.mrf.mxu0
        %v811 = vadd.f32 %v762, %v810
        %812 = vdwg.mxu0
        %813 = vmatpush.msra.mxu0 0.0
        %814 = vmatpush.msra.mxu0 0.0
        %815 = vmatpush.msra.mxu0 0.0
        %816 = vmatpush.msra.mxu0 0.0
        %817 = vmatpush.msra.mxu0 0.0
        %818 = vmatpush.msra.mxu0 0.0
        %819 = vmatpush.msra.mxu0 0.0
        %820 = vmatpush.msra.mxu0 0.0
        %v821 = vand.u32 %v571, 4294901760
        %822 = vmatpush.msra.mxu0 %v821
        %v823 = vand.u32 %v570, 4294901760
        %824 = vmatpush.msra.mxu0 %v823
        %v825 = vand.u32 %v569, 4294901760
        %826 = vmatpush.msra.mxu0 %v825
        %v827 = vand.u32 %v568, 4294901760
        %828 = vmatpush.msra.mxu0 %v827
        %v829 = vand.u32 %v567, 4294901760
        %830 = vmatpush.msra.mxu0 %v829
        %v831 = vand.u32 %v566, 4294901760
        %832 = vmatpush.msra.mxu0 %v831
        %v833 = vand.u32 %v565, 4294901760
        %834 = vmatpush.msra.mxu0 %v833
        %v835 = vand.u32 %v564, 4294901760
        %836 = vmatpush.msra.mxu0 %v835
        %v837 = vand.u32 %v573, 4294901760
        %838 = vmatmul.f32.gmra.mxu0 %v837
        %v839 = vpop.f32.mrf.mxu0
        %v840 = vadd.f32 %v807, %v839
        %v841 = vand.u32 %v576, 4294901760
        %842 = vmatmul.f32.gmra.mxu0 %v841
        %v843 = vpop.f32.mrf.mxu0
        %v844 = vadd.f32 %v811, %v843
        %845 = vdwg.mxu0
        %v846 = vld [vmem:[%s4] sm:$0xff]
        %v847 = vld [vmem:[%s4 + $0x8] sm:$0xff]
        %v848 = vld [vmem:[%s4 + $0x10] sm:$0xff]
        %v849 = vld [vmem:[%s4 + $0x18] sm:$0xff]
        %v850 = vld [vmem:[%s4 + $0x20] sm:$0xff]
        %v851 = vld [vmem:[%s4 + $0x28] sm:$0xff]
        %v852 = vld [vmem:[%s4 + $0x30] sm:$0xff]
        %v853 = vld [vmem:[%s4 + $0x38] sm:$0xff]
        %854 = vmatpush.msra.mxu0 0.0
        %855 = vmatpush.msra.mxu0 0.0
        %856 = vmatpush.msra.mxu0 0.0
        %857 = vmatpush.msra.mxu0 0.0
        %858 = vmatpush.msra.mxu0 0.0
        %859 = vmatpush.msra.mxu0 0.0
        %860 = vmatpush.msra.mxu0 0.0
        %861 = vmatpush.msra.mxu0 0.0
        %v862 = vand.u32 %v853, 4294901760
        %863 = vmatpush.msra.mxu0 %v862
        %v864 = vand.u32 %v852, 4294901760
        %865 = vmatpush.msra.mxu0 %v864
        %v866 = vand.u32 %v851, 4294901760
        %867 = vmatpush.msra.mxu0 %v866
        %v868 = vand.u32 %v850, 4294901760
        %869 = vmatpush.msra.mxu0 %v868
        %v870 = vand.u32 %v849, 4294901760
        %871 = vmatpush.msra.mxu0 %v870
        %v872 = vand.u32 %v848, 4294901760
        %873 = vmatpush.msra.mxu0 %v872
        %v874 = vand.u32 %v847, 4294901760
        %875 = vmatpush.msra.mxu0 %v874
        %v876 = vand.u32 %v846, 4294901760
        %877 = vmatpush.msra.mxu0 %v876
        %v878 = vand.u32 %v573, 4294901760
        %v879 = vsub.f32 %v573, %v878
        %v880 = vand.u32 %v879, 4294901760
        %v881 = vsub.f32 %v879, %v880
        %v882 = vand.u32 %v881, 4294901760
        %883 = vmatmul.f32.gmra.mxu0 %v882
        %v884 = vpop.f32.mrf.mxu0
        %v885 = vadd.f32 0.0, %v884
        %v886 = vand.u32 %v576, 4294901760
        %v887 = vsub.f32 %v576, %v886
        %v888 = vand.u32 %v887, 4294901760
        %v889 = vsub.f32 %v887, %v888
        %v890 = vand.u32 %v889, 4294901760
        %891 = vmatmul.f32.gmra.mxu0 %v890
        %v892 = vpop.f32.mrf.mxu0
        %v893 = vadd.f32 0.0, %v892
        %894 = vdwg.mxu0
        %895 = vmatpush.msra.mxu0 0.0
        %896 = vmatpush.msra.mxu0 0.0
        %897 = vmatpush.msra.mxu0 0.0
        %898 = vmatpush.msra.mxu0 0.0
        %899 = vmatpush.msra.mxu0 0.0
        %900 = vmatpush.msra.mxu0 0.0
        %901 = vmatpush.msra.mxu0 0.0
        %902 = vmatpush.msra.mxu0 0.0
        %v903 = vand.u32 %v853, 4294901760
        %v904 = vsub.f32 %v853, %v903
        %v905 = vand.u32 %v904, 4294901760
        %v906 = vsub.f32 %v904, %v905
        %v907 = vand.u32 %v906, 4294901760
        %908 = vmatpush.msra.mxu0 %v907
        %v909 = vand.u32 %v852, 4294901760
        %v910 = vsub.f32 %v852, %v909
        %v911 = vand.u32 %v910, 4294901760
        %v912 = vsub.f32 %v910, %v911
        %v913 = vand.u32 %v912, 4294901760
        %914 = vmatpush.msra.mxu0 %v913
        %v915 = vand.u32 %v851, 4294901760
        %v916 = vsub.f32 %v851, %v915
        %v917 = vand.u32 %v916, 4294901760
        %v918 = vsub.f32 %v916, %v917
        %v919 = vand.u32 %v918, 4294901760
        %920 = vmatpush.msra.mxu0 %v919
        %v921 = vand.u32 %v850, 4294901760
        %v922 = vsub.f32 %v850, %v921
        %v923 = vand.u32 %v922, 4294901760
        %v924 = vsub.f32 %v922, %v923
        %v925 = vand.u32 %v924, 4294901760
        %926 = vmatpush.msra.mxu0 %v925
        %v927 = vand.u32 %v849, 4294901760
        %v928 = vsub.f32 %v849, %v927
        %v929 = vand.u32 %v928, 4294901760
        %v930 = vsub.f32 %v928, %v929
        %v931 = vand.u32 %v930, 4294901760
        %932 = vmatpush.msra.mxu0 %v931
        %v933 = vand.u32 %v848, 4294901760
        %v934 = vsub.f32 %v848, %v933
        %v935 = vand.u32 %v934, 4294901760
        %v936 = vsub.f32 %v934, %v935
        %v937 = vand.u32 %v936, 4294901760
        %938 = vmatpush.msra.mxu0 %v937
        %v939 = vand.u32 %v847, 4294901760
        %v940 = vsub.f32 %v847, %v939
        %v941 = vand.u32 %v940, 4294901760
        %v942 = vsub.f32 %v940, %v941
        %v943 = vand.u32 %v942, 4294901760
        %944 = vmatpush.msra.mxu0 %v943
        %v945 = vand.u32 %v846, 4294901760
        %v946 = vsub.f32 %v846, %v945
        %v947 = vand.u32 %v946, 4294901760
        %v948 = vsub.f32 %v946, %v947
        %v949 = vand.u32 %v948, 4294901760
        %950 = vmatpush.msra.mxu0 %v949
        %v951 = vand.u32 %v573, 4294901760
        %952 = vmatmul.f32.gmra.mxu0 %v951
        %v953 = vpop.f32.mrf.mxu0
        %v954 = vadd.f32 %v885, %v953
        %v955 = vand.u32 %v576, 4294901760
        %956 = vmatmul.f32.gmra.mxu0 %v955
        %v957 = vpop.f32.mrf.mxu0
        %v958 = vadd.f32 %v893, %v957
        %959 = vdwg.mxu0
        %960 = vmatpush.msra.mxu0 0.0
        %961 = vmatpush.msra.mxu0 0.0
        %962 = vmatpush.msra.mxu0 0.0
        %963 = vmatpush.msra.mxu0 0.0
        %964 = vmatpush.msra.mxu0 0.0
        %965 = vmatpush.msra.mxu0 0.0
        %966 = vmatpush.msra.mxu0 0.0
        %967 = vmatpush.msra.mxu0 0.0
        %v968 = vand.u32 %v853, 4294901760
        %v969 = vsub.f32 %v853, %v968
        %970 = vmatpush.msra.mxu0 %v969
        %v971 = vand.u32 %v852, 4294901760
        %v972 = vsub.f32 %v852, %v971
        %973 = vmatpush.msra.mxu0 %v972
        %v974 = vand.u32 %v851, 4294901760
        %v975 = vsub.f32 %v851, %v974
        %976 = vmatpush.msra.mxu0 %v975
        %v977 = vand.u32 %v850, 4294901760
        %v978 = vsub.f32 %v850, %v977
        %979 = vmatpush.msra.mxu0 %v978
        %v980 = vand.u32 %v849, 4294901760
        %v981 = vsub.f32 %v849, %v980
        %982 = vmatpush.msra.mxu0 %v981
        %v983 = vand.u32 %v848, 4294901760
        %v984 = vsub.f32 %v848, %v983
        %985 = vmatpush.msra.mxu0 %v984
        %v986 = vand.u32 %v847, 4294901760
        %v987 = vsub.f32 %v847, %v986
        %988 = vmatpush.msra.mxu0 %v987
        %v989 = vand.u32 %v846, 4294901760
        %v990 = vsub.f32 %v846, %v989
        %991 = vmatpush.msra.mxu0 %v990
        %v992 = vand.u32 %v573, 4294901760
        %v993 = vsub.f32 %v573, %v992
        %994 = vmatmul.f32.gmra.mxu0 %v993
        %v995 = vpop.f32.mrf.mxu0
        %v996 = vadd.f32 %v954, %v995
        %v997 = vand.u32 %v576, 4294901760
        %v998 = vsub.f32 %v576, %v997
        %999 = vmatmul.f32.gmra.mxu0 %v998
        %v1000 = vpop.f32.mrf.mxu0
        %v1001 = vadd.f32 %v958, %v1000
        %1002 = vdwg.mxu0
        %1003 = vmatpush.msra.mxu0 0.0
        %1004 = vmatpush.msra.mxu0 0.0
        %1005 = vmatpush.msra.mxu0 0.0
        %1006 = vmatpush.msra.mxu0 0.0
        %1007 = vmatpush.msra.mxu0 0.0
        %1008 = vmatpush.msra.mxu0 0.0
        %1009 = vmatpush.msra.mxu0 0.0
        %1010 = vmatpush.msra.mxu0 0.0
        %v1011 = vand.u32 %v853, 4294901760
        %1012 = vmatpush.msra.mxu0 %v1011
        %v1013 = vand.u32 %v852, 4294901760
        %1014 = vmatpush.msra.mxu0 %v1013
        %v1015 = vand.u32 %v851, 4294901760
        %1016 = vmatpush.msra.mxu0 %v1015
        %v1017 = vand.u32 %v850, 4294901760
        %1018 = vmatpush.msra.mxu0 %v1017
        %v1019 = vand.u32 %v849, 4294901760
        %1020 = vmatpush.msra.mxu0 %v1019
        %v1021 = vand.u32 %v848, 4294901760
        %1022 = vmatpush.msra.mxu0 %v1021
        %v1023 = vand.u32 %v847, 4294901760
        %1024 = vmatpush.msra.mxu0 %v1023
        %v1025 = vand.u32 %v846, 4294901760
        %1026 = vmatpush.msra.mxu0 %v1025
        %v1027 = vand.u32 %v573, 4294901760
        %v1028 = vsub.f32 %v573, %v1027
        %v1029 = vand.u32 %v1028, 4294901760
        %1030 = vmatmul.f32.gmra.mxu0 %v1029
        %v1031 = vpop.f32.mrf.mxu0
        %v1032 = vadd.f32 %v996, %v1031
        %v1033 = vand.u32 %v576, 4294901760
        %v1034 = vsub.f32 %v576, %v1033
        %v1035 = vand.u32 %v1034, 4294901760
        %1036 = vmatmul.f32.gmra.mxu0 %v1035
        %v1037 = vpop.f32.mrf.mxu0
        %v1038 = vadd.f32 %v1001, %v1037
        %1039 = vdwg.mxu0
        %1040 = vmatpush.msra.mxu0 0.0
        %1041 = vmatpush.msra.mxu0 0.0
        %1042 = vmatpush.msra.mxu0 0.0
        %1043 = vmatpush.msra.mxu0 0.0
        %1044 = vmatpush.msra.mxu0 0.0
        %1045 = vmatpush.msra.mxu0 0.0
        %1046 = vmatpush.msra.mxu0 0.0
        %1047 = vmatpush.msra.mxu0 0.0
        %v1048 = vand.u32 %v853, 4294901760
        %v1049 = vsub.f32 %v853, %v1048
        %v1050 = vand.u32 %v1049, 4294901760
        %1051 = vmatpush.msra.mxu0 %v1050
        %v1052 = vand.u32 %v852, 4294901760
        %v1053 = vsub.f32 %v852, %v1052
        %v1054 = vand.u32 %v1053, 4294901760
        %1055 = vmatpush.msra.mxu0 %v1054
        %v1056 = vand.u32 %v851, 4294901760
        %v1057 = vsub.f32 %v851, %v1056
        %v1058 = vand.u32 %v1057, 4294901760
        %1059 = vmatpush.msra.mxu0 %v1058
        %v1060 = vand.u32 %v850, 4294901760
        %v1061 = vsub.f32 %v850, %v1060
        %v1062 = vand.u32 %v1061, 4294901760
        %1063 = vmatpush.msra.mxu0 %v1062
        %v1064 = vand.u32 %v849, 4294901760
        %v1065 = vsub.f32 %v849, %v1064
        %v1066 = vand.u32 %v1065, 4294901760
        %1067 = vmatpush.msra.mxu0 %v1066
        %v1068 = vand.u32 %v848, 4294901760
        %v1069 = vsub.f32 %v848, %v1068
        %v1070 = vand.u32 %v1069, 4294901760
        %1071 = vmatpush.msra.mxu0 %v1070
        %v1072 = vand.u32 %v847, 4294901760
        %v1073 = vsub.f32 %v847, %v1072
        %v1074 = vand.u32 %v1073, 4294901760
        %1075 = vmatpush.msra.mxu0 %v1074
        %v1076 = vand.u32 %v846, 4294901760
        %v1077 = vsub.f32 %v846, %v1076
        %v1078 = vand.u32 %v1077, 4294901760
        %1079 = vmatpush.msra.mxu0 %v1078
        %v1080 = vand.u32 %v573, 4294901760
        %1081 = vmatmul.f32.gmra.mxu0 %v1080
        %v1082 = vpop.f32.mrf.mxu0
        %v1083 = vadd.f32 %v1032, %v1082
        %v1084 = vand.u32 %v576, 4294901760
        %1085 = vmatmul.f32.gmra.mxu0 %v1084
        %v1086 = vpop.f32.mrf.mxu0
        %v1087 = vadd.f32 %v1038, %v1086
        %1088 = vdwg.mxu0
        %1089 = vmatpush.msra.mxu0 0.0
        %1090 = vmatpush.msra.mxu0 0.0
        %1091 = vmatpush.msra.mxu0 0.0
        %1092 = vmatpush.msra.mxu0 0.0
        %1093 = vmatpush.msra.mxu0 0.0
        %1094 = vmatpush.msra.mxu0 0.0
        %1095 = vmatpush.msra.mxu0 0.0
        %1096 = vmatpush.msra.mxu0 0.0
        %v1097 = vand.u32 %v853, 4294901760
        %1098 = vmatpush.msra.mxu0 %v1097
        %v1099 = vand.u32 %v852, 4294901760
        %1100 = vmatpush.msra.mxu0 %v1099
        %v1101 = vand.u32 %v851, 4294901760
        %1102 = vmatpush.msra.mxu0 %v1101
        %v1103 = vand.u32 %v850, 4294901760
        %1104 = vmatpush.msra.mxu0 %v1103
        %v1105 = vand.u32 %v849, 4294901760
        %1106 = vmatpush.msra.mxu0 %v1105
        %v1107 = vand.u32 %v848, 4294901760
        %1108 = vmatpush.msra.mxu0 %v1107
        %v1109 = vand.u32 %v847, 4294901760
        %1110 = vmatpush.msra.mxu0 %v1109
        %v1111 = vand.u32 %v846, 4294901760
        %1112 = vmatpush.msra.mxu0 %v1111
        %v1113 = vand.u32 %v573, 4294901760
        %1114 = vmatmul.f32.gmra.mxu0 %v1113
        %v1115 = vpop.f32.mrf.mxu0
        %v1116 = vadd.f32 %v1083, %v1115
        %v1117 = vand.u32 %v576, 4294901760
        %1118 = vmatmul.f32.gmra.mxu0 %v1117
        %v1119 = vpop.f32.mrf.mxu0
        %v1120 = vadd.f32 %v1087, %v1119
        %1121 = vdwg.mxu0
        %v1122 = vld [vmem:[%s5] sm:$0xff]
        %v1123 = vld [vmem:[%s5 + $0x8] sm:$0xff]
        %v1124 = vld [vmem:[%s5 + $0x10] sm:$0xff]
        %v1125 = vld [vmem:[%s5 + $0x18] sm:$0xff]
        %v1126 = vld [vmem:[%s5 + $0x20] sm:$0xff]
        %v1127 = vld [vmem:[%s5 + $0x28] sm:$0xff]
        %v1128 = vld [vmem:[%s5 + $0x30] sm:$0xff]
        %v1129 = vld [vmem:[%s5 + $0x38] sm:$0xff]
        %1130 = vmatpush.msra.mxu0 0.0
        %1131 = vmatpush.msra.mxu0 0.0
        %1132 = vmatpush.msra.mxu0 0.0
        %1133 = vmatpush.msra.mxu0 0.0
        %1134 = vmatpush.msra.mxu0 0.0
        %1135 = vmatpush.msra.mxu0 0.0
        %1136 = vmatpush.msra.mxu0 0.0
        %1137 = vmatpush.msra.mxu0 0.0
        %v1138 = vand.u32 %v1129, 4294901760
        %1139 = vmatpush.msra.mxu0 %v1138
        %v1140 = vand.u32 %v1128, 4294901760
        %1141 = vmatpush.msra.mxu0 %v1140
        %v1142 = vand.u32 %v1127, 4294901760
        %1143 = vmatpush.msra.mxu0 %v1142
        %v1144 = vand.u32 %v1126, 4294901760
        %1145 = vmatpush.msra.mxu0 %v1144
        %v1146 = vand.u32 %v1125, 4294901760
        %1147 = vmatpush.msra.mxu0 %v1146
        %v1148 = vand.u32 %v1124, 4294901760
        %1149 = vmatpush.msra.mxu0 %v1148
        %v1150 = vand.u32 %v1123, 4294901760
        %1151 = vmatpush.msra.mxu0 %v1150
        %v1152 = vand.u32 %v1122, 4294901760
        %1153 = vmatpush.msra.mxu0 %v1152
        %v1154 = vand.u32 %v573, 4294901760
        %v1155 = vsub.f32 %v573, %v1154
        %v1156 = vand.u32 %v1155, 4294901760
        %v1157 = vsub.f32 %v1155, %v1156
        %v1158 = vand.u32 %v1157, 4294901760
        %1159 = vmatmul.f32.gmra.mxu0 %v1158
        %v1160 = vpop.f32.mrf.mxu0
        %v1161 = vadd.f32 0.0, %v1160
        %v1162 = vand.u32 %v576, 4294901760
        %v1163 = vsub.f32 %v576, %v1162
        %v1164 = vand.u32 %v1163, 4294901760
        %v1165 = vsub.f32 %v1163, %v1164
        %v1166 = vand.u32 %v1165, 4294901760
        %1167 = vmatmul.f32.gmra.mxu0 %v1166
        %v1168 = vpop.f32.mrf.mxu0
        %v1169 = vadd.f32 0.0, %v1168
        %1170 = vdwg.mxu0
        %1171 = vmatpush.msra.mxu0 0.0
        %1172 = vmatpush.msra.mxu0 0.0
        %1173 = vmatpush.msra.mxu0 0.0
        %1174 = vmatpush.msra.mxu0 0.0
        %1175 = vmatpush.msra.mxu0 0.0
        %1176 = vmatpush.msra.mxu0 0.0
        %1177 = vmatpush.msra.mxu0 0.0
        %1178 = vmatpush.msra.mxu0 0.0
        %v1179 = vand.u32 %v1129, 4294901760
        %v1180 = vsub.f32 %v1129, %v1179
        %v1181 = vand.u32 %v1180, 4294901760
        %v1182 = vsub.f32 %v1180, %v1181
        %v1183 = vand.u32 %v1182, 4294901760
        %1184 = vmatpush.msra.mxu0 %v1183
        %v1185 = vand.u32 %v1128, 4294901760
        %v1186 = vsub.f32 %v1128, %v1185
        %v1187 = vand.u32 %v1186, 4294901760
        %v1188 = vsub.f32 %v1186, %v1187
        %v1189 = vand.u32 %v1188, 4294901760
        %1190 = vmatpush.msra.mxu0 %v1189
        %v1191 = vand.u32 %v1127, 4294901760
        %v1192 = vsub.f32 %v1127, %v1191
        %v1193 = vand.u32 %v1192, 4294901760
        %v1194 = vsub.f32 %v1192, %v1193
        %v1195 = vand.u32 %v1194, 4294901760
        %1196 = vmatpush.msra.mxu0 %v1195
        %v1197 = vand.u32 %v1126, 4294901760
        %v1198 = vsub.f32 %v1126, %v1197
        %v1199 = vand.u32 %v1198, 4294901760
        %v1200 = vsub.f32 %v1198, %v1199
        %v1201 = vand.u32 %v1200, 4294901760
        %1202 = vmatpush.msra.mxu0 %v1201
        %v1203 = vand.u32 %v1125, 4294901760
        %v1204 = vsub.f32 %v1125, %v1203
        %v1205 = vand.u32 %v1204, 4294901760
        %v1206 = vsub.f32 %v1204, %v1205
        %v1207 = vand.u32 %v1206, 4294901760
        %1208 = vmatpush.msra.mxu0 %v1207
        %v1209 = vand.u32 %v1124, 4294901760
        %v1210 = vsub.f32 %v1124, %v1209
        %v1211 = vand.u32 %v1210, 4294901760
        %v1212 = vsub.f32 %v1210, %v1211
        %v1213 = vand.u32 %v1212, 4294901760
        %1214 = vmatpush.msra.mxu0 %v1213
        %v1215 = vand.u32 %v1123, 4294901760
        %v1216 = vsub.f32 %v1123, %v1215
        %v1217 = vand.u32 %v1216, 4294901760
        %v1218 = vsub.f32 %v1216, %v1217
        %v1219 = vand.u32 %v1218, 4294901760
        %1220 = vmatpush.msra.mxu0 %v1219
        %v1221 = vand.u32 %v1122, 4294901760
        %v1222 = vsub.f32 %v1122, %v1221
        %v1223 = vand.u32 %v1222, 4294901760
        %v1224 = vsub.f32 %v1222, %v1223
        %v1225 = vand.u32 %v1224, 4294901760
        %1226 = vmatpush.msra.mxu0 %v1225
        %v1227 = vand.u32 %v573, 4294901760
        %1228 = vmatmul.f32.gmra.mxu0 %v1227
        %v1229 = vpop.f32.mrf.mxu0
        %v1230 = vadd.f32 %v1161, %v1229
        %v1231 = vand.u32 %v576, 4294901760
        %1232 = vmatmul.f32.gmra.mxu0 %v1231
        %v1233 = vpop.f32.mrf.mxu0
        %v1234 = vadd.f32 %v1169, %v1233
        %1235 = vdwg.mxu0
        %1236 = vmatpush.msra.mxu0 0.0
        %1237 = vmatpush.msra.mxu0 0.0
        %1238 = vmatpush.msra.mxu0 0.0
        %1239 = vmatpush.msra.mxu0 0.0
        %1240 = vmatpush.msra.mxu0 0.0
        %1241 = vmatpush.msra.mxu0 0.0
        %1242 = vmatpush.msra.mxu0 0.0
        %1243 = vmatpush.msra.mxu0 0.0
        %v1244 = vand.u32 %v1129, 4294901760
        %v1245 = vsub.f32 %v1129, %v1244
        %1246 = vmatpush.msra.mxu0 %v1245
        %v1247 = vand.u32 %v1128, 4294901760
        %v1248 = vsub.f32 %v1128, %v1247
        %1249 = vmatpush.msra.mxu0 %v1248
        %v1250 = vand.u32 %v1127, 4294901760
        %v1251 = vsub.f32 %v1127, %v1250
        %1252 = vmatpush.msra.mxu0 %v1251
        %v1253 = vand.u32 %v1126, 4294901760
        %v1254 = vsub.f32 %v1126, %v1253
        %1255 = vmatpush.msra.mxu0 %v1254
        %v1256 = vand.u32 %v1125, 4294901760
        %v1257 = vsub.f32 %v1125, %v1256
        %1258 = vmatpush.msra.mxu0 %v1257
        %v1259 = vand.u32 %v1124, 4294901760
        %v1260 = vsub.f32 %v1124, %v1259
        %1261 = vmatpush.msra.mxu0 %v1260
        %v1262 = vand.u32 %v1123, 4294901760
        %v1263 = vsub.f32 %v1123, %v1262
        %1264 = vmatpush.msra.mxu0 %v1263
        %v1265 = vand.u32 %v1122, 4294901760
        %v1266 = vsub.f32 %v1122, %v1265
        %1267 = vmatpush.msra.mxu0 %v1266
        %v1268 = vand.u32 %v573, 4294901760
        %v1269 = vsub.f32 %v573, %v1268
        %1270 = vmatmul.f32.gmra.mxu0 %v1269
        %v1271 = vpop.f32.mrf.mxu0
        %v1272 = vadd.f32 %v1230, %v1271
        %v1273 = vand.u32 %v576, 4294901760
        %v1274 = vsub.f32 %v576, %v1273
        %1275 = vmatmul.f32.gmra.mxu0 %v1274
        %v1276 = vpop.f32.mrf.mxu0
        %v1277 = vadd.f32 %v1234, %v1276
        %1278 = vdwg.mxu0
        %1279 = vmatpush.msra.mxu0 0.0
        %1280 = vmatpush.msra.mxu0 0.0
        %1281 = vmatpush.msra.mxu0 0.0
        %1282 = vmatpush.msra.mxu0 0.0
        %1283 = vmatpush.msra.mxu0 0.0
        %1284 = vmatpush.msra.mxu0 0.0
        %1285 = vmatpush.msra.mxu0 0.0
        %1286 = vmatpush.msra.mxu0 0.0
        %v1287 = vand.u32 %v1129, 4294901760
        %1288 = vmatpush.msra.mxu0 %v1287
        %v1289 = vand.u32 %v1128, 4294901760
        %1290 = vmatpush.msra.mxu0 %v1289
        %v1291 = vand.u32 %v1127, 4294901760
        %1292 = vmatpush.msra.mxu0 %v1291
        %v1293 = vand.u32 %v1126, 4294901760
        %1294 = vmatpush.msra.mxu0 %v1293
        %v1295 = vand.u32 %v1125, 4294901760
        %1296 = vmatpush.msra.mxu0 %v1295
        %v1297 = vand.u32 %v1124, 4294901760
        %1298 = vmatpush.msra.mxu0 %v1297
        %v1299 = vand.u32 %v1123, 4294901760
        %1300 = vmatpush.msra.mxu0 %v1299
        %v1301 = vand.u32 %v1122, 4294901760
        %1302 = vmatpush.msra.mxu0 %v1301
        %v1303 = vand.u32 %v573, 4294901760
        %v1304 = vsub.f32 %v573, %v1303
        %v1305 = vand.u32 %v1304, 4294901760
        %1306 = vmatmul.f32.gmra.mxu0 %v1305
        %v1307 = vpop.f32.mrf.mxu0
        %v1308 = vadd.f32 %v1272, %v1307
        %v1309 = vand.u32 %v576, 4294901760
        %v1310 = vsub.f32 %v576, %v1309
        %v1311 = vand.u32 %v1310, 4294901760
        %1312 = vmatmul.f32.gmra.mxu0 %v1311
        %v1313 = vpop.f32.mrf.mxu0
        %v1314 = vadd.f32 %v1277, %v1313
        %1315 = vdwg.mxu0
        %1316 = vmatpush.msra.mxu0 0.0
        %1317 = vmatpush.msra.mxu0 0.0
        %1318 = vmatpush.msra.mxu0 0.0
        %1319 = vmatpush.msra.mxu0 0.0
        %1320 = vmatpush.msra.mxu0 0.0
        %1321 = vmatpush.msra.mxu0 0.0
        %1322 = vmatpush.msra.mxu0 0.0
        %1323 = vmatpush.msra.mxu0 0.0
        %v1324 = vand.u32 %v1129, 4294901760
        %v1325 = vsub.f32 %v1129, %v1324
        %v1326 = vand.u32 %v1325, 4294901760
        %1327 = vmatpush.msra.mxu0 %v1326
        %v1328 = vand.u32 %v1128, 4294901760
        %v1329 = vsub.f32 %v1128, %v1328
        %v1330 = vand.u32 %v1329, 4294901760
        %1331 = vmatpush.msra.mxu0 %v1330
        %v1332 = vand.u32 %v1127, 4294901760
        %v1333 = vsub.f32 %v1127, %v1332
        %v1334 = vand.u32 %v1333, 4294901760
        %1335 = vmatpush.msra.mxu0 %v1334
        %v1336 = vand.u32 %v1126, 4294901760
        %v1337 = vsub.f32 %v1126, %v1336
        %v1338 = vand.u32 %v1337, 4294901760
        %1339 = vmatpush.msra.mxu0 %v1338
        %v1340 = vand.u32 %v1125, 4294901760
        %v1341 = vsub.f32 %v1125, %v1340
        %v1342 = vand.u32 %v1341, 4294901760
        %1343 = vmatpush.msra.mxu0 %v1342
        %v1344 = vand.u32 %v1124, 4294901760
        %v1345 = vsub.f32 %v1124, %v1344
        %v1346 = vand.u32 %v1345, 4294901760
        %1347 = vmatpush.msra.mxu0 %v1346
        %v1348 = vand.u32 %v1123, 4294901760
        %v1349 = vsub.f32 %v1123, %v1348
        %v1350 = vand.u32 %v1349, 4294901760
        %1351 = vmatpush.msra.mxu0 %v1350
        %v1352 = vand.u32 %v1122, 4294901760
        %v1353 = vsub.f32 %v1122, %v1352
        %v1354 = vand.u32 %v1353, 4294901760
        %1355 = vmatpush.msra.mxu0 %v1354
        %v1356 = vand.u32 %v573, 4294901760
        %1357 = vmatmul.f32.gmra.mxu0 %v1356
        %v1358 = vpop.f32.mrf.mxu0
        %v1359 = vadd.f32 %v1308, %v1358
        %v1360 = vand.u32 %v576, 4294901760
        %1361 = vmatmul.f32.gmra.mxu0 %v1360
        %v1362 = vpop.f32.mrf.mxu0
        %v1363 = vadd.f32 %v1314, %v1362
        %1364 = vdwg.mxu0
        %1365 = vmatpush.msra.mxu0 0.0
        %1366 = vmatpush.msra.mxu0 0.0
        %1367 = vmatpush.msra.mxu0 0.0
        %1368 = vmatpush.msra.mxu0 0.0
        %1369 = vmatpush.msra.mxu0 0.0
        %1370 = vmatpush.msra.mxu0 0.0
        %1371 = vmatpush.msra.mxu0 0.0
        %1372 = vmatpush.msra.mxu0 0.0
        %v1373 = vand.u32 %v1129, 4294901760
        %1374 = vmatpush.msra.mxu0 %v1373
        %v1375 = vand.u32 %v1128, 4294901760
        %1376 = vmatpush.msra.mxu0 %v1375
        %v1377 = vand.u32 %v1127, 4294901760
        %1378 = vmatpush.msra.mxu0 %v1377
        %v1379 = vand.u32 %v1126, 4294901760
        %1380 = vmatpush.msra.mxu0 %v1379
        %v1381 = vand.u32 %v1125, 4294901760
        %1382 = vmatpush.msra.mxu0 %v1381
        %v1383 = vand.u32 %v1124, 4294901760
        %1384 = vmatpush.msra.mxu0 %v1383
        %v1385 = vand.u32 %v1123, 4294901760
        %1386 = vmatpush.msra.mxu0 %v1385
        %v1387 = vand.u32 %v1122, 4294901760
        %1388 = vmatpush.msra.mxu0 %v1387
        %v1389 = vand.u32 %v573, 4294901760
        %1390 = vmatmul.f32.gmra.mxu0 %v1389
        %v1391 = vpop.f32.mrf.mxu0
        %v1392 = vadd.f32 %v1359, %v1391
        %v1393 = vand.u32 %v576, 4294901760
        %1394 = vmatmul.f32.gmra.mxu0 %v1393
        %v1395 = vpop.f32.mrf.mxu0
        %v1396 = vadd.f32 %v1363, %v1395
        %1397 = vdwg.mxu0
        %vm1398 = vcmask 130048
        %v1400 = vsel %vm1398, %v840, 0
        %v1403 = vsel %vm1398, %v844, 0
        %v1406 = vsel %vm1398, %v1116, 0
        %v1409 = vsel %vm1398, %v1120, 0
        %1411 = vmatpush.xpose.msra.mxu0 0.0
        %1412 = vmatpush.xpose.msra.mxu0 0.0
        %1413 = vmatpush.xpose.msra.mxu0 0.0
        %1414 = vmatpush.xpose.msra.mxu0 0.0
        %1415 = vmatpush.xpose.msra.mxu0 0.0
        %1416 = vmatpush.xpose.msra.mxu0 0.0
        %1417 = vmatpush.xpose.msra.mxu0 0.0
        %1418 = vmatpush.xpose.msra.mxu0 0.0
        %1419 = vmatpush.xpose.msra.mxu0 0.0
        %1420 = vmatpush.xpose.msra.mxu0 0.0
        %1421 = vmatpush.xpose.msra.mxu0 0.0
        %1422 = vmatpush.xpose.msra.mxu0 0.0
        %1423 = vmatpush.xpose.msra.mxu0 0.0
        %1424 = vmatpush.xpose.msra.mxu0 0.0
        %v1425 = vand.u32 %v1409, 4294901760
        %1426 = vmatpush.xpose.msra.mxu0 %v1425
        %v1427 = vand.u32 %v1406, 4294901760
        %1428 = vmatpush.xpose.msra.mxu0 %v1427
        %v1429 = vand.u32 %v1400, 4294901760
        %v1430 = vsub.f32 %v1400, %v1429
        %v1431 = vand.u32 %v1430, 4294901760
        %v1432 = vsub.f32 %v1430, %v1431
        %v1433 = vand.u32 %v1432, 4294901760
        %1434 = vmatmul.f32.gmra.mxu0 %v1433
        %v1435 = vpop.f32.mrf.mxu0
        %v1436 = vadd.f32 0.0, %v1435
        %v1437 = vand.u32 %v1403, 4294901760
        %v1438 = vsub.f32 %v1403, %v1437
        %v1439 = vand.u32 %v1438, 4294901760
        %v1440 = vsub.f32 %v1438, %v1439
        %v1441 = vand.u32 %v1440, 4294901760
        %1442 = vmatmul.f32.gmra.mxu0 %v1441
        %v1443 = vpop.f32.mrf.mxu0
        %v1444 = vadd.f32 0.0, %v1443
        %1445 = vdwg.mxu0
        %1446 = vmatpush.xpose.msra.mxu0 0.0
        %1447 = vmatpush.xpose.msra.mxu0 0.0
        %1448 = vmatpush.xpose.msra.mxu0 0.0
        %1449 = vmatpush.xpose.msra.mxu0 0.0
        %1450 = vmatpush.xpose.msra.mxu0 0.0
        %1451 = vmatpush.xpose.msra.mxu0 0.0
        %1452 = vmatpush.xpose.msra.mxu0 0.0
        %1453 = vmatpush.xpose.msra.mxu0 0.0
        %1454 = vmatpush.xpose.msra.mxu0 0.0
        %1455 = vmatpush.xpose.msra.mxu0 0.0
        %1456 = vmatpush.xpose.msra.mxu0 0.0
        %1457 = vmatpush.xpose.msra.mxu0 0.0
        %1458 = vmatpush.xpose.msra.mxu0 0.0
        %1459 = vmatpush.xpose.msra.mxu0 0.0
        %v1460 = vand.u32 %v1409, 4294901760
        %v1461 = vsub.f32 %v1409, %v1460
        %v1462 = vand.u32 %v1461, 4294901760
        %v1463 = vsub.f32 %v1461, %v1462
        %v1464 = vand.u32 %v1463, 4294901760
        %1465 = vmatpush.xpose.msra.mxu0 %v1464
        %v1466 = vand.u32 %v1406, 4294901760
        %v1467 = vsub.f32 %v1406, %v1466
        %v1468 = vand.u32 %v1467, 4294901760
        %v1469 = vsub.f32 %v1467, %v1468
        %v1470 = vand.u32 %v1469, 4294901760
        %1471 = vmatpush.xpose.msra.mxu0 %v1470
        %v1472 = vand.u32 %v1400, 4294901760
        %1473 = vmatmul.f32.gmra.mxu0 %v1472
        %v1474 = vpop.f32.mrf.mxu0
        %v1475 = vadd.f32 %v1436, %v1474
        %v1476 = vand.u32 %v1403, 4294901760
        %1477 = vmatmul.f32.gmra.mxu0 %v1476
        %v1478 = vpop.f32.mrf.mxu0
        %v1479 = vadd.f32 %v1444, %v1478
        %1480 = vdwg.mxu0
        %1481 = vmatpush.xpose.msra.mxu0 0.0
        %1482 = vmatpush.xpose.msra.mxu0 0.0
        %1483 = vmatpush.xpose.msra.mxu0 0.0
        %1484 = vmatpush.xpose.msra.mxu0 0.0
        %1485 = vmatpush.xpose.msra.mxu0 0.0
        %1486 = vmatpush.xpose.msra.mxu0 0.0
        %1487 = vmatpush.xpose.msra.mxu0 0.0
        %1488 = vmatpush.xpose.msra.mxu0 0.0
        %1489 = vmatpush.xpose.msra.mxu0 0.0
        %1490 = vmatpush.xpose.msra.mxu0 0.0
        %1491 = vmatpush.xpose.msra.mxu0 0.0
        %1492 = vmatpush.xpose.msra.mxu0 0.0
        %1493 = vmatpush.xpose.msra.mxu0 0.0
        %1494 = vmatpush.xpose.msra.mxu0 0.0
        %v1495 = vand.u32 %v1409, 4294901760
        %v1496 = vsub.f32 %v1409, %v1495
        %1497 = vmatpush.xpose.msra.mxu0 %v1496
        %v1498 = vand.u32 %v1406, 4294901760
        %v1499 = vsub.f32 %v1406, %v1498
        %1500 = vmatpush.xpose.msra.mxu0 %v1499
        %v1501 = vand.u32 %v1400, 4294901760
        %v1502 = vsub.f32 %v1400, %v1501
        %1503 = vmatmul.f32.gmra.mxu0 %v1502
        %v1504 = vpop.f32.mrf.mxu0
        %v1505 = vadd.f32 %v1475, %v1504
        %v1506 = vand.u32 %v1403, 4294901760
        %v1507 = vsub.f32 %v1403, %v1506
        %1508 = vmatmul.f32.gmra.mxu0 %v1507
        %v1509 = vpop.f32.mrf.mxu0
        %v1510 = vadd.f32 %v1479, %v1509
        %1511 = vdwg.mxu0
        %1512 = vmatpush.xpose.msra.mxu0 0.0
        %1513 = vmatpush.xpose.msra.mxu0 0.0
        %1514 = vmatpush.xpose.msra.mxu0 0.0
        %1515 = vmatpush.xpose.msra.mxu0 0.0
        %1516 = vmatpush.xpose.msra.mxu0 0.0
        %1517 = vmatpush.xpose.msra.mxu0 0.0
        %1518 = vmatpush.xpose.msra.mxu0 0.0
        %1519 = vmatpush.xpose.msra.mxu0 0.0
        %1520 = vmatpush.xpose.msra.mxu0 0.0
        %1521 = vmatpush.xpose.msra.mxu0 0.0
        %1522 = vmatpush.xpose.msra.mxu0 0.0
        %1523 = vmatpush.xpose.msra.mxu0 0.0
        %1524 = vmatpush.xpose.msra.mxu0 0.0
        %1525 = vmatpush.xpose.msra.mxu0 0.0
        %v1526 = vand.u32 %v1409, 4294901760
        %1527 = vmatpush.xpose.msra.mxu0 %v1526
        %v1528 = vand.u32 %v1406, 4294901760
        %1529 = vmatpush.xpose.msra.mxu0 %v1528
        %v1530 = vand.u32 %v1400, 4294901760
        %v1531 = vsub.f32 %v1400, %v1530
        %v1532 = vand.u32 %v1531, 4294901760
        %1533 = vmatmul.f32.gmra.mxu0 %v1532
        %v1534 = vpop.f32.mrf.mxu0
        %v1535 = vadd.f32 %v1505, %v1534
        %v1536 = vand.u32 %v1403, 4294901760
        %v1537 = vsub.f32 %v1403, %v1536
        %v1538 = vand.u32 %v1537, 4294901760
        %1539 = vmatmul.f32.gmra.mxu0 %v1538
        %v1540 = vpop.f32.mrf.mxu0
        %v1541 = vadd.f32 %v1510, %v1540
        %1542 = vdwg.mxu0
        %1543 = vmatpush.xpose.msra.mxu0 0.0
        %1544 = vmatpush.xpose.msra.mxu0 0.0
        %1545 = vmatpush.xpose.msra.mxu0 0.0
        %1546 = vmatpush.xpose.msra.mxu0 0.0
        %1547 = vmatpush.xpose.msra.mxu0 0.0
        %1548 = vmatpush.xpose.msra.mxu0 0.0
        %1549 = vmatpush.xpose.msra.mxu0 0.0
        %1550 = vmatpush.xpose.msra.mxu0 0.0
        %1551 = vmatpush.xpose.msra.mxu0 0.0
        %1552 = vmatpush.xpose.msra.mxu0 0.0
        %1553 = vmatpush.xpose.msra.mxu0 0.0
        %1554 = vmatpush.xpose.msra.mxu0 0.0
        %1555 = vmatpush.xpose.msra.mxu0 0.0
        %1556 = vmatpush.xpose.msra.mxu0 0.0
        %v1557 = vand.u32 %v1409, 4294901760
        %v1558 = vsub.f32 %v1409, %v1557
        %v1559 = vand.u32 %v1558, 4294901760
        %1560 = vmatpush.xpose.msra.mxu0 %v1559
        %v1561 = vand.u32 %v1406, 4294901760
        %v1562 = vsub.f32 %v1406, %v1561
        %v1563 = vand.u32 %v1562, 4294901760
        %1564 = vmatpush.xpose.msra.mxu0 %v1563
        %v1565 = vand.u32 %v1400, 4294901760
        %1566 = vmatmul.f32.gmra.mxu0 %v1565
        %v1567 = vpop.f32.mrf.mxu0
        %v1568 = vadd.f32 %v1535, %v1567
        %v1569 = vand.u32 %v1403, 4294901760
        %1570 = vmatmul.f32.gmra.mxu0 %v1569
        %v1571 = vpop.f32.mrf.mxu0
        %v1572 = vadd.f32 %v1541, %v1571
        %1573 = vdwg.mxu0
        %1574 = vmatpush.xpose.msra.mxu0 0.0
        %1575 = vmatpush.xpose.msra.mxu0 0.0
        %1576 = vmatpush.xpose.msra.mxu0 0.0
        %1577 = vmatpush.xpose.msra.mxu0 0.0
        %1578 = vmatpush.xpose.msra.mxu0 0.0
        %1579 = vmatpush.xpose.msra.mxu0 0.0
        %1580 = vmatpush.xpose.msra.mxu0 0.0
        %1581 = vmatpush.xpose.msra.mxu0 0.0
        %1582 = vmatpush.xpose.msra.mxu0 0.0
        %1583 = vmatpush.xpose.msra.mxu0 0.0
        %1584 = vmatpush.xpose.msra.mxu0 0.0
        %1585 = vmatpush.xpose.msra.mxu0 0.0
        %1586 = vmatpush.xpose.msra.mxu0 0.0
        %1587 = vmatpush.xpose.msra.mxu0 0.0
        %v1588 = vand.u32 %v1409, 4294901760
        %1589 = vmatpush.xpose.msra.mxu0 %v1588
        %v1590 = vand.u32 %v1406, 4294901760
        %1591 = vmatpush.xpose.msra.mxu0 %v1590
        %v1592 = vand.u32 %v1400, 4294901760
        %1593 = vmatmul.f32.gmra.mxu0 %v1592
        %v1594 = vpop.f32.mrf.mxu0
        %v1595 = vadd.f32 %v1568, %v1594
        %v1596 = vand.u32 %v1403, 4294901760
        %1597 = vmatmul.f32.gmra.mxu0 %v1596
        %v1598 = vpop.f32.mrf.mxu0
        %v1599 = vadd.f32 %v1572, %v1598
        %1600 = vdwg.mxu0
        %v1601 = vmul.f32 %v1595, 0.125
        %v1602 = vmul.f32 %v1599, 0.125
        %v1603 = vsel %vm1398, %v1601, -inf
        %1604 = vmax.xlane.f32.xlu0 %v1603
        %v1605 = vpop.xlane.xlu0 %1604
        %v1606 = vsel %vm1398, %v1602, -inf
        %1607 = vmax.xlane.f32.xlu0 %v1606
        %v1608 = vpop.xlane.xlu0 %1607
        %v1609 = vsub.f32 %v1601, %v1605
        %v1610 = vsub.f32 %v1602, %v1608
        %v1611 = vmul.f32 %v1609, 1.442695
        %v1612 = vpow.pop %v1611
        %v1613 = vmul.f32 %v1610, 1.442695
        %v1614 = vpow.pop %v1613
        %v1615 = vsel %vm1398, %v1612, 0.0
        %1616 = vadd.xlane.f32.xlu0 %v1615
        %v1617 = vpop.xlane.xlu0 %1616
        %v1618 = vsel %vm1398, %v1614, 0.0
        %1619 = vadd.xlane.f32.xlu0 %v1618
        %v1620 = vpop.xlane.xlu0 %1619
        %v1621 = vrcp.pop %v1617
        %v1622 = vmul.f32 %v1617, %v1621
        %v1623 = vsub.f32 1.0, %v1622
        %v1624 = vmul.f32 %v1621, %v1623
        %v1625 = vadd.f32 %v1621, %v1624
        %vm1626 = vweird.f32 %v1617
        %vm1627 = vweird.f32 %v1621
        %vm1628 = vmor %vm1626, %vm1627
        %v1629 = vsel %vm1628, %v1621, %v1625
        %v1630 = vand.u32 2147483647, %v1617
        %vm1631 = vcmp.eq.f32.partialorder %v1630, 8.507059e+37
        %v1632 = vand.u32 %v1617, 2147483648
        %v1633 = vor.u32 1.1754944e-38, %v1632
        %v1634 = vsel %vm1631, %v1633, %v1629
        %v1635 = vmul.f32 %v1612, %v1634
        %v1636 = vrcp.pop %v1620
        %v1637 = vmul.f32 %v1620, %v1636
        %v1638 = vsub.f32 1.0, %v1637
        %v1639 = vmul.f32 %v1636, %v1638
        %v1640 = vadd.f32 %v1636, %v1639
        %vm1641 = vweird.f32 %v1620
        %vm1642 = vweird.f32 %v1636
        %vm1643 = vmor %vm1641, %vm1642
        %v1644 = vsel %vm1643, %v1636, %v1640
        %v1645 = vand.u32 2147483647, %v1620
        %vm1646 = vcmp.eq.f32.partialorder %v1645, 8.507059e+37
        %v1647 = vand.u32 %v1620, 2147483648
        %v1648 = vor.u32 1.1754944e-38, %v1647
        %v1649 = vsel %vm1646, %v1648, %v1644
        %v1650 = vmul.f32 %v1614, %v1649
        %v1652 = vsel %vm1398, %v1635, 0
        %v1655 = vsel %vm1398, %v1650, 0
        %1657 = vmatpush.msra.mxu0 0.0
        %1658 = vmatpush.msra.mxu0 0.0
        %1659 = vmatpush.msra.mxu0 0.0
        %1660 = vmatpush.msra.mxu0 0.0
        %1661 = vmatpush.msra.mxu0 0.0
        %1662 = vmatpush.msra.mxu0 0.0
        %1663 = vmatpush.msra.mxu0 0.0
        %1664 = vmatpush.msra.mxu0 0.0
        %1665 = vmatpush.msra.mxu0 0.0
        %1666 = vmatpush.msra.mxu0 0.0
        %1667 = vmatpush.msra.mxu0 0.0
        %1668 = vmatpush.msra.mxu0 0.0
        %1669 = vmatpush.msra.mxu0 0.0
        %1670 = vmatpush.msra.mxu0 0.0
        %v1671 = vand.u32 %v1396, 4294901760
        %1672 = vmatpush.msra.mxu0 %v1671
        %v1673 = vand.u32 %v1392, 4294901760
        %1674 = vmatpush.msra.mxu0 %v1673
        %v1675 = vand.u32 %v1652, 4294901760
        %v1676 = vsub.f32 %v1652, %v1675
        %v1677 = vand.u32 %v1676, 4294901760
        %v1678 = vsub.f32 %v1676, %v1677
        %v1679 = vand.u32 %v1678, 4294901760
        %1680 = vmatmul.f32.gmra.mxu0 %v1679
        %v1681 = vpop.f32.mrf.mxu0
        %v1682 = vadd.f32 0.0, %v1681
        %v1683 = vand.u32 %v1655, 4294901760
        %v1684 = vsub.f32 %v1655, %v1683
        %v1685 = vand.u32 %v1684, 4294901760
        %v1686 = vsub.f32 %v1684, %v1685
        %v1687 = vand.u32 %v1686, 4294901760
        %1688 = vmatmul.f32.gmra.mxu0 %v1687
        %v1689 = vpop.f32.mrf.mxu0
        %v1690 = vadd.f32 0.0, %v1689
        %1691 = vdwg.mxu0
        %1692 = vmatpush.msra.mxu0 0.0
        %1693 = vmatpush.msra.mxu0 0.0
        %1694 = vmatpush.msra.mxu0 0.0
        %1695 = vmatpush.msra.mxu0 0.0
        %1696 = vmatpush.msra.mxu0 0.0
        %1697 = vmatpush.msra.mxu0 0.0
        %1698 = vmatpush.msra.mxu0 0.0
        %1699 = vmatpush.msra.mxu0 0.0
        %1700 = vmatpush.msra.mxu0 0.0
        %1701 = vmatpush.msra.mxu0 0.0
        %1702 = vmatpush.msra.mxu0 0.0
        %1703 = vmatpush.msra.mxu0 0.0
        %1704 = vmatpush.msra.mxu0 0.0
        %1705 = vmatpush.msra.mxu0 0.0
        %v1706 = vand.u32 %v1396, 4294901760
        %v1707 = vsub.f32 %v1396, %v1706
        %v1708 = vand.u32 %v1707, 4294901760
        %v1709 = vsub.f32 %v1707, %v1708
        %v1710 = vand.u32 %v1709, 4294901760
        %1711 = vmatpush.msra.mxu0 %v1710
        %v1712 = vand.u32 %v1392, 4294901760
        %v1713 = vsub.f32 %v1392, %v1712
        %v1714 = vand.u32 %v1713, 4294901760
        %v1715 = vsub.f32 %v1713, %v1714
        %v1716 = vand.u32 %v1715, 4294901760
        %1717 = vmatpush.msra.mxu0 %v1716
        %v1718 = vand.u32 %v1652, 4294901760
        %1719 = vmatmul.f32.gmra.mxu0 %v1718
        %v1720 = vpop.f32.mrf.mxu0
        %v1721 = vadd.f32 %v1682, %v1720
        %v1722 = vand.u32 %v1655, 4294901760
        %1723 = vmatmul.f32.gmra.mxu0 %v1722
        %v1724 = vpop.f32.mrf.mxu0
        %v1725 = vadd.f32 %v1690, %v1724
        %1726 = vdwg.mxu0
        %1727 = vmatpush.msra.mxu0 0.0
        %1728 = vmatpush.msra.mxu0 0.0
        %1729 = vmatpush.msra.mxu0 0.0
        %1730 = vmatpush.msra.mxu0 0.0
        %1731 = vmatpush.msra.mxu0 0.0
        %1732 = vmatpush.msra.mxu0 0.0
        %1733 = vmatpush.msra.mxu0 0.0
        %1734 = vmatpush.msra.mxu0 0.0
        %1735 = vmatpush.msra.mxu0 0.0
        %1736 = vmatpush.msra.mxu0 0.0
        %1737 = vmatpush.msra.mxu0 0.0
        %1738 = vmatpush.msra.mxu0 0.0
        %1739 = vmatpush.msra.mxu0 0.0
        %1740 = vmatpush.msra.mxu0 0.0
        %v1741 = vand.u32 %v1396, 4294901760
        %v1742 = vsub.f32 %v1396, %v1741
        %1743 = vmatpush.msra.mxu0 %v1742
        %v1744 = vand.u32 %v1392, 4294901760
        %v1745 = vsub.f32 %v1392, %v1744
        %1746 = vmatpush.msra.mxu0 %v1745
        %v1747 = vand.u32 %v1652, 4294901760
        %v1748 = vsub.f32 %v1652, %v1747
        %1749 = vmatmul.f32.gmra.mxu0 %v1748
        %v1750 = vpop.f32.mrf.mxu0
        %v1751 = vadd.f32 %v1721, %v1750
        %v1752 = vand.u32 %v1655, 4294901760
        %v1753 = vsub.f32 %v1655, %v1752
        %1754 = vmatmul.f32.gmra.mxu0 %v1753
        %v1755 = vpop.f32.mrf.mxu0
        %v1756 = vadd.f32 %v1725, %v1755
        %1757 = vdwg.mxu0
        %1758 = vmatpush.msra.mxu0 0.0
        %1759 = vmatpush.msra.mxu0 0.0
        %1760 = vmatpush.msra.mxu0 0.0
        %1761 = vmatpush.msra.mxu0 0.0
        %1762 = vmatpush.msra.mxu0 0.0
        %1763 = vmatpush.msra.mxu0 0.0
        %1764 = vmatpush.msra.mxu0 0.0
        %1765 = vmatpush.msra.mxu0 0.0
        %1766 = vmatpush.msra.mxu0 0.0
        %1767 = vmatpush.msra.mxu0 0.0
        %1768 = vmatpush.msra.mxu0 0.0
        %1769 = vmatpush.msra.mxu0 0.0
        %1770 = vmatpush.msra.mxu0 0.0
        %1771 = vmatpush.msra.mxu0 0.0
        %v1772 = vand.u32 %v1396, 4294901760
        %1773 = vmatpush.msra.mxu0 %v1772
        %v1774 = vand.u32 %v1392, 4294901760
        %1775 = vmatpush.msra.mxu0 %v1774
        %v1776 = vand.u32 %v1652, 4294901760
        %v1777 = vsub.f32 %v1652, %v1776
        %v1778 = vand.u32 %v1777, 4294901760
        %1779 = vmatmul.f32.gmra.mxu0 %v1778
        %v1780 = vpop.f32.mrf.mxu0
        %v1781 = vadd.f32 %v1751, %v1780
        %v1782 = vand.u32 %v1655, 4294901760
        %v1783 = vsub.f32 %v1655, %v1782
        %v1784 = vand.u32 %v1783, 4294901760
        %1785 = vmatmul.f32.gmra.mxu0 %v1784
        %v1786 = vpop.f32.mrf.mxu0
        %v1787 = vadd.f32 %v1756, %v1786
        %1788 = vdwg.mxu0
        %1789 = vmatpush.msra.mxu0 0.0
        %1790 = vmatpush.msra.mxu0 0.0
        %1791 = vmatpush.msra.mxu0 0.0
        %1792 = vmatpush.msra.mxu0 0.0
        %1793 = vmatpush.msra.mxu0 0.0
        %1794 = vmatpush.msra.mxu0 0.0
        %1795 = vmatpush.msra.mxu0 0.0
        %1796 = vmatpush.msra.mxu0 0.0
        %1797 = vmatpush.msra.mxu0 0.0
        %1798 = vmatpush.msra.mxu0 0.0
        %1799 = vmatpush.msra.mxu0 0.0
        %1800 = vmatpush.msra.mxu0 0.0
        %1801 = vmatpush.msra.mxu0 0.0
        %1802 = vmatpush.msra.mxu0 0.0
        %v1803 = vand.u32 %v1396, 4294901760
        %v1804 = vsub.f32 %v1396, %v1803
        %v1805 = vand.u32 %v1804, 4294901760
        %1806 = vmatpush.msra.mxu0 %v1805
        %v1807 = vand.u32 %v1392, 4294901760
        %v1808 = vsub.f32 %v1392, %v1807
        %v1809 = vand.u32 %v1808, 4294901760
        %1810 = vmatpush.msra.mxu0 %v1809
        %v1811 = vand.u32 %v1652, 4294901760
        %1812 = vmatmul.f32.gmra.mxu0 %v1811
        %v1813 = vpop.f32.mrf.mxu0
        %v1814 = vadd.f32 %v1781, %v1813
        %v1815 = vand.u32 %v1655, 4294901760
        %1816 = vmatmul.f32.gmra.mxu0 %v1815
        %v1817 = vpop.f32.mrf.mxu0
        %v1818 = vadd.f32 %v1787, %v1817
        %1819 = vdwg.mxu0
        %1820 = vmatpush.msra.mxu0 0.0
        %1821 = vmatpush.msra.mxu0 0.0
        %1822 = vmatpush.msra.mxu0 0.0
        %1823 = vmatpush.msra.mxu0 0.0
        %1824 = vmatpush.msra.mxu0 0.0
        %1825 = vmatpush.msra.mxu0 0.0
        %1826 = vmatpush.msra.mxu0 0.0
        %1827 = vmatpush.msra.mxu0 0.0
        %1828 = vmatpush.msra.mxu0 0.0
        %1829 = vmatpush.msra.mxu0 0.0
        %1830 = vmatpush.msra.mxu0 0.0
        %1831 = vmatpush.msra.mxu0 0.0
        %1832 = vmatpush.msra.mxu0 0.0
        %1833 = vmatpush.msra.mxu0 0.0
        %v1834 = vand.u32 %v1396, 4294901760
        %1835 = vmatpush.msra.mxu0 %v1834
        %v1836 = vand.u32 %v1392, 4294901760
        %1837 = vmatpush.msra.mxu0 %v1836
        %v1838 = vand.u32 %v1652, 4294901760
        %1839 = vmatmul.f32.gmra.mxu0 %v1838
        %v1840 = vpop.f32.mrf.mxu0
        %v1841 = vadd.f32 %v1814, %v1840
        %v1842 = vand.u32 %v1655, 4294901760
        %1843 = vmatmul.f32.gmra.mxu0 %v1842
        %v1844 = vpop.f32.mrf.mxu0
        %v1845 = vadd.f32 %v1818, %v1844
        %1846 = vdwg.mxu0
        %v1847 = vld [vmem:[%s6] sm:$0xff]
        %v1848 = vld [vmem:[%s6 + $0x8] sm:$0xff]
        %s1849 = scalar_lea.vmem %s3, 64
        %v1850 = vld [vmem:[%s1849] sm:$0xff]
        %v1851 = vld [vmem:[%s1849 + $0x8] sm:$0xff]
        %v1852 = vld [vmem:[%s1849 + $0x10] sm:$0xff]
        %v1853 = vld [vmem:[%s1849 + $0x18] sm:$0xff]
        %v1854 = vld [vmem:[%s1849 + $0x20] sm:$0xff]
        %v1855 = vld [vmem:[%s1849 + $0x28] sm:$0xff]
        %v1856 = vld [vmem:[%s1849 + $0x30] sm:$0xff]
        %v1857 = vld [vmem:[%s1849 + $0x38] sm:$0xff]
        %1858 = vmatpush.msra.mxu0 0.0
        %1859 = vmatpush.msra.mxu0 0.0
        %1860 = vmatpush.msra.mxu0 0.0
        %1861 = vmatpush.msra.mxu0 0.0
        %1862 = vmatpush.msra.mxu0 0.0
        %1863 = vmatpush.msra.mxu0 0.0
        %1864 = vmatpush.msra.mxu0 0.0
        %1865 = vmatpush.msra.mxu0 0.0
        %v1866 = vand.u32 %v1857, 4294901760
        %1867 = vmatpush.msra.mxu0 %v1866
        %v1868 = vand.u32 %v1856, 4294901760
        %1869 = vmatpush.msra.mxu0 %v1868
        %v1870 = vand.u32 %v1855, 4294901760
        %1871 = vmatpush.msra.mxu0 %v1870
        %v1872 = vand.u32 %v1854, 4294901760
        %1873 = vmatpush.msra.mxu0 %v1872
        %v1874 = vand.u32 %v1853, 4294901760
        %1875 = vmatpush.msra.mxu0 %v1874
        %v1876 = vand.u32 %v1852, 4294901760
        %1877 = vmatpush.msra.mxu0 %v1876
        %v1878 = vand.u32 %v1851, 4294901760
        %1879 = vmatpush.msra.mxu0 %v1878
        %v1880 = vand.u32 %v1850, 4294901760
        %1881 = vmatpush.msra.mxu0 %v1880
        %v1882 = vand.u32 %v573, 4294901760
        %v1883 = vsub.f32 %v573, %v1882
        %v1884 = vand.u32 %v1883, 4294901760
        %v1885 = vsub.f32 %v1883, %v1884
        %v1886 = vand.u32 %v1885, 4294901760
        %1887 = vmatmul.f32.gmra.mxu0 %v1886
        %v1888 = vpop.f32.mrf.mxu0
        %v1889 = vadd.f32 0.0, %v1888
        %v1890 = vand.u32 %v576, 4294901760
        %v1891 = vsub.f32 %v576, %v1890
        %v1892 = vand.u32 %v1891, 4294901760
        %v1893 = vsub.f32 %v1891, %v1892
        %v1894 = vand.u32 %v1893, 4294901760
        %1895 = vmatmul.f32.gmra.mxu0 %v1894
        %v1896 = vpop.f32.mrf.mxu0
        %v1897 = vadd.f32 0.0, %v1896
        %1898 = vdwg.mxu0
        %1899 = vmatpush.msra.mxu0 0.0
        %1900 = vmatpush.msra.mxu0 0.0
        %1901 = vmatpush.msra.mxu0 0.0
        %1902 = vmatpush.msra.mxu0 0.0
        %1903 = vmatpush.msra.mxu0 0.0
        %1904 = vmatpush.msra.mxu0 0.0
        %1905 = vmatpush.msra.mxu0 0.0
        %1906 = vmatpush.msra.mxu0 0.0
        %v1907 = vand.u32 %v1857, 4294901760
        %v1908 = vsub.f32 %v1857, %v1907
        %v1909 = vand.u32 %v1908, 4294901760
        %v1910 = vsub.f32 %v1908, %v1909
        %v1911 = vand.u32 %v1910, 4294901760
        %1912 = vmatpush.msra.mxu0 %v1911
        %v1913 = vand.u32 %v1856, 4294901760
        %v1914 = vsub.f32 %v1856, %v1913
        %v1915 = vand.u32 %v1914, 4294901760
        %v1916 = vsub.f32 %v1914, %v1915
        %v1917 = vand.u32 %v1916, 4294901760
        %1918 = vmatpush.msra.mxu0 %v1917
        %v1919 = vand.u32 %v1855, 4294901760
        %v1920 = vsub.f32 %v1855, %v1919
        %v1921 = vand.u32 %v1920, 4294901760
        %v1922 = vsub.f32 %v1920, %v1921
        %v1923 = vand.u32 %v1922, 4294901760
        %1924 = vmatpush.msra.mxu0 %v1923
        %v1925 = vand.u32 %v1854, 4294901760
        %v1926 = vsub.f32 %v1854, %v1925
        %v1927 = vand.u32 %v1926, 4294901760
        %v1928 = vsub.f32 %v1926, %v1927
        %v1929 = vand.u32 %v1928, 4294901760
        %1930 = vmatpush.msra.mxu0 %v1929
        %v1931 = vand.u32 %v1853, 4294901760
        %v1932 = vsub.f32 %v1853, %v1931
        %v1933 = vand.u32 %v1932, 4294901760
        %v1934 = vsub.f32 %v1932, %v1933
        %v1935 = vand.u32 %v1934, 4294901760
        %1936 = vmatpush.msra.mxu0 %v1935
        %v1937 = vand.u32 %v1852, 4294901760
        %v1938 = vsub.f32 %v1852, %v1937
        %v1939 = vand.u32 %v1938, 4294901760
        %v1940 = vsub.f32 %v1938, %v1939
        %v1941 = vand.u32 %v1940, 4294901760
        %1942 = vmatpush.msra.mxu0 %v1941
        %v1943 = vand.u32 %v1851, 4294901760
        %v1944 = vsub.f32 %v1851, %v1943
        %v1945 = vand.u32 %v1944, 4294901760
        %v1946 = vsub.f32 %v1944, %v1945
        %v1947 = vand.u32 %v1946, 4294901760
        %1948 = vmatpush.msra.mxu0 %v1947
        %v1949 = vand.u32 %v1850, 4294901760
        %v1950 = vsub.f32 %v1850, %v1949
        %v1951 = vand.u32 %v1950, 4294901760
        %v1952 = vsub.f32 %v1950, %v1951
        %v1953 = vand.u32 %v1952, 4294901760
        %1954 = vmatpush.msra.mxu0 %v1953
        %v1955 = vand.u32 %v573, 4294901760
        %1956 = vmatmul.f32.gmra.mxu0 %v1955
        %v1957 = vpop.f32.mrf.mxu0
        %v1958 = vadd.f32 %v1889, %v1957
        %v1959 = vand.u32 %v576, 4294901760
        %1960 = vmatmul.f32.gmra.mxu0 %v1959
        %v1961 = vpop.f32.mrf.mxu0
        %v1962 = vadd.f32 %v1897, %v1961
        %1963 = vdwg.mxu0
        %1964 = vmatpush.msra.mxu0 0.0
        %1965 = vmatpush.msra.mxu0 0.0
        %1966 = vmatpush.msra.mxu0 0.0
        %1967 = vmatpush.msra.mxu0 0.0
        %1968 = vmatpush.msra.mxu0 0.0
        %1969 = vmatpush.msra.mxu0 0.0
        %1970 = vmatpush.msra.mxu0 0.0
        %1971 = vmatpush.msra.mxu0 0.0
        %v1972 = vand.u32 %v1857, 4294901760
        %v1973 = vsub.f32 %v1857, %v1972
        %1974 = vmatpush.msra.mxu0 %v1973
        %v1975 = vand.u32 %v1856, 4294901760
        %v1976 = vsub.f32 %v1856, %v1975
        %1977 = vmatpush.msra.mxu0 %v1976
        %v1978 = vand.u32 %v1855, 4294901760
        %v1979 = vsub.f32 %v1855, %v1978
        %1980 = vmatpush.msra.mxu0 %v1979
        %v1981 = vand.u32 %v1854, 4294901760
        %v1982 = vsub.f32 %v1854, %v1981
        %1983 = vmatpush.msra.mxu0 %v1982
        %v1984 = vand.u32 %v1853, 4294901760
        %v1985 = vsub.f32 %v1853, %v1984
        %1986 = vmatpush.msra.mxu0 %v1985
        %v1987 = vand.u32 %v1852, 4294901760
        %v1988 = vsub.f32 %v1852, %v1987
        %1989 = vmatpush.msra.mxu0 %v1988
        %v1990 = vand.u32 %v1851, 4294901760
        %v1991 = vsub.f32 %v1851, %v1990
        %1992 = vmatpush.msra.mxu0 %v1991
        %v1993 = vand.u32 %v1850, 4294901760
        %v1994 = vsub.f32 %v1850, %v1993
        %1995 = vmatpush.msra.mxu0 %v1994
        %v1996 = vand.u32 %v573, 4294901760
        %v1997 = vsub.f32 %v573, %v1996
        %1998 = vmatmul.f32.gmra.mxu0 %v1997
        %v1999 = vpop.f32.mrf.mxu0
        %v2000 = vadd.f32 %v1958, %v1999
        %v2001 = vand.u32 %v576, 4294901760
        %v2002 = vsub.f32 %v576, %v2001
        %2003 = vmatmul.f32.gmra.mxu0 %v2002
        %v2004 = vpop.f32.mrf.mxu0
        %v2005 = vadd.f32 %v1962, %v2004
        %2006 = vdwg.mxu0
        %2007 = vmatpush.msra.mxu0 0.0
        %2008 = vmatpush.msra.mxu0 0.0
        %2009 = vmatpush.msra.mxu0 0.0
        %2010 = vmatpush.msra.mxu0 0.0
        %2011 = vmatpush.msra.mxu0 0.0
        %2012 = vmatpush.msra.mxu0 0.0
        %2013 = vmatpush.msra.mxu0 0.0
        %2014 = vmatpush.msra.mxu0 0.0
        %v2015 = vand.u32 %v1857, 4294901760
        %2016 = vmatpush.msra.mxu0 %v2015
        %v2017 = vand.u32 %v1856, 4294901760
        %2018 = vmatpush.msra.mxu0 %v2017
        %v2019 = vand.u32 %v1855, 4294901760
        %2020 = vmatpush.msra.mxu0 %v2019
        %v2021 = vand.u32 %v1854, 4294901760
        %2022 = vmatpush.msra.mxu0 %v2021
        %v2023 = vand.u32 %v1853, 4294901760
        %2024 = vmatpush.msra.mxu0 %v2023
        %v2025 = vand.u32 %v1852, 4294901760
        %2026 = vmatpush.msra.mxu0 %v2025
        %v2027 = vand.u32 %v1851, 4294901760
        %2028 = vmatpush.msra.mxu0 %v2027
        %v2029 = vand.u32 %v1850, 4294901760
        %2030 = vmatpush.msra.mxu0 %v2029
        %v2031 = vand.u32 %v573, 4294901760
        %v2032 = vsub.f32 %v573, %v2031
        %v2033 = vand.u32 %v2032, 4294901760
        %2034 = vmatmul.f32.gmra.mxu0 %v2033
        %v2035 = vpop.f32.mrf.mxu0
        %v2036 = vadd.f32 %v2000, %v2035
        %v2037 = vand.u32 %v576, 4294901760
        %v2038 = vsub.f32 %v576, %v2037
        %v2039 = vand.u32 %v2038, 4294901760
        %2040 = vmatmul.f32.gmra.mxu0 %v2039
        %v2041 = vpop.f32.mrf.mxu0
        %v2042 = vadd.f32 %v2005, %v2041
        %2043 = vdwg.mxu0
        %2044 = vmatpush.msra.mxu0 0.0
        %2045 = vmatpush.msra.mxu0 0.0
        %2046 = vmatpush.msra.mxu0 0.0
        %2047 = vmatpush.msra.mxu0 0.0
        %2048 = vmatpush.msra.mxu0 0.0
        %2049 = vmatpush.msra.mxu0 0.0
        %2050 = vmatpush.msra.mxu0 0.0
        %2051 = vmatpush.msra.mxu0 0.0
        %v2052 = vand.u32 %v1857, 4294901760
        %v2053 = vsub.f32 %v1857, %v2052
        %v2054 = vand.u32 %v2053, 4294901760
        %2055 = vmatpush.msra.mxu0 %v2054
        %v2056 = vand.u32 %v1856, 4294901760
        %v2057 = vsub.f32 %v1856, %v2056
        %v2058 = vand.u32 %v2057, 4294901760
        %2059 = vmatpush.msra.mxu0 %v2058
        %v2060 = vand.u32 %v1855, 4294901760
        %v2061 = vsub.f32 %v1855, %v2060
        %v2062 = vand.u32 %v2061, 4294901760
        %2063 = vmatpush.msra.mxu0 %v2062
        %v2064 = vand.u32 %v1854, 4294901760
        %v2065 = vsub.f32 %v1854, %v2064
        %v2066 = vand.u32 %v2065, 4294901760
        %2067 = vmatpush.msra.mxu0 %v2066
        %v2068 = vand.u32 %v1853, 4294901760
        %v2069 = vsub.f32 %v1853, %v2068
        %v2070 = vand.u32 %v2069, 4294901760
        %2071 = vmatpush.msra.mxu0 %v2070
        %v2072 = vand.u32 %v1852, 4294901760
        %v2073 = vsub.f32 %v1852, %v2072
        %v2074 = vand.u32 %v2073, 4294901760
        %2075 = vmatpush.msra.mxu0 %v2074
        %v2076 = vand.u32 %v1851, 4294901760
        %v2077 = vsub.f32 %v1851, %v2076
        %v2078 = vand.u32 %v2077, 4294901760
        %2079 = vmatpush.msra.mxu0 %v2078
        %v2080 = vand.u32 %v1850, 4294901760
        %v2081 = vsub.f32 %v1850, %v2080
        %v2082 = vand.u32 %v2081, 4294901760
        %2083 = vmatpush.msra.mxu0 %v2082
        %v2084 = vand.u32 %v573, 4294901760
        %2085 = vmatmul.f32.gmra.mxu0 %v2084
        %v2086 = vpop.f32.mrf.mxu0
        %v2087 = vadd.f32 %v2036, %v2086
        %v2088 = vand.u32 %v576, 4294901760
        %2089 = vmatmul.f32.gmra.mxu0 %v2088
        %v2090 = vpop.f32.mrf.mxu0
        %v2091 = vadd.f32 %v2042, %v2090
        %2092 = vdwg.mxu0
        %2093 = vmatpush.msra.mxu0 0.0
        %2094 = vmatpush.msra.mxu0 0.0
        %2095 = vmatpush.msra.mxu0 0.0
        %2096 = vmatpush.msra.mxu0 0.0
        %2097 = vmatpush.msra.mxu0 0.0
        %2098 = vmatpush.msra.mxu0 0.0
        %2099 = vmatpush.msra.mxu0 0.0
        %2100 = vmatpush.msra.mxu0 0.0
        %v2101 = vand.u32 %v1857, 4294901760
        %2102 = vmatpush.msra.mxu0 %v2101
        %v2103 = vand.u32 %v1856, 4294901760
        %2104 = vmatpush.msra.mxu0 %v2103
        %v2105 = vand.u32 %v1855, 4294901760
        %2106 = vmatpush.msra.mxu0 %v2105
        %v2107 = vand.u32 %v1854, 4294901760
        %2108 = vmatpush.msra.mxu0 %v2107
        %v2109 = vand.u32 %v1853, 4294901760
        %2110 = vmatpush.msra.mxu0 %v2109
        %v2111 = vand.u32 %v1852, 4294901760
        %2112 = vmatpush.msra.mxu0 %v2111
        %v2113 = vand.u32 %v1851, 4294901760
        %2114 = vmatpush.msra.mxu0 %v2113
        %v2115 = vand.u32 %v1850, 4294901760
        %2116 = vmatpush.msra.mxu0 %v2115
        %v2117 = vand.u32 %v573, 4294901760
        %2118 = vmatmul.f32.gmra.mxu0 %v2117
        %v2119 = vpop.f32.mrf.mxu0
        %v2120 = vadd.f32 %v2087, %v2119
        %v2121 = vand.u32 %v576, 4294901760
        %2122 = vmatmul.f32.gmra.mxu0 %v2121
        %v2123 = vpop.f32.mrf.mxu0
        %v2124 = vadd.f32 %v2091, %v2123
        %2125 = vdwg.mxu0
        %s2126 = scalar_lea.vmem %s4, 64
        %v2127 = vld [vmem:[%s2126] sm:$0xff]
        %v2128 = vld [vmem:[%s2126 + $0x8] sm:$0xff]
        %v2129 = vld [vmem:[%s2126 + $0x10] sm:$0xff]
        %v2130 = vld [vmem:[%s2126 + $0x18] sm:$0xff]
        %v2131 = vld [vmem:[%s2126 + $0x20] sm:$0xff]
        %v2132 = vld [vmem:[%s2126 + $0x28] sm:$0xff]
        %v2133 = vld [vmem:[%s2126 + $0x30] sm:$0xff]
        %v2134 = vld [vmem:[%s2126 + $0x38] sm:$0xff]
        %2135 = vmatpush.msra.mxu0 0.0
        %2136 = vmatpush.msra.mxu0 0.0
        %2137 = vmatpush.msra.mxu0 0.0
        %2138 = vmatpush.msra.mxu0 0.0
        %2139 = vmatpush.msra.mxu0 0.0
        %2140 = vmatpush.msra.mxu0 0.0
        %2141 = vmatpush.msra.mxu0 0.0
        %2142 = vmatpush.msra.mxu0 0.0
        %v2143 = vand.u32 %v2134, 4294901760
        %2144 = vmatpush.msra.mxu0 %v2143
        %v2145 = vand.u32 %v2133, 4294901760
        %2146 = vmatpush.msra.mxu0 %v2145
        %v2147 = vand.u32 %v2132, 4294901760
        %2148 = vmatpush.msra.mxu0 %v2147
        %v2149 = vand.u32 %v2131, 4294901760
        %2150 = vmatpush.msra.mxu0 %v2149
        %v2151 = vand.u32 %v2130, 4294901760
        %2152 = vmatpush.msra.mxu0 %v2151
        %v2153 = vand.u32 %v2129, 4294901760
        %2154 = vmatpush.msra.mxu0 %v2153
        %v2155 = vand.u32 %v2128, 4294901760
        %2156 = vmatpush.msra.mxu0 %v2155
        %v2157 = vand.u32 %v2127, 4294901760
        %2158 = vmatpush.msra.mxu0 %v2157
        %v2159 = vand.u32 %v573, 4294901760
        %v2160 = vsub.f32 %v573, %v2159
        %v2161 = vand.u32 %v2160, 4294901760
        %v2162 = vsub.f32 %v2160, %v2161
        %v2163 = vand.u32 %v2162, 4294901760
        %2164 = vmatmul.f32.gmra.mxu0 %v2163
        %v2165 = vpop.f32.mrf.mxu0
        %v2166 = vadd.f32 0.0, %v2165
        %v2167 = vand.u32 %v576, 4294901760
        %v2168 = vsub.f32 %v576, %v2167
        %v2169 = vand.u32 %v2168, 4294901760
        %v2170 = vsub.f32 %v2168, %v2169
        %v2171 = vand.u32 %v2170, 4294901760
        %2172 = vmatmul.f32.gmra.mxu0 %v2171
        %v2173 = vpop.f32.mrf.mxu0
        %v2174 = vadd.f32 0.0, %v2173
        %2175 = vdwg.mxu0
        %2176 = vmatpush.msra.mxu0 0.0
        %2177 = vmatpush.msra.mxu0 0.0
        %2178 = vmatpush.msra.mxu0 0.0
        %2179 = vmatpush.msra.mxu0 0.0
        %2180 = vmatpush.msra.mxu0 0.0
        %2181 = vmatpush.msra.mxu0 0.0
        %2182 = vmatpush.msra.mxu0 0.0
        %2183 = vmatpush.msra.mxu0 0.0
        %v2184 = vand.u32 %v2134, 4294901760
        %v2185 = vsub.f32 %v2134, %v2184
        %v2186 = vand.u32 %v2185, 4294901760
        %v2187 = vsub.f32 %v2185, %v2186
        %v2188 = vand.u32 %v2187, 4294901760
        %2189 = vmatpush.msra.mxu0 %v2188
        %v2190 = vand.u32 %v2133, 4294901760
        %v2191 = vsub.f32 %v2133, %v2190
        %v2192 = vand.u32 %v2191, 4294901760
        %v2193 = vsub.f32 %v2191, %v2192
        %v2194 = vand.u32 %v2193, 4294901760
        %2195 = vmatpush.msra.mxu0 %v2194
        %v2196 = vand.u32 %v2132, 4294901760
        %v2197 = vsub.f32 %v2132, %v2196
        %v2198 = vand.u32 %v2197, 4294901760
        %v2199 = vsub.f32 %v2197, %v2198
        %v2200 = vand.u32 %v2199, 4294901760
        %2201 = vmatpush.msra.mxu0 %v2200
        %v2202 = vand.u32 %v2131, 4294901760
        %v2203 = vsub.f32 %v2131, %v2202
        %v2204 = vand.u32 %v2203, 4294901760
        %v2205 = vsub.f32 %v2203, %v2204
        %v2206 = vand.u32 %v2205, 4294901760
        %2207 = vmatpush.msra.mxu0 %v2206
        %v2208 = vand.u32 %v2130, 4294901760
        %v2209 = vsub.f32 %v2130, %v2208
        %v2210 = vand.u32 %v2209, 4294901760
        %v2211 = vsub.f32 %v2209, %v2210
        %v2212 = vand.u32 %v2211, 4294901760
        %2213 = vmatpush.msra.mxu0 %v2212
        %v2214 = vand.u32 %v2129, 4294901760
        %v2215 = vsub.f32 %v2129, %v2214
        %v2216 = vand.u32 %v2215, 4294901760
        %v2217 = vsub.f32 %v2215, %v2216
        %v2218 = vand.u32 %v2217, 4294901760
        %2219 = vmatpush.msra.mxu0 %v2218
        %v2220 = vand.u32 %v2128, 4294901760
        %v2221 = vsub.f32 %v2128, %v2220
        %v2222 = vand.u32 %v2221, 4294901760
        %v2223 = vsub.f32 %v2221, %v2222
        %v2224 = vand.u32 %v2223, 4294901760
        %2225 = vmatpush.msra.mxu0 %v2224
        %v2226 = vand.u32 %v2127, 4294901760
        %v2227 = vsub.f32 %v2127, %v2226
        %v2228 = vand.u32 %v2227, 4294901760
        %v2229 = vsub.f32 %v2227, %v2228
        %v2230 = vand.u32 %v2229, 4294901760
        %2231 = vmatpush.msra.mxu0 %v2230
        %v2232 = vand.u32 %v573, 4294901760
        %2233 = vmatmul.f32.gmra.mxu0 %v2232
        %v2234 = vpop.f32.mrf.mxu0
        %v2235 = vadd.f32 %v2166, %v2234
        %v2236 = vand.u32 %v576, 4294901760
        %2237 = vmatmul.f32.gmra.mxu0 %v2236
        %v2238 = vpop.f32.mrf.mxu0
        %v2239 = vadd.f32 %v2174, %v2238
        %2240 = vdwg.mxu0
        %2241 = vmatpush.msra.mxu0 0.0
        %2242 = vmatpush.msra.mxu0 0.0
        %2243 = vmatpush.msra.mxu0 0.0
        %2244 = vmatpush.msra.mxu0 0.0
        %2245 = vmatpush.msra.mxu0 0.0
        %2246 = vmatpush.msra.mxu0 0.0
        %2247 = vmatpush.msra.mxu0 0.0
        %2248 = vmatpush.msra.mxu0 0.0
        %v2249 = vand.u32 %v2134, 4294901760
        %v2250 = vsub.f32 %v2134, %v2249
        %2251 = vmatpush.msra.mxu0 %v2250
        %v2252 = vand.u32 %v2133, 4294901760
        %v2253 = vsub.f32 %v2133, %v2252
        %2254 = vmatpush.msra.mxu0 %v2253
        %v2255 = vand.u32 %v2132, 4294901760
        %v2256 = vsub.f32 %v2132, %v2255
        %2257 = vmatpush.msra.mxu0 %v2256
        %v2258 = vand.u32 %v2131, 4294901760
        %v2259 = vsub.f32 %v2131, %v2258
        %2260 = vmatpush.msra.mxu0 %v2259
        %v2261 = vand.u32 %v2130, 4294901760
        %v2262 = vsub.f32 %v2130, %v2261
        %2263 = vmatpush.msra.mxu0 %v2262
        %v2264 = vand.u32 %v2129, 4294901760
        %v2265 = vsub.f32 %v2129, %v2264
        %2266 = vmatpush.msra.mxu0 %v2265
        %v2267 = vand.u32 %v2128, 4294901760
        %v2268 = vsub.f32 %v2128, %v2267
        %2269 = vmatpush.msra.mxu0 %v2268
        %v2270 = vand.u32 %v2127, 4294901760
        %v2271 = vsub.f32 %v2127, %v2270
        %2272 = vmatpush.msra.mxu0 %v2271
        %v2273 = vand.u32 %v573, 4294901760
        %v2274 = vsub.f32 %v573, %v2273
        %2275 = vmatmul.f32.gmra.mxu0 %v2274
        %v2276 = vpop.f32.mrf.mxu0
        %v2277 = vadd.f32 %v2235, %v2276
        %v2278 = vand.u32 %v576, 4294901760
        %v2279 = vsub.f32 %v576, %v2278
        %2280 = vmatmul.f32.gmra.mxu0 %v2279
        %v2281 = vpop.f32.mrf.mxu0
        %v2282 = vadd.f32 %v2239, %v2281
        %2283 = vdwg.mxu0
        %2284 = vmatpush.msra.mxu0 0.0
        %2285 = vmatpush.msra.mxu0 0.0
        %2286 = vmatpush.msra.mxu0 0.0
        %2287 = vmatpush.msra.mxu0 0.0
        %2288 = vmatpush.msra.mxu0 0.0
        %2289 = vmatpush.msra.mxu0 0.0
        %2290 = vmatpush.msra.mxu0 0.0
        %2291 = vmatpush.msra.mxu0 0.0
        %v2292 = vand.u32 %v2134, 4294901760
        %2293 = vmatpush.msra.mxu0 %v2292
        %v2294 = vand.u32 %v2133, 4294901760
        %2295 = vmatpush.msra.mxu0 %v2294
        %v2296 = vand.u32 %v2132, 4294901760
        %2297 = vmatpush.msra.mxu0 %v2296
        %v2298 = vand.u32 %v2131, 4294901760
        %2299 = vmatpush.msra.mxu0 %v2298
        %v2300 = vand.u32 %v2130, 4294901760
        %2301 = vmatpush.msra.mxu0 %v2300
        %v2302 = vand.u32 %v2129, 4294901760
        %2303 = vmatpush.msra.mxu0 %v2302
        %v2304 = vand.u32 %v2128, 4294901760
        %2305 = vmatpush.msra.mxu0 %v2304
        %v2306 = vand.u32 %v2127, 4294901760
        %2307 = vmatpush.msra.mxu0 %v2306
        %v2308 = vand.u32 %v573, 4294901760
        %v2309 = vsub.f32 %v573, %v2308
        %v2310 = vand.u32 %v2309, 4294901760
        %2311 = vmatmul.f32.gmra.mxu0 %v2310
        %v2312 = vpop.f32.mrf.mxu0
        %v2313 = vadd.f32 %v2277, %v2312
        %v2314 = vand.u32 %v576, 4294901760
        %v2315 = vsub.f32 %v576, %v2314
        %v2316 = vand.u32 %v2315, 4294901760
        %2317 = vmatmul.f32.gmra.mxu0 %v2316
        %v2318 = vpop.f32.mrf.mxu0
        %v2319 = vadd.f32 %v2282, %v2318
        %2320 = vdwg.mxu0
        %2321 = vmatpush.msra.mxu0 0.0
        %2322 = vmatpush.msra.mxu0 0.0
        %2323 = vmatpush.msra.mxu0 0.0
        %2324 = vmatpush.msra.mxu0 0.0
        %2325 = vmatpush.msra.mxu0 0.0
        %2326 = vmatpush.msra.mxu0 0.0
        %2327 = vmatpush.msra.mxu0 0.0
        %2328 = vmatpush.msra.mxu0 0.0
        %v2329 = vand.u32 %v2134, 4294901760
        %v2330 = vsub.f32 %v2134, %v2329
        %v2331 = vand.u32 %v2330, 4294901760
        %2332 = vmatpush.msra.mxu0 %v2331
        %v2333 = vand.u32 %v2133, 4294901760
        %v2334 = vsub.f32 %v2133, %v2333
        %v2335 = vand.u32 %v2334, 4294901760
        %2336 = vmatpush.msra.mxu0 %v2335
        %v2337 = vand.u32 %v2132, 4294901760
        %v2338 = vsub.f32 %v2132, %v2337
        %v2339 = vand.u32 %v2338, 4294901760
        %2340 = vmatpush.msra.mxu0 %v2339
        %v2341 = vand.u32 %v2131, 4294901760
        %v2342 = vsub.f32 %v2131, %v2341
        %v2343 = vand.u32 %v2342, 4294901760
        %2344 = vmatpush.msra.mxu0 %v2343
        %v2345 = vand.u32 %v2130, 4294901760
        %v2346 = vsub.f32 %v2130, %v2345
        %v2347 = vand.u32 %v2346, 4294901760
        %2348 = vmatpush.msra.mxu0 %v2347
        %v2349 = vand.u32 %v2129, 4294901760
        %v2350 = vsub.f32 %v2129, %v2349
        %v2351 = vand.u32 %v2350, 4294901760
        %2352 = vmatpush.msra.mxu0 %v2351
        %v2353 = vand.u32 %v2128, 4294901760
        %v2354 = vsub.f32 %v2128, %v2353
        %v2355 = vand.u32 %v2354, 4294901760
        %2356 = vmatpush.msra.mxu0 %v2355
        %v2357 = vand.u32 %v2127, 4294901760
        %v2358 = vsub.f32 %v2127, %v2357
        %v2359 = vand.u32 %v2358, 4294901760
        %2360 = vmatpush.msra.mxu0 %v2359
        %v2361 = vand.u32 %v573, 4294901760
        %2362 = vmatmul.f32.gmra.mxu0 %v2361
        %v2363 = vpop.f32.mrf.mxu0
        %v2364 = vadd.f32 %v2313, %v2363
        %v2365 = vand.u32 %v576, 4294901760
        %2366 = vmatmul.f32.gmra.mxu0 %v2365
        %v2367 = vpop.f32.mrf.mxu0
        %v2368 = vadd.f32 %v2319, %v2367
        %2369 = vdwg.mxu0
        %2370 = vmatpush.msra.mxu0 0.0
        %2371 = vmatpush.msra.mxu0 0.0
        %2372 = vmatpush.msra.mxu0 0.0
        %2373 = vmatpush.msra.mxu0 0.0
        %2374 = vmatpush.msra.mxu0 0.0
        %2375 = vmatpush.msra.mxu0 0.0
        %2376 = vmatpush.msra.mxu0 0.0
        %2377 = vmatpush.msra.mxu0 0.0
        %v2378 = vand.u32 %v2134, 4294901760
        %2379 = vmatpush.msra.mxu0 %v2378
        %v2380 = vand.u32 %v2133, 4294901760
        %2381 = vmatpush.msra.mxu0 %v2380
        %v2382 = vand.u32 %v2132, 4294901760
        %2383 = vmatpush.msra.mxu0 %v2382
        %v2384 = vand.u32 %v2131, 4294901760
        %2385 = vmatpush.msra.mxu0 %v2384
        %v2386 = vand.u32 %v2130, 4294901760
        %2387 = vmatpush.msra.mxu0 %v2386
        %v2388 = vand.u32 %v2129, 4294901760
        %2389 = vmatpush.msra.mxu0 %v2388
        %v2390 = vand.u32 %v2128, 4294901760
        %2391 = vmatpush.msra.mxu0 %v2390
        %v2392 = vand.u32 %v2127, 4294901760
        %2393 = vmatpush.msra.mxu0 %v2392
        %v2394 = vand.u32 %v573, 4294901760
        %2395 = vmatmul.f32.gmra.mxu0 %v2394
        %v2396 = vpop.f32.mrf.mxu0
        %v2397 = vadd.f32 %v2364, %v2396
        %v2398 = vand.u32 %v576, 4294901760
        %2399 = vmatmul.f32.gmra.mxu0 %v2398
        %v2400 = vpop.f32.mrf.mxu0
        %v2401 = vadd.f32 %v2368, %v2400
        %2402 = vdwg.mxu0
        %s2403 = scalar_lea.vmem %s5, 64
        %v2404 = vld [vmem:[%s2403] sm:$0xff]
        %v2405 = vld [vmem:[%s2403 + $0x8] sm:$0xff]
        %v2406 = vld [vmem:[%s2403 + $0x10] sm:$0xff]
        %v2407 = vld [vmem:[%s2403 + $0x18] sm:$0xff]
        %v2408 = vld [vmem:[%s2403 + $0x20] sm:$0xff]
        %v2409 = vld [vmem:[%s2403 + $0x28] sm:$0xff]
        %v2410 = vld [vmem:[%s2403 + $0x30] sm:$0xff]
        %v2411 = vld [vmem:[%s2403 + $0x38] sm:$0xff]
        %2412 = vmatpush.msra.mxu0 0.0
        %2413 = vmatpush.msra.mxu0 0.0
        %2414 = vmatpush.msra.mxu0 0.0
        %2415 = vmatpush.msra.mxu0 0.0
        %2416 = vmatpush.msra.mxu0 0.0
        %2417 = vmatpush.msra.mxu0 0.0
        %2418 = vmatpush.msra.mxu0 0.0
        %2419 = vmatpush.msra.mxu0 0.0
        %v2420 = vand.u32 %v2411, 4294901760
        %2421 = vmatpush.msra.mxu0 %v2420
        %v2422 = vand.u32 %v2410, 4294901760
        %2423 = vmatpush.msra.mxu0 %v2422
        %v2424 = vand.u32 %v2409, 4294901760
        %2425 = vmatpush.msra.mxu0 %v2424
        %v2426 = vand.u32 %v2408, 4294901760
        %2427 = vmatpush.msra.mxu0 %v2426
        %v2428 = vand.u32 %v2407, 4294901760
        %2429 = vmatpush.msra.mxu0 %v2428
        %v2430 = vand.u32 %v2406, 4294901760
        %2431 = vmatpush.msra.mxu0 %v2430
        %v2432 = vand.u32 %v2405, 4294901760
        %2433 = vmatpush.msra.mxu0 %v2432
        %v2434 = vand.u32 %v2404, 4294901760
        %2435 = vmatpush.msra.mxu0 %v2434
        %v2436 = vand.u32 %v573, 4294901760
        %v2437 = vsub.f32 %v573, %v2436
        %v2438 = vand.u32 %v2437, 4294901760
        %v2439 = vsub.f32 %v2437, %v2438
        %v2440 = vand.u32 %v2439, 4294901760
        %2441 = vmatmul.f32.gmra.mxu0 %v2440
        %v2442 = vpop.f32.mrf.mxu0
        %v2443 = vadd.f32 0.0, %v2442
        %v2444 = vand.u32 %v576, 4294901760
        %v2445 = vsub.f32 %v576, %v2444
        %v2446 = vand.u32 %v2445, 4294901760
        %v2447 = vsub.f32 %v2445, %v2446
        %v2448 = vand.u32 %v2447, 4294901760
        %2449 = vmatmul.f32.gmra.mxu0 %v2448
        %v2450 = vpop.f32.mrf.mxu0
        %v2451 = vadd.f32 0.0, %v2450
        %2452 = vdwg.mxu0
        %2453 = vmatpush.msra.mxu0 0.0
        %2454 = vmatpush.msra.mxu0 0.0
        %2455 = vmatpush.msra.mxu0 0.0
        %2456 = vmatpush.msra.mxu0 0.0
        %2457 = vmatpush.msra.mxu0 0.0
        %2458 = vmatpush.msra.mxu0 0.0
        %2459 = vmatpush.msra.mxu0 0.0
        %2460 = vmatpush.msra.mxu0 0.0
        %v2461 = vand.u32 %v2411, 4294901760
        %v2462 = vsub.f32 %v2411, %v2461
        %v2463 = vand.u32 %v2462, 4294901760
        %v2464 = vsub.f32 %v2462, %v2463
        %v2465 = vand.u32 %v2464, 4294901760
        %2466 = vmatpush.msra.mxu0 %v2465
        %v2467 = vand.u32 %v2410, 4294901760
        %v2468 = vsub.f32 %v2410, %v2467
        %v2469 = vand.u32 %v2468, 4294901760
        %v2470 = vsub.f32 %v2468, %v2469
        %v2471 = vand.u32 %v2470, 4294901760
        %2472 = vmatpush.msra.mxu0 %v2471
        %v2473 = vand.u32 %v2409, 4294901760
        %v2474 = vsub.f32 %v2409, %v2473
        %v2475 = vand.u32 %v2474, 4294901760
        %v2476 = vsub.f32 %v2474, %v2475
        %v2477 = vand.u32 %v2476, 4294901760
        %2478 = vmatpush.msra.mxu0 %v2477
        %v2479 = vand.u32 %v2408, 4294901760
        %v2480 = vsub.f32 %v2408, %v2479
        %v2481 = vand.u32 %v2480, 4294901760
        %v2482 = vsub.f32 %v2480, %v2481
        %v2483 = vand.u32 %v2482, 4294901760
        %2484 = vmatpush.msra.mxu0 %v2483
        %v2485 = vand.u32 %v2407, 4294901760
        %v2486 = vsub.f32 %v2407, %v2485
        %v2487 = vand.u32 %v2486, 4294901760
        %v2488 = vsub.f32 %v2486, %v2487
        %v2489 = vand.u32 %v2488, 4294901760
        %2490 = vmatpush.msra.mxu0 %v2489
        %v2491 = vand.u32 %v2406, 4294901760
        %v2492 = vsub.f32 %v2406, %v2491
        %v2493 = vand.u32 %v2492, 4294901760
        %v2494 = vsub.f32 %v2492, %v2493
        %v2495 = vand.u32 %v2494, 4294901760
        %2496 = vmatpush.msra.mxu0 %v2495
        %v2497 = vand.u32 %v2405, 4294901760
        %v2498 = vsub.f32 %v2405, %v2497
        %v2499 = vand.u32 %v2498, 4294901760
        %v2500 = vsub.f32 %v2498, %v2499
        %v2501 = vand.u32 %v2500, 4294901760
        %2502 = vmatpush.msra.mxu0 %v2501
        %v2503 = vand.u32 %v2404, 4294901760
        %v2504 = vsub.f32 %v2404, %v2503
        %v2505 = vand.u32 %v2504, 4294901760
        %v2506 = vsub.f32 %v2504, %v2505
        %v2507 = vand.u32 %v2506, 4294901760
        %2508 = vmatpush.msra.mxu0 %v2507
        %v2509 = vand.u32 %v573, 4294901760
        %2510 = vmatmul.f32.gmra.mxu0 %v2509
        %v2511 = vpop.f32.mrf.mxu0
        %v2512 = vadd.f32 %v2443, %v2511
        %v2513 = vand.u32 %v576, 4294901760
        %2514 = vmatmul.f32.gmra.mxu0 %v2513
        %v2515 = vpop.f32.mrf.mxu0
        %v2516 = vadd.f32 %v2451, %v2515
        %2517 = vdwg.mxu0
        %2518 = vmatpush.msra.mxu0 0.0
        %2519 = vmatpush.msra.mxu0 0.0
        %2520 = vmatpush.msra.mxu0 0.0
        %2521 = vmatpush.msra.mxu0 0.0
        %2522 = vmatpush.msra.mxu0 0.0
        %2523 = vmatpush.msra.mxu0 0.0
        %2524 = vmatpush.msra.mxu0 0.0
        %2525 = vmatpush.msra.mxu0 0.0
        %v2526 = vand.u32 %v2411, 4294901760
        %v2527 = vsub.f32 %v2411, %v2526
        %2528 = vmatpush.msra.mxu0 %v2527
        %v2529 = vand.u32 %v2410, 4294901760
        %v2530 = vsub.f32 %v2410, %v2529
        %2531 = vmatpush.msra.mxu0 %v2530
        %v2532 = vand.u32 %v2409, 4294901760
        %v2533 = vsub.f32 %v2409, %v2532
        %2534 = vmatpush.msra.mxu0 %v2533
        %v2535 = vand.u32 %v2408, 4294901760
        %v2536 = vsub.f32 %v2408, %v2535
        %2537 = vmatpush.msra.mxu0 %v2536
        %v2538 = vand.u32 %v2407, 4294901760
        %v2539 = vsub.f32 %v2407, %v2538
        %2540 = vmatpush.msra.mxu0 %v2539
        %v2541 = vand.u32 %v2406, 4294901760
        %v2542 = vsub.f32 %v2406, %v2541
        %2543 = vmatpush.msra.mxu0 %v2542
        %v2544 = vand.u32 %v2405, 4294901760
        %v2545 = vsub.f32 %v2405, %v2544
        %2546 = vmatpush.msra.mxu0 %v2545
        %v2547 = vand.u32 %v2404, 4294901760
        %v2548 = vsub.f32 %v2404, %v2547
        %2549 = vmatpush.msra.mxu0 %v2548
        %v2550 = vand.u32 %v573, 4294901760
        %v2551 = vsub.f32 %v573, %v2550
        %2552 = vmatmul.f32.gmra.mxu0 %v2551
        %v2553 = vpop.f32.mrf.mxu0
        %v2554 = vadd.f32 %v2512, %v2553
        %v2555 = vand.u32 %v576, 4294901760
        %v2556 = vsub.f32 %v576, %v2555
        %2557 = vmatmul.f32.gmra.mxu0 %v2556
        %v2558 = vpop.f32.mrf.mxu0
        %v2559 = vadd.f32 %v2516, %v2558
        %2560 = vdwg.mxu0
        %2561 = vmatpush.msra.mxu0 0.0
        %2562 = vmatpush.msra.mxu0 0.0
        %2563 = vmatpush.msra.mxu0 0.0
        %2564 = vmatpush.msra.mxu0 0.0
        %2565 = vmatpush.msra.mxu0 0.0
        %2566 = vmatpush.msra.mxu0 0.0
        %2567 = vmatpush.msra.mxu0 0.0
        %2568 = vmatpush.msra.mxu0 0.0
        %v2569 = vand.u32 %v2411, 4294901760
        %2570 = vmatpush.msra.mxu0 %v2569
        %v2571 = vand.u32 %v2410, 4294901760
        %2572 = vmatpush.msra.mxu0 %v2571
        %v2573 = vand.u32 %v2409, 4294901760
        %2574 = vmatpush.msra.mxu0 %v2573
        %v2575 = vand.u32 %v2408, 4294901760
        %2576 = vmatpush.msra.mxu0 %v2575
        %v2577 = vand.u32 %v2407, 4294901760
        %2578 = vmatpush.msra.mxu0 %v2577
        %v2579 = vand.u32 %v2406, 4294901760
        %2580 = vmatpush.msra.mxu0 %v2579
        %v2581 = vand.u32 %v2405, 4294901760
        %2582 = vmatpush.msra.mxu0 %v2581
        %v2583 = vand.u32 %v2404, 4294901760
        %2584 = vmatpush.msra.mxu0 %v2583
        %v2585 = vand.u32 %v573, 4294901760
        %v2586 = vsub.f32 %v573, %v2585
        %v2587 = vand.u32 %v2586, 4294901760
        %2588 = vmatmul.f32.gmra.mxu0 %v2587
        %v2589 = vpop.f32.mrf.mxu0
        %v2590 = vadd.f32 %v2554, %v2589
        %v2591 = vand.u32 %v576, 4294901760
        %v2592 = vsub.f32 %v576, %v2591
        %v2593 = vand.u32 %v2592, 4294901760
        %2594 = vmatmul.f32.gmra.mxu0 %v2593
        %v2595 = vpop.f32.mrf.mxu0
        %v2596 = vadd.f32 %v2559, %v2595
        %2597 = vdwg.mxu0
        %2598 = vmatpush.msra.mxu0 0.0
        %2599 = vmatpush.msra.mxu0 0.0
        %2600 = vmatpush.msra.mxu0 0.0
        %2601 = vmatpush.msra.mxu0 0.0
        %2602 = vmatpush.msra.mxu0 0.0
        %2603 = vmatpush.msra.mxu0 0.0
        %2604 = vmatpush.msra.mxu0 0.0
        %2605 = vmatpush.msra.mxu0 0.0
        %v2606 = vand.u32 %v2411, 4294901760
        %v2607 = vsub.f32 %v2411, %v2606
        %v2608 = vand.u32 %v2607, 4294901760
        %2609 = vmatpush.msra.mxu0 %v2608
        %v2610 = vand.u32 %v2410, 4294901760
        %v2611 = vsub.f32 %v2410, %v2610
        %v2612 = vand.u32 %v2611, 4294901760
        %2613 = vmatpush.msra.mxu0 %v2612
        %v2614 = vand.u32 %v2409, 4294901760
        %v2615 = vsub.f32 %v2409, %v2614
        %v2616 = vand.u32 %v2615, 4294901760
        %2617 = vmatpush.msra.mxu0 %v2616
        %v2618 = vand.u32 %v2408, 4294901760
        %v2619 = vsub.f32 %v2408, %v2618
        %v2620 = vand.u32 %v2619, 4294901760
        %2621 = vmatpush.msra.mxu0 %v2620
        %v2622 = vand.u32 %v2407, 4294901760
        %v2623 = vsub.f32 %v2407, %v2622
        %v2624 = vand.u32 %v2623, 4294901760
        %2625 = vmatpush.msra.mxu0 %v2624
        %v2626 = vand.u32 %v2406, 4294901760
        %v2627 = vsub.f32 %v2406, %v2626
        %v2628 = vand.u32 %v2627, 4294901760
        %2629 = vmatpush.msra.mxu0 %v2628
        %v2630 = vand.u32 %v2405, 4294901760
        %v2631 = vsub.f32 %v2405, %v2630
        %v2632 = vand.u32 %v2631, 4294901760
        %2633 = vmatpush.msra.mxu0 %v2632
        %v2634 = vand.u32 %v2404, 4294901760
        %v2635 = vsub.f32 %v2404, %v2634
        %v2636 = vand.u32 %v2635, 4294901760
        %2637 = vmatpush.msra.mxu0 %v2636
        %v2638 = vand.u32 %v573, 4294901760
        %2639 = vmatmul.f32.gmra.mxu0 %v2638
        %v2640 = vpop.f32.mrf.mxu0
        %v2641 = vadd.f32 %v2590, %v2640
        %v2642 = vand.u32 %v576, 4294901760
        %2643 = vmatmul.f32.gmra.mxu0 %v2642
        %v2644 = vpop.f32.mrf.mxu0
        %v2645 = vadd.f32 %v2596, %v2644
        %2646 = vdwg.mxu0
        %2647 = vmatpush.msra.mxu0 0.0
        %2648 = vmatpush.msra.mxu0 0.0
        %2649 = vmatpush.msra.mxu0 0.0
        %2650 = vmatpush.msra.mxu0 0.0
        %2651 = vmatpush.msra.mxu0 0.0
        %2652 = vmatpush.msra.mxu0 0.0
        %2653 = vmatpush.msra.mxu0 0.0
        %2654 = vmatpush.msra.mxu0 0.0
        %v2655 = vand.u32 %v2411, 4294901760
        %2656 = vmatpush.msra.mxu0 %v2655
        %v2657 = vand.u32 %v2410, 4294901760
        %2658 = vmatpush.msra.mxu0 %v2657
        %v2659 = vand.u32 %v2409, 4294901760
        %2660 = vmatpush.msra.mxu0 %v2659
        %v2661 = vand.u32 %v2408, 4294901760
        %2662 = vmatpush.msra.mxu0 %v2661
        %v2663 = vand.u32 %v2407, 4294901760
        %2664 = vmatpush.msra.mxu0 %v2663
        %v2665 = vand.u32 %v2406, 4294901760
        %2666 = vmatpush.msra.mxu0 %v2665
        %v2667 = vand.u32 %v2405, 4294901760
        %2668 = vmatpush.msra.mxu0 %v2667
        %v2669 = vand.u32 %v2404, 4294901760
        %2670 = vmatpush.msra.mxu0 %v2669
        %v2671 = vand.u32 %v573, 4294901760
        %2672 = vmatmul.f32.gmra.mxu0 %v2671
        %v2673 = vpop.f32.mrf.mxu0
        %v2674 = vadd.f32 %v2641, %v2673
        %v2675 = vand.u32 %v576, 4294901760
        %2676 = vmatmul.f32.gmra.mxu0 %v2675
        %v2677 = vpop.f32.mrf.mxu0
        %v2678 = vadd.f32 %v2645, %v2677
        %2679 = vdwg.mxu0
        %v2681 = vsel %vm1398, %v2120, 0
        %v2684 = vsel %vm1398, %v2124, 0
        %v2687 = vsel %vm1398, %v2397, 0
        %v2690 = vsel %vm1398, %v2401, 0
        %2692 = vmatpush.xpose.msra.mxu0 0.0
        %2693 = vmatpush.xpose.msra.mxu0 0.0
        %2694 = vmatpush.xpose.msra.mxu0 0.0
        %2695 = vmatpush.xpose.msra.mxu0 0.0
        %2696 = vmatpush.xpose.msra.mxu0 0.0
        %2697 = vmatpush.xpose.msra.mxu0 0.0
        %2698 = vmatpush.xpose.msra.mxu0 0.0
        %2699 = vmatpush.xpose.msra.mxu0 0.0
        %2700 = vmatpush.xpose.msra.mxu0 0.0
        %2701 = vmatpush.xpose.msra.mxu0 0.0
        %2702 = vmatpush.xpose.msra.mxu0 0.0
        %2703 = vmatpush.xpose.msra.mxu0 0.0
        %2704 = vmatpush.xpose.msra.mxu0 0.0
        %2705 = vmatpush.xpose.msra.mxu0 0.0
        %v2706 = vand.u32 %v2690, 4294901760
        %2707 = vmatpush.xpose.msra.mxu0 %v2706
        %v2708 = vand.u32 %v2687, 4294901760
        %2709 = vmatpush.xpose.msra.mxu0 %v2708
        %v2710 = vand.u32 %v2681, 4294901760
        %v2711 = vsub.f32 %v2681, %v2710
        %v2712 = vand.u32 %v2711, 4294901760
        %v2713 = vsub.f32 %v2711, %v2712
        %v2714 = vand.u32 %v2713, 4294901760
        %2715 = vmatmul.f32.gmra.mxu0 %v2714
        %v2716 = vpop.f32.mrf.mxu0
        %v2717 = vadd.f32 0.0, %v2716
        %v2718 = vand.u32 %v2684, 4294901760
        %v2719 = vsub.f32 %v2684, %v2718
        %v2720 = vand.u32 %v2719, 4294901760
        %v2721 = vsub.f32 %v2719, %v2720
        %v2722 = vand.u32 %v2721, 4294901760
        %2723 = vmatmul.f32.gmra.mxu0 %v2722
        %v2724 = vpop.f32.mrf.mxu0
        %v2725 = vadd.f32 0.0, %v2724
        %2726 = vdwg.mxu0
        %2727 = vmatpush.xpose.msra.mxu0 0.0
        %2728 = vmatpush.xpose.msra.mxu0 0.0
        %2729 = vmatpush.xpose.msra.mxu0 0.0
        %2730 = vmatpush.xpose.msra.mxu0 0.0
        %2731 = vmatpush.xpose.msra.mxu0 0.0
        %2732 = vmatpush.xpose.msra.mxu0 0.0
        %2733 = vmatpush.xpose.msra.mxu0 0.0
        %2734 = vmatpush.xpose.msra.mxu0 0.0
        %2735 = vmatpush.xpose.msra.mxu0 0.0
        %2736 = vmatpush.xpose.msra.mxu0 0.0
        %2737 = vmatpush.xpose.msra.mxu0 0.0
        %2738 = vmatpush.xpose.msra.mxu0 0.0
        %2739 = vmatpush.xpose.msra.mxu0 0.0
        %2740 = vmatpush.xpose.msra.mxu0 0.0
        %v2741 = vand.u32 %v2690, 4294901760
        %v2742 = vsub.f32 %v2690, %v2741
        %v2743 = vand.u32 %v2742, 4294901760
        %v2744 = vsub.f32 %v2742, %v2743
        %v2745 = vand.u32 %v2744, 4294901760
        %2746 = vmatpush.xpose.msra.mxu0 %v2745
        %v2747 = vand.u32 %v2687, 4294901760
        %v2748 = vsub.f32 %v2687, %v2747
        %v2749 = vand.u32 %v2748, 4294901760
        %v2750 = vsub.f32 %v2748, %v2749
        %v2751 = vand.u32 %v2750, 4294901760
        %2752 = vmatpush.xpose.msra.mxu0 %v2751
        %v2753 = vand.u32 %v2681, 4294901760
        %2754 = vmatmul.f32.gmra.mxu0 %v2753
        %v2755 = vpop.f32.mrf.mxu0
        %v2756 = vadd.f32 %v2717, %v2755
        %v2757 = vand.u32 %v2684, 4294901760
        %2758 = vmatmul.f32.gmra.mxu0 %v2757
        %v2759 = vpop.f32.mrf.mxu0
        %v2760 = vadd.f32 %v2725, %v2759
        %2761 = vdwg.mxu0
        %2762 = vmatpush.xpose.msra.mxu0 0.0
        %2763 = vmatpush.xpose.msra.mxu0 0.0
        %2764 = vmatpush.xpose.msra.mxu0 0.0
        %2765 = vmatpush.xpose.msra.mxu0 0.0
        %2766 = vmatpush.xpose.msra.mxu0 0.0
        %2767 = vmatpush.xpose.msra.mxu0 0.0
        %2768 = vmatpush.xpose.msra.mxu0 0.0
        %2769 = vmatpush.xpose.msra.mxu0 0.0
        %2770 = vmatpush.xpose.msra.mxu0 0.0
        %2771 = vmatpush.xpose.msra.mxu0 0.0
        %2772 = vmatpush.xpose.msra.mxu0 0.0
        %2773 = vmatpush.xpose.msra.mxu0 0.0
        %2774 = vmatpush.xpose.msra.mxu0 0.0
        %2775 = vmatpush.xpose.msra.mxu0 0.0
        %v2776 = vand.u32 %v2690, 4294901760
        %v2777 = vsub.f32 %v2690, %v2776
        %2778 = vmatpush.xpose.msra.mxu0 %v2777
        %v2779 = vand.u32 %v2687, 4294901760
        %v2780 = vsub.f32 %v2687, %v2779
        %2781 = vmatpush.xpose.msra.mxu0 %v2780
        %v2782 = vand.u32 %v2681, 4294901760
        %v2783 = vsub.f32 %v2681, %v2782
        %2784 = vmatmul.f32.gmra.mxu0 %v2783
        %v2785 = vpop.f32.mrf.mxu0
        %v2786 = vadd.f32 %v2756, %v2785
        %v2787 = vand.u32 %v2684, 4294901760
        %v2788 = vsub.f32 %v2684, %v2787
        %2789 = vmatmul.f32.gmra.mxu0 %v2788
        %v2790 = vpop.f32.mrf.mxu0
        %v2791 = vadd.f32 %v2760, %v2790
        %2792 = vdwg.mxu0
        %2793 = vmatpush.xpose.msra.mxu0 0.0
        %2794 = vmatpush.xpose.msra.mxu0 0.0
        %2795 = vmatpush.xpose.msra.mxu0 0.0
        %2796 = vmatpush.xpose.msra.mxu0 0.0
        %2797 = vmatpush.xpose.msra.mxu0 0.0
        %2798 = vmatpush.xpose.msra.mxu0 0.0
        %2799 = vmatpush.xpose.msra.mxu0 0.0
        %2800 = vmatpush.xpose.msra.mxu0 0.0
        %2801 = vmatpush.xpose.msra.mxu0 0.0
        %2802 = vmatpush.xpose.msra.mxu0 0.0
        %2803 = vmatpush.xpose.msra.mxu0 0.0
        %2804 = vmatpush.xpose.msra.mxu0 0.0
        %2805 = vmatpush.xpose.msra.mxu0 0.0
        %2806 = vmatpush.xpose.msra.mxu0 0.0
        %v2807 = vand.u32 %v2690, 4294901760
        %2808 = vmatpush.xpose.msra.mxu0 %v2807
        %v2809 = vand.u32 %v2687, 4294901760
        %2810 = vmatpush.xpose.msra.mxu0 %v2809
        %v2811 = vand.u32 %v2681, 4294901760
        %v2812 = vsub.f32 %v2681, %v2811
        %v2813 = vand.u32 %v2812, 4294901760
        %2814 = vmatmul.f32.gmra.mxu0 %v2813
        %v2815 = vpop.f32.mrf.mxu0
        %v2816 = vadd.f32 %v2786, %v2815
        %v2817 = vand.u32 %v2684, 4294901760
        %v2818 = vsub.f32 %v2684, %v2817
        %v2819 = vand.u32 %v2818, 4294901760
        %2820 = vmatmul.f32.gmra.mxu0 %v2819
        %v2821 = vpop.f32.mrf.mxu0
        %v2822 = vadd.f32 %v2791, %v2821
        %2823 = vdwg.mxu0
        %2824 = vmatpush.xpose.msra.mxu0 0.0
        %2825 = vmatpush.xpose.msra.mxu0 0.0
        %2826 = vmatpush.xpose.msra.mxu0 0.0
        %2827 = vmatpush.xpose.msra.mxu0 0.0
        %2828 = vmatpush.xpose.msra.mxu0 0.0
        %2829 = vmatpush.xpose.msra.mxu0 0.0
        %2830 = vmatpush.xpose.msra.mxu0 0.0
        %2831 = vmatpush.xpose.msra.mxu0 0.0
        %2832 = vmatpush.xpose.msra.mxu0 0.0
        %2833 = vmatpush.xpose.msra.mxu0 0.0
        %2834 = vmatpush.xpose.msra.mxu0 0.0
        %2835 = vmatpush.xpose.msra.mxu0 0.0
        %2836 = vmatpush.xpose.msra.mxu0 0.0
        %2837 = vmatpush.xpose.msra.mxu0 0.0
        %v2838 = vand.u32 %v2690, 4294901760
        %v2839 = vsub.f32 %v2690, %v2838
        %v2840 = vand.u32 %v2839, 4294901760
        %2841 = vmatpush.xpose.msra.mxu0 %v2840
        %v2842 = vand.u32 %v2687, 4294901760
        %v2843 = vsub.f32 %v2687, %v2842
        %v2844 = vand.u32 %v2843, 4294901760
        %2845 = vmatpush.xpose.msra.mxu0 %v2844
        %v2846 = vand.u32 %v2681, 4294901760
        %2847 = vmatmul.f32.gmra.mxu0 %v2846
        %v2848 = vpop.f32.mrf.mxu0
        %v2849 = vadd.f32 %v2816, %v2848
        %v2850 = vand.u32 %v2684, 4294901760
        %2851 = vmatmul.f32.gmra.mxu0 %v2850
        %v2852 = vpop.f32.mrf.mxu0
        %v2853 = vadd.f32 %v2822, %v2852
        %2854 = vdwg.mxu0
        %2855 = vmatpush.xpose.msra.mxu0 0.0
        %2856 = vmatpush.xpose.msra.mxu0 0.0
        %2857 = vmatpush.xpose.msra.mxu0 0.0
        %2858 = vmatpush.xpose.msra.mxu0 0.0
        %2859 = vmatpush.xpose.msra.mxu0 0.0
        %2860 = vmatpush.xpose.msra.mxu0 0.0
        %2861 = vmatpush.xpose.msra.mxu0 0.0
        %2862 = vmatpush.xpose.msra.mxu0 0.0
        %2863 = vmatpush.xpose.msra.mxu0 0.0
        %2864 = vmatpush.xpose.msra.mxu0 0.0
        %2865 = vmatpush.xpose.msra.mxu0 0.0
        %2866 = vmatpush.xpose.msra.mxu0 0.0
        %2867 = vmatpush.xpose.msra.mxu0 0.0
        %2868 = vmatpush.xpose.msra.mxu0 0.0
        %v2869 = vand.u32 %v2690, 4294901760
        %2870 = vmatpush.xpose.msra.mxu0 %v2869
        %v2871 = vand.u32 %v2687, 4294901760
        %2872 = vmatpush.xpose.msra.mxu0 %v2871
        %v2873 = vand.u32 %v2681, 4294901760
        %2874 = vmatmul.f32.gmra.mxu0 %v2873
        %v2875 = vpop.f32.mrf.mxu0
        %v2876 = vadd.f32 %v2849, %v2875
        %v2877 = vand.u32 %v2684, 4294901760
        %2878 = vmatmul.f32.gmra.mxu0 %v2877
        %v2879 = vpop.f32.mrf.mxu0
        %v2880 = vadd.f32 %v2853, %v2879
        %2881 = vdwg.mxu0
        %v2882 = vmul.f32 %v2876, 0.125
        %v2883 = vmul.f32 %v2880, 0.125
        %v2884 = vsel %vm1398, %v2882, -inf
        %2885 = vmax.xlane.f32.xlu0 %v2884
        %v2886 = vpop.xlane.xlu0 %2885
        %v2887 = vsel %vm1398, %v2883, -inf
        %2888 = vmax.xlane.f32.xlu0 %v2887
        %v2889 = vpop.xlane.xlu0 %2888
        %v2890 = vsub.f32 %v2882, %v2886
        %v2891 = vsub.f32 %v2883, %v2889
        %v2892 = vmul.f32 %v2890, 1.442695
        %v2893 = vpow.pop %v2892
        %v2894 = vmul.f32 %v2891, 1.442695
        %v2895 = vpow.pop %v2894
        %v2896 = vsel %vm1398, %v2893, 0.0
        %2897 = vadd.xlane.f32.xlu0 %v2896
        %v2898 = vpop.xlane.xlu0 %2897
        %v2899 = vsel %vm1398, %v2895, 0.0
        %2900 = vadd.xlane.f32.xlu0 %v2899
        %v2901 = vpop.xlane.xlu0 %2900
        %v2902 = vrcp.pop %v2898
        %v2903 = vmul.f32 %v2898, %v2902
        %v2904 = vsub.f32 1.0, %v2903
        %v2905 = vmul.f32 %v2902, %v2904
        %v2906 = vadd.f32 %v2902, %v2905
        %vm2907 = vweird.f32 %v2898
        %vm2908 = vweird.f32 %v2902
        %vm2909 = vmor %vm2907, %vm2908
        %v2910 = vsel %vm2909, %v2902, %v2906
        %v2911 = vand.u32 2147483647, %v2898
        %vm2912 = vcmp.eq.f32.partialorder %v2911, 8.507059e+37
        %v2913 = vand.u32 %v2898, 2147483648
        %v2914 = vor.u32 1.1754944e-38, %v2913
        %v2915 = vsel %vm2912, %v2914, %v2910
        %v2916 = vmul.f32 %v2893, %v2915
        %v2917 = vrcp.pop %v2901
        %v2918 = vmul.f32 %v2901, %v2917
        %v2919 = vsub.f32 1.0, %v2918
        %v2920 = vmul.f32 %v2917, %v2919
        %v2921 = vadd.f32 %v2917, %v2920
        %vm2922 = vweird.f32 %v2901
        %vm2923 = vweird.f32 %v2917
        %vm2924 = vmor %vm2922, %vm2923
        %v2925 = vsel %vm2924, %v2917, %v2921
        %v2926 = vand.u32 2147483647, %v2901
        %vm2927 = vcmp.eq.f32.partialorder %v2926, 8.507059e+37
        %v2928 = vand.u32 %v2901, 2147483648
        %v2929 = vor.u32 1.1754944e-38, %v2928
        %v2930 = vsel %vm2927, %v2929, %v2925
        %v2931 = vmul.f32 %v2895, %v2930
        %v2933 = vsel %vm1398, %v2916, 0
        %v2936 = vsel %vm1398, %v2931, 0
        %2938 = vmatpush.msra.mxu0 0.0
        %2939 = vmatpush.msra.mxu0 0.0
        %2940 = vmatpush.msra.mxu0 0.0
        %2941 = vmatpush.msra.mxu0 0.0
        %2942 = vmatpush.msra.mxu0 0.0
        %2943 = vmatpush.msra.mxu0 0.0
        %2944 = vmatpush.msra.mxu0 0.0
        %2945 = vmatpush.msra.mxu0 0.0
        %2946 = vmatpush.msra.mxu0 0.0
        %2947 = vmatpush.msra.mxu0 0.0
        %2948 = vmatpush.msra.mxu0 0.0
        %2949 = vmatpush.msra.mxu0 0.0
        %2950 = vmatpush.msra.mxu0 0.0
        %2951 = vmatpush.msra.mxu0 0.0
        %v2952 = vand.u32 %v2678, 4294901760
        %2953 = vmatpush.msra.mxu0 %v2952
        %v2954 = vand.u32 %v2674, 4294901760
        %2955 = vmatpush.msra.mxu0 %v2954
        %v2956 = vand.u32 %v2933, 4294901760
        %v2957 = vsub.f32 %v2933, %v2956
        %v2958 = vand.u32 %v2957, 4294901760
        %v2959 = vsub.f32 %v2957, %v2958
        %v2960 = vand.u32 %v2959, 4294901760
        %2961 = vmatmul.f32.gmra.mxu0 %v2960
        %v2962 = vpop.f32.mrf.mxu0
        %v2963 = vadd.f32 0.0, %v2962
        %v2964 = vand.u32 %v2936, 4294901760
        %v2965 = vsub.f32 %v2936, %v2964
        %v2966 = vand.u32 %v2965, 4294901760
        %v2967 = vsub.f32 %v2965, %v2966
        %v2968 = vand.u32 %v2967, 4294901760
        %2969 = vmatmul.f32.gmra.mxu0 %v2968
        %v2970 = vpop.f32.mrf.mxu0
        %v2971 = vadd.f32 0.0, %v2970
        %2972 = vdwg.mxu0
        %2973 = vmatpush.msra.mxu0 0.0
        %2974 = vmatpush.msra.mxu0 0.0
        %2975 = vmatpush.msra.mxu0 0.0
        %2976 = vmatpush.msra.mxu0 0.0
        %2977 = vmatpush.msra.mxu0 0.0
        %2978 = vmatpush.msra.mxu0 0.0
        %2979 = vmatpush.msra.mxu0 0.0
        %2980 = vmatpush.msra.mxu0 0.0
        %2981 = vmatpush.msra.mxu0 0.0
        %2982 = vmatpush.msra.mxu0 0.0
        %2983 = vmatpush.msra.mxu0 0.0
        %2984 = vmatpush.msra.mxu0 0.0
        %2985 = vmatpush.msra.mxu0 0.0
        %2986 = vmatpush.msra.mxu0 0.0
        %v2987 = vand.u32 %v2678, 4294901760
        %v2988 = vsub.f32 %v2678, %v2987
        %v2989 = vand.u32 %v2988, 4294901760
        %v2990 = vsub.f32 %v2988, %v2989
        %v2991 = vand.u32 %v2990, 4294901760
        %2992 = vmatpush.msra.mxu0 %v2991
        %v2993 = vand.u32 %v2674, 4294901760
        %v2994 = vsub.f32 %v2674, %v2993
        %v2995 = vand.u32 %v2994, 4294901760
        %v2996 = vsub.f32 %v2994, %v2995
        %v2997 = vand.u32 %v2996, 4294901760
        %2998 = vmatpush.msra.mxu0 %v2997
        %v2999 = vand.u32 %v2933, 4294901760
        %3000 = vmatmul.f32.gmra.mxu0 %v2999
        %v3001 = vpop.f32.mrf.mxu0
        %v3002 = vadd.f32 %v2963, %v3001
        %v3003 = vand.u32 %v2936, 4294901760
        %3004 = vmatmul.f32.gmra.mxu0 %v3003
        %v3005 = vpop.f32.mrf.mxu0
        %v3006 = vadd.f32 %v2971, %v3005
        %3007 = vdwg.mxu0
        %3008 = vmatpush.msra.mxu0 0.0
        %3009 = vmatpush.msra.mxu0 0.0
        %3010 = vmatpush.msra.mxu0 0.0
        %3011 = vmatpush.msra.mxu0 0.0
        %3012 = vmatpush.msra.mxu0 0.0
        %3013 = vmatpush.msra.mxu0 0.0
        %3014 = vmatpush.msra.mxu0 0.0
        %3015 = vmatpush.msra.mxu0 0.0
        %3016 = vmatpush.msra.mxu0 0.0
        %3017 = vmatpush.msra.mxu0 0.0
        %3018 = vmatpush.msra.mxu0 0.0
        %3019 = vmatpush.msra.mxu0 0.0
        %3020 = vmatpush.msra.mxu0 0.0
        %3021 = vmatpush.msra.mxu0 0.0
        %v3022 = vand.u32 %v2678, 4294901760
        %v3023 = vsub.f32 %v2678, %v3022
        %3024 = vmatpush.msra.mxu0 %v3023
        %v3025 = vand.u32 %v2674, 4294901760
        %v3026 = vsub.f32 %v2674, %v3025
        %3027 = vmatpush.msra.mxu0 %v3026
        %v3028 = vand.u32 %v2933, 4294901760
        %v3029 = vsub.f32 %v2933, %v3028
        %3030 = vmatmul.f32.gmra.mxu0 %v3029
        %v3031 = vpop.f32.mrf.mxu0
        %v3032 = vadd.f32 %v3002, %v3031
        %v3033 = vand.u32 %v2936, 4294901760
        %v3034 = vsub.f32 %v2936, %v3033
        %3035 = vmatmul.f32.gmra.mxu0 %v3034
        %v3036 = vpop.f32.mrf.mxu0
        %v3037 = vadd.f32 %v3006, %v3036
        %3038 = vdwg.mxu0
        %3039 = vmatpush.msra.mxu0 0.0
        %3040 = vmatpush.msra.mxu0 0.0
        %3041 = vmatpush.msra.mxu0 0.0
        %3042 = vmatpush.msra.mxu0 0.0
        %3043 = vmatpush.msra.mxu0 0.0
        %3044 = vmatpush.msra.mxu0 0.0
        %3045 = vmatpush.msra.mxu0 0.0
        %3046 = vmatpush.msra.mxu0 0.0
        %3047 = vmatpush.msra.mxu0 0.0
        %3048 = vmatpush.msra.mxu0 0.0
        %3049 = vmatpush.msra.mxu0 0.0
        %3050 = vmatpush.msra.mxu0 0.0
        %3051 = vmatpush.msra.mxu0 0.0
        %3052 = vmatpush.msra.mxu0 0.0
        %v3053 = vand.u32 %v2678, 4294901760
        %3054 = vmatpush.msra.mxu0 %v3053
        %v3055 = vand.u32 %v2674, 4294901760
        %3056 = vmatpush.msra.mxu0 %v3055
        %v3057 = vand.u32 %v2933, 4294901760
        %v3058 = vsub.f32 %v2933, %v3057
        %v3059 = vand.u32 %v3058, 4294901760
        %3060 = vmatmul.f32.gmra.mxu0 %v3059
        %v3061 = vpop.f32.mrf.mxu0
        %v3062 = vadd.f32 %v3032, %v3061
        %v3063 = vand.u32 %v2936, 4294901760
        %v3064 = vsub.f32 %v2936, %v3063
        %v3065 = vand.u32 %v3064, 4294901760
        %3066 = vmatmul.f32.gmra.mxu0 %v3065
        %v3067 = vpop.f32.mrf.mxu0
        %v3068 = vadd.f32 %v3037, %v3067
        %3069 = vdwg.mxu0
        %3070 = vmatpush.msra.mxu0 0.0
        %3071 = vmatpush.msra.mxu0 0.0
        %3072 = vmatpush.msra.mxu0 0.0
        %3073 = vmatpush.msra.mxu0 0.0
        %3074 = vmatpush.msra.mxu0 0.0
        %3075 = vmatpush.msra.mxu0 0.0
        %3076 = vmatpush.msra.mxu0 0.0
        %3077 = vmatpush.msra.mxu0 0.0
        %3078 = vmatpush.msra.mxu0 0.0
        %3079 = vmatpush.msra.mxu0 0.0
        %3080 = vmatpush.msra.mxu0 0.0
        %3081 = vmatpush.msra.mxu0 0.0
        %3082 = vmatpush.msra.mxu0 0.0
        %3083 = vmatpush.msra.mxu0 0.0
        %v3084 = vand.u32 %v2678, 4294901760
        %v3085 = vsub.f32 %v2678, %v3084
        %v3086 = vand.u32 %v3085, 4294901760
        %3087 = vmatpush.msra.mxu0 %v3086
        %v3088 = vand.u32 %v2674, 4294901760
        %v3089 = vsub.f32 %v2674, %v3088
        %v3090 = vand.u32 %v3089, 4294901760
        %3091 = vmatpush.msra.mxu0 %v3090
        %v3092 = vand.u32 %v2933, 4294901760
        %3093 = vmatmul.f32.gmra.mxu0 %v3092
        %v3094 = vpop.f32.mrf.mxu0
        %v3095 = vadd.f32 %v3062, %v3094
        %v3096 = vand.u32 %v2936, 4294901760
        %3097 = vmatmul.f32.gmra.mxu0 %v3096
        %v3098 = vpop.f32.mrf.mxu0
        %v3099 = vadd.f32 %v3068, %v3098
        %3100 = vdwg.mxu0
        %3101 = vmatpush.msra.mxu0 0.0
        %3102 = vmatpush.msra.mxu0 0.0
        %3103 = vmatpush.msra.mxu0 0.0
        %3104 = vmatpush.msra.mxu0 0.0
        %3105 = vmatpush.msra.mxu0 0.0
        %3106 = vmatpush.msra.mxu0 0.0
        %3107 = vmatpush.msra.mxu0 0.0
        %3108 = vmatpush.msra.mxu0 0.0
        %3109 = vmatpush.msra.mxu0 0.0
        %3110 = vmatpush.msra.mxu0 0.0
        %3111 = vmatpush.msra.mxu0 0.0
        %3112 = vmatpush.msra.mxu0 0.0
        %3113 = vmatpush.msra.mxu0 0.0
        %3114 = vmatpush.msra.mxu0 0.0
        %v3115 = vand.u32 %v2678, 4294901760
        %3116 = vmatpush.msra.mxu0 %v3115
        %v3117 = vand.u32 %v2674, 4294901760
        %3118 = vmatpush.msra.mxu0 %v3117
        %v3119 = vand.u32 %v2933, 4294901760
        %3120 = vmatmul.f32.gmra.mxu0 %v3119
        %v3121 = vpop.f32.mrf.mxu0
        %v3122 = vadd.f32 %v3095, %v3121
        %v3123 = vand.u32 %v2936, 4294901760
        %3124 = vmatmul.f32.gmra.mxu0 %v3123
        %v3125 = vpop.f32.mrf.mxu0
        %v3126 = vadd.f32 %v3099, %v3125
        %3127 = vdwg.mxu0
        %s3128 = scalar_lea.vmem %s6, 16
        %v3129 = vld [vmem:[%s3128] sm:$0xff]
        %v3130 = vld [vmem:[%s3128 + $0x8] sm:$0xff]
        %v3132 = vsel %vm1398, %v3122, 0
        %v3135 = vsel %vm1398, %v3126, 0
        %3137 = vmatpush.msra.mxu0 0.0
        %3138 = vmatpush.msra.mxu0 0.0
        %3139 = vmatpush.msra.mxu0 0.0
        %3140 = vmatpush.msra.mxu0 0.0
        %3141 = vmatpush.msra.mxu0 0.0
        %3142 = vmatpush.msra.mxu0 0.0
        %3143 = vmatpush.msra.mxu0 0.0
        %3144 = vmatpush.msra.mxu0 0.0
        %3145 = vmatpush.msra.mxu0 0.0
        %3146 = vmatpush.msra.mxu0 0.0
        %3147 = vmatpush.msra.mxu0 0.0
        %3148 = vmatpush.msra.mxu0 0.0
        %3149 = vmatpush.msra.mxu0 0.0
        %3150 = vmatpush.msra.mxu0 0.0
        %v3151 = vand.u32 %v3130, 4294901760
        %3152 = vmatpush.msra.mxu0 %v3151
        %v3153 = vand.u32 %v3129, 4294901760
        %3154 = vmatpush.msra.mxu0 %v3153
        %v3155 = vand.u32 %v3132, 4294901760
        %v3156 = vsub.f32 %v3132, %v3155
        %v3157 = vand.u32 %v3156, 4294901760
        %v3158 = vsub.f32 %v3156, %v3157
        %v3159 = vand.u32 %v3158, 4294901760
        %3160 = vmatmul.f32.gmra.mxu0 %v3159
        %v3161 = vpop.f32.mrf.mxu0
        %v3162 = vadd.f32 0.0, %v3161
        %v3163 = vand.u32 %v3135, 4294901760
        %v3164 = vsub.f32 %v3135, %v3163
        %v3165 = vand.u32 %v3164, 4294901760
        %v3166 = vsub.f32 %v3164, %v3165
        %v3167 = vand.u32 %v3166, 4294901760
        %3168 = vmatmul.f32.gmra.mxu0 %v3167
        %v3169 = vpop.f32.mrf.mxu0
        %v3170 = vadd.f32 0.0, %v3169
        %3171 = vdwg.mxu0
        %3172 = vmatpush.msra.mxu0 0.0
        %3173 = vmatpush.msra.mxu0 0.0
        %3174 = vmatpush.msra.mxu0 0.0
        %3175 = vmatpush.msra.mxu0 0.0
        %3176 = vmatpush.msra.mxu0 0.0
        %3177 = vmatpush.msra.mxu0 0.0
        %3178 = vmatpush.msra.mxu0 0.0
        %3179 = vmatpush.msra.mxu0 0.0
        %3180 = vmatpush.msra.mxu0 0.0
        %3181 = vmatpush.msra.mxu0 0.0
        %3182 = vmatpush.msra.mxu0 0.0
        %3183 = vmatpush.msra.mxu0 0.0
        %3184 = vmatpush.msra.mxu0 0.0
        %3185 = vmatpush.msra.mxu0 0.0
        %v3186 = vand.u32 %v3130, 4294901760
        %v3187 = vsub.f32 %v3130, %v3186
        %v3188 = vand.u32 %v3187, 4294901760
        %v3189 = vsub.f32 %v3187, %v3188
        %v3190 = vand.u32 %v3189, 4294901760
        %3191 = vmatpush.msra.mxu0 %v3190
        %v3192 = vand.u32 %v3129, 4294901760
        %v3193 = vsub.f32 %v3129, %v3192
        %v3194 = vand.u32 %v3193, 4294901760
        %v3195 = vsub.f32 %v3193, %v3194
        %v3196 = vand.u32 %v3195, 4294901760
        %3197 = vmatpush.msra.mxu0 %v3196
        %v3198 = vand.u32 %v3132, 4294901760
        %3199 = vmatmul.f32.gmra.mxu0 %v3198
        %v3200 = vpop.f32.mrf.mxu0
        %v3201 = vadd.f32 %v3162, %v3200
        %v3202 = vand.u32 %v3135, 4294901760
        %3203 = vmatmul.f32.gmra.mxu0 %v3202
        %v3204 = vpop.f32.mrf.mxu0
        %v3205 = vadd.f32 %v3170, %v3204
        %3206 = vdwg.mxu0
        %3207 = vmatpush.msra.mxu0 0.0
        %3208 = vmatpush.msra.mxu0 0.0
        %3209 = vmatpush.msra.mxu0 0.0
        %3210 = vmatpush.msra.mxu0 0.0
        %3211 = vmatpush.msra.mxu0 0.0
        %3212 = vmatpush.msra.mxu0 0.0
        %3213 = vmatpush.msra.mxu0 0.0
        %3214 = vmatpush.msra.mxu0 0.0
        %3215 = vmatpush.msra.mxu0 0.0
        %3216 = vmatpush.msra.mxu0 0.0
        %3217 = vmatpush.msra.mxu0 0.0
        %3218 = vmatpush.msra.mxu0 0.0
        %3219 = vmatpush.msra.mxu0 0.0
        %3220 = vmatpush.msra.mxu0 0.0
        %v3221 = vand.u32 %v3130, 4294901760
        %v3222 = vsub.f32 %v3130, %v3221
        %3223 = vmatpush.msra.mxu0 %v3222
        %v3224 = vand.u32 %v3129, 4294901760
        %v3225 = vsub.f32 %v3129, %v3224
        %3226 = vmatpush.msra.mxu0 %v3225
        %v3227 = vand.u32 %v3132, 4294901760
        %v3228 = vsub.f32 %v3132, %v3227
        %3229 = vmatmul.f32.gmra.mxu0 %v3228
        %v3230 = vpop.f32.mrf.mxu0
        %v3231 = vadd.f32 %v3201, %v3230
        %v3232 = vand.u32 %v3135, 4294901760
        %v3233 = vsub.f32 %v3135, %v3232
        %3234 = vmatmul.f32.gmra.mxu0 %v3233
        %v3235 = vpop.f32.mrf.mxu0
        %v3236 = vadd.f32 %v3205, %v3235
        %3237 = vdwg.mxu0
        %3238 = vmatpush.msra.mxu0 0.0
        %3239 = vmatpush.msra.mxu0 0.0
        %3240 = vmatpush.msra.mxu0 0.0
        %3241 = vmatpush.msra.mxu0 0.0
        %3242 = vmatpush.msra.mxu0 0.0
        %3243 = vmatpush.msra.mxu0 0.0
        %3244 = vmatpush.msra.mxu0 0.0
        %3245 = vmatpush.msra.mxu0 0.0
        %3246 = vmatpush.msra.mxu0 0.0
        %3247 = vmatpush.msra.mxu0 0.0
        %3248 = vmatpush.msra.mxu0 0.0
        %3249 = vmatpush.msra.mxu0 0.0
        %3250 = vmatpush.msra.mxu0 0.0
        %3251 = vmatpush.msra.mxu0 0.0
        %v3252 = vand.u32 %v3130, 4294901760
        %3253 = vmatpush.msra.mxu0 %v3252
        %v3254 = vand.u32 %v3129, 4294901760
        %3255 = vmatpush.msra.mxu0 %v3254
        %v3256 = vand.u32 %v3132, 4294901760
        %v3257 = vsub.f32 %v3132, %v3256
        %v3258 = vand.u32 %v3257, 4294901760
        %3259 = vmatmul.f32.gmra.mxu0 %v3258
        %v3260 = vpop.f32.mrf.mxu0
        %v3261 = vadd.f32 %v3231, %v3260
        %v3262 = vand.u32 %v3135, 4294901760
        %v3263 = vsub.f32 %v3135, %v3262
        %v3264 = vand.u32 %v3263, 4294901760
        %3265 = vmatmul.f32.gmra.mxu0 %v3264
        %v3266 = vpop.f32.mrf.mxu0
        %v3267 = vadd.f32 %v3236, %v3266
        %3268 = vdwg.mxu0
        %3269 = vmatpush.msra.mxu0 0.0
        %3270 = vmatpush.msra.mxu0 0.0
        %3271 = vmatpush.msra.mxu0 0.0
        %3272 = vmatpush.msra.mxu0 0.0
        %3273 = vmatpush.msra.mxu0 0.0
        %3274 = vmatpush.msra.mxu0 0.0
        %3275 = vmatpush.msra.mxu0 0.0
        %3276 = vmatpush.msra.mxu0 0.0
        %3277 = vmatpush.msra.mxu0 0.0
        %3278 = vmatpush.msra.mxu0 0.0
        %3279 = vmatpush.msra.mxu0 0.0
        %3280 = vmatpush.msra.mxu0 0.0
        %3281 = vmatpush.msra.mxu0 0.0
        %3282 = vmatpush.msra.mxu0 0.0
        %v3283 = vand.u32 %v3130, 4294901760
        %v3284 = vsub.f32 %v3130, %v3283
        %v3285 = vand.u32 %v3284, 4294901760
        %3286 = vmatpush.msra.mxu0 %v3285
        %v3287 = vand.u32 %v3129, 4294901760
        %v3288 = vsub.f32 %v3129, %v3287
        %v3289 = vand.u32 %v3288, 4294901760
        %3290 = vmatpush.msra.mxu0 %v3289
        %v3291 = vand.u32 %v3132, 4294901760
        %3292 = vmatmul.f32.gmra.mxu0 %v3291
        %v3293 = vpop.f32.mrf.mxu0
        %v3294 = vadd.f32 %v3261, %v3293
        %v3295 = vand.u32 %v3135, 4294901760
        %3296 = vmatmul.f32.gmra.mxu0 %v3295
        %v3297 = vpop.f32.mrf.mxu0
        %v3298 = vadd.f32 %v3267, %v3297
        %3299 = vdwg.mxu0
        %3300 = vmatpush.msra.mxu0 0.0
        %3301 = vmatpush.msra.mxu0 0.0
        %3302 = vmatpush.msra.mxu0 0.0
        %3303 = vmatpush.msra.mxu0 0.0
        %3304 = vmatpush.msra.mxu0 0.0
        %3305 = vmatpush.msra.mxu0 0.0
        %3306 = vmatpush.msra.mxu0 0.0
        %3307 = vmatpush.msra.mxu0 0.0
        %3308 = vmatpush.msra.mxu0 0.0
        %3309 = vmatpush.msra.mxu0 0.0
        %3310 = vmatpush.msra.mxu0 0.0
        %3311 = vmatpush.msra.mxu0 0.0
        %3312 = vmatpush.msra.mxu0 0.0
        %3313 = vmatpush.msra.mxu0 0.0
        %v3314 = vand.u32 %v3130, 4294901760
        %3315 = vmatpush.msra.mxu0 %v3314
        %v3316 = vand.u32 %v3129, 4294901760
        %3317 = vmatpush.msra.mxu0 %v3316
        %v3318 = vand.u32 %v3132, 4294901760
        %3319 = vmatmul.f32.gmra.mxu0 %v3318
        %v3320 = vpop.f32.mrf.mxu0
        %v3321 = vadd.f32 %v3294, %v3320
        %v3322 = vand.u32 %v3135, 4294901760
        %3323 = vmatmul.f32.gmra.mxu0 %v3322
        %v3324 = vpop.f32.mrf.mxu0
        %v3325 = vadd.f32 %v3298, %v3324
        %3326 = vdwg.mxu0
        %v3328 = vsel %vm1398, %v1841, 0
        %v3331 = vsel %vm1398, %v1845, 0
        %3333 = vmatpush.msra.mxu0 0.0
        %3334 = vmatpush.msra.mxu0 0.0
        %3335 = vmatpush.msra.mxu0 0.0
        %3336 = vmatpush.msra.mxu0 0.0
        %3337 = vmatpush.msra.mxu0 0.0
        %3338 = vmatpush.msra.mxu0 0.0
        %3339 = vmatpush.msra.mxu0 0.0
        %3340 = vmatpush.msra.mxu0 0.0
        %3341 = vmatpush.msra.mxu0 0.0
        %3342 = vmatpush.msra.mxu0 0.0
        %3343 = vmatpush.msra.mxu0 0.0
        %3344 = vmatpush.msra.mxu0 0.0
        %3345 = vmatpush.msra.mxu0 0.0
        %3346 = vmatpush.msra.mxu0 0.0
        %v3347 = vand.u32 %v1848, 4294901760
        %3348 = vmatpush.msra.mxu0 %v3347
        %v3349 = vand.u32 %v1847, 4294901760
        %3350 = vmatpush.msra.mxu0 %v3349
        %v3351 = vand.u32 %v3328, 4294901760
        %v3352 = vsub.f32 %v3328, %v3351
        %v3353 = vand.u32 %v3352, 4294901760
        %v3354 = vsub.f32 %v3352, %v3353
        %v3355 = vand.u32 %v3354, 4294901760
        %3356 = vmatmul.f32.gmra.mxu0 %v3355
        %v3357 = vpop.f32.mrf.mxu0
        %v3358 = vadd.f32 %v3321, %v3357
        %v3359 = vand.u32 %v3331, 4294901760
        %v3360 = vsub.f32 %v3331, %v3359
        %v3361 = vand.u32 %v3360, 4294901760
        %v3362 = vsub.f32 %v3360, %v3361
        %v3363 = vand.u32 %v3362, 4294901760
        %3364 = vmatmul.f32.gmra.mxu0 %v3363
        %v3365 = vpop.f32.mrf.mxu0
        %v3366 = vadd.f32 %v3325, %v3365
        %3367 = vdwg.mxu0
        %3368 = vmatpush.msra.mxu0 0.0
        %3369 = vmatpush.msra.mxu0 0.0
        %3370 = vmatpush.msra.mxu0 0.0
        %3371 = vmatpush.msra.mxu0 0.0
        %3372 = vmatpush.msra.mxu0 0.0
        %3373 = vmatpush.msra.mxu0 0.0
        %3374 = vmatpush.msra.mxu0 0.0
        %3375 = vmatpush.msra.mxu0 0.0
        %3376 = vmatpush.msra.mxu0 0.0
        %3377 = vmatpush.msra.mxu0 0.0
        %3378 = vmatpush.msra.mxu0 0.0
        %3379 = vmatpush.msra.mxu0 0.0
        %3380 = vmatpush.msra.mxu0 0.0
        %3381 = vmatpush.msra.mxu0 0.0
        %v3382 = vand.u32 %v1848, 4294901760
        %v3383 = vsub.f32 %v1848, %v3382
        %v3384 = vand.u32 %v3383, 4294901760
        %v3385 = vsub.f32 %v3383, %v3384
        %v3386 = vand.u32 %v3385, 4294901760
        %3387 = vmatpush.msra.mxu0 %v3386
        %v3388 = vand.u32 %v1847, 4294901760
        %v3389 = vsub.f32 %v1847, %v3388
        %v3390 = vand.u32 %v3389, 4294901760
        %v3391 = vsub.f32 %v3389, %v3390
        %v3392 = vand.u32 %v3391, 4294901760
        %3393 = vmatpush.msra.mxu0 %v3392
        %v3394 = vand.u32 %v3328, 4294901760
        %3395 = vmatmul.f32.gmra.mxu0 %v3394
        %v3396 = vpop.f32.mrf.mxu0
        %v3397 = vadd.f32 %v3358, %v3396
        %v3398 = vand.u32 %v3331, 4294901760
        %3399 = vmatmul.f32.gmra.mxu0 %v3398
        %v3400 = vpop.f32.mrf.mxu0
        %v3401 = vadd.f32 %v3366, %v3400
        %3402 = vdwg.mxu0
        %3403 = vmatpush.msra.mxu0 0.0
        %3404 = vmatpush.msra.mxu0 0.0
        %3405 = vmatpush.msra.mxu0 0.0
        %3406 = vmatpush.msra.mxu0 0.0
        %3407 = vmatpush.msra.mxu0 0.0
        %3408 = vmatpush.msra.mxu0 0.0
        %3409 = vmatpush.msra.mxu0 0.0
        %3410 = vmatpush.msra.mxu0 0.0
        %3411 = vmatpush.msra.mxu0 0.0
        %3412 = vmatpush.msra.mxu0 0.0
        %3413 = vmatpush.msra.mxu0 0.0
        %3414 = vmatpush.msra.mxu0 0.0
        %3415 = vmatpush.msra.mxu0 0.0
        %3416 = vmatpush.msra.mxu0 0.0
        %v3417 = vand.u32 %v1848, 4294901760
        %v3418 = vsub.f32 %v1848, %v3417
        %3419 = vmatpush.msra.mxu0 %v3418
        %v3420 = vand.u32 %v1847, 4294901760
        %v3421 = vsub.f32 %v1847, %v3420
        %3422 = vmatpush.msra.mxu0 %v3421
        %v3423 = vand.u32 %v3328, 4294901760
        %v3424 = vsub.f32 %v3328, %v3423
        %3425 = vmatmul.f32.gmra.mxu0 %v3424
        %v3426 = vpop.f32.mrf.mxu0
        %v3427 = vadd.f32 %v3397, %v3426
        %v3428 = vand.u32 %v3331, 4294901760
        %v3429 = vsub.f32 %v3331, %v3428
        %3430 = vmatmul.f32.gmra.mxu0 %v3429
        %v3431 = vpop.f32.mrf.mxu0
        %v3432 = vadd.f32 %v3401, %v3431
        %3433 = vdwg.mxu0
        %3434 = vmatpush.msra.mxu0 0.0
        %3435 = vmatpush.msra.mxu0 0.0
        %3436 = vmatpush.msra.mxu0 0.0
        %3437 = vmatpush.msra.mxu0 0.0
        %3438 = vmatpush.msra.mxu0 0.0
        %3439 = vmatpush.msra.mxu0 0.0
        %3440 = vmatpush.msra.mxu0 0.0
        %3441 = vmatpush.msra.mxu0 0.0
        %3442 = vmatpush.msra.mxu0 0.0
        %3443 = vmatpush.msra.mxu0 0.0
        %3444 = vmatpush.msra.mxu0 0.0
        %3445 = vmatpush.msra.mxu0 0.0
        %3446 = vmatpush.msra.mxu0 0.0
        %3447 = vmatpush.msra.mxu0 0.0
        %v3448 = vand.u32 %v1848, 4294901760
        %3449 = vmatpush.msra.mxu0 %v3448
        %v3450 = vand.u32 %v1847, 4294901760
        %3451 = vmatpush.msra.mxu0 %v3450
        %v3452 = vand.u32 %v3328, 4294901760
        %v3453 = vsub.f32 %v3328, %v3452
        %v3454 = vand.u32 %v3453, 4294901760
        %3455 = vmatmul.f32.gmra.mxu0 %v3454
        %v3456 = vpop.f32.mrf.mxu0
        %v3457 = vadd.f32 %v3427, %v3456
        %v3458 = vand.u32 %v3331, 4294901760
        %v3459 = vsub.f32 %v3331, %v3458
        %v3460 = vand.u32 %v3459, 4294901760
        %3461 = vmatmul.f32.gmra.mxu0 %v3460
        %v3462 = vpop.f32.mrf.mxu0
        %v3463 = vadd.f32 %v3432, %v3462
        %3464 = vdwg.mxu0
        %3465 = vmatpush.msra.mxu0 0.0
        %3466 = vmatpush.msra.mxu0 0.0
        %3467 = vmatpush.msra.mxu0 0.0
        %3468 = vmatpush.msra.mxu0 0.0
        %3469 = vmatpush.msra.mxu0 0.0
        %3470 = vmatpush.msra.mxu0 0.0
        %3471 = vmatpush.msra.mxu0 0.0
        %3472 = vmatpush.msra.mxu0 0.0
        %3473 = vmatpush.msra.mxu0 0.0
        %3474 = vmatpush.msra.mxu0 0.0
        %3475 = vmatpush.msra.mxu0 0.0
        %3476 = vmatpush.msra.mxu0 0.0
        %3477 = vmatpush.msra.mxu0 0.0
        %3478 = vmatpush.msra.mxu0 0.0
        %v3479 = vand.u32 %v1848, 4294901760
        %v3480 = vsub.f32 %v1848, %v3479
        %v3481 = vand.u32 %v3480, 4294901760
        %3482 = vmatpush.msra.mxu0 %v3481
        %v3483 = vand.u32 %v1847, 4294901760
        %v3484 = vsub.f32 %v1847, %v3483
        %v3485 = vand.u32 %v3484, 4294901760
        %3486 = vmatpush.msra.mxu0 %v3485
        %v3487 = vand.u32 %v3328, 4294901760
        %3488 = vmatmul.f32.gmra.mxu0 %v3487
        %v3489 = vpop.f32.mrf.mxu0
        %v3490 = vadd.f32 %v3457, %v3489
        %v3491 = vand.u32 %v3331, 4294901760
        %3492 = vmatmul.f32.gmra.mxu0 %v3491
        %v3493 = vpop.f32.mrf.mxu0
        %v3494 = vadd.f32 %v3463, %v3493
        %3495 = vdwg.mxu0
        %3496 = vmatpush.msra.mxu0 0.0
        %3497 = vmatpush.msra.mxu0 0.0
        %3498 = vmatpush.msra.mxu0 0.0
        %3499 = vmatpush.msra.mxu0 0.0
        %3500 = vmatpush.msra.mxu0 0.0
        %3501 = vmatpush.msra.mxu0 0.0
        %3502 = vmatpush.msra.mxu0 0.0
        %3503 = vmatpush.msra.mxu0 0.0
        %3504 = vmatpush.msra.mxu0 0.0
        %3505 = vmatpush.msra.mxu0 0.0
        %3506 = vmatpush.msra.mxu0 0.0
        %3507 = vmatpush.msra.mxu0 0.0
        %3508 = vmatpush.msra.mxu0 0.0
        %3509 = vmatpush.msra.mxu0 0.0
        %v3510 = vand.u32 %v1848, 4294901760
        %3511 = vmatpush.msra.mxu0 %v3510
        %v3512 = vand.u32 %v1847, 4294901760
        %3513 = vmatpush.msra.mxu0 %v3512
        %v3514 = vand.u32 %v3328, 4294901760
        %3515 = vmatmul.f32.gmra.mxu0 %v3514
        %v3516 = vpop.f32.mrf.mxu0
        %v3517 = vadd.f32 %v3490, %v3516
        %v3518 = vand.u32 %v3331, 4294901760
        %3519 = vmatmul.f32.gmra.mxu0 %v3518
        %v3520 = vpop.f32.mrf.mxu0
        %v3521 = vadd.f32 %v3494, %v3520
        %3522 = vdwg.mxu0
        %s3523 = scalar_lea.vmem %s3, 128
        %v3524 = vld [vmem:[%s3523] sm:$0xff]
        %v3525 = vld [vmem:[%s3523 + $0x8] sm:$0xff]
        %v3526 = vld [vmem:[%s3523 + $0x10] sm:$0xff]
        %v3527 = vld [vmem:[%s3523 + $0x18] sm:$0xff]
        %v3528 = vld [vmem:[%s3523 + $0x20] sm:$0xff]
        %v3529 = vld [vmem:[%s3523 + $0x28] sm:$0xff]
        %v3530 = vld [vmem:[%s3523 + $0x30] sm:$0xff]
        %v3531 = vld [vmem:[%s3523 + $0x38] sm:$0xff]
        %3532 = vmatpush.msra.mxu0 0.0
        %3533 = vmatpush.msra.mxu0 0.0
        %3534 = vmatpush.msra.mxu0 0.0
        %3535 = vmatpush.msra.mxu0 0.0
        %3536 = vmatpush.msra.mxu0 0.0
        %3537 = vmatpush.msra.mxu0 0.0
        %3538 = vmatpush.msra.mxu0 0.0
        %3539 = vmatpush.msra.mxu0 0.0
        %v3540 = vand.u32 %v3531, 4294901760
        %3541 = vmatpush.msra.mxu0 %v3540
        %v3542 = vand.u32 %v3530, 4294901760
        %3543 = vmatpush.msra.mxu0 %v3542
        %v3544 = vand.u32 %v3529, 4294901760
        %3545 = vmatpush.msra.mxu0 %v3544
        %v3546 = vand.u32 %v3528, 4294901760
        %3547 = vmatpush.msra.mxu0 %v3546
        %v3548 = vand.u32 %v3527, 4294901760
        %3549 = vmatpush.msra.mxu0 %v3548
        %v3550 = vand.u32 %v3526, 4294901760
        %3551 = vmatpush.msra.mxu0 %v3550
        %v3552 = vand.u32 %v3525, 4294901760
        %3553 = vmatpush.msra.mxu0 %v3552
        %v3554 = vand.u32 %v3524, 4294901760
        %3555 = vmatpush.msra.mxu0 %v3554
        %v3556 = vand.u32 %v573, 4294901760
        %v3557 = vsub.f32 %v573, %v3556
        %v3558 = vand.u32 %v3557, 4294901760
        %v3559 = vsub.f32 %v3557, %v3558
        %v3560 = vand.u32 %v3559, 4294901760
        %3561 = vmatmul.f32.gmra.mxu0 %v3560
        %v3562 = vpop.f32.mrf.mxu0
        %v3563 = vadd.f32 0.0, %v3562
        %v3564 = vand.u32 %v576, 4294901760
        %v3565 = vsub.f32 %v576, %v3564
        %v3566 = vand.u32 %v3565, 4294901760
        %v3567 = vsub.f32 %v3565, %v3566
        %v3568 = vand.u32 %v3567, 4294901760
        %3569 = vmatmul.f32.gmra.mxu0 %v3568
        %v3570 = vpop.f32.mrf.mxu0
        %v3571 = vadd.f32 0.0, %v3570
        %3572 = vdwg.mxu0
        %3573 = vmatpush.msra.mxu0 0.0
        %3574 = vmatpush.msra.mxu0 0.0
        %3575 = vmatpush.msra.mxu0 0.0
        %3576 = vmatpush.msra.mxu0 0.0
        %3577 = vmatpush.msra.mxu0 0.0
        %3578 = vmatpush.msra.mxu0 0.0
        %3579 = vmatpush.msra.mxu0 0.0
        %3580 = vmatpush.msra.mxu0 0.0
        %v3581 = vand.u32 %v3531, 4294901760
        %v3582 = vsub.f32 %v3531, %v3581
        %v3583 = vand.u32 %v3582, 4294901760
        %v3584 = vsub.f32 %v3582, %v3583
        %v3585 = vand.u32 %v3584, 4294901760
        %3586 = vmatpush.msra.mxu0 %v3585
        %v3587 = vand.u32 %v3530, 4294901760
        %v3588 = vsub.f32 %v3530, %v3587
        %v3589 = vand.u32 %v3588, 4294901760
        %v3590 = vsub.f32 %v3588, %v3589
        %v3591 = vand.u32 %v3590, 4294901760
        %3592 = vmatpush.msra.mxu0 %v3591
        %v3593 = vand.u32 %v3529, 4294901760
        %v3594 = vsub.f32 %v3529, %v3593
        %v3595 = vand.u32 %v3594, 4294901760
        %v3596 = vsub.f32 %v3594, %v3595
        %v3597 = vand.u32 %v3596, 4294901760
        %3598 = vmatpush.msra.mxu0 %v3597
        %v3599 = vand.u32 %v3528, 4294901760
        %v3600 = vsub.f32 %v3528, %v3599
        %v3601 = vand.u32 %v3600, 4294901760
        %v3602 = vsub.f32 %v3600, %v3601
        %v3603 = vand.u32 %v3602, 4294901760
        %3604 = vmatpush.msra.mxu0 %v3603
        %v3605 = vand.u32 %v3527, 4294901760
        %v3606 = vsub.f32 %v3527, %v3605
        %v3607 = vand.u32 %v3606, 4294901760
        %v3608 = vsub.f32 %v3606, %v3607
        %v3609 = vand.u32 %v3608, 4294901760
        %3610 = vmatpush.msra.mxu0 %v3609
        %v3611 = vand.u32 %v3526, 4294901760
        %v3612 = vsub.f32 %v3526, %v3611
        %v3613 = vand.u32 %v3612, 4294901760
        %v3614 = vsub.f32 %v3612, %v3613
        %v3615 = vand.u32 %v3614, 4294901760
        %3616 = vmatpush.msra.mxu0 %v3615
        %v3617 = vand.u32 %v3525, 4294901760
        %v3618 = vsub.f32 %v3525, %v3617
        %v3619 = vand.u32 %v3618, 4294901760
        %v3620 = vsub.f32 %v3618, %v3619
        %v3621 = vand.u32 %v3620, 4294901760
        %3622 = vmatpush.msra.mxu0 %v3621
        %v3623 = vand.u32 %v3524, 4294901760
        %v3624 = vsub.f32 %v3524, %v3623
        %v3625 = vand.u32 %v3624, 4294901760
        %v3626 = vsub.f32 %v3624, %v3625
        %v3627 = vand.u32 %v3626, 4294901760
        %3628 = vmatpush.msra.mxu0 %v3627
        %v3629 = vand.u32 %v573, 4294901760
        %3630 = vmatmul.f32.gmra.mxu0 %v3629
        %v3631 = vpop.f32.mrf.mxu0
        %v3632 = vadd.f32 %v3563, %v3631
        %v3633 = vand.u32 %v576, 4294901760
        %3634 = vmatmul.f32.gmra.mxu0 %v3633
        %v3635 = vpop.f32.mrf.mxu0
        %v3636 = vadd.f32 %v3571, %v3635
        %3637 = vdwg.mxu0
        %3638 = vmatpush.msra.mxu0 0.0
        %3639 = vmatpush.msra.mxu0 0.0
        %3640 = vmatpush.msra.mxu0 0.0
        %3641 = vmatpush.msra.mxu0 0.0
        %3642 = vmatpush.msra.mxu0 0.0
        %3643 = vmatpush.msra.mxu0 0.0
        %3644 = vmatpush.msra.mxu0 0.0
        %3645 = vmatpush.msra.mxu0 0.0
        %v3646 = vand.u32 %v3531, 4294901760
        %v3647 = vsub.f32 %v3531, %v3646
        %3648 = vmatpush.msra.mxu0 %v3647
        %v3649 = vand.u32 %v3530, 4294901760
        %v3650 = vsub.f32 %v3530, %v3649
        %3651 = vmatpush.msra.mxu0 %v3650
        %v3652 = vand.u32 %v3529, 4294901760
        %v3653 = vsub.f32 %v3529, %v3652
        %3654 = vmatpush.msra.mxu0 %v3653
        %v3655 = vand.u32 %v3528, 4294901760
        %v3656 = vsub.f32 %v3528, %v3655
        %3657 = vmatpush.msra.mxu0 %v3656
        %v3658 = vand.u32 %v3527, 4294901760
        %v3659 = vsub.f32 %v3527, %v3658
        %3660 = vmatpush.msra.mxu0 %v3659
        %v3661 = vand.u32 %v3526, 4294901760
        %v3662 = vsub.f32 %v3526, %v3661
        %3663 = vmatpush.msra.mxu0 %v3662
        %v3664 = vand.u32 %v3525, 4294901760
        %v3665 = vsub.f32 %v3525, %v3664
        %3666 = vmatpush.msra.mxu0 %v3665
        %v3667 = vand.u32 %v3524, 4294901760
        %v3668 = vsub.f32 %v3524, %v3667
        %3669 = vmatpush.msra.mxu0 %v3668
        %v3670 = vand.u32 %v573, 4294901760
        %v3671 = vsub.f32 %v573, %v3670
        %3672 = vmatmul.f32.gmra.mxu0 %v3671
        %v3673 = vpop.f32.mrf.mxu0
        %v3674 = vadd.f32 %v3632, %v3673
        %v3675 = vand.u32 %v576, 4294901760
        %v3676 = vsub.f32 %v576, %v3675
        %3677 = vmatmul.f32.gmra.mxu0 %v3676
        %v3678 = vpop.f32.mrf.mxu0
        %v3679 = vadd.f32 %v3636, %v3678
        %3680 = vdwg.mxu0
        %3681 = vmatpush.msra.mxu0 0.0
        %3682 = vmatpush.msra.mxu0 0.0
        %3683 = vmatpush.msra.mxu0 0.0
        %3684 = vmatpush.msra.mxu0 0.0
        %3685 = vmatpush.msra.mxu0 0.0
        %3686 = vmatpush.msra.mxu0 0.0
        %3687 = vmatpush.msra.mxu0 0.0
        %3688 = vmatpush.msra.mxu0 0.0
        %v3689 = vand.u32 %v3531, 4294901760
        %3690 = vmatpush.msra.mxu0 %v3689
        %v3691 = vand.u32 %v3530, 4294901760
        %3692 = vmatpush.msra.mxu0 %v3691
        %v3693 = vand.u32 %v3529, 4294901760
        %3694 = vmatpush.msra.mxu0 %v3693
        %v3695 = vand.u32 %v3528, 4294901760
        %3696 = vmatpush.msra.mxu0 %v3695
        %v3697 = vand.u32 %v3527, 4294901760
        %3698 = vmatpush.msra.mxu0 %v3697
        %v3699 = vand.u32 %v3526, 4294901760
        %3700 = vmatpush.msra.mxu0 %v3699
        %v3701 = vand.u32 %v3525, 4294901760
        %3702 = vmatpush.msra.mxu0 %v3701
        %v3703 = vand.u32 %v3524, 4294901760
        %3704 = vmatpush.msra.mxu0 %v3703
        %v3705 = vand.u32 %v573, 4294901760
        %v3706 = vsub.f32 %v573, %v3705
        %v3707 = vand.u32 %v3706, 4294901760
        %3708 = vmatmul.f32.gmra.mxu0 %v3707
        %v3709 = vpop.f32.mrf.mxu0
        %v3710 = vadd.f32 %v3674, %v3709
        %v3711 = vand.u32 %v576, 4294901760
        %v3712 = vsub.f32 %v576, %v3711
        %v3713 = vand.u32 %v3712, 4294901760
        %3714 = vmatmul.f32.gmra.mxu0 %v3713
        %v3715 = vpop.f32.mrf.mxu0
        %v3716 = vadd.f32 %v3679, %v3715
        %3717 = vdwg.mxu0
        %3718 = vmatpush.msra.mxu0 0.0
        %3719 = vmatpush.msra.mxu0 0.0
        %3720 = vmatpush.msra.mxu0 0.0
        %3721 = vmatpush.msra.mxu0 0.0
        %3722 = vmatpush.msra.mxu0 0.0
        %3723 = vmatpush.msra.mxu0 0.0
        %3724 = vmatpush.msra.mxu0 0.0
        %3725 = vmatpush.msra.mxu0 0.0
        %v3726 = vand.u32 %v3531, 4294901760
        %v3727 = vsub.f32 %v3531, %v3726
        %v3728 = vand.u32 %v3727, 4294901760
        %3729 = vmatpush.msra.mxu0 %v3728
        %v3730 = vand.u32 %v3530, 4294901760
        %v3731 = vsub.f32 %v3530, %v3730
        %v3732 = vand.u32 %v3731, 4294901760
        %3733 = vmatpush.msra.mxu0 %v3732
        %v3734 = vand.u32 %v3529, 4294901760
        %v3735 = vsub.f32 %v3529, %v3734
        %v3736 = vand.u32 %v3735, 4294901760
        %3737 = vmatpush.msra.mxu0 %v3736
        %v3738 = vand.u32 %v3528, 4294901760
        %v3739 = vsub.f32 %v3528, %v3738
        %v3740 = vand.u32 %v3739, 4294901760
        %3741 = vmatpush.msra.mxu0 %v3740
        %v3742 = vand.u32 %v3527, 4294901760
        %v3743 = vsub.f32 %v3527, %v3742
        %v3744 = vand.u32 %v3743, 4294901760
        %3745 = vmatpush.msra.mxu0 %v3744
        %v3746 = vand.u32 %v3526, 4294901760
        %v3747 = vsub.f32 %v3526, %v3746
        %v3748 = vand.u32 %v3747, 4294901760
        %3749 = vmatpush.msra.mxu0 %v3748
        %v3750 = vand.u32 %v3525, 4294901760
        %v3751 = vsub.f32 %v3525, %v3750
        %v3752 = vand.u32 %v3751, 4294901760
        %3753 = vmatpush.msra.mxu0 %v3752
        %v3754 = vand.u32 %v3524, 4294901760
        %v3755 = vsub.f32 %v3524, %v3754
        %v3756 = vand.u32 %v3755, 4294901760
        %3757 = vmatpush.msra.mxu0 %v3756
        %v3758 = vand.u32 %v573, 4294901760
        %3759 = vmatmul.f32.gmra.mxu0 %v3758
        %v3760 = vpop.f32.mrf.mxu0
        %v3761 = vadd.f32 %v3710, %v3760
        %v3762 = vand.u32 %v576, 4294901760
        %3763 = vmatmul.f32.gmra.mxu0 %v3762
        %v3764 = vpop.f32.mrf.mxu0
        %v3765 = vadd.f32 %v3716, %v3764
        %3766 = vdwg.mxu0
        %3767 = vmatpush.msra.mxu0 0.0
        %3768 = vmatpush.msra.mxu0 0.0
        %3769 = vmatpush.msra.mxu0 0.0
        %3770 = vmatpush.msra.mxu0 0.0
        %3771 = vmatpush.msra.mxu0 0.0
        %3772 = vmatpush.msra.mxu0 0.0
        %3773 = vmatpush.msra.mxu0 0.0
        %3774 = vmatpush.msra.mxu0 0.0
        %v3775 = vand.u32 %v3531, 4294901760
        %3776 = vmatpush.msra.mxu0 %v3775
        %v3777 = vand.u32 %v3530, 4294901760
        %3778 = vmatpush.msra.mxu0 %v3777
        %v3779 = vand.u32 %v3529, 4294901760
        %3780 = vmatpush.msra.mxu0 %v3779
        %v3781 = vand.u32 %v3528, 4294901760
        %3782 = vmatpush.msra.mxu0 %v3781
        %v3783 = vand.u32 %v3527, 4294901760
        %3784 = vmatpush.msra.mxu0 %v3783
        %v3785 = vand.u32 %v3526, 4294901760
        %3786 = vmatpush.msra.mxu0 %v3785
        %v3787 = vand.u32 %v3525, 4294901760
        %3788 = vmatpush.msra.mxu0 %v3787
        %v3789 = vand.u32 %v3524, 4294901760
        %3790 = vmatpush.msra.mxu0 %v3789
        %v3791 = vand.u32 %v573, 4294901760
        %3792 = vmatmul.f32.gmra.mxu0 %v3791
        %v3793 = vpop.f32.mrf.mxu0
        %v3794 = vadd.f32 %v3761, %v3793
        %v3795 = vand.u32 %v576, 4294901760
        %3796 = vmatmul.f32.gmra.mxu0 %v3795
        %v3797 = vpop.f32.mrf.mxu0
        %v3798 = vadd.f32 %v3765, %v3797
        %3799 = vdwg.mxu0
        %s3800 = scalar_lea.vmem %s4, 128
        %v3801 = vld [vmem:[%s3800] sm:$0xff]
        %v3802 = vld [vmem:[%s3800 + $0x8] sm:$0xff]
        %v3803 = vld [vmem:[%s3800 + $0x10] sm:$0xff]
        %v3804 = vld [vmem:[%s3800 + $0x18] sm:$0xff]
        %v3805 = vld [vmem:[%s3800 + $0x20] sm:$0xff]
        %v3806 = vld [vmem:[%s3800 + $0x28] sm:$0xff]
        %v3807 = vld [vmem:[%s3800 + $0x30] sm:$0xff]
        %v3808 = vld [vmem:[%s3800 + $0x38] sm:$0xff]
        %3809 = vmatpush.msra.mxu0 0.0
        %3810 = vmatpush.msra.mxu0 0.0
        %3811 = vmatpush.msra.mxu0 0.0
        %3812 = vmatpush.msra.mxu0 0.0
        %3813 = vmatpush.msra.mxu0 0.0
        %3814 = vmatpush.msra.mxu0 0.0
        %3815 = vmatpush.msra.mxu0 0.0
        %3816 = vmatpush.msra.mxu0 0.0
        %v3817 = vand.u32 %v3808, 4294901760
        %3818 = vmatpush.msra.mxu0 %v3817
        %v3819 = vand.u32 %v3807, 4294901760
        %3820 = vmatpush.msra.mxu0 %v3819
        %v3821 = vand.u32 %v3806, 4294901760
        %3822 = vmatpush.msra.mxu0 %v3821
        %v3823 = vand.u32 %v3805, 4294901760
        %3824 = vmatpush.msra.mxu0 %v3823
        %v3825 = vand.u32 %v3804, 4294901760
        %3826 = vmatpush.msra.mxu0 %v3825
        %v3827 = vand.u32 %v3803, 4294901760
        %3828 = vmatpush.msra.mxu0 %v3827
        %v3829 = vand.u32 %v3802, 4294901760
        %3830 = vmatpush.msra.mxu0 %v3829
        %v3831 = vand.u32 %v3801, 4294901760
        %3832 = vmatpush.msra.mxu0 %v3831
        %v3833 = vand.u32 %v573, 4294901760
        %v3834 = vsub.f32 %v573, %v3833
        %v3835 = vand.u32 %v3834, 4294901760
        %v3836 = vsub.f32 %v3834, %v3835
        %v3837 = vand.u32 %v3836, 4294901760
        %3838 = vmatmul.f32.gmra.mxu0 %v3837
        %v3839 = vpop.f32.mrf.mxu0
        %v3840 = vadd.f32 0.0, %v3839
        %v3841 = vand.u32 %v576, 4294901760
        %v3842 = vsub.f32 %v576, %v3841
        %v3843 = vand.u32 %v3842, 4294901760
        %v3844 = vsub.f32 %v3842, %v3843
        %v3845 = vand.u32 %v3844, 4294901760
        %3846 = vmatmul.f32.gmra.mxu0 %v3845
        %v3847 = vpop.f32.mrf.mxu0
        %v3848 = vadd.f32 0.0, %v3847
        %3849 = vdwg.mxu0
        %3850 = vmatpush.msra.mxu0 0.0
        %3851 = vmatpush.msra.mxu0 0.0
        %3852 = vmatpush.msra.mxu0 0.0
        %3853 = vmatpush.msra.mxu0 0.0
        %3854 = vmatpush.msra.mxu0 0.0
        %3855 = vmatpush.msra.mxu0 0.0
        %3856 = vmatpush.msra.mxu0 0.0
        %3857 = vmatpush.msra.mxu0 0.0
        %v3858 = vand.u32 %v3808, 4294901760
        %v3859 = vsub.f32 %v3808, %v3858
        %v3860 = vand.u32 %v3859, 4294901760
        %v3861 = vsub.f32 %v3859, %v3860
        %v3862 = vand.u32 %v3861, 4294901760
        %3863 = vmatpush.msra.mxu0 %v3862
        %v3864 = vand.u32 %v3807, 4294901760
        %v3865 = vsub.f32 %v3807, %v3864
        %v3866 = vand.u32 %v3865, 4294901760
        %v3867 = vsub.f32 %v3865, %v3866
        %v3868 = vand.u32 %v3867, 4294901760
        %3869 = vmatpush.msra.mxu0 %v3868
        %v3870 = vand.u32 %v3806, 4294901760
        %v3871 = vsub.f32 %v3806, %v3870
        %v3872 = vand.u32 %v3871, 4294901760
        %v3873 = vsub.f32 %v3871, %v3872
        %v3874 = vand.u32 %v3873, 4294901760
        %3875 = vmatpush.msra.mxu0 %v3874
        %v3876 = vand.u32 %v3805, 4294901760
        %v3877 = vsub.f32 %v3805, %v3876
        %v3878 = vand.u32 %v3877, 4294901760
        %v3879 = vsub.f32 %v3877, %v3878
        %v3880 = vand.u32 %v3879, 4294901760
        %3881 = vmatpush.msra.mxu0 %v3880
        %v3882 = vand.u32 %v3804, 4294901760
        %v3883 = vsub.f32 %v3804, %v3882
        %v3884 = vand.u32 %v3883, 4294901760
        %v3885 = vsub.f32 %v3883, %v3884
        %v3886 = vand.u32 %v3885, 4294901760
        %3887 = vmatpush.msra.mxu0 %v3886
        %v3888 = vand.u32 %v3803, 4294901760
        %v3889 = vsub.f32 %v3803, %v3888
        %v3890 = vand.u32 %v3889, 4294901760
        %v3891 = vsub.f32 %v3889, %v3890
        %v3892 = vand.u32 %v3891, 4294901760
        %3893 = vmatpush.msra.mxu0 %v3892
        %v3894 = vand.u32 %v3802, 4294901760
        %v3895 = vsub.f32 %v3802, %v3894
        %v3896 = vand.u32 %v3895, 4294901760
        %v3897 = vsub.f32 %v3895, %v3896
        %v3898 = vand.u32 %v3897, 4294901760
        %3899 = vmatpush.msra.mxu0 %v3898
        %v3900 = vand.u32 %v3801, 4294901760
        %v3901 = vsub.f32 %v3801, %v3900
        %v3902 = vand.u32 %v3901, 4294901760
        %v3903 = vsub.f32 %v3901, %v3902
        %v3904 = vand.u32 %v3903, 4294901760
        %3905 = vmatpush.msra.mxu0 %v3904
        %v3906 = vand.u32 %v573, 4294901760
        %3907 = vmatmul.f32.gmra.mxu0 %v3906
        %v3908 = vpop.f32.mrf.mxu0
        %v3909 = vadd.f32 %v3840, %v3908
        %v3910 = vand.u32 %v576, 4294901760
        %3911 = vmatmul.f32.gmra.mxu0 %v3910
        %v3912 = vpop.f32.mrf.mxu0
        %v3913 = vadd.f32 %v3848, %v3912
        %3914 = vdwg.mxu0
        %3915 = vmatpush.msra.mxu0 0.0
        %3916 = vmatpush.msra.mxu0 0.0
        %3917 = vmatpush.msra.mxu0 0.0
        %3918 = vmatpush.msra.mxu0 0.0
        %3919 = vmatpush.msra.mxu0 0.0
        %3920 = vmatpush.msra.mxu0 0.0
        %3921 = vmatpush.msra.mxu0 0.0
        %3922 = vmatpush.msra.mxu0 0.0
        %v3923 = vand.u32 %v3808, 4294901760
        %v3924 = vsub.f32 %v3808, %v3923
        %3925 = vmatpush.msra.mxu0 %v3924
        %v3926 = vand.u32 %v3807, 4294901760
        %v3927 = vsub.f32 %v3807, %v3926
        %3928 = vmatpush.msra.mxu0 %v3927
        %v3929 = vand.u32 %v3806, 4294901760
        %v3930 = vsub.f32 %v3806, %v3929
        %3931 = vmatpush.msra.mxu0 %v3930
        %v3932 = vand.u32 %v3805, 4294901760
        %v3933 = vsub.f32 %v3805, %v3932
        %3934 = vmatpush.msra.mxu0 %v3933
        %v3935 = vand.u32 %v3804, 4294901760
        %v3936 = vsub.f32 %v3804, %v3935
        %3937 = vmatpush.msra.mxu0 %v3936
        %v3938 = vand.u32 %v3803, 4294901760
        %v3939 = vsub.f32 %v3803, %v3938
        %3940 = vmatpush.msra.mxu0 %v3939
        %v3941 = vand.u32 %v3802, 4294901760
        %v3942 = vsub.f32 %v3802, %v3941
        %3943 = vmatpush.msra.mxu0 %v3942
        %v3944 = vand.u32 %v3801, 4294901760
        %v3945 = vsub.f32 %v3801, %v3944
        %3946 = vmatpush.msra.mxu0 %v3945
        %v3947 = vand.u32 %v573, 4294901760
        %v3948 = vsub.f32 %v573, %v3947
        %3949 = vmatmul.f32.gmra.mxu0 %v3948
        %v3950 = vpop.f32.mrf.mxu0
        %v3951 = vadd.f32 %v3909, %v3950
        %v3952 = vand.u32 %v576, 4294901760
        %v3953 = vsub.f32 %v576, %v3952
        %3954 = vmatmul.f32.gmra.mxu0 %v3953
        %v3955 = vpop.f32.mrf.mxu0
        %v3956 = vadd.f32 %v3913, %v3955
        %3957 = vdwg.mxu0
        %3958 = vmatpush.msra.mxu0 0.0
        %3959 = vmatpush.msra.mxu0 0.0
        %3960 = vmatpush.msra.mxu0 0.0
        %3961 = vmatpush.msra.mxu0 0.0
        %3962 = vmatpush.msra.mxu0 0.0
        %3963 = vmatpush.msra.mxu0 0.0
        %3964 = vmatpush.msra.mxu0 0.0
        %3965 = vmatpush.msra.mxu0 0.0
        %v3966 = vand.u32 %v3808, 4294901760
        %3967 = vmatpush.msra.mxu0 %v3966
        %v3968 = vand.u32 %v3807, 4294901760
        %3969 = vmatpush.msra.mxu0 %v3968
        %v3970 = vand.u32 %v3806, 4294901760
        %3971 = vmatpush.msra.mxu0 %v3970
        %v3972 = vand.u32 %v3805, 4294901760
        %3973 = vmatpush.msra.mxu0 %v3972
        %v3974 = vand.u32 %v3804, 4294901760
        %3975 = vmatpush.msra.mxu0 %v3974
        %v3976 = vand.u32 %v3803, 4294901760
        %3977 = vmatpush.msra.mxu0 %v3976
        %v3978 = vand.u32 %v3802, 4294901760
        %3979 = vmatpush.msra.mxu0 %v3978
        %v3980 = vand.u32 %v3801, 4294901760
        %3981 = vmatpush.msra.mxu0 %v3980
        %v3982 = vand.u32 %v573, 4294901760
        %v3983 = vsub.f32 %v573, %v3982
        %v3984 = vand.u32 %v3983, 4294901760
        %3985 = vmatmul.f32.gmra.mxu0 %v3984
        %v3986 = vpop.f32.mrf.mxu0
        %v3987 = vadd.f32 %v3951, %v3986
        %v3988 = vand.u32 %v576, 4294901760
        %v3989 = vsub.f32 %v576, %v3988
        %v3990 = vand.u32 %v3989, 4294901760
        %3991 = vmatmul.f32.gmra.mxu0 %v3990
        %v3992 = vpop.f32.mrf.mxu0
        %v3993 = vadd.f32 %v3956, %v3992
        %3994 = vdwg.mxu0
        %3995 = vmatpush.msra.mxu0 0.0
        %3996 = vmatpush.msra.mxu0 0.0
        %3997 = vmatpush.msra.mxu0 0.0
        %3998 = vmatpush.msra.mxu0 0.0
        %3999 = vmatpush.msra.mxu0 0.0
        %4000 = vmatpush.msra.mxu0 0.0
        %4001 = vmatpush.msra.mxu0 0.0
        %4002 = vmatpush.msra.mxu0 0.0
        %v4003 = vand.u32 %v3808, 4294901760
        %v4004 = vsub.f32 %v3808, %v4003
        %v4005 = vand.u32 %v4004, 4294901760
        %4006 = vmatpush.msra.mxu0 %v4005
        %v4007 = vand.u32 %v3807, 4294901760
        %v4008 = vsub.f32 %v3807, %v4007
        %v4009 = vand.u32 %v4008, 4294901760
        %4010 = vmatpush.msra.mxu0 %v4009
        %v4011 = vand.u32 %v3806, 4294901760
        %v4012 = vsub.f32 %v3806, %v4011
        %v4013 = vand.u32 %v4012, 4294901760
        %4014 = vmatpush.msra.mxu0 %v4013
        %v4015 = vand.u32 %v3805, 4294901760
        %v4016 = vsub.f32 %v3805, %v4015
        %v4017 = vand.u32 %v4016, 4294901760
        %4018 = vmatpush.msra.mxu0 %v4017
        %v4019 = vand.u32 %v3804, 4294901760
        %v4020 = vsub.f32 %v3804, %v4019
        %v4021 = vand.u32 %v4020, 4294901760
        %4022 = vmatpush.msra.mxu0 %v4021
        %v4023 = vand.u32 %v3803, 4294901760
        %v4024 = vsub.f32 %v3803, %v4023
        %v4025 = vand.u32 %v4024, 4294901760
        %4026 = vmatpush.msra.mxu0 %v4025
        %v4027 = vand.u32 %v3802, 4294901760
        %v4028 = vsub.f32 %v3802, %v4027
        %v4029 = vand.u32 %v4028, 4294901760
        %4030 = vmatpush.msra.mxu0 %v4029
        %v4031 = vand.u32 %v3801, 4294901760
        %v4032 = vsub.f32 %v3801, %v4031
        %v4033 = vand.u32 %v4032, 4294901760
        %4034 = vmatpush.msra.mxu0 %v4033
        %v4035 = vand.u32 %v573, 4294901760
        %4036 = vmatmul.f32.gmra.mxu0 %v4035
        %v4037 = vpop.f32.mrf.mxu0
        %v4038 = vadd.f32 %v3987, %v4037
        %v4039 = vand.u32 %v576, 4294901760
        %4040 = vmatmul.f32.gmra.mxu0 %v4039
        %v4041 = vpop.f32.mrf.mxu0
        %v4042 = vadd.f32 %v3993, %v4041
        %4043 = vdwg.mxu0
        %4044 = vmatpush.msra.mxu0 0.0
        %4045 = vmatpush.msra.mxu0 0.0
        %4046 = vmatpush.msra.mxu0 0.0
        %4047 = vmatpush.msra.mxu0 0.0
        %4048 = vmatpush.msra.mxu0 0.0
        %4049 = vmatpush.msra.mxu0 0.0
        %4050 = vmatpush.msra.mxu0 0.0
        %4051 = vmatpush.msra.mxu0 0.0
        %v4052 = vand.u32 %v3808, 4294901760
        %4053 = vmatpush.msra.mxu0 %v4052
        %v4054 = vand.u32 %v3807, 4294901760
        %4055 = vmatpush.msra.mxu0 %v4054
        %v4056 = vand.u32 %v3806, 4294901760
        %4057 = vmatpush.msra.mxu0 %v4056
        %v4058 = vand.u32 %v3805, 4294901760
        %4059 = vmatpush.msra.mxu0 %v4058
        %v4060 = vand.u32 %v3804, 4294901760
        %4061 = vmatpush.msra.mxu0 %v4060
        %v4062 = vand.u32 %v3803, 4294901760
        %4063 = vmatpush.msra.mxu0 %v4062
        %v4064 = vand.u32 %v3802, 4294901760
        %4065 = vmatpush.msra.mxu0 %v4064
        %v4066 = vand.u32 %v3801, 4294901760
        %4067 = vmatpush.msra.mxu0 %v4066
        %v4068 = vand.u32 %v573, 4294901760
        %4069 = vmatmul.f32.gmra.mxu0 %v4068
        %v4070 = vpop.f32.mrf.mxu0
        %v4071 = vadd.f32 %v4038, %v4070
        %v4072 = vand.u32 %v576, 4294901760
        %4073 = vmatmul.f32.gmra.mxu0 %v4072
        %v4074 = vpop.f32.mrf.mxu0
        %v4075 = vadd.f32 %v4042, %v4074
        %4076 = vdwg.mxu0
        %s4077 = scalar_lea.vmem %s5, 128
        %v4078 = vld [vmem:[%s4077] sm:$0xff]
        %v4079 = vld [vmem:[%s4077 + $0x8] sm:$0xff]
        %v4080 = vld [vmem:[%s4077 + $0x10] sm:$0xff]
        %v4081 = vld [vmem:[%s4077 + $0x18] sm:$0xff]
        %v4082 = vld [vmem:[%s4077 + $0x20] sm:$0xff]
        %v4083 = vld [vmem:[%s4077 + $0x28] sm:$0xff]
        %v4084 = vld [vmem:[%s4077 + $0x30] sm:$0xff]
        %v4085 = vld [vmem:[%s4077 + $0x38] sm:$0xff]
        %4086 = vmatpush.msra.mxu0 0.0
        %4087 = vmatpush.msra.mxu0 0.0
        %4088 = vmatpush.msra.mxu0 0.0
        %4089 = vmatpush.msra.mxu0 0.0
        %4090 = vmatpush.msra.mxu0 0.0
        %4091 = vmatpush.msra.mxu0 0.0
        %4092 = vmatpush.msra.mxu0 0.0
        %4093 = vmatpush.msra.mxu0 0.0
        %v4094 = vand.u32 %v4085, 4294901760
        %4095 = vmatpush.msra.mxu0 %v4094
        %v4096 = vand.u32 %v4084, 4294901760
        %4097 = vmatpush.msra.mxu0 %v4096
        %v4098 = vand.u32 %v4083, 4294901760
        %4099 = vmatpush.msra.mxu0 %v4098
        %v4100 = vand.u32 %v4082, 4294901760
        %4101 = vmatpush.msra.mxu0 %v4100
        %v4102 = vand.u32 %v4081, 4294901760
        %4103 = vmatpush.msra.mxu0 %v4102
        %v4104 = vand.u32 %v4080, 4294901760
        %4105 = vmatpush.msra.mxu0 %v4104
        %v4106 = vand.u32 %v4079, 4294901760
        %4107 = vmatpush.msra.mxu0 %v4106
        %v4108 = vand.u32 %v4078, 4294901760
        %4109 = vmatpush.msra.mxu0 %v4108
        %v4110 = vand.u32 %v573, 4294901760
        %v4111 = vsub.f32 %v573, %v4110
        %v4112 = vand.u32 %v4111, 4294901760
        %v4113 = vsub.f32 %v4111, %v4112
        %v4114 = vand.u32 %v4113, 4294901760
        %4115 = vmatmul.f32.gmra.mxu0 %v4114
        %v4116 = vpop.f32.mrf.mxu0
        %v4117 = vadd.f32 0.0, %v4116
        %v4118 = vand.u32 %v576, 4294901760
        %v4119 = vsub.f32 %v576, %v4118
        %v4120 = vand.u32 %v4119, 4294901760
        %v4121 = vsub.f32 %v4119, %v4120
        %v4122 = vand.u32 %v4121, 4294901760
        %4123 = vmatmul.f32.gmra.mxu0 %v4122
        %v4124 = vpop.f32.mrf.mxu0
        %v4125 = vadd.f32 0.0, %v4124
        %4126 = vdwg.mxu0
        %4127 = vmatpush.msra.mxu0 0.0
        %4128 = vmatpush.msra.mxu0 0.0
        %4129 = vmatpush.msra.mxu0 0.0
        %4130 = vmatpush.msra.mxu0 0.0
        %4131 = vmatpush.msra.mxu0 0.0
        %4132 = vmatpush.msra.mxu0 0.0
        %4133 = vmatpush.msra.mxu0 0.0
        %4134 = vmatpush.msra.mxu0 0.0
        %v4135 = vand.u32 %v4085, 4294901760
        %v4136 = vsub.f32 %v4085, %v4135
        %v4137 = vand.u32 %v4136, 4294901760
        %v4138 = vsub.f32 %v4136, %v4137
        %v4139 = vand.u32 %v4138, 4294901760
        %4140 = vmatpush.msra.mxu0 %v4139
        %v4141 = vand.u32 %v4084, 4294901760
        %v4142 = vsub.f32 %v4084, %v4141
        %v4143 = vand.u32 %v4142, 4294901760
        %v4144 = vsub.f32 %v4142, %v4143
        %v4145 = vand.u32 %v4144, 4294901760
        %4146 = vmatpush.msra.mxu0 %v4145
        %v4147 = vand.u32 %v4083, 4294901760
        %v4148 = vsub.f32 %v4083, %v4147
        %v4149 = vand.u32 %v4148, 4294901760
        %v4150 = vsub.f32 %v4148, %v4149
        %v4151 = vand.u32 %v4150, 4294901760
        %4152 = vmatpush.msra.mxu0 %v4151
        %v4153 = vand.u32 %v4082, 4294901760
        %v4154 = vsub.f32 %v4082, %v4153
        %v4155 = vand.u32 %v4154, 4294901760
        %v4156 = vsub.f32 %v4154, %v4155
        %v4157 = vand.u32 %v4156, 4294901760
        %4158 = vmatpush.msra.mxu0 %v4157
        %v4159 = vand.u32 %v4081, 4294901760
        %v4160 = vsub.f32 %v4081, %v4159
        %v4161 = vand.u32 %v4160, 4294901760
        %v4162 = vsub.f32 %v4160, %v4161
        %v4163 = vand.u32 %v4162, 4294901760
        %4164 = vmatpush.msra.mxu0 %v4163
        %v4165 = vand.u32 %v4080, 4294901760
        %v4166 = vsub.f32 %v4080, %v4165
        %v4167 = vand.u32 %v4166, 4294901760
        %v4168 = vsub.f32 %v4166, %v4167
        %v4169 = vand.u32 %v4168, 4294901760
        %4170 = vmatpush.msra.mxu0 %v4169
        %v4171 = vand.u32 %v4079, 4294901760
        %v4172 = vsub.f32 %v4079, %v4171
        %v4173 = vand.u32 %v4172, 4294901760
        %v4174 = vsub.f32 %v4172, %v4173
        %v4175 = vand.u32 %v4174, 4294901760
        %4176 = vmatpush.msra.mxu0 %v4175
        %v4177 = vand.u32 %v4078, 4294901760
        %v4178 = vsub.f32 %v4078, %v4177
        %v4179 = vand.u32 %v4178, 4294901760
        %v4180 = vsub.f32 %v4178, %v4179
        %v4181 = vand.u32 %v4180, 4294901760
        %4182 = vmatpush.msra.mxu0 %v4181
        %v4183 = vand.u32 %v573, 4294901760
        %4184 = vmatmul.f32.gmra.mxu0 %v4183
        %v4185 = vpop.f32.mrf.mxu0
        %v4186 = vadd.f32 %v4117, %v4185
        %v4187 = vand.u32 %v576, 4294901760
        %4188 = vmatmul.f32.gmra.mxu0 %v4187
        %v4189 = vpop.f32.mrf.mxu0
        %v4190 = vadd.f32 %v4125, %v4189
        %4191 = vdwg.mxu0
        %4192 = vmatpush.msra.mxu0 0.0
        %4193 = vmatpush.msra.mxu0 0.0
        %4194 = vmatpush.msra.mxu0 0.0
        %4195 = vmatpush.msra.mxu0 0.0
        %4196 = vmatpush.msra.mxu0 0.0
        %4197 = vmatpush.msra.mxu0 0.0
        %4198 = vmatpush.msra.mxu0 0.0
        %4199 = vmatpush.msra.mxu0 0.0
        %v4200 = vand.u32 %v4085, 4294901760
        %v4201 = vsub.f32 %v4085, %v4200
        %4202 = vmatpush.msra.mxu0 %v4201
        %v4203 = vand.u32 %v4084, 4294901760
        %v4204 = vsub.f32 %v4084, %v4203
        %4205 = vmatpush.msra.mxu0 %v4204
        %v4206 = vand.u32 %v4083, 4294901760
        %v4207 = vsub.f32 %v4083, %v4206
        %4208 = vmatpush.msra.mxu0 %v4207
        %v4209 = vand.u32 %v4082, 4294901760
        %v4210 = vsub.f32 %v4082, %v4209
        %4211 = vmatpush.msra.mxu0 %v4210
        %v4212 = vand.u32 %v4081, 4294901760
        %v4213 = vsub.f32 %v4081, %v4212
        %4214 = vmatpush.msra.mxu0 %v4213
        %v4215 = vand.u32 %v4080, 4294901760
        %v4216 = vsub.f32 %v4080, %v4215
        %4217 = vmatpush.msra.mxu0 %v4216
        %v4218 = vand.u32 %v4079, 4294901760
        %v4219 = vsub.f32 %v4079, %v4218
        %4220 = vmatpush.msra.mxu0 %v4219
        %v4221 = vand.u32 %v4078, 4294901760
        %v4222 = vsub.f32 %v4078, %v4221
        %4223 = vmatpush.msra.mxu0 %v4222
        %v4224 = vand.u32 %v573, 4294901760
        %v4225 = vsub.f32 %v573, %v4224
        %4226 = vmatmul.f32.gmra.mxu0 %v4225
        %v4227 = vpop.f32.mrf.mxu0
        %v4228 = vadd.f32 %v4186, %v4227
        %v4229 = vand.u32 %v576, 4294901760
        %v4230 = vsub.f32 %v576, %v4229
        %4231 = vmatmul.f32.gmra.mxu0 %v4230
        %v4232 = vpop.f32.mrf.mxu0
        %v4233 = vadd.f32 %v4190, %v4232
        %4234 = vdwg.mxu0
        %4235 = vmatpush.msra.mxu0 0.0
        %4236 = vmatpush.msra.mxu0 0.0
        %4237 = vmatpush.msra.mxu0 0.0
        %4238 = vmatpush.msra.mxu0 0.0
        %4239 = vmatpush.msra.mxu0 0.0
        %4240 = vmatpush.msra.mxu0 0.0
        %4241 = vmatpush.msra.mxu0 0.0
        %4242 = vmatpush.msra.mxu0 0.0
        %v4243 = vand.u32 %v4085, 4294901760
        %4244 = vmatpush.msra.mxu0 %v4243
        %v4245 = vand.u32 %v4084, 4294901760
        %4246 = vmatpush.msra.mxu0 %v4245
        %v4247 = vand.u32 %v4083, 4294901760
        %4248 = vmatpush.msra.mxu0 %v4247
        %v4249 = vand.u32 %v4082, 4294901760
        %4250 = vmatpush.msra.mxu0 %v4249
        %v4251 = vand.u32 %v4081, 4294901760
        %4252 = vmatpush.msra.mxu0 %v4251
        %v4253 = vand.u32 %v4080, 4294901760
        %4254 = vmatpush.msra.mxu0 %v4253
        %v4255 = vand.u32 %v4079, 4294901760
        %4256 = vmatpush.msra.mxu0 %v4255
        %v4257 = vand.u32 %v4078, 4294901760
        %4258 = vmatpush.msra.mxu0 %v4257
        %v4259 = vand.u32 %v573, 4294901760
        %v4260 = vsub.f32 %v573, %v4259
        %v4261 = vand.u32 %v4260, 4294901760
        %4262 = vmatmul.f32.gmra.mxu0 %v4261
        %v4263 = vpop.f32.mrf.mxu0
        %v4264 = vadd.f32 %v4228, %v4263
        %v4265 = vand.u32 %v576, 4294901760
        %v4266 = vsub.f32 %v576, %v4265
        %v4267 = vand.u32 %v4266, 4294901760
        %4268 = vmatmul.f32.gmra.mxu0 %v4267
        %v4269 = vpop.f32.mrf.mxu0
        %v4270 = vadd.f32 %v4233, %v4269
        %4271 = vdwg.mxu0
        %4272 = vmatpush.msra.mxu0 0.0
        %4273 = vmatpush.msra.mxu0 0.0
        %4274 = vmatpush.msra.mxu0 0.0
        %4275 = vmatpush.msra.mxu0 0.0
        %4276 = vmatpush.msra.mxu0 0.0
        %4277 = vmatpush.msra.mxu0 0.0
        %4278 = vmatpush.msra.mxu0 0.0
        %4279 = vmatpush.msra.mxu0 0.0
        %v4280 = vand.u32 %v4085, 4294901760
        %v4281 = vsub.f32 %v4085, %v4280
        %v4282 = vand.u32 %v4281, 4294901760
        %4283 = vmatpush.msra.mxu0 %v4282
        %v4284 = vand.u32 %v4084, 4294901760
        %v4285 = vsub.f32 %v4084, %v4284
        %v4286 = vand.u32 %v4285, 4294901760
        %4287 = vmatpush.msra.mxu0 %v4286
        %v4288 = vand.u32 %v4083, 4294901760
        %v4289 = vsub.f32 %v4083, %v4288
        %v4290 = vand.u32 %v4289, 4294901760
        %4291 = vmatpush.msra.mxu0 %v4290
        %v4292 = vand.u32 %v4082, 4294901760
        %v4293 = vsub.f32 %v4082, %v4292
        %v4294 = vand.u32 %v4293, 4294901760
        %4295 = vmatpush.msra.mxu0 %v4294
        %v4296 = vand.u32 %v4081, 4294901760
        %v4297 = vsub.f32 %v4081, %v4296
        %v4298 = vand.u32 %v4297, 4294901760
        %4299 = vmatpush.msra.mxu0 %v4298
        %v4300 = vand.u32 %v4080, 4294901760
        %v4301 = vsub.f32 %v4080, %v4300
        %v4302 = vand.u32 %v4301, 4294901760
        %4303 = vmatpush.msra.mxu0 %v4302
        %v4304 = vand.u32 %v4079, 4294901760
        %v4305 = vsub.f32 %v4079, %v4304
        %v4306 = vand.u32 %v4305, 4294901760
        %4307 = vmatpush.msra.mxu0 %v4306
        %v4308 = vand.u32 %v4078, 4294901760
        %v4309 = vsub.f32 %v4078, %v4308
        %v4310 = vand.u32 %v4309, 4294901760
        %4311 = vmatpush.msra.mxu0 %v4310
        %v4312 = vand.u32 %v573, 4294901760
        %4313 = vmatmul.f32.gmra.mxu0 %v4312
        %v4314 = vpop.f32.mrf.mxu0
        %v4315 = vadd.f32 %v4264, %v4314
        %v4316 = vand.u32 %v576, 4294901760
        %4317 = vmatmul.f32.gmra.mxu0 %v4316
        %v4318 = vpop.f32.mrf.mxu0
        %v4319 = vadd.f32 %v4270, %v4318
        %4320 = vdwg.mxu0
        %4321 = vmatpush.msra.mxu0 0.0
        %4322 = vmatpush.msra.mxu0 0.0
        %4323 = vmatpush.msra.mxu0 0.0
        %4324 = vmatpush.msra.mxu0 0.0
        %4325 = vmatpush.msra.mxu0 0.0
        %4326 = vmatpush.msra.mxu0 0.0
        %4327 = vmatpush.msra.mxu0 0.0
        %4328 = vmatpush.msra.mxu0 0.0
        %v4329 = vand.u32 %v4085, 4294901760
        %4330 = vmatpush.msra.mxu0 %v4329
        %v4331 = vand.u32 %v4084, 4294901760
        %4332 = vmatpush.msra.mxu0 %v4331
        %v4333 = vand.u32 %v4083, 4294901760
        %4334 = vmatpush.msra.mxu0 %v4333
        %v4335 = vand.u32 %v4082, 4294901760
        %4336 = vmatpush.msra.mxu0 %v4335
        %v4337 = vand.u32 %v4081, 4294901760
        %4338 = vmatpush.msra.mxu0 %v4337
        %v4339 = vand.u32 %v4080, 4294901760
        %4340 = vmatpush.msra.mxu0 %v4339
        %v4341 = vand.u32 %v4079, 4294901760
        %4342 = vmatpush.msra.mxu0 %v4341
        %v4343 = vand.u32 %v4078, 4294901760
        %4344 = vmatpush.msra.mxu0 %v4343
        %v4345 = vand.u32 %v573, 4294901760
        %4346 = vmatmul.f32.gmra.mxu0 %v4345
        %v4347 = vpop.f32.mrf.mxu0
        %v4348 = vadd.f32 %v4315, %v4347
        %v4349 = vand.u32 %v576, 4294901760
        %4350 = vmatmul.f32.gmra.mxu0 %v4349
        %v4351 = vpop.f32.mrf.mxu0
        %v4352 = vadd.f32 %v4319, %v4351
        %4353 = vdwg.mxu0
        %v4355 = vsel %vm1398, %v3794, 0
        %v4358 = vsel %vm1398, %v3798, 0
        %v4361 = vsel %vm1398, %v4071, 0
        %v4364 = vsel %vm1398, %v4075, 0
        %4366 = vmatpush.xpose.msra.mxu0 0.0
        %4367 = vmatpush.xpose.msra.mxu0 0.0
        %4368 = vmatpush.xpose.msra.mxu0 0.0
        %4369 = vmatpush.xpose.msra.mxu0 0.0
        %4370 = vmatpush.xpose.msra.mxu0 0.0
        %4371 = vmatpush.xpose.msra.mxu0 0.0
        %4372 = vmatpush.xpose.msra.mxu0 0.0
        %4373 = vmatpush.xpose.msra.mxu0 0.0
        %4374 = vmatpush.xpose.msra.mxu0 0.0
        %4375 = vmatpush.xpose.msra.mxu0 0.0
        %4376 = vmatpush.xpose.msra.mxu0 0.0
        %4377 = vmatpush.xpose.msra.mxu0 0.0
        %4378 = vmatpush.xpose.msra.mxu0 0.0
        %4379 = vmatpush.xpose.msra.mxu0 0.0
        %v4380 = vand.u32 %v4364, 4294901760
        %4381 = vmatpush.xpose.msra.mxu0 %v4380
        %v4382 = vand.u32 %v4361, 4294901760
        %4383 = vmatpush.xpose.msra.mxu0 %v4382
        %v4384 = vand.u32 %v4355, 4294901760
        %v4385 = vsub.f32 %v4355, %v4384
        %v4386 = vand.u32 %v4385, 4294901760
        %v4387 = vsub.f32 %v4385, %v4386
        %v4388 = vand.u32 %v4387, 4294901760
        %4389 = vmatmul.f32.gmra.mxu0 %v4388
        %v4390 = vpop.f32.mrf.mxu0
        %v4391 = vadd.f32 0.0, %v4390
        %v4392 = vand.u32 %v4358, 4294901760
        %v4393 = vsub.f32 %v4358, %v4392
        %v4394 = vand.u32 %v4393, 4294901760
        %v4395 = vsub.f32 %v4393, %v4394
        %v4396 = vand.u32 %v4395, 4294901760
        %4397 = vmatmul.f32.gmra.mxu0 %v4396
        %v4398 = vpop.f32.mrf.mxu0
        %v4399 = vadd.f32 0.0, %v4398
        %4400 = vdwg.mxu0
        %4401 = vmatpush.xpose.msra.mxu0 0.0
        %4402 = vmatpush.xpose.msra.mxu0 0.0
        %4403 = vmatpush.xpose.msra.mxu0 0.0
        %4404 = vmatpush.xpose.msra.mxu0 0.0
        %4405 = vmatpush.xpose.msra.mxu0 0.0
        %4406 = vmatpush.xpose.msra.mxu0 0.0
        %4407 = vmatpush.xpose.msra.mxu0 0.0
        %4408 = vmatpush.xpose.msra.mxu0 0.0
        %4409 = vmatpush.xpose.msra.mxu0 0.0
        %4410 = vmatpush.xpose.msra.mxu0 0.0
        %4411 = vmatpush.xpose.msra.mxu0 0.0
        %4412 = vmatpush.xpose.msra.mxu0 0.0
        %4413 = vmatpush.xpose.msra.mxu0 0.0
        %4414 = vmatpush.xpose.msra.mxu0 0.0
        %v4415 = vand.u32 %v4364, 4294901760
        %v4416 = vsub.f32 %v4364, %v4415
        %v4417 = vand.u32 %v4416, 4294901760
        %v4418 = vsub.f32 %v4416, %v4417
        %v4419 = vand.u32 %v4418, 4294901760
        %4420 = vmatpush.xpose.msra.mxu0 %v4419
        %v4421 = vand.u32 %v4361, 4294901760
        %v4422 = vsub.f32 %v4361, %v4421
        %v4423 = vand.u32 %v4422, 4294901760
        %v4424 = vsub.f32 %v4422, %v4423
        %v4425 = vand.u32 %v4424, 4294901760
        %4426 = vmatpush.xpose.msra.mxu0 %v4425
        %v4427 = vand.u32 %v4355, 4294901760
        %4428 = vmatmul.f32.gmra.mxu0 %v4427
        %v4429 = vpop.f32.mrf.mxu0
        %v4430 = vadd.f32 %v4391, %v4429
        %v4431 = vand.u32 %v4358, 4294901760
        %4432 = vmatmul.f32.gmra.mxu0 %v4431
        %v4433 = vpop.f32.mrf.mxu0
        %v4434 = vadd.f32 %v4399, %v4433
        %4435 = vdwg.mxu0
        %4436 = vmatpush.xpose.msra.mxu0 0.0
        %4437 = vmatpush.xpose.msra.mxu0 0.0
        %4438 = vmatpush.xpose.msra.mxu0 0.0
        %4439 = vmatpush.xpose.msra.mxu0 0.0
        %4440 = vmatpush.xpose.msra.mxu0 0.0
        %4441 = vmatpush.xpose.msra.mxu0 0.0
        %4442 = vmatpush.xpose.msra.mxu0 0.0
        %4443 = vmatpush.xpose.msra.mxu0 0.0
        %4444 = vmatpush.xpose.msra.mxu0 0.0
        %4445 = vmatpush.xpose.msra.mxu0 0.0
        %4446 = vmatpush.xpose.msra.mxu0 0.0
        %4447 = vmatpush.xpose.msra.mxu0 0.0
        %4448 = vmatpush.xpose.msra.mxu0 0.0
        %4449 = vmatpush.xpose.msra.mxu0 0.0
        %v4450 = vand.u32 %v4364, 4294901760
        %v4451 = vsub.f32 %v4364, %v4450
        %4452 = vmatpush.xpose.msra.mxu0 %v4451
        %v4453 = vand.u32 %v4361, 4294901760
        %v4454 = vsub.f32 %v4361, %v4453
        %4455 = vmatpush.xpose.msra.mxu0 %v4454
        %v4456 = vand.u32 %v4355, 4294901760
        %v4457 = vsub.f32 %v4355, %v4456
        %4458 = vmatmul.f32.gmra.mxu0 %v4457
        %v4459 = vpop.f32.mrf.mxu0
        %v4460 = vadd.f32 %v4430, %v4459
        %v4461 = vand.u32 %v4358, 4294901760
        %v4462 = vsub.f32 %v4358, %v4461
        %4463 = vmatmul.f32.gmra.mxu0 %v4462
        %v4464 = vpop.f32.mrf.mxu0
        %v4465 = vadd.f32 %v4434, %v4464
        %4466 = vdwg.mxu0
        %4467 = vmatpush.xpose.msra.mxu0 0.0
        %4468 = vmatpush.xpose.msra.mxu0 0.0
        %4469 = vmatpush.xpose.msra.mxu0 0.0
        %4470 = vmatpush.xpose.msra.mxu0 0.0
        %4471 = vmatpush.xpose.msra.mxu0 0.0
        %4472 = vmatpush.xpose.msra.mxu0 0.0
        %4473 = vmatpush.xpose.msra.mxu0 0.0
        %4474 = vmatpush.xpose.msra.mxu0 0.0
        %4475 = vmatpush.xpose.msra.mxu0 0.0
        %4476 = vmatpush.xpose.msra.mxu0 0.0
        %4477 = vmatpush.xpose.msra.mxu0 0.0
        %4478 = vmatpush.xpose.msra.mxu0 0.0
        %4479 = vmatpush.xpose.msra.mxu0 0.0
        %4480 = vmatpush.xpose.msra.mxu0 0.0
        %v4481 = vand.u32 %v4364, 4294901760
        %4482 = vmatpush.xpose.msra.mxu0 %v4481
        %v4483 = vand.u32 %v4361, 4294901760
        %4484 = vmatpush.xpose.msra.mxu0 %v4483
        %v4485 = vand.u32 %v4355, 4294901760
        %v4486 = vsub.f32 %v4355, %v4485
        %v4487 = vand.u32 %v4486, 4294901760
        %4488 = vmatmul.f32.gmra.mxu0 %v4487
        %v4489 = vpop.f32.mrf.mxu0
        %v4490 = vadd.f32 %v4460, %v4489
        %v4491 = vand.u32 %v4358, 4294901760
        %v4492 = vsub.f32 %v4358, %v4491
        %v4493 = vand.u32 %v4492, 4294901760
        %4494 = vmatmul.f32.gmra.mxu0 %v4493
        %v4495 = vpop.f32.mrf.mxu0
        %v4496 = vadd.f32 %v4465, %v4495
        %4497 = vdwg.mxu0
        %4498 = vmatpush.xpose.msra.mxu0 0.0
        %4499 = vmatpush.xpose.msra.mxu0 0.0
        %4500 = vmatpush.xpose.msra.mxu0 0.0
        %4501 = vmatpush.xpose.msra.mxu0 0.0
        %4502 = vmatpush.xpose.msra.mxu0 0.0
        %4503 = vmatpush.xpose.msra.mxu0 0.0
        %4504 = vmatpush.xpose.msra.mxu0 0.0
        %4505 = vmatpush.xpose.msra.mxu0 0.0
        %4506 = vmatpush.xpose.msra.mxu0 0.0
        %4507 = vmatpush.xpose.msra.mxu0 0.0
        %4508 = vmatpush.xpose.msra.mxu0 0.0
        %4509 = vmatpush.xpose.msra.mxu0 0.0
        %4510 = vmatpush.xpose.msra.mxu0 0.0
        %4511 = vmatpush.xpose.msra.mxu0 0.0
        %v4512 = vand.u32 %v4364, 4294901760
        %v4513 = vsub.f32 %v4364, %v4512
        %v4514 = vand.u32 %v4513, 4294901760
        %4515 = vmatpush.xpose.msra.mxu0 %v4514
        %v4516 = vand.u32 %v4361, 4294901760
        %v4517 = vsub.f32 %v4361, %v4516
        %v4518 = vand.u32 %v4517, 4294901760
        %4519 = vmatpush.xpose.msra.mxu0 %v4518
        %v4520 = vand.u32 %v4355, 4294901760
        %4521 = vmatmul.f32.gmra.mxu0 %v4520
        %v4522 = vpop.f32.mrf.mxu0
        %v4523 = vadd.f32 %v4490, %v4522
        %v4524 = vand.u32 %v4358, 4294901760
        %4525 = vmatmul.f32.gmra.mxu0 %v4524
        %v4526 = vpop.f32.mrf.mxu0
        %v4527 = vadd.f32 %v4496, %v4526
        %4528 = vdwg.mxu0
        %4529 = vmatpush.xpose.msra.mxu0 0.0
        %4530 = vmatpush.xpose.msra.mxu0 0.0
        %4531 = vmatpush.xpose.msra.mxu0 0.0
        %4532 = vmatpush.xpose.msra.mxu0 0.0
        %4533 = vmatpush.xpose.msra.mxu0 0.0
        %4534 = vmatpush.xpose.msra.mxu0 0.0
        %4535 = vmatpush.xpose.msra.mxu0 0.0
        %4536 = vmatpush.xpose.msra.mxu0 0.0
        %4537 = vmatpush.xpose.msra.mxu0 0.0
        %4538 = vmatpush.xpose.msra.mxu0 0.0
        %4539 = vmatpush.xpose.msra.mxu0 0.0
        %4540 = vmatpush.xpose.msra.mxu0 0.0
        %4541 = vmatpush.xpose.msra.mxu0 0.0
        %4542 = vmatpush.xpose.msra.mxu0 0.0
        %v4543 = vand.u32 %v4364, 4294901760
        %4544 = vmatpush.xpose.msra.mxu0 %v4543
        %v4545 = vand.u32 %v4361, 4294901760
        %4546 = vmatpush.xpose.msra.mxu0 %v4545
        %v4547 = vand.u32 %v4355, 4294901760
        %4548 = vmatmul.f32.gmra.mxu0 %v4547
        %v4549 = vpop.f32.mrf.mxu0
        %v4550 = vadd.f32 %v4523, %v4549
        %v4551 = vand.u32 %v4358, 4294901760
        %4552 = vmatmul.f32.gmra.mxu0 %v4551
        %v4553 = vpop.f32.mrf.mxu0
        %v4554 = vadd.f32 %v4527, %v4553
        %4555 = vdwg.mxu0
        %v4556 = vmul.f32 %v4550, 0.125
        %v4557 = vmul.f32 %v4554, 0.125
        %v4558 = vsel %vm1398, %v4556, -inf
        %4559 = vmax.xlane.f32.xlu0 %v4558
        %v4560 = vpop.xlane.xlu0 %4559
        %v4561 = vsel %vm1398, %v4557, -inf
        %4562 = vmax.xlane.f32.xlu0 %v4561
        %v4563 = vpop.xlane.xlu0 %4562
        %v4564 = vsub.f32 %v4556, %v4560
        %v4565 = vsub.f32 %v4557, %v4563
        %v4566 = vmul.f32 %v4564, 1.442695
        %v4567 = vpow.pop %v4566
        %v4568 = vmul.f32 %v4565, 1.442695
        %v4569 = vpow.pop %v4568
        %v4570 = vsel %vm1398, %v4567, 0.0
        %4571 = vadd.xlane.f32.xlu0 %v4570
        %v4572 = vpop.xlane.xlu0 %4571
        %v4573 = vsel %vm1398, %v4569, 0.0
        %4574 = vadd.xlane.f32.xlu0 %v4573
        %v4575 = vpop.xlane.xlu0 %4574
        %v4576 = vrcp.pop %v4572
        %v4577 = vmul.f32 %v4572, %v4576
        %v4578 = vsub.f32 1.0, %v4577
        %v4579 = vmul.f32 %v4576, %v4578
        %v4580 = vadd.f32 %v4576, %v4579
        %vm4581 = vweird.f32 %v4572
        %vm4582 = vweird.f32 %v4576
        %vm4583 = vmor %vm4581, %vm4582
        %v4584 = vsel %vm4583, %v4576, %v4580
        %v4585 = vand.u32 2147483647, %v4572
        %vm4586 = vcmp.eq.f32.partialorder %v4585, 8.507059e+37
        %v4587 = vand.u32 %v4572, 2147483648
        %v4588 = vor.u32 1.1754944e-38, %v4587
        %v4589 = vsel %vm4586, %v4588, %v4584
        %v4590 = vmul.f32 %v4567, %v4589
        %v4591 = vrcp.pop %v4575
        %v4592 = vmul.f32 %v4575, %v4591
        %v4593 = vsub.f32 1.0, %v4592
        %v4594 = vmul.f32 %v4591, %v4593
        %v4595 = vadd.f32 %v4591, %v4594
        %vm4596 = vweird.f32 %v4575
        %vm4597 = vweird.f32 %v4591
        %vm4598 = vmor %vm4596, %vm4597
        %v4599 = vsel %vm4598, %v4591, %v4595
        %v4600 = vand.u32 2147483647, %v4575
        %vm4601 = vcmp.eq.f32.partialorder %v4600, 8.507059e+37
        %v4602 = vand.u32 %v4575, 2147483648
        %v4603 = vor.u32 1.1754944e-38, %v4602
        %v4604 = vsel %vm4601, %v4603, %v4599
        %v4605 = vmul.f32 %v4569, %v4604
        %v4607 = vsel %vm1398, %v4590, 0
        %v4610 = vsel %vm1398, %v4605, 0
        %4612 = vmatpush.msra.mxu0 0.0
        %4613 = vmatpush.msra.mxu0 0.0
        %4614 = vmatpush.msra.mxu0 0.0
        %4615 = vmatpush.msra.mxu0 0.0
        %4616 = vmatpush.msra.mxu0 0.0
        %4617 = vmatpush.msra.mxu0 0.0
        %4618 = vmatpush.msra.mxu0 0.0
        %4619 = vmatpush.msra.mxu0 0.0
        %4620 = vmatpush.msra.mxu0 0.0
        %4621 = vmatpush.msra.mxu0 0.0
        %4622 = vmatpush.msra.mxu0 0.0
        %4623 = vmatpush.msra.mxu0 0.0
        %4624 = vmatpush.msra.mxu0 0.0
        %4625 = vmatpush.msra.mxu0 0.0
        %v4626 = vand.u32 %v4352, 4294901760
        %4627 = vmatpush.msra.mxu0 %v4626
        %v4628 = vand.u32 %v4348, 4294901760
        %4629 = vmatpush.msra.mxu0 %v4628
        %v4630 = vand.u32 %v4607, 4294901760
        %v4631 = vsub.f32 %v4607, %v4630
        %v4632 = vand.u32 %v4631, 4294901760
        %v4633 = vsub.f32 %v4631, %v4632
        %v4634 = vand.u32 %v4633, 4294901760
        %4635 = vmatmul.f32.gmra.mxu0 %v4634
        %v4636 = vpop.f32.mrf.mxu0
        %v4637 = vadd.f32 0.0, %v4636
        %v4638 = vand.u32 %v4610, 4294901760
        %v4639 = vsub.f32 %v4610, %v4638
        %v4640 = vand.u32 %v4639, 4294901760
        %v4641 = vsub.f32 %v4639, %v4640
        %v4642 = vand.u32 %v4641, 4294901760
        %4643 = vmatmul.f32.gmra.mxu0 %v4642
        %v4644 = vpop.f32.mrf.mxu0
        %v4645 = vadd.f32 0.0, %v4644
        %4646 = vdwg.mxu0
        %4647 = vmatpush.msra.mxu0 0.0
        %4648 = vmatpush.msra.mxu0 0.0
        %4649 = vmatpush.msra.mxu0 0.0
        %4650 = vmatpush.msra.mxu0 0.0
        %4651 = vmatpush.msra.mxu0 0.0
        %4652 = vmatpush.msra.mxu0 0.0
        %4653 = vmatpush.msra.mxu0 0.0
        %4654 = vmatpush.msra.mxu0 0.0
        %4655 = vmatpush.msra.mxu0 0.0
        %4656 = vmatpush.msra.mxu0 0.0
        %4657 = vmatpush.msra.mxu0 0.0
        %4658 = vmatpush.msra.mxu0 0.0
        %4659 = vmatpush.msra.mxu0 0.0
        %4660 = vmatpush.msra.mxu0 0.0
        %v4661 = vand.u32 %v4352, 4294901760
        %v4662 = vsub.f32 %v4352, %v4661
        %v4663 = vand.u32 %v4662, 4294901760
        %v4664 = vsub.f32 %v4662, %v4663
        %v4665 = vand.u32 %v4664, 4294901760
        %4666 = vmatpush.msra.mxu0 %v4665
        %v4667 = vand.u32 %v4348, 4294901760
        %v4668 = vsub.f32 %v4348, %v4667
        %v4669 = vand.u32 %v4668, 4294901760
        %v4670 = vsub.f32 %v4668, %v4669
        %v4671 = vand.u32 %v4670, 4294901760
        %4672 = vmatpush.msra.mxu0 %v4671
        %v4673 = vand.u32 %v4607, 4294901760
        %4674 = vmatmul.f32.gmra.mxu0 %v4673
        %v4675 = vpop.f32.mrf.mxu0
        %v4676 = vadd.f32 %v4637, %v4675
        %v4677 = vand.u32 %v4610, 4294901760
        %4678 = vmatmul.f32.gmra.mxu0 %v4677
        %v4679 = vpop.f32.mrf.mxu0
        %v4680 = vadd.f32 %v4645, %v4679
        %4681 = vdwg.mxu0
        %4682 = vmatpush.msra.mxu0 0.0
        %4683 = vmatpush.msra.mxu0 0.0
        %4684 = vmatpush.msra.mxu0 0.0
        %4685 = vmatpush.msra.mxu0 0.0
        %4686 = vmatpush.msra.mxu0 0.0
        %4687 = vmatpush.msra.mxu0 0.0
        %4688 = vmatpush.msra.mxu0 0.0
        %4689 = vmatpush.msra.mxu0 0.0
        %4690 = vmatpush.msra.mxu0 0.0
        %4691 = vmatpush.msra.mxu0 0.0
        %4692 = vmatpush.msra.mxu0 0.0
        %4693 = vmatpush.msra.mxu0 0.0
        %4694 = vmatpush.msra.mxu0 0.0
        %4695 = vmatpush.msra.mxu0 0.0
        %v4696 = vand.u32 %v4352, 4294901760
        %v4697 = vsub.f32 %v4352, %v4696
        %4698 = vmatpush.msra.mxu0 %v4697
        %v4699 = vand.u32 %v4348, 4294901760
        %v4700 = vsub.f32 %v4348, %v4699
        %4701 = vmatpush.msra.mxu0 %v4700
        %v4702 = vand.u32 %v4607, 4294901760
        %v4703 = vsub.f32 %v4607, %v4702
        %4704 = vmatmul.f32.gmra.mxu0 %v4703
        %v4705 = vpop.f32.mrf.mxu0
        %v4706 = vadd.f32 %v4676, %v4705
        %v4707 = vand.u32 %v4610, 4294901760
        %v4708 = vsub.f32 %v4610, %v4707
        %4709 = vmatmul.f32.gmra.mxu0 %v4708
        %v4710 = vpop.f32.mrf.mxu0
        %v4711 = vadd.f32 %v4680, %v4710
        %4712 = vdwg.mxu0
        %4713 = vmatpush.msra.mxu0 0.0
        %4714 = vmatpush.msra.mxu0 0.0
        %4715 = vmatpush.msra.mxu0 0.0
        %4716 = vmatpush.msra.mxu0 0.0
        %4717 = vmatpush.msra.mxu0 0.0
        %4718 = vmatpush.msra.mxu0 0.0
        %4719 = vmatpush.msra.mxu0 0.0
        %4720 = vmatpush.msra.mxu0 0.0
        %4721 = vmatpush.msra.mxu0 0.0
        %4722 = vmatpush.msra.mxu0 0.0
        %4723 = vmatpush.msra.mxu0 0.0
        %4724 = vmatpush.msra.mxu0 0.0
        %4725 = vmatpush.msra.mxu0 0.0
        %4726 = vmatpush.msra.mxu0 0.0
        %v4727 = vand.u32 %v4352, 4294901760
        %4728 = vmatpush.msra.mxu0 %v4727
        %v4729 = vand.u32 %v4348, 4294901760
        %4730 = vmatpush.msra.mxu0 %v4729
        %v4731 = vand.u32 %v4607, 4294901760
        %v4732 = vsub.f32 %v4607, %v4731
        %v4733 = vand.u32 %v4732, 4294901760
        %4734 = vmatmul.f32.gmra.mxu0 %v4733
        %v4735 = vpop.f32.mrf.mxu0
        %v4736 = vadd.f32 %v4706, %v4735
        %v4737 = vand.u32 %v4610, 4294901760
        %v4738 = vsub.f32 %v4610, %v4737
        %v4739 = vand.u32 %v4738, 4294901760
        %4740 = vmatmul.f32.gmra.mxu0 %v4739
        %v4741 = vpop.f32.mrf.mxu0
        %v4742 = vadd.f32 %v4711, %v4741
        %4743 = vdwg.mxu0
        %4744 = vmatpush.msra.mxu0 0.0
        %4745 = vmatpush.msra.mxu0 0.0
        %4746 = vmatpush.msra.mxu0 0.0
        %4747 = vmatpush.msra.mxu0 0.0
        %4748 = vmatpush.msra.mxu0 0.0
        %4749 = vmatpush.msra.mxu0 0.0
        %4750 = vmatpush.msra.mxu0 0.0
        %4751 = vmatpush.msra.mxu0 0.0
        %4752 = vmatpush.msra.mxu0 0.0
        %4753 = vmatpush.msra.mxu0 0.0
        %4754 = vmatpush.msra.mxu0 0.0
        %4755 = vmatpush.msra.mxu0 0.0
        %4756 = vmatpush.msra.mxu0 0.0
        %4757 = vmatpush.msra.mxu0 0.0
        %v4758 = vand.u32 %v4352, 4294901760
        %v4759 = vsub.f32 %v4352, %v4758
        %v4760 = vand.u32 %v4759, 4294901760
        %4761 = vmatpush.msra.mxu0 %v4760
        %v4762 = vand.u32 %v4348, 4294901760
        %v4763 = vsub.f32 %v4348, %v4762
        %v4764 = vand.u32 %v4763, 4294901760
        %4765 = vmatpush.msra.mxu0 %v4764
        %v4766 = vand.u32 %v4607, 4294901760
        %4767 = vmatmul.f32.gmra.mxu0 %v4766
        %v4768 = vpop.f32.mrf.mxu0
        %v4769 = vadd.f32 %v4736, %v4768
        %v4770 = vand.u32 %v4610, 4294901760
        %4771 = vmatmul.f32.gmra.mxu0 %v4770
        %v4772 = vpop.f32.mrf.mxu0
        %v4773 = vadd.f32 %v4742, %v4772
        %4774 = vdwg.mxu0
        %4775 = vmatpush.msra.mxu0 0.0
        %4776 = vmatpush.msra.mxu0 0.0
        %4777 = vmatpush.msra.mxu0 0.0
        %4778 = vmatpush.msra.mxu0 0.0
        %4779 = vmatpush.msra.mxu0 0.0
        %4780 = vmatpush.msra.mxu0 0.0
        %4781 = vmatpush.msra.mxu0 0.0
        %4782 = vmatpush.msra.mxu0 0.0
        %4783 = vmatpush.msra.mxu0 0.0
        %4784 = vmatpush.msra.mxu0 0.0
        %4785 = vmatpush.msra.mxu0 0.0
        %4786 = vmatpush.msra.mxu0 0.0
        %4787 = vmatpush.msra.mxu0 0.0
        %4788 = vmatpush.msra.mxu0 0.0
        %v4789 = vand.u32 %v4352, 4294901760
        %4790 = vmatpush.msra.mxu0 %v4789
        %v4791 = vand.u32 %v4348, 4294901760
        %4792 = vmatpush.msra.mxu0 %v4791
        %v4793 = vand.u32 %v4607, 4294901760
        %4794 = vmatmul.f32.gmra.mxu0 %v4793
        %v4795 = vpop.f32.mrf.mxu0
        %v4796 = vadd.f32 %v4769, %v4795
        %v4797 = vand.u32 %v4610, 4294901760
        %4798 = vmatmul.f32.gmra.mxu0 %v4797
        %v4799 = vpop.f32.mrf.mxu0
        %v4800 = vadd.f32 %v4773, %v4799
        %4801 = vdwg.mxu0
        %s4802 = scalar_lea.vmem %s6, 32
        %v4803 = vld [vmem:[%s4802] sm:$0xff]
        %v4804 = vld [vmem:[%s4802 + $0x8] sm:$0xff]
        %v4806 = vsel %vm1398, %v4796, 0
        %v4809 = vsel %vm1398, %v4800, 0
        %4811 = vmatpush.msra.mxu0 0.0
        %4812 = vmatpush.msra.mxu0 0.0
        %4813 = vmatpush.msra.mxu0 0.0
        %4814 = vmatpush.msra.mxu0 0.0
        %4815 = vmatpush.msra.mxu0 0.0
        %4816 = vmatpush.msra.mxu0 0.0
        %4817 = vmatpush.msra.mxu0 0.0
        %4818 = vmatpush.msra.mxu0 0.0
        %4819 = vmatpush.msra.mxu0 0.0
        %4820 = vmatpush.msra.mxu0 0.0
        %4821 = vmatpush.msra.mxu0 0.0
        %4822 = vmatpush.msra.mxu0 0.0
        %4823 = vmatpush.msra.mxu0 0.0
        %4824 = vmatpush.msra.mxu0 0.0
        %v4825 = vand.u32 %v4804, 4294901760
        %4826 = vmatpush.msra.mxu0 %v4825
        %v4827 = vand.u32 %v4803, 4294901760
        %4828 = vmatpush.msra.mxu0 %v4827
        %v4829 = vand.u32 %v4806, 4294901760
        %v4830 = vsub.f32 %v4806, %v4829
        %v4831 = vand.u32 %v4830, 4294901760
        %v4832 = vsub.f32 %v4830, %v4831
        %v4833 = vand.u32 %v4832, 4294901760
        %4834 = vmatmul.f32.gmra.mxu0 %v4833
        %v4835 = vpop.f32.mrf.mxu0
        %v4836 = vadd.f32 0.0, %v4835
        %v4837 = vand.u32 %v4809, 4294901760
        %v4838 = vsub.f32 %v4809, %v4837
        %v4839 = vand.u32 %v4838, 4294901760
        %v4840 = vsub.f32 %v4838, %v4839
        %v4841 = vand.u32 %v4840, 4294901760
        %4842 = vmatmul.f32.gmra.mxu0 %v4841
        %v4843 = vpop.f32.mrf.mxu0
        %v4844 = vadd.f32 0.0, %v4843
        %4845 = vdwg.mxu0
        %4846 = vmatpush.msra.mxu0 0.0
        %4847 = vmatpush.msra.mxu0 0.0
        %4848 = vmatpush.msra.mxu0 0.0
        %4849 = vmatpush.msra.mxu0 0.0
        %4850 = vmatpush.msra.mxu0 0.0
        %4851 = vmatpush.msra.mxu0 0.0
        %4852 = vmatpush.msra.mxu0 0.0
        %4853 = vmatpush.msra.mxu0 0.0
        %4854 = vmatpush.msra.mxu0 0.0
        %4855 = vmatpush.msra.mxu0 0.0
        %4856 = vmatpush.msra.mxu0 0.0
        %4857 = vmatpush.msra.mxu0 0.0
        %4858 = vmatpush.msra.mxu0 0.0
        %4859 = vmatpush.msra.mxu0 0.0
        %v4860 = vand.u32 %v4804, 4294901760
        %v4861 = vsub.f32 %v4804, %v4860
        %v4862 = vand.u32 %v4861, 4294901760
        %v4863 = vsub.f32 %v4861, %v4862
        %v4864 = vand.u32 %v4863, 4294901760
        %4865 = vmatpush.msra.mxu0 %v4864
        %v4866 = vand.u32 %v4803, 4294901760
        %v4867 = vsub.f32 %v4803, %v4866
        %v4868 = vand.u32 %v4867, 4294901760
        %v4869 = vsub.f32 %v4867, %v4868
        %v4870 = vand.u32 %v4869, 4294901760
        %4871 = vmatpush.msra.mxu0 %v4870
        %v4872 = vand.u32 %v4806, 4294901760
        %4873 = vmatmul.f32.gmra.mxu0 %v4872
        %v4874 = vpop.f32.mrf.mxu0
        %v4875 = vadd.f32 %v4836, %v4874
        %v4876 = vand.u32 %v4809, 4294901760
        %4877 = vmatmul.f32.gmra.mxu0 %v4876
        %v4878 = vpop.f32.mrf.mxu0
        %v4879 = vadd.f32 %v4844, %v4878
        %4880 = vdwg.mxu0
        %4881 = vmatpush.msra.mxu0 0.0
        %4882 = vmatpush.msra.mxu0 0.0
        %4883 = vmatpush.msra.mxu0 0.0
        %4884 = vmatpush.msra.mxu0 0.0
        %4885 = vmatpush.msra.mxu0 0.0
        %4886 = vmatpush.msra.mxu0 0.0
        %4887 = vmatpush.msra.mxu0 0.0
        %4888 = vmatpush.msra.mxu0 0.0
        %4889 = vmatpush.msra.mxu0 0.0
        %4890 = vmatpush.msra.mxu0 0.0
        %4891 = vmatpush.msra.mxu0 0.0
        %4892 = vmatpush.msra.mxu0 0.0
        %4893 = vmatpush.msra.mxu0 0.0
        %4894 = vmatpush.msra.mxu0 0.0
        %v4895 = vand.u32 %v4804, 4294901760
        %v4896 = vsub.f32 %v4804, %v4895
        %4897 = vmatpush.msra.mxu0 %v4896
        %v4898 = vand.u32 %v4803, 4294901760
        %v4899 = vsub.f32 %v4803, %v4898
        %4900 = vmatpush.msra.mxu0 %v4899
        %v4901 = vand.u32 %v4806, 4294901760
        %v4902 = vsub.f32 %v4806, %v4901
        %4903 = vmatmul.f32.gmra.mxu0 %v4902
        %v4904 = vpop.f32.mrf.mxu0
        %v4905 = vadd.f32 %v4875, %v4904
        %v4906 = vand.u32 %v4809, 4294901760
        %v4907 = vsub.f32 %v4809, %v4906
        %4908 = vmatmul.f32.gmra.mxu0 %v4907
        %v4909 = vpop.f32.mrf.mxu0
        %v4910 = vadd.f32 %v4879, %v4909
        %4911 = vdwg.mxu0
        %4912 = vmatpush.msra.mxu0 0.0
        %4913 = vmatpush.msra.mxu0 0.0
        %4914 = vmatpush.msra.mxu0 0.0
        %4915 = vmatpush.msra.mxu0 0.0
        %4916 = vmatpush.msra.mxu0 0.0
        %4917 = vmatpush.msra.mxu0 0.0
        %4918 = vmatpush.msra.mxu0 0.0
        %4919 = vmatpush.msra.mxu0 0.0
        %4920 = vmatpush.msra.mxu0 0.0
        %4921 = vmatpush.msra.mxu0 0.0
        %4922 = vmatpush.msra.mxu0 0.0
        %4923 = vmatpush.msra.mxu0 0.0
        %4924 = vmatpush.msra.mxu0 0.0
        %4925 = vmatpush.msra.mxu0 0.0
        %v4926 = vand.u32 %v4804, 4294901760
        %4927 = vmatpush.msra.mxu0 %v4926
        %v4928 = vand.u32 %v4803, 4294901760
        %4929 = vmatpush.msra.mxu0 %v4928
        %v4930 = vand.u32 %v4806, 4294901760
        %v4931 = vsub.f32 %v4806, %v4930
        %v4932 = vand.u32 %v4931, 4294901760
        %4933 = vmatmul.f32.gmra.mxu0 %v4932
        %v4934 = vpop.f32.mrf.mxu0
        %v4935 = vadd.f32 %v4905, %v4934
        %v4936 = vand.u32 %v4809, 4294901760
        %v4937 = vsub.f32 %v4809, %v4936
        %v4938 = vand.u32 %v4937, 4294901760
        %4939 = vmatmul.f32.gmra.mxu0 %v4938
        %v4940 = vpop.f32.mrf.mxu0
        %v4941 = vadd.f32 %v4910, %v4940
        %4942 = vdwg.mxu0
        %4943 = vmatpush.msra.mxu0 0.0
        %4944 = vmatpush.msra.mxu0 0.0
        %4945 = vmatpush.msra.mxu0 0.0
        %4946 = vmatpush.msra.mxu0 0.0
        %4947 = vmatpush.msra.mxu0 0.0
        %4948 = vmatpush.msra.mxu0 0.0
        %4949 = vmatpush.msra.mxu0 0.0
        %4950 = vmatpush.msra.mxu0 0.0
        %4951 = vmatpush.msra.mxu0 0.0
        %4952 = vmatpush.msra.mxu0 0.0
        %4953 = vmatpush.msra.mxu0 0.0
        %4954 = vmatpush.msra.mxu0 0.0
        %4955 = vmatpush.msra.mxu0 0.0
        %4956 = vmatpush.msra.mxu0 0.0
        %v4957 = vand.u32 %v4804, 4294901760
        %v4958 = vsub.f32 %v4804, %v4957
        %v4959 = vand.u32 %v4958, 4294901760
        %4960 = vmatpush.msra.mxu0 %v4959
        %v4961 = vand.u32 %v4803, 4294901760
        %v4962 = vsub.f32 %v4803, %v4961
        %v4963 = vand.u32 %v4962, 4294901760
        %4964 = vmatpush.msra.mxu0 %v4963
        %v4965 = vand.u32 %v4806, 4294901760
        %4966 = vmatmul.f32.gmra.mxu0 %v4965
        %v4967 = vpop.f32.mrf.mxu0
        %v4968 = vadd.f32 %v4935, %v4967
        %v4969 = vand.u32 %v4809, 4294901760
        %4970 = vmatmul.f32.gmra.mxu0 %v4969
        %v4971 = vpop.f32.mrf.mxu0
        %v4972 = vadd.f32 %v4941, %v4971
        %4973 = vdwg.mxu0
        %4974 = vmatpush.msra.mxu0 0.0
        %4975 = vmatpush.msra.mxu0 0.0
        %4976 = vmatpush.msra.mxu0 0.0
        %4977 = vmatpush.msra.mxu0 0.0
        %4978 = vmatpush.msra.mxu0 0.0
        %4979 = vmatpush.msra.mxu0 0.0
        %4980 = vmatpush.msra.mxu0 0.0
        %4981 = vmatpush.msra.mxu0 0.0
        %4982 = vmatpush.msra.mxu0 0.0
        %4983 = vmatpush.msra.mxu0 0.0
        %4984 = vmatpush.msra.mxu0 0.0
        %4985 = vmatpush.msra.mxu0 0.0
        %4986 = vmatpush.msra.mxu0 0.0
        %4987 = vmatpush.msra.mxu0 0.0
        %v4988 = vand.u32 %v4804, 4294901760
        %4989 = vmatpush.msra.mxu0 %v4988
        %v4990 = vand.u32 %v4803, 4294901760
        %4991 = vmatpush.msra.mxu0 %v4990
        %v4992 = vand.u32 %v4806, 4294901760
        %4993 = vmatmul.f32.gmra.mxu0 %v4992
        %v4994 = vpop.f32.mrf.mxu0
        %v4995 = vadd.f32 %v4968, %v4994
        %v4996 = vand.u32 %v4809, 4294901760
        %4997 = vmatmul.f32.gmra.mxu0 %v4996
        %v4998 = vpop.f32.mrf.mxu0
        %v4999 = vadd.f32 %v4972, %v4998
        %5000 = vdwg.mxu0
        %v5001 = vadd.f32 %v3517, %v4995
        %v5002 = vadd.f32 %v3521, %v4999
        %s5003 = scalar_lea.vmem %s3, 192
        %v5004 = vld [vmem:[%s5003] sm:$0xff]
        %v5005 = vld [vmem:[%s5003 + $0x8] sm:$0xff]
        %v5006 = vld [vmem:[%s5003 + $0x10] sm:$0xff]
        %v5007 = vld [vmem:[%s5003 + $0x18] sm:$0xff]
        %v5008 = vld [vmem:[%s5003 + $0x20] sm:$0xff]
        %v5009 = vld [vmem:[%s5003 + $0x28] sm:$0xff]
        %v5010 = vld [vmem:[%s5003 + $0x30] sm:$0xff]
        %v5011 = vld [vmem:[%s5003 + $0x38] sm:$0xff]
        %5012 = vmatpush.msra.mxu0 0.0
        %5013 = vmatpush.msra.mxu0 0.0
        %5014 = vmatpush.msra.mxu0 0.0
        %5015 = vmatpush.msra.mxu0 0.0
        %5016 = vmatpush.msra.mxu0 0.0
        %5017 = vmatpush.msra.mxu0 0.0
        %5018 = vmatpush.msra.mxu0 0.0
        %5019 = vmatpush.msra.mxu0 0.0
        %v5020 = vand.u32 %v5011, 4294901760
        %5021 = vmatpush.msra.mxu0 %v5020
        %v5022 = vand.u32 %v5010, 4294901760
        %5023 = vmatpush.msra.mxu0 %v5022
        %v5024 = vand.u32 %v5009, 4294901760
        %5025 = vmatpush.msra.mxu0 %v5024
        %v5026 = vand.u32 %v5008, 4294901760
        %5027 = vmatpush.msra.mxu0 %v5026
        %v5028 = vand.u32 %v5007, 4294901760
        %5029 = vmatpush.msra.mxu0 %v5028
        %v5030 = vand.u32 %v5006, 4294901760
        %5031 = vmatpush.msra.mxu0 %v5030
        %v5032 = vand.u32 %v5005, 4294901760
        %5033 = vmatpush.msra.mxu0 %v5032
        %v5034 = vand.u32 %v5004, 4294901760
        %5035 = vmatpush.msra.mxu0 %v5034
        %v5036 = vand.u32 %v573, 4294901760
        %v5037 = vsub.f32 %v573, %v5036
        %v5038 = vand.u32 %v5037, 4294901760
        %v5039 = vsub.f32 %v5037, %v5038
        %v5040 = vand.u32 %v5039, 4294901760
        %5041 = vmatmul.f32.gmra.mxu0 %v5040
        %v5042 = vpop.f32.mrf.mxu0
        %v5043 = vadd.f32 0.0, %v5042
        %v5044 = vand.u32 %v576, 4294901760
        %v5045 = vsub.f32 %v576, %v5044
        %v5046 = vand.u32 %v5045, 4294901760
        %v5047 = vsub.f32 %v5045, %v5046
        %v5048 = vand.u32 %v5047, 4294901760
        %5049 = vmatmul.f32.gmra.mxu0 %v5048
        %v5050 = vpop.f32.mrf.mxu0
        %v5051 = vadd.f32 0.0, %v5050
        %5052 = vdwg.mxu0
        %5053 = vmatpush.msra.mxu0 0.0
        %5054 = vmatpush.msra.mxu0 0.0
        %5055 = vmatpush.msra.mxu0 0.0
        %5056 = vmatpush.msra.mxu0 0.0
        %5057 = vmatpush.msra.mxu0 0.0
        %5058 = vmatpush.msra.mxu0 0.0
        %5059 = vmatpush.msra.mxu0 0.0
        %5060 = vmatpush.msra.mxu0 0.0
        %v5061 = vand.u32 %v5011, 4294901760
        %v5062 = vsub.f32 %v5011, %v5061
        %v5063 = vand.u32 %v5062, 4294901760
        %v5064 = vsub.f32 %v5062, %v5063
        %v5065 = vand.u32 %v5064, 4294901760
        %5066 = vmatpush.msra.mxu0 %v5065
        %v5067 = vand.u32 %v5010, 4294901760
        %v5068 = vsub.f32 %v5010, %v5067
        %v5069 = vand.u32 %v5068, 4294901760
        %v5070 = vsub.f32 %v5068, %v5069
        %v5071 = vand.u32 %v5070, 4294901760
        %5072 = vmatpush.msra.mxu0 %v5071
        %v5073 = vand.u32 %v5009, 4294901760
        %v5074 = vsub.f32 %v5009, %v5073
        %v5075 = vand.u32 %v5074, 4294901760
        %v5076 = vsub.f32 %v5074, %v5075
        %v5077 = vand.u32 %v5076, 4294901760
        %5078 = vmatpush.msra.mxu0 %v5077
        %v5079 = vand.u32 %v5008, 4294901760
        %v5080 = vsub.f32 %v5008, %v5079
        %v5081 = vand.u32 %v5080, 4294901760
        %v5082 = vsub.f32 %v5080, %v5081
        %v5083 = vand.u32 %v5082, 4294901760
        %5084 = vmatpush.msra.mxu0 %v5083
        %v5085 = vand.u32 %v5007, 4294901760
        %v5086 = vsub.f32 %v5007, %v5085
        %v5087 = vand.u32 %v5086, 4294901760
        %v5088 = vsub.f32 %v5086, %v5087
        %v5089 = vand.u32 %v5088, 4294901760
        %5090 = vmatpush.msra.mxu0 %v5089
        %v5091 = vand.u32 %v5006, 4294901760
        %v5092 = vsub.f32 %v5006, %v5091
        %v5093 = vand.u32 %v5092, 4294901760
        %v5094 = vsub.f32 %v5092, %v5093
        %v5095 = vand.u32 %v5094, 4294901760
        %5096 = vmatpush.msra.mxu0 %v5095
        %v5097 = vand.u32 %v5005, 4294901760
        %v5098 = vsub.f32 %v5005, %v5097
        %v5099 = vand.u32 %v5098, 4294901760
        %v5100 = vsub.f32 %v5098, %v5099
        %v5101 = vand.u32 %v5100, 4294901760
        %5102 = vmatpush.msra.mxu0 %v5101
        %v5103 = vand.u32 %v5004, 4294901760
        %v5104 = vsub.f32 %v5004, %v5103
        %v5105 = vand.u32 %v5104, 4294901760
        %v5106 = vsub.f32 %v5104, %v5105
        %v5107 = vand.u32 %v5106, 4294901760
        %5108 = vmatpush.msra.mxu0 %v5107
        %v5109 = vand.u32 %v573, 4294901760
        %5110 = vmatmul.f32.gmra.mxu0 %v5109
        %v5111 = vpop.f32.mrf.mxu0
        %v5112 = vadd.f32 %v5043, %v5111
        %v5113 = vand.u32 %v576, 4294901760
        %5114 = vmatmul.f32.gmra.mxu0 %v5113
        %v5115 = vpop.f32.mrf.mxu0
        %v5116 = vadd.f32 %v5051, %v5115
        %5117 = vdwg.mxu0
        %5118 = vmatpush.msra.mxu0 0.0
        %5119 = vmatpush.msra.mxu0 0.0
        %5120 = vmatpush.msra.mxu0 0.0
        %5121 = vmatpush.msra.mxu0 0.0
        %5122 = vmatpush.msra.mxu0 0.0
        %5123 = vmatpush.msra.mxu0 0.0
        %5124 = vmatpush.msra.mxu0 0.0
        %5125 = vmatpush.msra.mxu0 0.0
        %v5126 = vand.u32 %v5011, 4294901760
        %v5127 = vsub.f32 %v5011, %v5126
        %5128 = vmatpush.msra.mxu0 %v5127
        %v5129 = vand.u32 %v5010, 4294901760
        %v5130 = vsub.f32 %v5010, %v5129
        %5131 = vmatpush.msra.mxu0 %v5130
        %v5132 = vand.u32 %v5009, 4294901760
        %v5133 = vsub.f32 %v5009, %v5132
        %5134 = vmatpush.msra.mxu0 %v5133
        %v5135 = vand.u32 %v5008, 4294901760
        %v5136 = vsub.f32 %v5008, %v5135
        %5137 = vmatpush.msra.mxu0 %v5136
        %v5138 = vand.u32 %v5007, 4294901760
        %v5139 = vsub.f32 %v5007, %v5138
        %5140 = vmatpush.msra.mxu0 %v5139
        %v5141 = vand.u32 %v5006, 4294901760
        %v5142 = vsub.f32 %v5006, %v5141
        %5143 = vmatpush.msra.mxu0 %v5142
        %v5144 = vand.u32 %v5005, 4294901760
        %v5145 = vsub.f32 %v5005, %v5144
        %5146 = vmatpush.msra.mxu0 %v5145
        %v5147 = vand.u32 %v5004, 4294901760
        %v5148 = vsub.f32 %v5004, %v5147
        %5149 = vmatpush.msra.mxu0 %v5148
        %v5150 = vand.u32 %v573, 4294901760
        %v5151 = vsub.f32 %v573, %v5150
        %5152 = vmatmul.f32.gmra.mxu0 %v5151
        %v5153 = vpop.f32.mrf.mxu0
        %v5154 = vadd.f32 %v5112, %v5153
        %v5155 = vand.u32 %v576, 4294901760
        %v5156 = vsub.f32 %v576, %v5155
        %5157 = vmatmul.f32.gmra.mxu0 %v5156
        %v5158 = vpop.f32.mrf.mxu0
        %v5159 = vadd.f32 %v5116, %v5158
        %5160 = vdwg.mxu0
        %5161 = vmatpush.msra.mxu0 0.0
        %5162 = vmatpush.msra.mxu0 0.0
        %5163 = vmatpush.msra.mxu0 0.0
        %5164 = vmatpush.msra.mxu0 0.0
        %5165 = vmatpush.msra.mxu0 0.0
        %5166 = vmatpush.msra.mxu0 0.0
        %5167 = vmatpush.msra.mxu0 0.0
        %5168 = vmatpush.msra.mxu0 0.0
        %v5169 = vand.u32 %v5011, 4294901760
        %5170 = vmatpush.msra.mxu0 %v5169
        %v5171 = vand.u32 %v5010, 4294901760
        %5172 = vmatpush.msra.mxu0 %v5171
        %v5173 = vand.u32 %v5009, 4294901760
        %5174 = vmatpush.msra.mxu0 %v5173
        %v5175 = vand.u32 %v5008, 4294901760
        %5176 = vmatpush.msra.mxu0 %v5175
        %v5177 = vand.u32 %v5007, 4294901760
        %5178 = vmatpush.msra.mxu0 %v5177
        %v5179 = vand.u32 %v5006, 4294901760
        %5180 = vmatpush.msra.mxu0 %v5179
        %v5181 = vand.u32 %v5005, 4294901760
        %5182 = vmatpush.msra.mxu0 %v5181
        %v5183 = vand.u32 %v5004, 4294901760
        %5184 = vmatpush.msra.mxu0 %v5183
        %v5185 = vand.u32 %v573, 4294901760
        %v5186 = vsub.f32 %v573, %v5185
        %v5187 = vand.u32 %v5186, 4294901760
        %5188 = vmatmul.f32.gmra.mxu0 %v5187
        %v5189 = vpop.f32.mrf.mxu0
        %v5190 = vadd.f32 %v5154, %v5189
        %v5191 = vand.u32 %v576, 4294901760
        %v5192 = vsub.f32 %v576, %v5191
        %v5193 = vand.u32 %v5192, 4294901760
        %5194 = vmatmul.f32.gmra.mxu0 %v5193
        %v5195 = vpop.f32.mrf.mxu0
        %v5196 = vadd.f32 %v5159, %v5195
        %5197 = vdwg.mxu0
        %5198 = vmatpush.msra.mxu0 0.0
        %5199 = vmatpush.msra.mxu0 0.0
        %5200 = vmatpush.msra.mxu0 0.0
        %5201 = vmatpush.msra.mxu0 0.0
        %5202 = vmatpush.msra.mxu0 0.0
        %5203 = vmatpush.msra.mxu0 0.0
        %5204 = vmatpush.msra.mxu0 0.0
        %5205 = vmatpush.msra.mxu0 0.0
        %v5206 = vand.u32 %v5011, 4294901760
        %v5207 = vsub.f32 %v5011, %v5206
        %v5208 = vand.u32 %v5207, 4294901760
        %5209 = vmatpush.msra.mxu0 %v5208
        %v5210 = vand.u32 %v5010, 4294901760
        %v5211 = vsub.f32 %v5010, %v5210
        %v5212 = vand.u32 %v5211, 4294901760
        %5213 = vmatpush.msra.mxu0 %v5212
        %v5214 = vand.u32 %v5009, 4294901760
        %v5215 = vsub.f32 %v5009, %v5214
        %v5216 = vand.u32 %v5215, 4294901760
        %5217 = vmatpush.msra.mxu0 %v5216
        %v5218 = vand.u32 %v5008, 4294901760
        %v5219 = vsub.f32 %v5008, %v5218
        %v5220 = vand.u32 %v5219, 4294901760
        %5221 = vmatpush.msra.mxu0 %v5220
        %v5222 = vand.u32 %v5007, 4294901760
        %v5223 = vsub.f32 %v5007, %v5222
        %v5224 = vand.u32 %v5223, 4294901760
        %5225 = vmatpush.msra.mxu0 %v5224
        %v5226 = vand.u32 %v5006, 4294901760
        %v5227 = vsub.f32 %v5006, %v5226
        %v5228 = vand.u32 %v5227, 4294901760
        %5229 = vmatpush.msra.mxu0 %v5228
        %v5230 = vand.u32 %v5005, 4294901760
        %v5231 = vsub.f32 %v5005, %v5230
        %v5232 = vand.u32 %v5231, 4294901760
        %5233 = vmatpush.msra.mxu0 %v5232
        %v5234 = vand.u32 %v5004, 4294901760
        %v5235 = vsub.f32 %v5004, %v5234
        %v5236 = vand.u32 %v5235, 4294901760
        %5237 = vmatpush.msra.mxu0 %v5236
        %v5238 = vand.u32 %v573, 4294901760
        %5239 = vmatmul.f32.gmra.mxu0 %v5238
        %v5240 = vpop.f32.mrf.mxu0
        %v5241 = vadd.f32 %v5190, %v5240
        %v5242 = vand.u32 %v576, 4294901760
        %5243 = vmatmul.f32.gmra.mxu0 %v5242
        %v5244 = vpop.f32.mrf.mxu0
        %v5245 = vadd.f32 %v5196, %v5244
        %5246 = vdwg.mxu0
        %5247 = vmatpush.msra.mxu0 0.0
        %5248 = vmatpush.msra.mxu0 0.0
        %5249 = vmatpush.msra.mxu0 0.0
        %5250 = vmatpush.msra.mxu0 0.0
        %5251 = vmatpush.msra.mxu0 0.0
        %5252 = vmatpush.msra.mxu0 0.0
        %5253 = vmatpush.msra.mxu0 0.0
        %5254 = vmatpush.msra.mxu0 0.0
        %v5255 = vand.u32 %v5011, 4294901760
        %5256 = vmatpush.msra.mxu0 %v5255
        %v5257 = vand.u32 %v5010, 4294901760
        %5258 = vmatpush.msra.mxu0 %v5257
        %v5259 = vand.u32 %v5009, 4294901760
        %5260 = vmatpush.msra.mxu0 %v5259
        %v5261 = vand.u32 %v5008, 4294901760
        %5262 = vmatpush.msra.mxu0 %v5261
        %v5263 = vand.u32 %v5007, 4294901760
        %5264 = vmatpush.msra.mxu0 %v5263
        %v5265 = vand.u32 %v5006, 4294901760
        %5266 = vmatpush.msra.mxu0 %v5265
        %v5267 = vand.u32 %v5005, 4294901760
        %5268 = vmatpush.msra.mxu0 %v5267
        %v5269 = vand.u32 %v5004, 4294901760
        %5270 = vmatpush.msra.mxu0 %v5269
        %v5271 = vand.u32 %v573, 4294901760
        %5272 = vmatmul.f32.gmra.mxu0 %v5271
        %v5273 = vpop.f32.mrf.mxu0
        %v5274 = vadd.f32 %v5241, %v5273
        %v5275 = vand.u32 %v576, 4294901760
        %5276 = vmatmul.f32.gmra.mxu0 %v5275
        %v5277 = vpop.f32.mrf.mxu0
        %v5278 = vadd.f32 %v5245, %v5277
        %5279 = vdwg.mxu0
        %s5280 = scalar_lea.vmem %s4, 192
        %v5281 = vld [vmem:[%s5280] sm:$0xff]
        %v5282 = vld [vmem:[%s5280 + $0x8] sm:$0xff]
        %v5283 = vld [vmem:[%s5280 + $0x10] sm:$0xff]
        %v5284 = vld [vmem:[%s5280 + $0x18] sm:$0xff]
        %v5285 = vld [vmem:[%s5280 + $0x20] sm:$0xff]
        %v5286 = vld [vmem:[%s5280 + $0x28] sm:$0xff]
        %v5287 = vld [vmem:[%s5280 + $0x30] sm:$0xff]
        %v5288 = vld [vmem:[%s5280 + $0x38] sm:$0xff]
        %5289 = vmatpush.msra.mxu0 0.0
        %5290 = vmatpush.msra.mxu0 0.0
        %5291 = vmatpush.msra.mxu0 0.0
        %5292 = vmatpush.msra.mxu0 0.0
        %5293 = vmatpush.msra.mxu0 0.0
        %5294 = vmatpush.msra.mxu0 0.0
        %5295 = vmatpush.msra.mxu0 0.0
        %5296 = vmatpush.msra.mxu0 0.0
        %v5297 = vand.u32 %v5288, 4294901760
        %5298 = vmatpush.msra.mxu0 %v5297
        %v5299 = vand.u32 %v5287, 4294901760
        %5300 = vmatpush.msra.mxu0 %v5299
        %v5301 = vand.u32 %v5286, 4294901760
        %5302 = vmatpush.msra.mxu0 %v5301
        %v5303 = vand.u32 %v5285, 4294901760
        %5304 = vmatpush.msra.mxu0 %v5303
        %v5305 = vand.u32 %v5284, 4294901760
        %5306 = vmatpush.msra.mxu0 %v5305
        %v5307 = vand.u32 %v5283, 4294901760
        %5308 = vmatpush.msra.mxu0 %v5307
        %v5309 = vand.u32 %v5282, 4294901760
        %5310 = vmatpush.msra.mxu0 %v5309
        %v5311 = vand.u32 %v5281, 4294901760
        %5312 = vmatpush.msra.mxu0 %v5311
        %v5313 = vand.u32 %v573, 4294901760
        %v5314 = vsub.f32 %v573, %v5313
        %v5315 = vand.u32 %v5314, 4294901760
        %v5316 = vsub.f32 %v5314, %v5315
        %v5317 = vand.u32 %v5316, 4294901760
        %5318 = vmatmul.f32.gmra.mxu0 %v5317
        %v5319 = vpop.f32.mrf.mxu0
        %v5320 = vadd.f32 0.0, %v5319
        %v5321 = vand.u32 %v576, 4294901760
        %v5322 = vsub.f32 %v576, %v5321
        %v5323 = vand.u32 %v5322, 4294901760
        %v5324 = vsub.f32 %v5322, %v5323
        %v5325 = vand.u32 %v5324, 4294901760
        %5326 = vmatmul.f32.gmra.mxu0 %v5325
        %v5327 = vpop.f32.mrf.mxu0
        %v5328 = vadd.f32 0.0, %v5327
        %5329 = vdwg.mxu0
        %5330 = vmatpush.msra.mxu0 0.0
        %5331 = vmatpush.msra.mxu0 0.0
        %5332 = vmatpush.msra.mxu0 0.0
        %5333 = vmatpush.msra.mxu0 0.0
        %5334 = vmatpush.msra.mxu0 0.0
        %5335 = vmatpush.msra.mxu0 0.0
        %5336 = vmatpush.msra.mxu0 0.0
        %5337 = vmatpush.msra.mxu0 0.0
        %v5338 = vand.u32 %v5288, 4294901760
        %v5339 = vsub.f32 %v5288, %v5338
        %v5340 = vand.u32 %v5339, 4294901760
        %v5341 = vsub.f32 %v5339, %v5340
        %v5342 = vand.u32 %v5341, 4294901760
        %5343 = vmatpush.msra.mxu0 %v5342
        %v5344 = vand.u32 %v5287, 4294901760
        %v5345 = vsub.f32 %v5287, %v5344
        %v5346 = vand.u32 %v5345, 4294901760
        %v5347 = vsub.f32 %v5345, %v5346
        %v5348 = vand.u32 %v5347, 4294901760
        %5349 = vmatpush.msra.mxu0 %v5348
        %v5350 = vand.u32 %v5286, 4294901760
        %v5351 = vsub.f32 %v5286, %v5350
        %v5352 = vand.u32 %v5351, 4294901760
        %v5353 = vsub.f32 %v5351, %v5352
        %v5354 = vand.u32 %v5353, 4294901760
        %5355 = vmatpush.msra.mxu0 %v5354
        %v5356 = vand.u32 %v5285, 4294901760
        %v5357 = vsub.f32 %v5285, %v5356
        %v5358 = vand.u32 %v5357, 4294901760
        %v5359 = vsub.f32 %v5357, %v5358
        %v5360 = vand.u32 %v5359, 4294901760
        %5361 = vmatpush.msra.mxu0 %v5360
        %v5362 = vand.u32 %v5284, 4294901760
        %v5363 = vsub.f32 %v5284, %v5362
        %v5364 = vand.u32 %v5363, 4294901760
        %v5365 = vsub.f32 %v5363, %v5364
        %v5366 = vand.u32 %v5365, 4294901760
        %5367 = vmatpush.msra.mxu0 %v5366
        %v5368 = vand.u32 %v5283, 4294901760
        %v5369 = vsub.f32 %v5283, %v5368
        %v5370 = vand.u32 %v5369, 4294901760
        %v5371 = vsub.f32 %v5369, %v5370
        %v5372 = vand.u32 %v5371, 4294901760
        %5373 = vmatpush.msra.mxu0 %v5372
        %v5374 = vand.u32 %v5282, 4294901760
        %v5375 = vsub.f32 %v5282, %v5374
        %v5376 = vand.u32 %v5375, 4294901760
        %v5377 = vsub.f32 %v5375, %v5376
        %v5378 = vand.u32 %v5377, 4294901760
        %5379 = vmatpush.msra.mxu0 %v5378
        %v5380 = vand.u32 %v5281, 4294901760
        %v5381 = vsub.f32 %v5281, %v5380
        %v5382 = vand.u32 %v5381, 4294901760
        %v5383 = vsub.f32 %v5381, %v5382
        %v5384 = vand.u32 %v5383, 4294901760
        %5385 = vmatpush.msra.mxu0 %v5384
        %v5386 = vand.u32 %v573, 4294901760
        %5387 = vmatmul.f32.gmra.mxu0 %v5386
        %v5388 = vpop.f32.mrf.mxu0
        %v5389 = vadd.f32 %v5320, %v5388
        %v5390 = vand.u32 %v576, 4294901760
        %5391 = vmatmul.f32.gmra.mxu0 %v5390
        %v5392 = vpop.f32.mrf.mxu0
        %v5393 = vadd.f32 %v5328, %v5392
        %5394 = vdwg.mxu0
        %5395 = vmatpush.msra.mxu0 0.0
        %5396 = vmatpush.msra.mxu0 0.0
        %5397 = vmatpush.msra.mxu0 0.0
        %5398 = vmatpush.msra.mxu0 0.0
        %5399 = vmatpush.msra.mxu0 0.0
        %5400 = vmatpush.msra.mxu0 0.0
        %5401 = vmatpush.msra.mxu0 0.0
        %5402 = vmatpush.msra.mxu0 0.0
        %v5403 = vand.u32 %v5288, 4294901760
        %v5404 = vsub.f32 %v5288, %v5403
        %5405 = vmatpush.msra.mxu0 %v5404
        %v5406 = vand.u32 %v5287, 4294901760
        %v5407 = vsub.f32 %v5287, %v5406
        %5408 = vmatpush.msra.mxu0 %v5407
        %v5409 = vand.u32 %v5286, 4294901760
        %v5410 = vsub.f32 %v5286, %v5409
        %5411 = vmatpush.msra.mxu0 %v5410
        %v5412 = vand.u32 %v5285, 4294901760
        %v5413 = vsub.f32 %v5285, %v5412
        %5414 = vmatpush.msra.mxu0 %v5413
        %v5415 = vand.u32 %v5284, 4294901760
        %v5416 = vsub.f32 %v5284, %v5415
        %5417 = vmatpush.msra.mxu0 %v5416
        %v5418 = vand.u32 %v5283, 4294901760
        %v5419 = vsub.f32 %v5283, %v5418
        %5420 = vmatpush.msra.mxu0 %v5419
        %v5421 = vand.u32 %v5282, 4294901760
        %v5422 = vsub.f32 %v5282, %v5421
        %5423 = vmatpush.msra.mxu0 %v5422
        %v5424 = vand.u32 %v5281, 4294901760
        %v5425 = vsub.f32 %v5281, %v5424
        %5426 = vmatpush.msra.mxu0 %v5425
        %v5427 = vand.u32 %v573, 4294901760
        %v5428 = vsub.f32 %v573, %v5427
        %5429 = vmatmul.f32.gmra.mxu0 %v5428
        %v5430 = vpop.f32.mrf.mxu0
        %v5431 = vadd.f32 %v5389, %v5430
        %v5432 = vand.u32 %v576, 4294901760
        %v5433 = vsub.f32 %v576, %v5432
        %5434 = vmatmul.f32.gmra.mxu0 %v5433
        %v5435 = vpop.f32.mrf.mxu0
        %v5436 = vadd.f32 %v5393, %v5435
        %5437 = vdwg.mxu0
        %5438 = vmatpush.msra.mxu0 0.0
        %5439 = vmatpush.msra.mxu0 0.0
        %5440 = vmatpush.msra.mxu0 0.0
        %5441 = vmatpush.msra.mxu0 0.0
        %5442 = vmatpush.msra.mxu0 0.0
        %5443 = vmatpush.msra.mxu0 0.0
        %5444 = vmatpush.msra.mxu0 0.0
        %5445 = vmatpush.msra.mxu0 0.0
        %v5446 = vand.u32 %v5288, 4294901760
        %5447 = vmatpush.msra.mxu0 %v5446
        %v5448 = vand.u32 %v5287, 4294901760
        %5449 = vmatpush.msra.mxu0 %v5448
        %v5450 = vand.u32 %v5286, 4294901760
        %5451 = vmatpush.msra.mxu0 %v5450
        %v5452 = vand.u32 %v5285, 4294901760
        %5453 = vmatpush.msra.mxu0 %v5452
        %v5454 = vand.u32 %v5284, 4294901760
        %5455 = vmatpush.msra.mxu0 %v5454
        %v5456 = vand.u32 %v5283, 4294901760
        %5457 = vmatpush.msra.mxu0 %v5456
        %v5458 = vand.u32 %v5282, 4294901760
        %5459 = vmatpush.msra.mxu0 %v5458
        %v5460 = vand.u32 %v5281, 4294901760
        %5461 = vmatpush.msra.mxu0 %v5460
        %v5462 = vand.u32 %v573, 4294901760
        %v5463 = vsub.f32 %v573, %v5462
        %v5464 = vand.u32 %v5463, 4294901760
        %5465 = vmatmul.f32.gmra.mxu0 %v5464
        %v5466 = vpop.f32.mrf.mxu0
        %v5467 = vadd.f32 %v5431, %v5466
        %v5468 = vand.u32 %v576, 4294901760
        %v5469 = vsub.f32 %v576, %v5468
        %v5470 = vand.u32 %v5469, 4294901760
        %5471 = vmatmul.f32.gmra.mxu0 %v5470
        %v5472 = vpop.f32.mrf.mxu0
        %v5473 = vadd.f32 %v5436, %v5472
        %5474 = vdwg.mxu0
        %5475 = vmatpush.msra.mxu0 0.0
        %5476 = vmatpush.msra.mxu0 0.0
        %5477 = vmatpush.msra.mxu0 0.0
        %5478 = vmatpush.msra.mxu0 0.0
        %5479 = vmatpush.msra.mxu0 0.0
        %5480 = vmatpush.msra.mxu0 0.0
        %5481 = vmatpush.msra.mxu0 0.0
        %5482 = vmatpush.msra.mxu0 0.0
        %v5483 = vand.u32 %v5288, 4294901760
        %v5484 = vsub.f32 %v5288, %v5483
        %v5485 = vand.u32 %v5484, 4294901760
        %5486 = vmatpush.msra.mxu0 %v5485
        %v5487 = vand.u32 %v5287, 4294901760
        %v5488 = vsub.f32 %v5287, %v5487
        %v5489 = vand.u32 %v5488, 4294901760
        %5490 = vmatpush.msra.mxu0 %v5489
        %v5491 = vand.u32 %v5286, 4294901760
        %v5492 = vsub.f32 %v5286, %v5491
        %v5493 = vand.u32 %v5492, 4294901760
        %5494 = vmatpush.msra.mxu0 %v5493
        %v5495 = vand.u32 %v5285, 4294901760
        %v5496 = vsub.f32 %v5285, %v5495
        %v5497 = vand.u32 %v5496, 4294901760
        %5498 = vmatpush.msra.mxu0 %v5497
        %v5499 = vand.u32 %v5284, 4294901760
        %v5500 = vsub.f32 %v5284, %v5499
        %v5501 = vand.u32 %v5500, 4294901760
        %5502 = vmatpush.msra.mxu0 %v5501
        %v5503 = vand.u32 %v5283, 4294901760
        %v5504 = vsub.f32 %v5283, %v5503
        %v5505 = vand.u32 %v5504, 4294901760
        %5506 = vmatpush.msra.mxu0 %v5505
        %v5507 = vand.u32 %v5282, 4294901760
        %v5508 = vsub.f32 %v5282, %v5507
        %v5509 = vand.u32 %v5508, 4294901760
        %5510 = vmatpush.msra.mxu0 %v5509
        %v5511 = vand.u32 %v5281, 4294901760
        %v5512 = vsub.f32 %v5281, %v5511
        %v5513 = vand.u32 %v5512, 4294901760
        %5514 = vmatpush.msra.mxu0 %v5513
        %v5515 = vand.u32 %v573, 4294901760
        %5516 = vmatmul.f32.gmra.mxu0 %v5515
        %v5517 = vpop.f32.mrf.mxu0
        %v5518 = vadd.f32 %v5467, %v5517
        %v5519 = vand.u32 %v576, 4294901760
        %5520 = vmatmul.f32.gmra.mxu0 %v5519
        %v5521 = vpop.f32.mrf.mxu0
        %v5522 = vadd.f32 %v5473, %v5521
        %5523 = vdwg.mxu0
        %5524 = vmatpush.msra.mxu0 0.0
        %5525 = vmatpush.msra.mxu0 0.0
        %5526 = vmatpush.msra.mxu0 0.0
        %5527 = vmatpush.msra.mxu0 0.0
        %5528 = vmatpush.msra.mxu0 0.0
        %5529 = vmatpush.msra.mxu0 0.0
        %5530 = vmatpush.msra.mxu0 0.0
        %5531 = vmatpush.msra.mxu0 0.0
        %v5532 = vand.u32 %v5288, 4294901760
        %5533 = vmatpush.msra.mxu0 %v5532
        %v5534 = vand.u32 %v5287, 4294901760
        %5535 = vmatpush.msra.mxu0 %v5534
        %v5536 = vand.u32 %v5286, 4294901760
        %5537 = vmatpush.msra.mxu0 %v5536
        %v5538 = vand.u32 %v5285, 4294901760
        %5539 = vmatpush.msra.mxu0 %v5538
        %v5540 = vand.u32 %v5284, 4294901760
        %5541 = vmatpush.msra.mxu0 %v5540
        %v5542 = vand.u32 %v5283, 4294901760
        %5543 = vmatpush.msra.mxu0 %v5542
        %v5544 = vand.u32 %v5282, 4294901760
        %5545 = vmatpush.msra.mxu0 %v5544
        %v5546 = vand.u32 %v5281, 4294901760
        %5547 = vmatpush.msra.mxu0 %v5546
        %v5548 = vand.u32 %v573, 4294901760
        %5549 = vmatmul.f32.gmra.mxu0 %v5548
        %v5550 = vpop.f32.mrf.mxu0
        %v5551 = vadd.f32 %v5518, %v5550
        %v5552 = vand.u32 %v576, 4294901760
        %5553 = vmatmul.f32.gmra.mxu0 %v5552
        %v5554 = vpop.f32.mrf.mxu0
        %v5555 = vadd.f32 %v5522, %v5554
        %5556 = vdwg.mxu0
        %s5557 = scalar_lea.vmem %s5, 192
        %v5558 = vld [vmem:[%s5557] sm:$0xff]
        %v5559 = vld [vmem:[%s5557 + $0x8] sm:$0xff]
        %v5560 = vld [vmem:[%s5557 + $0x10] sm:$0xff]
        %v5561 = vld [vmem:[%s5557 + $0x18] sm:$0xff]
        %v5562 = vld [vmem:[%s5557 + $0x20] sm:$0xff]
        %v5563 = vld [vmem:[%s5557 + $0x28] sm:$0xff]
        %v5564 = vld [vmem:[%s5557 + $0x30] sm:$0xff]
        %v5565 = vld [vmem:[%s5557 + $0x38] sm:$0xff]
        %5566 = vmatpush.msra.mxu0 0.0
        %5567 = vmatpush.msra.mxu0 0.0
        %5568 = vmatpush.msra.mxu0 0.0
        %5569 = vmatpush.msra.mxu0 0.0
        %5570 = vmatpush.msra.mxu0 0.0
        %5571 = vmatpush.msra.mxu0 0.0
        %5572 = vmatpush.msra.mxu0 0.0
        %5573 = vmatpush.msra.mxu0 0.0
        %v5574 = vand.u32 %v5565, 4294901760
        %5575 = vmatpush.msra.mxu0 %v5574
        %v5576 = vand.u32 %v5564, 4294901760
        %5577 = vmatpush.msra.mxu0 %v5576
        %v5578 = vand.u32 %v5563, 4294901760
        %5579 = vmatpush.msra.mxu0 %v5578
        %v5580 = vand.u32 %v5562, 4294901760
        %5581 = vmatpush.msra.mxu0 %v5580
        %v5582 = vand.u32 %v5561, 4294901760
        %5583 = vmatpush.msra.mxu0 %v5582
        %v5584 = vand.u32 %v5560, 4294901760
        %5585 = vmatpush.msra.mxu0 %v5584
        %v5586 = vand.u32 %v5559, 4294901760
        %5587 = vmatpush.msra.mxu0 %v5586
        %v5588 = vand.u32 %v5558, 4294901760
        %5589 = vmatpush.msra.mxu0 %v5588
        %v5590 = vand.u32 %v573, 4294901760
        %v5591 = vsub.f32 %v573, %v5590
        %v5592 = vand.u32 %v5591, 4294901760
        %v5593 = vsub.f32 %v5591, %v5592
        %v5594 = vand.u32 %v5593, 4294901760
        %5595 = vmatmul.f32.gmra.mxu0 %v5594
        %v5596 = vpop.f32.mrf.mxu0
        %v5597 = vadd.f32 0.0, %v5596
        %v5598 = vand.u32 %v576, 4294901760
        %v5599 = vsub.f32 %v576, %v5598
        %v5600 = vand.u32 %v5599, 4294901760
        %v5601 = vsub.f32 %v5599, %v5600
        %v5602 = vand.u32 %v5601, 4294901760
        %5603 = vmatmul.f32.gmra.mxu0 %v5602
        %v5604 = vpop.f32.mrf.mxu0
        %v5605 = vadd.f32 0.0, %v5604
        %5606 = vdwg.mxu0
        %5607 = vmatpush.msra.mxu0 0.0
        %5608 = vmatpush.msra.mxu0 0.0
        %5609 = vmatpush.msra.mxu0 0.0
        %5610 = vmatpush.msra.mxu0 0.0
        %5611 = vmatpush.msra.mxu0 0.0
        %5612 = vmatpush.msra.mxu0 0.0
        %5613 = vmatpush.msra.mxu0 0.0
        %5614 = vmatpush.msra.mxu0 0.0
        %v5615 = vand.u32 %v5565, 4294901760
        %v5616 = vsub.f32 %v5565, %v5615
        %v5617 = vand.u32 %v5616, 4294901760
        %v5618 = vsub.f32 %v5616, %v5617
        %v5619 = vand.u32 %v5618, 4294901760
        %5620 = vmatpush.msra.mxu0 %v5619
        %v5621 = vand.u32 %v5564, 4294901760
        %v5622 = vsub.f32 %v5564, %v5621
        %v5623 = vand.u32 %v5622, 4294901760
        %v5624 = vsub.f32 %v5622, %v5623
        %v5625 = vand.u32 %v5624, 4294901760
        %5626 = vmatpush.msra.mxu0 %v5625
        %v5627 = vand.u32 %v5563, 4294901760
        %v5628 = vsub.f32 %v5563, %v5627
        %v5629 = vand.u32 %v5628, 4294901760
        %v5630 = vsub.f32 %v5628, %v5629
        %v5631 = vand.u32 %v5630, 4294901760
        %5632 = vmatpush.msra.mxu0 %v5631
        %v5633 = vand.u32 %v5562, 4294901760
        %v5634 = vsub.f32 %v5562, %v5633
        %v5635 = vand.u32 %v5634, 4294901760
        %v5636 = vsub.f32 %v5634, %v5635
        %v5637 = vand.u32 %v5636, 4294901760
        %5638 = vmatpush.msra.mxu0 %v5637
        %v5639 = vand.u32 %v5561, 4294901760
        %v5640 = vsub.f32 %v5561, %v5639
        %v5641 = vand.u32 %v5640, 4294901760
        %v5642 = vsub.f32 %v5640, %v5641
        %v5643 = vand.u32 %v5642, 4294901760
        %5644 = vmatpush.msra.mxu0 %v5643
        %v5645 = vand.u32 %v5560, 4294901760
        %v5646 = vsub.f32 %v5560, %v5645
        %v5647 = vand.u32 %v5646, 4294901760
        %v5648 = vsub.f32 %v5646, %v5647
        %v5649 = vand.u32 %v5648, 4294901760
        %5650 = vmatpush.msra.mxu0 %v5649
        %v5651 = vand.u32 %v5559, 4294901760
        %v5652 = vsub.f32 %v5559, %v5651
        %v5653 = vand.u32 %v5652, 4294901760
        %v5654 = vsub.f32 %v5652, %v5653
        %v5655 = vand.u32 %v5654, 4294901760
        %5656 = vmatpush.msra.mxu0 %v5655
        %v5657 = vand.u32 %v5558, 4294901760
        %v5658 = vsub.f32 %v5558, %v5657
        %v5659 = vand.u32 %v5658, 4294901760
        %v5660 = vsub.f32 %v5658, %v5659
        %v5661 = vand.u32 %v5660, 4294901760
        %5662 = vmatpush.msra.mxu0 %v5661
        %v5663 = vand.u32 %v573, 4294901760
        %5664 = vmatmul.f32.gmra.mxu0 %v5663
        %v5665 = vpop.f32.mrf.mxu0
        %v5666 = vadd.f32 %v5597, %v5665
        %v5667 = vand.u32 %v576, 4294901760
        %5668 = vmatmul.f32.gmra.mxu0 %v5667
        %v5669 = vpop.f32.mrf.mxu0
        %v5670 = vadd.f32 %v5605, %v5669
        %5671 = vdwg.mxu0
        %5672 = vmatpush.msra.mxu0 0.0
        %5673 = vmatpush.msra.mxu0 0.0
        %5674 = vmatpush.msra.mxu0 0.0
        %5675 = vmatpush.msra.mxu0 0.0
        %5676 = vmatpush.msra.mxu0 0.0
        %5677 = vmatpush.msra.mxu0 0.0
        %5678 = vmatpush.msra.mxu0 0.0
        %5679 = vmatpush.msra.mxu0 0.0
        %v5680 = vand.u32 %v5565, 4294901760
        %v5681 = vsub.f32 %v5565, %v5680
        %5682 = vmatpush.msra.mxu0 %v5681
        %v5683 = vand.u32 %v5564, 4294901760
        %v5684 = vsub.f32 %v5564, %v5683
        %5685 = vmatpush.msra.mxu0 %v5684
        %v5686 = vand.u32 %v5563, 4294901760
        %v5687 = vsub.f32 %v5563, %v5686
        %5688 = vmatpush.msra.mxu0 %v5687
        %v5689 = vand.u32 %v5562, 4294901760
        %v5690 = vsub.f32 %v5562, %v5689
        %5691 = vmatpush.msra.mxu0 %v5690
        %v5692 = vand.u32 %v5561, 4294901760
        %v5693 = vsub.f32 %v5561, %v5692
        %5694 = vmatpush.msra.mxu0 %v5693
        %v5695 = vand.u32 %v5560, 4294901760
        %v5696 = vsub.f32 %v5560, %v5695
        %5697 = vmatpush.msra.mxu0 %v5696
        %v5698 = vand.u32 %v5559, 4294901760
        %v5699 = vsub.f32 %v5559, %v5698
        %5700 = vmatpush.msra.mxu0 %v5699
        %v5701 = vand.u32 %v5558, 4294901760
        %v5702 = vsub.f32 %v5558, %v5701
        %5703 = vmatpush.msra.mxu0 %v5702
        %v5704 = vand.u32 %v573, 4294901760
        %v5705 = vsub.f32 %v573, %v5704
        %5706 = vmatmul.f32.gmra.mxu0 %v5705
        %v5707 = vpop.f32.mrf.mxu0
        %v5708 = vadd.f32 %v5666, %v5707
        %v5709 = vand.u32 %v576, 4294901760
        %v5710 = vsub.f32 %v576, %v5709
        %5711 = vmatmul.f32.gmra.mxu0 %v5710
        %v5712 = vpop.f32.mrf.mxu0
        %v5713 = vadd.f32 %v5670, %v5712
        %5714 = vdwg.mxu0
        %5715 = vmatpush.msra.mxu0 0.0
        %5716 = vmatpush.msra.mxu0 0.0
        %5717 = vmatpush.msra.mxu0 0.0
        %5718 = vmatpush.msra.mxu0 0.0
        %5719 = vmatpush.msra.mxu0 0.0
        %5720 = vmatpush.msra.mxu0 0.0
        %5721 = vmatpush.msra.mxu0 0.0
        %5722 = vmatpush.msra.mxu0 0.0
        %v5723 = vand.u32 %v5565, 4294901760
        %5724 = vmatpush.msra.mxu0 %v5723
        %v5725 = vand.u32 %v5564, 4294901760
        %5726 = vmatpush.msra.mxu0 %v5725
        %v5727 = vand.u32 %v5563, 4294901760
        %5728 = vmatpush.msra.mxu0 %v5727
        %v5729 = vand.u32 %v5562, 4294901760
        %5730 = vmatpush.msra.mxu0 %v5729
        %v5731 = vand.u32 %v5561, 4294901760
        %5732 = vmatpush.msra.mxu0 %v5731
        %v5733 = vand.u32 %v5560, 4294901760
        %5734 = vmatpush.msra.mxu0 %v5733
        %v5735 = vand.u32 %v5559, 4294901760
        %5736 = vmatpush.msra.mxu0 %v5735
        %v5737 = vand.u32 %v5558, 4294901760
        %5738 = vmatpush.msra.mxu0 %v5737
        %v5739 = vand.u32 %v573, 4294901760
        %v5740 = vsub.f32 %v573, %v5739
        %v5741 = vand.u32 %v5740, 4294901760
        %5742 = vmatmul.f32.gmra.mxu0 %v5741
        %v5743 = vpop.f32.mrf.mxu0
        %v5744 = vadd.f32 %v5708, %v5743
        %v5745 = vand.u32 %v576, 4294901760
        %v5746 = vsub.f32 %v576, %v5745
        %v5747 = vand.u32 %v5746, 4294901760
        %5748 = vmatmul.f32.gmra.mxu0 %v5747
        %v5749 = vpop.f32.mrf.mxu0
        %v5750 = vadd.f32 %v5713, %v5749
        %5751 = vdwg.mxu0
        %5752 = vmatpush.msra.mxu0 0.0
        %5753 = vmatpush.msra.mxu0 0.0
        %5754 = vmatpush.msra.mxu0 0.0
        %5755 = vmatpush.msra.mxu0 0.0
        %5756 = vmatpush.msra.mxu0 0.0
        %5757 = vmatpush.msra.mxu0 0.0
        %5758 = vmatpush.msra.mxu0 0.0
        %5759 = vmatpush.msra.mxu0 0.0
        %v5760 = vand.u32 %v5565, 4294901760
        %v5761 = vsub.f32 %v5565, %v5760
        %v5762 = vand.u32 %v5761, 4294901760
        %5763 = vmatpush.msra.mxu0 %v5762
        %v5764 = vand.u32 %v5564, 4294901760
        %v5765 = vsub.f32 %v5564, %v5764
        %v5766 = vand.u32 %v5765, 4294901760
        %5767 = vmatpush.msra.mxu0 %v5766
        %v5768 = vand.u32 %v5563, 4294901760
        %v5769 = vsub.f32 %v5563, %v5768
        %v5770 = vand.u32 %v5769, 4294901760
        %5771 = vmatpush.msra.mxu0 %v5770
        %v5772 = vand.u32 %v5562, 4294901760
        %v5773 = vsub.f32 %v5562, %v5772
        %v5774 = vand.u32 %v5773, 4294901760
        %5775 = vmatpush.msra.mxu0 %v5774
        %v5776 = vand.u32 %v5561, 4294901760
        %v5777 = vsub.f32 %v5561, %v5776
        %v5778 = vand.u32 %v5777, 4294901760
        %5779 = vmatpush.msra.mxu0 %v5778
        %v5780 = vand.u32 %v5560, 4294901760
        %v5781 = vsub.f32 %v5560, %v5780
        %v5782 = vand.u32 %v5781, 4294901760
        %5783 = vmatpush.msra.mxu0 %v5782
        %v5784 = vand.u32 %v5559, 4294901760
        %v5785 = vsub.f32 %v5559, %v5784
        %v5786 = vand.u32 %v5785, 4294901760
        %5787 = vmatpush.msra.mxu0 %v5786
        %v5788 = vand.u32 %v5558, 4294901760
        %v5789 = vsub.f32 %v5558, %v5788
        %v5790 = vand.u32 %v5789, 4294901760
        %5791 = vmatpush.msra.mxu0 %v5790
        %v5792 = vand.u32 %v573, 4294901760
        %5793 = vmatmul.f32.gmra.mxu0 %v5792
        %v5794 = vpop.f32.mrf.mxu0
        %v5795 = vadd.f32 %v5744, %v5794
        %v5796 = vand.u32 %v576, 4294901760
        %5797 = vmatmul.f32.gmra.mxu0 %v5796
        %v5798 = vpop.f32.mrf.mxu0
        %v5799 = vadd.f32 %v5750, %v5798
        %5800 = vdwg.mxu0
        %5801 = vmatpush.msra.mxu0 0.0
        %5802 = vmatpush.msra.mxu0 0.0
        %5803 = vmatpush.msra.mxu0 0.0
        %5804 = vmatpush.msra.mxu0 0.0
        %5805 = vmatpush.msra.mxu0 0.0
        %5806 = vmatpush.msra.mxu0 0.0
        %5807 = vmatpush.msra.mxu0 0.0
        %5808 = vmatpush.msra.mxu0 0.0
        %v5809 = vand.u32 %v5565, 4294901760
        %5810 = vmatpush.msra.mxu0 %v5809
        %v5811 = vand.u32 %v5564, 4294901760
        %5812 = vmatpush.msra.mxu0 %v5811
        %v5813 = vand.u32 %v5563, 4294901760
        %5814 = vmatpush.msra.mxu0 %v5813
        %v5815 = vand.u32 %v5562, 4294901760
        %5816 = vmatpush.msra.mxu0 %v5815
        %v5817 = vand.u32 %v5561, 4294901760
        %5818 = vmatpush.msra.mxu0 %v5817
        %v5819 = vand.u32 %v5560, 4294901760
        %5820 = vmatpush.msra.mxu0 %v5819
        %v5821 = vand.u32 %v5559, 4294901760
        %5822 = vmatpush.msra.mxu0 %v5821
        %v5823 = vand.u32 %v5558, 4294901760
        %5824 = vmatpush.msra.mxu0 %v5823
        %v5825 = vand.u32 %v573, 4294901760
        %5826 = vmatmul.f32.gmra.mxu0 %v5825
        %v5827 = vpop.f32.mrf.mxu0
        %v5828 = vadd.f32 %v5795, %v5827
        %v5829 = vand.u32 %v576, 4294901760
        %5830 = vmatmul.f32.gmra.mxu0 %v5829
        %v5831 = vpop.f32.mrf.mxu0
        %v5832 = vadd.f32 %v5799, %v5831
        %5833 = vdwg.mxu0
        %v5835 = vsel %vm1398, %v5274, 0
        %v5838 = vsel %vm1398, %v5278, 0
        %v5841 = vsel %vm1398, %v5551, 0
        %v5844 = vsel %vm1398, %v5555, 0
        %5846 = vmatpush.xpose.msra.mxu0 0.0
        %5847 = vmatpush.xpose.msra.mxu0 0.0
        %5848 = vmatpush.xpose.msra.mxu0 0.0
        %5849 = vmatpush.xpose.msra.mxu0 0.0
        %5850 = vmatpush.xpose.msra.mxu0 0.0
        %5851 = vmatpush.xpose.msra.mxu0 0.0
        %5852 = vmatpush.xpose.msra.mxu0 0.0
        %5853 = vmatpush.xpose.msra.mxu0 0.0
        %5854 = vmatpush.xpose.msra.mxu0 0.0
        %5855 = vmatpush.xpose.msra.mxu0 0.0
        %5856 = vmatpush.xpose.msra.mxu0 0.0
        %5857 = vmatpush.xpose.msra.mxu0 0.0
        %5858 = vmatpush.xpose.msra.mxu0 0.0
        %5859 = vmatpush.xpose.msra.mxu0 0.0
        %v5860 = vand.u32 %v5844, 4294901760
        %5861 = vmatpush.xpose.msra.mxu0 %v5860
        %v5862 = vand.u32 %v5841, 4294901760
        %5863 = vmatpush.xpose.msra.mxu0 %v5862
        %v5864 = vand.u32 %v5835, 4294901760
        %v5865 = vsub.f32 %v5835, %v5864
        %v5866 = vand.u32 %v5865, 4294901760
        %v5867 = vsub.f32 %v5865, %v5866
        %v5868 = vand.u32 %v5867, 4294901760
        %5869 = vmatmul.f32.gmra.mxu0 %v5868
        %v5870 = vpop.f32.mrf.mxu0
        %v5871 = vadd.f32 0.0, %v5870
        %v5872 = vand.u32 %v5838, 4294901760
        %v5873 = vsub.f32 %v5838, %v5872
        %v5874 = vand.u32 %v5873, 4294901760
        %v5875 = vsub.f32 %v5873, %v5874
        %v5876 = vand.u32 %v5875, 4294901760
        %5877 = vmatmul.f32.gmra.mxu0 %v5876
        %v5878 = vpop.f32.mrf.mxu0
        %v5879 = vadd.f32 0.0, %v5878
        %5880 = vdwg.mxu0
        %5881 = vmatpush.xpose.msra.mxu0 0.0
        %5882 = vmatpush.xpose.msra.mxu0 0.0
        %5883 = vmatpush.xpose.msra.mxu0 0.0
        %5884 = vmatpush.xpose.msra.mxu0 0.0
        %5885 = vmatpush.xpose.msra.mxu0 0.0
        %5886 = vmatpush.xpose.msra.mxu0 0.0
        %5887 = vmatpush.xpose.msra.mxu0 0.0
        %5888 = vmatpush.xpose.msra.mxu0 0.0
        %5889 = vmatpush.xpose.msra.mxu0 0.0
        %5890 = vmatpush.xpose.msra.mxu0 0.0
        %5891 = vmatpush.xpose.msra.mxu0 0.0
        %5892 = vmatpush.xpose.msra.mxu0 0.0
        %5893 = vmatpush.xpose.msra.mxu0 0.0
        %5894 = vmatpush.xpose.msra.mxu0 0.0
        %v5895 = vand.u32 %v5844, 4294901760
        %v5896 = vsub.f32 %v5844, %v5895
        %v5897 = vand.u32 %v5896, 4294901760
        %v5898 = vsub.f32 %v5896, %v5897
        %v5899 = vand.u32 %v5898, 4294901760
        %5900 = vmatpush.xpose.msra.mxu0 %v5899
        %v5901 = vand.u32 %v5841, 4294901760
        %v5902 = vsub.f32 %v5841, %v5901
        %v5903 = vand.u32 %v5902, 4294901760
        %v5904 = vsub.f32 %v5902, %v5903
        %v5905 = vand.u32 %v5904, 4294901760
        %5906 = vmatpush.xpose.msra.mxu0 %v5905
        %v5907 = vand.u32 %v5835, 4294901760
        %5908 = vmatmul.f32.gmra.mxu0 %v5907
        %v5909 = vpop.f32.mrf.mxu0
        %v5910 = vadd.f32 %v5871, %v5909
        %v5911 = vand.u32 %v5838, 4294901760
        %5912 = vmatmul.f32.gmra.mxu0 %v5911
        %v5913 = vpop.f32.mrf.mxu0
        %v5914 = vadd.f32 %v5879, %v5913
        %5915 = vdwg.mxu0
        %5916 = vmatpush.xpose.msra.mxu0 0.0
        %5917 = vmatpush.xpose.msra.mxu0 0.0
        %5918 = vmatpush.xpose.msra.mxu0 0.0
        %5919 = vmatpush.xpose.msra.mxu0 0.0
        %5920 = vmatpush.xpose.msra.mxu0 0.0
        %5921 = vmatpush.xpose.msra.mxu0 0.0
        %5922 = vmatpush.xpose.msra.mxu0 0.0
        %5923 = vmatpush.xpose.msra.mxu0 0.0
        %5924 = vmatpush.xpose.msra.mxu0 0.0
        %5925 = vmatpush.xpose.msra.mxu0 0.0
        %5926 = vmatpush.xpose.msra.mxu0 0.0
        %5927 = vmatpush.xpose.msra.mxu0 0.0
        %5928 = vmatpush.xpose.msra.mxu0 0.0
        %5929 = vmatpush.xpose.msra.mxu0 0.0
        %v5930 = vand.u32 %v5844, 4294901760
        %v5931 = vsub.f32 %v5844, %v5930
        %5932 = vmatpush.xpose.msra.mxu0 %v5931
        %v5933 = vand.u32 %v5841, 4294901760
        %v5934 = vsub.f32 %v5841, %v5933
        %5935 = vmatpush.xpose.msra.mxu0 %v5934
        %v5936 = vand.u32 %v5835, 4294901760
        %v5937 = vsub.f32 %v5835, %v5936
        %5938 = vmatmul.f32.gmra.mxu0 %v5937
        %v5939 = vpop.f32.mrf.mxu0
        %v5940 = vadd.f32 %v5910, %v5939
        %v5941 = vand.u32 %v5838, 4294901760
        %v5942 = vsub.f32 %v5838, %v5941
        %5943 = vmatmul.f32.gmra.mxu0 %v5942
        %v5944 = vpop.f32.mrf.mxu0
        %v5945 = vadd.f32 %v5914, %v5944
        %5946 = vdwg.mxu0
        %5947 = vmatpush.xpose.msra.mxu0 0.0
        %5948 = vmatpush.xpose.msra.mxu0 0.0
        %5949 = vmatpush.xpose.msra.mxu0 0.0
        %5950 = vmatpush.xpose.msra.mxu0 0.0
        %5951 = vmatpush.xpose.msra.mxu0 0.0
        %5952 = vmatpush.xpose.msra.mxu0 0.0
        %5953 = vmatpush.xpose.msra.mxu0 0.0
        %5954 = vmatpush.xpose.msra.mxu0 0.0
        %5955 = vmatpush.xpose.msra.mxu0 0.0
        %5956 = vmatpush.xpose.msra.mxu0 0.0
        %5957 = vmatpush.xpose.msra.mxu0 0.0
        %5958 = vmatpush.xpose.msra.mxu0 0.0
        %5959 = vmatpush.xpose.msra.mxu0 0.0
        %5960 = vmatpush.xpose.msra.mxu0 0.0
        %v5961 = vand.u32 %v5844, 4294901760
        %5962 = vmatpush.xpose.msra.mxu0 %v5961
        %v5963 = vand.u32 %v5841, 4294901760
        %5964 = vmatpush.xpose.msra.mxu0 %v5963
        %v5965 = vand.u32 %v5835, 4294901760
        %v5966 = vsub.f32 %v5835, %v5965
        %v5967 = vand.u32 %v5966, 4294901760
        %5968 = vmatmul.f32.gmra.mxu0 %v5967
        %v5969 = vpop.f32.mrf.mxu0
        %v5970 = vadd.f32 %v5940, %v5969
        %v5971 = vand.u32 %v5838, 4294901760
        %v5972 = vsub.f32 %v5838, %v5971
        %v5973 = vand.u32 %v5972, 4294901760
        %5974 = vmatmul.f32.gmra.mxu0 %v5973
        %v5975 = vpop.f32.mrf.mxu0
        %v5976 = vadd.f32 %v5945, %v5975
        %5977 = vdwg.mxu0
        %5978 = vmatpush.xpose.msra.mxu0 0.0
        %5979 = vmatpush.xpose.msra.mxu0 0.0
        %5980 = vmatpush.xpose.msra.mxu0 0.0
        %5981 = vmatpush.xpose.msra.mxu0 0.0
        %5982 = vmatpush.xpose.msra.mxu0 0.0
        %5983 = vmatpush.xpose.msra.mxu0 0.0
        %5984 = vmatpush.xpose.msra.mxu0 0.0
        %5985 = vmatpush.xpose.msra.mxu0 0.0
        %5986 = vmatpush.xpose.msra.mxu0 0.0
        %5987 = vmatpush.xpose.msra.mxu0 0.0
        %5988 = vmatpush.xpose.msra.mxu0 0.0
        %5989 = vmatpush.xpose.msra.mxu0 0.0
        %5990 = vmatpush.xpose.msra.mxu0 0.0
        %5991 = vmatpush.xpose.msra.mxu0 0.0
        %v5992 = vand.u32 %v5844, 4294901760
        %v5993 = vsub.f32 %v5844, %v5992
        %v5994 = vand.u32 %v5993, 4294901760
        %5995 = vmatpush.xpose.msra.mxu0 %v5994
        %v5996 = vand.u32 %v5841, 4294901760
        %v5997 = vsub.f32 %v5841, %v5996
        %v5998 = vand.u32 %v5997, 4294901760
        %5999 = vmatpush.xpose.msra.mxu0 %v5998
        %v6000 = vand.u32 %v5835, 4294901760
        %6001 = vmatmul.f32.gmra.mxu0 %v6000
        %v6002 = vpop.f32.mrf.mxu0
        %v6003 = vadd.f32 %v5970, %v6002
        %v6004 = vand.u32 %v5838, 4294901760
        %6005 = vmatmul.f32.gmra.mxu0 %v6004
        %v6006 = vpop.f32.mrf.mxu0
        %v6007 = vadd.f32 %v5976, %v6006
        %6008 = vdwg.mxu0
        %6009 = vmatpush.xpose.msra.mxu0 0.0
        %6010 = vmatpush.xpose.msra.mxu0 0.0
        %6011 = vmatpush.xpose.msra.mxu0 0.0
        %6012 = vmatpush.xpose.msra.mxu0 0.0
        %6013 = vmatpush.xpose.msra.mxu0 0.0
        %6014 = vmatpush.xpose.msra.mxu0 0.0
        %6015 = vmatpush.xpose.msra.mxu0 0.0
        %6016 = vmatpush.xpose.msra.mxu0 0.0
        %6017 = vmatpush.xpose.msra.mxu0 0.0
        %6018 = vmatpush.xpose.msra.mxu0 0.0
        %6019 = vmatpush.xpose.msra.mxu0 0.0
        %6020 = vmatpush.xpose.msra.mxu0 0.0
        %6021 = vmatpush.xpose.msra.mxu0 0.0
        %6022 = vmatpush.xpose.msra.mxu0 0.0
        %v6023 = vand.u32 %v5844, 4294901760
        %6024 = vmatpush.xpose.msra.mxu0 %v6023
        %v6025 = vand.u32 %v5841, 4294901760
        %6026 = vmatpush.xpose.msra.mxu0 %v6025
        %v6027 = vand.u32 %v5835, 4294901760
        %6028 = vmatmul.f32.gmra.mxu0 %v6027
        %v6029 = vpop.f32.mrf.mxu0
        %v6030 = vadd.f32 %v6003, %v6029
        %v6031 = vand.u32 %v5838, 4294901760
        %6032 = vmatmul.f32.gmra.mxu0 %v6031
        %v6033 = vpop.f32.mrf.mxu0
        %v6034 = vadd.f32 %v6007, %v6033
        %6035 = vdwg.mxu0
        %v6036 = vmul.f32 %v6030, 0.125
        %v6037 = vmul.f32 %v6034, 0.125
        %v6038 = vsel %vm1398, %v6036, -inf
        %6039 = vmax.xlane.f32.xlu0 %v6038
        %v6040 = vpop.xlane.xlu0 %6039
        %v6041 = vsel %vm1398, %v6037, -inf
        %6042 = vmax.xlane.f32.xlu0 %v6041
        %v6043 = vpop.xlane.xlu0 %6042
        %v6044 = vsub.f32 %v6036, %v6040
        %v6045 = vsub.f32 %v6037, %v6043
        %v6046 = vmul.f32 %v6044, 1.442695
        %v6047 = vpow.pop %v6046
        %v6048 = vmul.f32 %v6045, 1.442695
        %v6049 = vpow.pop %v6048
        %v6050 = vsel %vm1398, %v6047, 0.0
        %6051 = vadd.xlane.f32.xlu0 %v6050
        %v6052 = vpop.xlane.xlu0 %6051
        %v6053 = vsel %vm1398, %v6049, 0.0
        %6054 = vadd.xlane.f32.xlu0 %v6053
        %v6055 = vpop.xlane.xlu0 %6054
        %v6056 = vrcp.pop %v6052
        %v6057 = vmul.f32 %v6052, %v6056
        %v6058 = vsub.f32 1.0, %v6057
        %v6059 = vmul.f32 %v6056, %v6058
        %v6060 = vadd.f32 %v6056, %v6059
        %vm6061 = vweird.f32 %v6052
        %vm6062 = vweird.f32 %v6056
        %vm6063 = vmor %vm6061, %vm6062
        %v6064 = vsel %vm6063, %v6056, %v6060
        %v6065 = vand.u32 2147483647, %v6052
        %vm6066 = vcmp.eq.f32.partialorder %v6065, 8.507059e+37
        %v6067 = vand.u32 %v6052, 2147483648
        %v6068 = vor.u32 1.1754944e-38, %v6067
        %v6069 = vsel %vm6066, %v6068, %v6064
        %v6070 = vmul.f32 %v6047, %v6069
        %v6071 = vrcp.pop %v6055
        %v6072 = vmul.f32 %v6055, %v6071
        %v6073 = vsub.f32 1.0, %v6072
        %v6074 = vmul.f32 %v6071, %v6073
        %v6075 = vadd.f32 %v6071, %v6074
        %vm6076 = vweird.f32 %v6055
        %vm6077 = vweird.f32 %v6071
        %vm6078 = vmor %vm6076, %vm6077
        %v6079 = vsel %vm6078, %v6071, %v6075
        %v6080 = vand.u32 2147483647, %v6055
        %vm6081 = vcmp.eq.f32.partialorder %v6080, 8.507059e+37
        %v6082 = vand.u32 %v6055, 2147483648
        %v6083 = vor.u32 1.1754944e-38, %v6082
        %v6084 = vsel %vm6081, %v6083, %v6079
        %v6085 = vmul.f32 %v6049, %v6084
        %v6087 = vsel %vm1398, %v6070, 0
        %v6090 = vsel %vm1398, %v6085, 0
        %6092 = vmatpush.msra.mxu0 0.0
        %6093 = vmatpush.msra.mxu0 0.0
        %6094 = vmatpush.msra.mxu0 0.0
        %6095 = vmatpush.msra.mxu0 0.0
        %6096 = vmatpush.msra.mxu0 0.0
        %6097 = vmatpush.msra.mxu0 0.0
        %6098 = vmatpush.msra.mxu0 0.0
        %6099 = vmatpush.msra.mxu0 0.0
        %6100 = vmatpush.msra.mxu0 0.0
        %6101 = vmatpush.msra.mxu0 0.0
        %6102 = vmatpush.msra.mxu0 0.0
        %6103 = vmatpush.msra.mxu0 0.0
        %6104 = vmatpush.msra.mxu0 0.0
        %6105 = vmatpush.msra.mxu0 0.0
        %v6106 = vand.u32 %v5832, 4294901760
        %6107 = vmatpush.msra.mxu0 %v6106
        %v6108 = vand.u32 %v5828, 4294901760
        %6109 = vmatpush.msra.mxu0 %v6108
        %v6110 = vand.u32 %v6087, 4294901760
        %v6111 = vsub.f32 %v6087, %v6110
        %v6112 = vand.u32 %v6111, 4294901760
        %v6113 = vsub.f32 %v6111, %v6112
        %v6114 = vand.u32 %v6113, 4294901760
        %6115 = vmatmul.f32.gmra.mxu0 %v6114
        %v6116 = vpop.f32.mrf.mxu0
        %v6117 = vadd.f32 0.0, %v6116
        %v6118 = vand.u32 %v6090, 4294901760
        %v6119 = vsub.f32 %v6090, %v6118
        %v6120 = vand.u32 %v6119, 4294901760
        %v6121 = vsub.f32 %v6119, %v6120
        %v6122 = vand.u32 %v6121, 4294901760
        %6123 = vmatmul.f32.gmra.mxu0 %v6122
        %v6124 = vpop.f32.mrf.mxu0
        %v6125 = vadd.f32 0.0, %v6124
        %6126 = vdwg.mxu0
        %6127 = vmatpush.msra.mxu0 0.0
        %6128 = vmatpush.msra.mxu0 0.0
        %6129 = vmatpush.msra.mxu0 0.0
        %6130 = vmatpush.msra.mxu0 0.0
        %6131 = vmatpush.msra.mxu0 0.0
        %6132 = vmatpush.msra.mxu0 0.0
        %6133 = vmatpush.msra.mxu0 0.0
        %6134 = vmatpush.msra.mxu0 0.0
        %6135 = vmatpush.msra.mxu0 0.0
        %6136 = vmatpush.msra.mxu0 0.0
        %6137 = vmatpush.msra.mxu0 0.0
        %6138 = vmatpush.msra.mxu0 0.0
        %6139 = vmatpush.msra.mxu0 0.0
        %6140 = vmatpush.msra.mxu0 0.0
        %v6141 = vand.u32 %v5832, 4294901760
        %v6142 = vsub.f32 %v5832, %v6141
        %v6143 = vand.u32 %v6142, 4294901760
        %v6144 = vsub.f32 %v6142, %v6143
        %v6145 = vand.u32 %v6144, 4294901760
        %6146 = vmatpush.msra.mxu0 %v6145
        %v6147 = vand.u32 %v5828, 4294901760
        %v6148 = vsub.f32 %v5828, %v6147
        %v6149 = vand.u32 %v6148, 4294901760
        %v6150 = vsub.f32 %v6148, %v6149
        %v6151 = vand.u32 %v6150, 4294901760
        %6152 = vmatpush.msra.mxu0 %v6151
        %v6153 = vand.u32 %v6087, 4294901760
        %6154 = vmatmul.f32.gmra.mxu0 %v6153
        %v6155 = vpop.f32.mrf.mxu0
        %v6156 = vadd.f32 %v6117, %v6155
        %v6157 = vand.u32 %v6090, 4294901760
        %6158 = vmatmul.f32.gmra.mxu0 %v6157
        %v6159 = vpop.f32.mrf.mxu0
        %v6160 = vadd.f32 %v6125, %v6159
        %6161 = vdwg.mxu0
        %6162 = vmatpush.msra.mxu0 0.0
        %6163 = vmatpush.msra.mxu0 0.0
        %6164 = vmatpush.msra.mxu0 0.0
        %6165 = vmatpush.msra.mxu0 0.0
        %6166 = vmatpush.msra.mxu0 0.0
        %6167 = vmatpush.msra.mxu0 0.0
        %6168 = vmatpush.msra.mxu0 0.0
        %6169 = vmatpush.msra.mxu0 0.0
        %6170 = vmatpush.msra.mxu0 0.0
        %6171 = vmatpush.msra.mxu0 0.0
        %6172 = vmatpush.msra.mxu0 0.0
        %6173 = vmatpush.msra.mxu0 0.0
        %6174 = vmatpush.msra.mxu0 0.0
        %6175 = vmatpush.msra.mxu0 0.0
        %v6176 = vand.u32 %v5832, 4294901760
        %v6177 = vsub.f32 %v5832, %v6176
        %6178 = vmatpush.msra.mxu0 %v6177
        %v6179 = vand.u32 %v5828, 4294901760
        %v6180 = vsub.f32 %v5828, %v6179
        %6181 = vmatpush.msra.mxu0 %v6180
        %v6182 = vand.u32 %v6087, 4294901760
        %v6183 = vsub.f32 %v6087, %v6182
        %6184 = vmatmul.f32.gmra.mxu0 %v6183
        %v6185 = vpop.f32.mrf.mxu0
        %v6186 = vadd.f32 %v6156, %v6185
        %v6187 = vand.u32 %v6090, 4294901760
        %v6188 = vsub.f32 %v6090, %v6187
        %6189 = vmatmul.f32.gmra.mxu0 %v6188
        %v6190 = vpop.f32.mrf.mxu0
        %v6191 = vadd.f32 %v6160, %v6190
        %6192 = vdwg.mxu0
        %6193 = vmatpush.msra.mxu0 0.0
        %6194 = vmatpush.msra.mxu0 0.0
        %6195 = vmatpush.msra.mxu0 0.0
        %6196 = vmatpush.msra.mxu0 0.0
        %6197 = vmatpush.msra.mxu0 0.0
        %6198 = vmatpush.msra.mxu0 0.0
        %6199 = vmatpush.msra.mxu0 0.0
        %6200 = vmatpush.msra.mxu0 0.0
        %6201 = vmatpush.msra.mxu0 0.0
        %6202 = vmatpush.msra.mxu0 0.0
        %6203 = vmatpush.msra.mxu0 0.0
        %6204 = vmatpush.msra.mxu0 0.0
        %6205 = vmatpush.msra.mxu0 0.0
        %6206 = vmatpush.msra.mxu0 0.0
        %v6207 = vand.u32 %v5832, 4294901760
        %6208 = vmatpush.msra.mxu0 %v6207
        %v6209 = vand.u32 %v5828, 4294901760
        %6210 = vmatpush.msra.mxu0 %v6209
        %v6211 = vand.u32 %v6087, 4294901760
        %v6212 = vsub.f32 %v6087, %v6211
        %v6213 = vand.u32 %v6212, 4294901760
        %6214 = vmatmul.f32.gmra.mxu0 %v6213
        %v6215 = vpop.f32.mrf.mxu0
        %v6216 = vadd.f32 %v6186, %v6215
        %v6217 = vand.u32 %v6090, 4294901760
        %v6218 = vsub.f32 %v6090, %v6217
        %v6219 = vand.u32 %v6218, 4294901760
        %6220 = vmatmul.f32.gmra.mxu0 %v6219
        %v6221 = vpop.f32.mrf.mxu0
        %v6222 = vadd.f32 %v6191, %v6221
        %6223 = vdwg.mxu0
        %6224 = vmatpush.msra.mxu0 0.0
        %6225 = vmatpush.msra.mxu0 0.0
        %6226 = vmatpush.msra.mxu0 0.0
        %6227 = vmatpush.msra.mxu0 0.0
        %6228 = vmatpush.msra.mxu0 0.0
        %6229 = vmatpush.msra.mxu0 0.0
        %6230 = vmatpush.msra.mxu0 0.0
        %6231 = vmatpush.msra.mxu0 0.0
        %6232 = vmatpush.msra.mxu0 0.0
        %6233 = vmatpush.msra.mxu0 0.0
        %6234 = vmatpush.msra.mxu0 0.0
        %6235 = vmatpush.msra.mxu0 0.0
        %6236 = vmatpush.msra.mxu0 0.0
        %6237 = vmatpush.msra.mxu0 0.0
        %v6238 = vand.u32 %v5832, 4294901760
        %v6239 = vsub.f32 %v5832, %v6238
        %v6240 = vand.u32 %v6239, 4294901760
        %6241 = vmatpush.msra.mxu0 %v6240
        %v6242 = vand.u32 %v5828, 4294901760
        %v6243 = vsub.f32 %v5828, %v6242
        %v6244 = vand.u32 %v6243, 4294901760
        %6245 = vmatpush.msra.mxu0 %v6244
        %v6246 = vand.u32 %v6087, 4294901760
        %6247 = vmatmul.f32.gmra.mxu0 %v6246
        %v6248 = vpop.f32.mrf.mxu0
        %v6249 = vadd.f32 %v6216, %v6248
        %v6250 = vand.u32 %v6090, 4294901760
        %6251 = vmatmul.f32.gmra.mxu0 %v6250
        %v6252 = vpop.f32.mrf.mxu0
        %v6253 = vadd.f32 %v6222, %v6252
        %6254 = vdwg.mxu0
        %6255 = vmatpush.msra.mxu0 0.0
        %6256 = vmatpush.msra.mxu0 0.0
        %6257 = vmatpush.msra.mxu0 0.0
        %6258 = vmatpush.msra.mxu0 0.0
        %6259 = vmatpush.msra.mxu0 0.0
        %6260 = vmatpush.msra.mxu0 0.0
        %6261 = vmatpush.msra.mxu0 0.0
        %6262 = vmatpush.msra.mxu0 0.0
        %6263 = vmatpush.msra.mxu0 0.0
        %6264 = vmatpush.msra.mxu0 0.0
        %6265 = vmatpush.msra.mxu0 0.0
        %6266 = vmatpush.msra.mxu0 0.0
        %6267 = vmatpush.msra.mxu0 0.0
        %6268 = vmatpush.msra.mxu0 0.0
        %v6269 = vand.u32 %v5832, 4294901760
        %6270 = vmatpush.msra.mxu0 %v6269
        %v6271 = vand.u32 %v5828, 4294901760
        %6272 = vmatpush.msra.mxu0 %v6271
        %v6273 = vand.u32 %v6087, 4294901760
        %6274 = vmatmul.f32.gmra.mxu0 %v6273
        %v6275 = vpop.f32.mrf.mxu0
        %v6276 = vadd.f32 %v6249, %v6275
        %v6277 = vand.u32 %v6090, 4294901760
        %6278 = vmatmul.f32.gmra.mxu0 %v6277
        %v6279 = vpop.f32.mrf.mxu0
        %v6280 = vadd.f32 %v6253, %v6279
        %6281 = vdwg.mxu0
        %s6282 = scalar_lea.vmem %s6, 48
        %v6283 = vld [vmem:[%s6282] sm:$0xff]
        %v6284 = vld [vmem:[%s6282 + $0x8] sm:$0xff]
        %v6286 = vsel %vm1398, %v6276, 0
        %v6289 = vsel %vm1398, %v6280, 0
        %6291 = vmatpush.msra.mxu0 0.0
        %6292 = vmatpush.msra.mxu0 0.0
        %6293 = vmatpush.msra.mxu0 0.0
        %6294 = vmatpush.msra.mxu0 0.0
        %6295 = vmatpush.msra.mxu0 0.0
        %6296 = vmatpush.msra.mxu0 0.0
        %6297 = vmatpush.msra.mxu0 0.0
        %6298 = vmatpush.msra.mxu0 0.0
        %6299 = vmatpush.msra.mxu0 0.0
        %6300 = vmatpush.msra.mxu0 0.0
        %6301 = vmatpush.msra.mxu0 0.0
        %6302 = vmatpush.msra.mxu0 0.0
        %6303 = vmatpush.msra.mxu0 0.0
        %6304 = vmatpush.msra.mxu0 0.0
        %v6305 = vand.u32 %v6284, 4294901760
        %6306 = vmatpush.msra.mxu0 %v6305
        %v6307 = vand.u32 %v6283, 4294901760
        %6308 = vmatpush.msra.mxu0 %v6307
        %v6309 = vand.u32 %v6286, 4294901760
        %v6310 = vsub.f32 %v6286, %v6309
        %v6311 = vand.u32 %v6310, 4294901760
        %v6312 = vsub.f32 %v6310, %v6311
        %v6313 = vand.u32 %v6312, 4294901760
        %6314 = vmatmul.f32.gmra.mxu0 %v6313
        %v6315 = vpop.f32.mrf.mxu0
        %v6316 = vadd.f32 0.0, %v6315
        %v6317 = vand.u32 %v6289, 4294901760
        %v6318 = vsub.f32 %v6289, %v6317
        %v6319 = vand.u32 %v6318, 4294901760
        %v6320 = vsub.f32 %v6318, %v6319
        %v6321 = vand.u32 %v6320, 4294901760
        %6322 = vmatmul.f32.gmra.mxu0 %v6321
        %v6323 = vpop.f32.mrf.mxu0
        %v6324 = vadd.f32 0.0, %v6323
        %6325 = vdwg.mxu0
        %6326 = vmatpush.msra.mxu0 0.0
        %6327 = vmatpush.msra.mxu0 0.0
        %6328 = vmatpush.msra.mxu0 0.0
        %6329 = vmatpush.msra.mxu0 0.0
        %6330 = vmatpush.msra.mxu0 0.0
        %6331 = vmatpush.msra.mxu0 0.0
        %6332 = vmatpush.msra.mxu0 0.0
        %6333 = vmatpush.msra.mxu0 0.0
        %6334 = vmatpush.msra.mxu0 0.0
        %6335 = vmatpush.msra.mxu0 0.0
        %6336 = vmatpush.msra.mxu0 0.0
        %6337 = vmatpush.msra.mxu0 0.0
        %6338 = vmatpush.msra.mxu0 0.0
        %6339 = vmatpush.msra.mxu0 0.0
        %v6340 = vand.u32 %v6284, 4294901760
        %v6341 = vsub.f32 %v6284, %v6340
        %v6342 = vand.u32 %v6341, 4294901760
        %v6343 = vsub.f32 %v6341, %v6342
        %v6344 = vand.u32 %v6343, 4294901760
        %6345 = vmatpush.msra.mxu0 %v6344
        %v6346 = vand.u32 %v6283, 4294901760
        %v6347 = vsub.f32 %v6283, %v6346
        %v6348 = vand.u32 %v6347, 4294901760
        %v6349 = vsub.f32 %v6347, %v6348
        %v6350 = vand.u32 %v6349, 4294901760
        %6351 = vmatpush.msra.mxu0 %v6350
        %v6352 = vand.u32 %v6286, 4294901760
        %6353 = vmatmul.f32.gmra.mxu0 %v6352
        %v6354 = vpop.f32.mrf.mxu0
        %v6355 = vadd.f32 %v6316, %v6354
        %v6356 = vand.u32 %v6289, 4294901760
        %6357 = vmatmul.f32.gmra.mxu0 %v6356
        %v6358 = vpop.f32.mrf.mxu0
        %v6359 = vadd.f32 %v6324, %v6358
        %6360 = vdwg.mxu0
        %6361 = vmatpush.msra.mxu0 0.0
        %6362 = vmatpush.msra.mxu0 0.0
        %6363 = vmatpush.msra.mxu0 0.0
        %6364 = vmatpush.msra.mxu0 0.0
        %6365 = vmatpush.msra.mxu0 0.0
        %6366 = vmatpush.msra.mxu0 0.0
        %6367 = vmatpush.msra.mxu0 0.0
        %6368 = vmatpush.msra.mxu0 0.0
        %6369 = vmatpush.msra.mxu0 0.0
        %6370 = vmatpush.msra.mxu0 0.0
        %6371 = vmatpush.msra.mxu0 0.0
        %6372 = vmatpush.msra.mxu0 0.0
        %6373 = vmatpush.msra.mxu0 0.0
        %6374 = vmatpush.msra.mxu0 0.0
        %v6375 = vand.u32 %v6284, 4294901760
        %v6376 = vsub.f32 %v6284, %v6375
        %6377 = vmatpush.msra.mxu0 %v6376
        %v6378 = vand.u32 %v6283, 4294901760
        %v6379 = vsub.f32 %v6283, %v6378
        %6380 = vmatpush.msra.mxu0 %v6379
        %v6381 = vand.u32 %v6286, 4294901760
        %v6382 = vsub.f32 %v6286, %v6381
        %6383 = vmatmul.f32.gmra.mxu0 %v6382
        %v6384 = vpop.f32.mrf.mxu0
        %v6385 = vadd.f32 %v6355, %v6384
        %v6386 = vand.u32 %v6289, 4294901760
        %v6387 = vsub.f32 %v6289, %v6386
        %6388 = vmatmul.f32.gmra.mxu0 %v6387
        %v6389 = vpop.f32.mrf.mxu0
        %v6390 = vadd.f32 %v6359, %v6389
        %6391 = vdwg.mxu0
        %6392 = vmatpush.msra.mxu0 0.0
        %6393 = vmatpush.msra.mxu0 0.0
        %6394 = vmatpush.msra.mxu0 0.0
        %6395 = vmatpush.msra.mxu0 0.0
        %6396 = vmatpush.msra.mxu0 0.0
        %6397 = vmatpush.msra.mxu0 0.0
        %6398 = vmatpush.msra.mxu0 0.0
        %6399 = vmatpush.msra.mxu0 0.0
        %6400 = vmatpush.msra.mxu0 0.0
        %6401 = vmatpush.msra.mxu0 0.0
        %6402 = vmatpush.msra.mxu0 0.0
        %6403 = vmatpush.msra.mxu0 0.0
        %6404 = vmatpush.msra.mxu0 0.0
        %6405 = vmatpush.msra.mxu0 0.0
        %v6406 = vand.u32 %v6284, 4294901760
        %6407 = vmatpush.msra.mxu0 %v6406
        %v6408 = vand.u32 %v6283, 4294901760
        %6409 = vmatpush.msra.mxu0 %v6408
        %v6410 = vand.u32 %v6286, 4294901760
        %v6411 = vsub.f32 %v6286, %v6410
        %v6412 = vand.u32 %v6411, 4294901760
        %6413 = vmatmul.f32.gmra.mxu0 %v6412
        %v6414 = vpop.f32.mrf.mxu0
        %v6415 = vadd.f32 %v6385, %v6414
        %v6416 = vand.u32 %v6289, 4294901760
        %v6417 = vsub.f32 %v6289, %v6416
        %v6418 = vand.u32 %v6417, 4294901760
        %6419 = vmatmul.f32.gmra.mxu0 %v6418
        %v6420 = vpop.f32.mrf.mxu0
        %v6421 = vadd.f32 %v6390, %v6420
        %6422 = vdwg.mxu0
        %6423 = vmatpush.msra.mxu0 0.0
        %6424 = vmatpush.msra.mxu0 0.0
        %6425 = vmatpush.msra.mxu0 0.0
        %6426 = vmatpush.msra.mxu0 0.0
        %6427 = vmatpush.msra.mxu0 0.0
        %6428 = vmatpush.msra.mxu0 0.0
        %6429 = vmatpush.msra.mxu0 0.0
        %6430 = vmatpush.msra.mxu0 0.0
        %6431 = vmatpush.msra.mxu0 0.0
        %6432 = vmatpush.msra.mxu0 0.0
        %6433 = vmatpush.msra.mxu0 0.0
        %6434 = vmatpush.msra.mxu0 0.0
        %6435 = vmatpush.msra.mxu0 0.0
        %6436 = vmatpush.msra.mxu0 0.0
        %v6437 = vand.u32 %v6284, 4294901760
        %v6438 = vsub.f32 %v6284, %v6437
        %v6439 = vand.u32 %v6438, 4294901760
        %6440 = vmatpush.msra.mxu0 %v6439
        %v6441 = vand.u32 %v6283, 4294901760
        %v6442 = vsub.f32 %v6283, %v6441
        %v6443 = vand.u32 %v6442, 4294901760
        %6444 = vmatpush.msra.mxu0 %v6443
        %v6445 = vand.u32 %v6286, 4294901760
        %6446 = vmatmul.f32.gmra.mxu0 %v6445
        %v6447 = vpop.f32.mrf.mxu0
        %v6448 = vadd.f32 %v6415, %v6447
        %v6449 = vand.u32 %v6289, 4294901760
        %6450 = vmatmul.f32.gmra.mxu0 %v6449
        %v6451 = vpop.f32.mrf.mxu0
        %v6452 = vadd.f32 %v6421, %v6451
        %6453 = vdwg.mxu0
        %6454 = vmatpush.msra.mxu0 0.0
        %6455 = vmatpush.msra.mxu0 0.0
        %6456 = vmatpush.msra.mxu0 0.0
        %6457 = vmatpush.msra.mxu0 0.0
        %6458 = vmatpush.msra.mxu0 0.0
        %6459 = vmatpush.msra.mxu0 0.0
        %6460 = vmatpush.msra.mxu0 0.0
        %6461 = vmatpush.msra.mxu0 0.0
        %6462 = vmatpush.msra.mxu0 0.0
        %6463 = vmatpush.msra.mxu0 0.0
        %6464 = vmatpush.msra.mxu0 0.0
        %6465 = vmatpush.msra.mxu0 0.0
        %6466 = vmatpush.msra.mxu0 0.0
        %6467 = vmatpush.msra.mxu0 0.0
        %v6468 = vand.u32 %v6284, 4294901760
        %6469 = vmatpush.msra.mxu0 %v6468
        %v6470 = vand.u32 %v6283, 4294901760
        %6471 = vmatpush.msra.mxu0 %v6470
        %v6472 = vand.u32 %v6286, 4294901760
        %6473 = vmatmul.f32.gmra.mxu0 %v6472
        %v6474 = vpop.f32.mrf.mxu0
        %v6475 = vadd.f32 %v6448, %v6474
        %v6476 = vand.u32 %v6289, 4294901760
        %6477 = vmatmul.f32.gmra.mxu0 %v6476
        %v6478 = vpop.f32.mrf.mxu0
        %v6479 = vadd.f32 %v6452, %v6478
        %6480 = vdwg.mxu0
        %v6481 = vadd.f32 %v5001, %v6475
        %v6482 = vadd.f32 %v5002, %v6479
        %v6483 = vld [vmem:[%s7] sm:$0x1]
        %v6485 = vperm.slane %v6483, 0
        %v6487 = vadd.f32 %v6481, %v6485
        %v6488 = vadd.f32 %v6482, %v6485
        %v6489 = vadd.f32 %v6487, %v466
        %v6490 = vadd.f32 %v6488, %v467
        %v6491 = vld [vmem:[%s8] sm:$0x1]
        %v6492 = vld [vmem:[%s9] sm:$0x1]
        %v6493 = vsel %vm470, %v6489, 0.0
        %6494 = vadd.xlane.f32.xlu0 %v6493
        %v6495 = vpop.xlane.xlu0 %6494
        %v6496 = vsel %vm470, %v6490, 0.0
        %6497 = vadd.xlane.f32.xlu0 %v6496
        %v6498 = vpop.xlane.xlu0 %6497
        %v6499 = vmul.f32 %v6495, %v483
        %v6500 = vmul.f32 %v6498, %v483
        %v6501 = vsub.f32 %v6489, %v6499
        %v6502 = vsub.f32 %v6490, %v6500
        %v6503 = vmul.f32 %v6501, %v6501
        %v6504 = vmul.f32 %v6502, %v6502
        %v6505 = vsel %vm470, %v6503, 0.0
        %6506 = vadd.xlane.f32.xlu0 %v6505
        %v6507 = vpop.xlane.xlu0 %6506
        %v6508 = vsel %vm470, %v6504, 0.0
        %6509 = vadd.xlane.f32.xlu0 %v6508
        %v6510 = vpop.xlane.xlu0 %6509
        %v6511 = vmul.f32 %v6507, %v483
        %v6512 = vmul.f32 %v6510, %v483
        %v6513 = vadd.f32 %v6511, 1e-05
        %v6514 = vadd.f32 %v6512, 1e-05
        %v6515 = vrsqrt.pop %v6513
        %v6516 = vmul.f32 %v6515, %v6513
        %v6517 = vmul.f32 %v6516, %v6515
        %v6518 = vmul.f32 0.5, %v6517
        %v6519 = vsub.f32 1.5, %v6518
        %v6520 = vmul.f32 %v6515, %v6519
        %v6521 = vmul.f32 %v6513, %v6520
        %vm6522 = vcmp.eq.f32.partialorder %v6513, inf
        %v6523 = vsel %vm6522, %v6513, %v6521
        %vm6524 = vcmp.eq.f32.partialorder %v6513, 0.0
        %v6525 = vand.u32 %v6513, 2147483648
        %v6526 = vsel %vm6524, %v6525, %v6523
        %v6527 = vrsqrt.pop %v6514
        %v6528 = vmul.f32 %v6527, %v6514
        %v6529 = vmul.f32 %v6528, %v6527
        %v6530 = vmul.f32 0.5, %v6529
        %v6531 = vsub.f32 1.5, %v6530
        %v6532 = vmul.f32 %v6527, %v6531
        %v6533 = vmul.f32 %v6514, %v6532
        %vm6534 = vcmp.eq.f32.partialorder %v6514, inf
        %v6535 = vsel %vm6534, %v6514, %v6533
        %vm6536 = vcmp.eq.f32.partialorder %v6514, 0.0
        %v6537 = vand.u32 %v6514, 2147483648
        %v6538 = vsel %vm6536, %v6537, %v6535
        %v6539 = vrcp.pop %v6526
        %v6540 = vmul.f32 %v6526, %v6539
        %v6541 = vsub.f32 1.0, %v6540
        %v6542 = vmul.f32 %v6539, %v6541
        %v6543 = vadd.f32 %v6539, %v6542
        %vm6544 = vweird.f32 %v6526
        %vm6545 = vweird.f32 %v6539
        %vm6546 = vmor %vm6544, %vm6545
        %v6547 = vsel %vm6546, %v6539, %v6543
        %v6548 = vand.u32 2147483647, %v6526
        %vm6549 = vcmp.eq.f32.partialorder %v6548, 8.507059e+37
        %v6550 = vand.u32 %v6526, 2147483648
        %v6551 = vor.u32 1.1754944e-38, %v6550
        %v6552 = vsel %vm6549, %v6551, %v6547
        %v6553 = vmul.f32 %v6501, %v6552
        %v6554 = vrcp.pop %v6538
        %v6555 = vmul.f32 %v6538, %v6554
        %v6556 = vsub.f32 1.0, %v6555
        %v6557 = vmul.f32 %v6554, %v6556
        %v6558 = vadd.f32 %v6554, %v6557
        %vm6559 = vweird.f32 %v6538
        %vm6560 = vweird.f32 %v6554
        %vm6561 = vmor %vm6559, %vm6560
        %v6562 = vsel %vm6561, %v6554, %v6558
        %v6563 = vand.u32 2147483647, %v6538
        %vm6564 = vcmp.eq.f32.partialorder %v6563, 8.507059e+37
        %v6565 = vand.u32 %v6538, 2147483648
        %v6566 = vor.u32 1.1754944e-38, %v6565
        %v6567 = vsel %vm6564, %v6566, %v6562
        %v6568 = vmul.f32 %v6502, %v6567
        %v6570 = vperm.slane %v6491, 0
        %v6572 = vmul.f32 %v6553, %v6570
        %v6573 = vmul.f32 %v6568, %v6570
        %v6575 = vperm.slane %v6492, 0
        %v6577 = vadd.f32 %v6572, %v6575
        %v6578 = vadd.f32 %v6573, %v6575
        %v6579 = vld [vmem:[%s10] sm:$0xff]
        %v6580 = vld [vmem:[%s10 + $0x8] sm:$0xff]
        %v6581 = vld [vmem:[%s10 + $0x10] sm:$0xff]
        %v6582 = vld [vmem:[%s10 + $0x18] sm:$0xff]
        %v6583 = vld [vmem:[%s10 + $0x20] sm:$0xff]
        %v6584 = vld [vmem:[%s10 + $0x28] sm:$0xff]
        %v6585 = vld [vmem:[%s10 + $0x30] sm:$0xff]
        %v6586 = vld [vmem:[%s10 + $0x38] sm:$0xff]
        %v6587 = vld [vmem:[%s11] sm:$0x1]
        %v6589 = vperm.slane %v6587, 0
        %v6592 = vsel %vm470, %v6577, 0
        %v6595 = vsel %vm470, %v6578, 0
        %6597 = vmatpush.msra.mxu0 0.0
        %6598 = vmatpush.msra.mxu0 0.0
        %6599 = vmatpush.msra.mxu0 0.0
        %6600 = vmatpush.msra.mxu0 0.0
        %6601 = vmatpush.msra.mxu0 0.0
        %6602 = vmatpush.msra.mxu0 0.0
        %6603 = vmatpush.msra.mxu0 0.0
        %6604 = vmatpush.msra.mxu0 0.0
        %v6605 = vand.u32 %v6586, 4294901760
        %6606 = vmatpush.msra.mxu0 %v6605
        %v6607 = vand.u32 %v6585, 4294901760
        %6608 = vmatpush.msra.mxu0 %v6607
        %v6609 = vand.u32 %v6584, 4294901760
        %6610 = vmatpush.msra.mxu0 %v6609
        %v6611 = vand.u32 %v6583, 4294901760
        %6612 = vmatpush.msra.mxu0 %v6611
        %v6613 = vand.u32 %v6582, 4294901760
        %6614 = vmatpush.msra.mxu0 %v6613
        %v6615 = vand.u32 %v6581, 4294901760
        %6616 = vmatpush.msra.mxu0 %v6615
        %v6617 = vand.u32 %v6580, 4294901760
        %6618 = vmatpush.msra.mxu0 %v6617
        %v6619 = vand.u32 %v6579, 4294901760
        %6620 = vmatpush.msra.mxu0 %v6619
        %v6621 = vand.u32 %v6592, 4294901760
        %v6622 = vsub.f32 %v6592, %v6621
        %v6623 = vand.u32 %v6622, 4294901760
        %v6624 = vsub.f32 %v6622, %v6623
        %v6625 = vand.u32 %v6624, 4294901760
        %6626 = vmatmul.f32.gmra.mxu0 %v6625
        %v6627 = vpop.f32.mrf.mxu0
        %v6628 = vadd.f32 %v6589, %v6627
        %v6629 = vand.u32 %v6595, 4294901760
        %v6630 = vsub.f32 %v6595, %v6629
        %v6631 = vand.u32 %v6630, 4294901760
        %v6632 = vsub.f32 %v6630, %v6631
        %v6633 = vand.u32 %v6632, 4294901760
        %6634 = vmatmul.f32.gmra.mxu0 %v6633
        %v6635 = vpop.f32.mrf.mxu0
        %v6636 = vadd.f32 %v6589, %v6635
        %6637 = vdwg.mxu0
        %6638 = vmatpush.msra.mxu0 0.0
        %6639 = vmatpush.msra.mxu0 0.0
        %6640 = vmatpush.msra.mxu0 0.0
        %6641 = vmatpush.msra.mxu0 0.0
        %6642 = vmatpush.msra.mxu0 0.0
        %6643 = vmatpush.msra.mxu0 0.0
        %6644 = vmatpush.msra.mxu0 0.0
        %6645 = vmatpush.msra.mxu0 0.0
        %v6646 = vand.u32 %v6586, 4294901760
        %v6647 = vsub.f32 %v6586, %v6646
        %v6648 = vand.u32 %v6647, 4294901760
        %v6649 = vsub.f32 %v6647, %v6648
        %v6650 = vand.u32 %v6649, 4294901760
        %6651 = vmatpush.msra.mxu0 %v6650
        %v6652 = vand.u32 %v6585, 4294901760
        %v6653 = vsub.f32 %v6585, %v6652
        %v6654 = vand.u32 %v6653, 4294901760
        %v6655 = vsub.f32 %v6653, %v6654
        %v6656 = vand.u32 %v6655, 4294901760
        %6657 = vmatpush.msra.mxu0 %v6656
        %v6658 = vand.u32 %v6584, 4294901760
        %v6659 = vsub.f32 %v6584, %v6658
        %v6660 = vand.u32 %v6659, 4294901760
        %v6661 = vsub.f32 %v6659, %v6660
        %v6662 = vand.u32 %v6661, 4294901760
        %6663 = vmatpush.msra.mxu0 %v6662
        %v6664 = vand.u32 %v6583, 4294901760
        %v6665 = vsub.f32 %v6583, %v6664
        %v6666 = vand.u32 %v6665, 4294901760
        %v6667 = vsub.f32 %v6665, %v6666
        %v6668 = vand.u32 %v6667, 4294901760
        %6669 = vmatpush.msra.mxu0 %v6668
        %v6670 = vand.u32 %v6582, 4294901760
        %v6671 = vsub.f32 %v6582, %v6670
        %v6672 = vand.u32 %v6671, 4294901760
        %v6673 = vsub.f32 %v6671, %v6672
        %v6674 = vand.u32 %v6673, 4294901760
        %6675 = vmatpush.msra.mxu0 %v6674
        %v6676 = vand.u32 %v6581, 4294901760
        %v6677 = vsub.f32 %v6581, %v6676
        %v6678 = vand.u32 %v6677, 4294901760
        %v6679 = vsub.f32 %v6677, %v6678
        %v6680 = vand.u32 %v6679, 4294901760
        %6681 = vmatpush.msra.mxu0 %v6680
        %v6682 = vand.u32 %v6580, 4294901760
        %v6683 = vsub.f32 %v6580, %v6682
        %v6684 = vand.u32 %v6683, 4294901760
        %v6685 = vsub.f32 %v6683, %v6684
        %v6686 = vand.u32 %v6685, 4294901760
        %6687 = vmatpush.msra.mxu0 %v6686
        %v6688 = vand.u32 %v6579, 4294901760
        %v6689 = vsub.f32 %v6579, %v6688
        %v6690 = vand.u32 %v6689, 4294901760
        %v6691 = vsub.f32 %v6689, %v6690
        %v6692 = vand.u32 %v6691, 4294901760
        %6693 = vmatpush.msra.mxu0 %v6692
        %v6694 = vand.u32 %v6592, 4294901760
        %6695 = vmatmul.f32.gmra.mxu0 %v6694
        %v6696 = vpop.f32.mrf.mxu0
        %v6697 = vadd.f32 %v6628, %v6696
        %v6698 = vand.u32 %v6595, 4294901760
        %6699 = vmatmul.f32.gmra.mxu0 %v6698
        %v6700 = vpop.f32.mrf.mxu0
        %v6701 = vadd.f32 %v6636, %v6700
        %6702 = vdwg.mxu0
        %6703 = vmatpush.msra.mxu0 0.0
        %6704 = vmatpush.msra.mxu0 0.0
        %6705 = vmatpush.msra.mxu0 0.0
        %6706 = vmatpush.msra.mxu0 0.0
        %6707 = vmatpush.msra.mxu0 0.0
        %6708 = vmatpush.msra.mxu0 0.0
        %6709 = vmatpush.msra.mxu0 0.0
        %6710 = vmatpush.msra.mxu0 0.0
        %v6711 = vand.u32 %v6586, 4294901760
        %v6712 = vsub.f32 %v6586, %v6711
        %6713 = vmatpush.msra.mxu0 %v6712
        %v6714 = vand.u32 %v6585, 4294901760
        %v6715 = vsub.f32 %v6585, %v6714
        %6716 = vmatpush.msra.mxu0 %v6715
        %v6717 = vand.u32 %v6584, 4294901760
        %v6718 = vsub.f32 %v6584, %v6717
        %6719 = vmatpush.msra.mxu0 %v6718
        %v6720 = vand.u32 %v6583, 4294901760
        %v6721 = vsub.f32 %v6583, %v6720
        %6722 = vmatpush.msra.mxu0 %v6721
        %v6723 = vand.u32 %v6582, 4294901760
        %v6724 = vsub.f32 %v6582, %v6723
        %6725 = vmatpush.msra.mxu0 %v6724
        %v6726 = vand.u32 %v6581, 4294901760
        %v6727 = vsub.f32 %v6581, %v6726
        %6728 = vmatpush.msra.mxu0 %v6727
        %v6729 = vand.u32 %v6580, 4294901760
        %v6730 = vsub.f32 %v6580, %v6729
        %6731 = vmatpush.msra.mxu0 %v6730
        %v6732 = vand.u32 %v6579, 4294901760
        %v6733 = vsub.f32 %v6579, %v6732
        %6734 = vmatpush.msra.mxu0 %v6733
        %v6735 = vand.u32 %v6592, 4294901760
        %v6736 = vsub.f32 %v6592, %v6735
        %6737 = vmatmul.f32.gmra.mxu0 %v6736
        %v6738 = vpop.f32.mrf.mxu0
        %v6739 = vadd.f32 %v6697, %v6738
        %v6740 = vand.u32 %v6595, 4294901760
        %v6741 = vsub.f32 %v6595, %v6740
        %6742 = vmatmul.f32.gmra.mxu0 %v6741
        %v6743 = vpop.f32.mrf.mxu0
        %v6744 = vadd.f32 %v6701, %v6743
        %6745 = vdwg.mxu0
        %6746 = vmatpush.msra.mxu0 0.0
        %6747 = vmatpush.msra.mxu0 0.0
        %6748 = vmatpush.msra.mxu0 0.0
        %6749 = vmatpush.msra.mxu0 0.0
        %6750 = vmatpush.msra.mxu0 0.0
        %6751 = vmatpush.msra.mxu0 0.0
        %6752 = vmatpush.msra.mxu0 0.0
        %6753 = vmatpush.msra.mxu0 0.0
        %v6754 = vand.u32 %v6586, 4294901760
        %6755 = vmatpush.msra.mxu0 %v6754
        %v6756 = vand.u32 %v6585, 4294901760
        %6757 = vmatpush.msra.mxu0 %v6756
        %v6758 = vand.u32 %v6584, 4294901760
        %6759 = vmatpush.msra.mxu0 %v6758
        %v6760 = vand.u32 %v6583, 4294901760
        %6761 = vmatpush.msra.mxu0 %v6760
        %v6762 = vand.u32 %v6582, 4294901760
        %6763 = vmatpush.msra.mxu0 %v6762
        %v6764 = vand.u32 %v6581, 4294901760
        %6765 = vmatpush.msra.mxu0 %v6764
        %v6766 = vand.u32 %v6580, 4294901760
        %6767 = vmatpush.msra.mxu0 %v6766
        %v6768 = vand.u32 %v6579, 4294901760
        %6769 = vmatpush.msra.mxu0 %v6768
        %v6770 = vand.u32 %v6592, 4294901760
        %v6771 = vsub.f32 %v6592, %v6770
        %v6772 = vand.u32 %v6771, 4294901760
        %6773 = vmatmul.f32.gmra.mxu0 %v6772
        %v6774 = vpop.f32.mrf.mxu0
        %v6775 = vadd.f32 %v6739, %v6774
        %v6776 = vand.u32 %v6595, 4294901760
        %v6777 = vsub.f32 %v6595, %v6776
        %v6778 = vand.u32 %v6777, 4294901760
        %6779 = vmatmul.f32.gmra.mxu0 %v6778
        %v6780 = vpop.f32.mrf.mxu0
        %v6781 = vadd.f32 %v6744, %v6780
        %6782 = vdwg.mxu0
        %6783 = vmatpush.msra.mxu0 0.0
        %6784 = vmatpush.msra.mxu0 0.0
        %6785 = vmatpush.msra.mxu0 0.0
        %6786 = vmatpush.msra.mxu0 0.0
        %6787 = vmatpush.msra.mxu0 0.0
        %6788 = vmatpush.msra.mxu0 0.0
        %6789 = vmatpush.msra.mxu0 0.0
        %6790 = vmatpush.msra.mxu0 0.0
        %v6791 = vand.u32 %v6586, 4294901760
        %v6792 = vsub.f32 %v6586, %v6791
        %v6793 = vand.u32 %v6792, 4294901760
        %6794 = vmatpush.msra.mxu0 %v6793
        %v6795 = vand.u32 %v6585, 4294901760
        %v6796 = vsub.f32 %v6585, %v6795
        %v6797 = vand.u32 %v6796, 4294901760
        %6798 = vmatpush.msra.mxu0 %v6797
        %v6799 = vand.u32 %v6584, 4294901760
        %v6800 = vsub.f32 %v6584, %v6799
        %v6801 = vand.u32 %v6800, 4294901760
        %6802 = vmatpush.msra.mxu0 %v6801
        %v6803 = vand.u32 %v6583, 4294901760
        %v6804 = vsub.f32 %v6583, %v6803
        %v6805 = vand.u32 %v6804, 4294901760
        %6806 = vmatpush.msra.mxu0 %v6805
        %v6807 = vand.u32 %v6582, 4294901760
        %v6808 = vsub.f32 %v6582, %v6807
        %v6809 = vand.u32 %v6808, 4294901760
        %6810 = vmatpush.msra.mxu0 %v6809
        %v6811 = vand.u32 %v6581, 4294901760
        %v6812 = vsub.f32 %v6581, %v6811
        %v6813 = vand.u32 %v6812, 4294901760
        %6814 = vmatpush.msra.mxu0 %v6813
        %v6815 = vand.u32 %v6580, 4294901760
        %v6816 = vsub.f32 %v6580, %v6815
        %v6817 = vand.u32 %v6816, 4294901760
        %6818 = vmatpush.msra.mxu0 %v6817
        %v6819 = vand.u32 %v6579, 4294901760
        %v6820 = vsub.f32 %v6579, %v6819
        %v6821 = vand.u32 %v6820, 4294901760
        %6822 = vmatpush.msra.mxu0 %v6821
        %v6823 = vand.u32 %v6592, 4294901760
        %6824 = vmatmul.f32.gmra.mxu0 %v6823
        %v6825 = vpop.f32.mrf.mxu0
        %v6826 = vadd.f32 %v6775, %v6825
        %v6827 = vand.u32 %v6595, 4294901760
        %6828 = vmatmul.f32.gmra.mxu0 %v6827
        %v6829 = vpop.f32.mrf.mxu0
        %v6830 = vadd.f32 %v6781, %v6829
        %6831 = vdwg.mxu0
        %6832 = vmatpush.msra.mxu0 0.0
        %6833 = vmatpush.msra.mxu0 0.0
        %6834 = vmatpush.msra.mxu0 0.0
        %6835 = vmatpush.msra.mxu0 0.0
        %6836 = vmatpush.msra.mxu0 0.0
        %6837 = vmatpush.msra.mxu0 0.0
        %6838 = vmatpush.msra.mxu0 0.0
        %6839 = vmatpush.msra.mxu0 0.0
        %v6840 = vand.u32 %v6586, 4294901760
        %6841 = vmatpush.msra.mxu0 %v6840
        %v6842 = vand.u32 %v6585, 4294901760
        %6843 = vmatpush.msra.mxu0 %v6842
        %v6844 = vand.u32 %v6584, 4294901760
        %6845 = vmatpush.msra.mxu0 %v6844
        %v6846 = vand.u32 %v6583, 4294901760
        %6847 = vmatpush.msra.mxu0 %v6846
        %v6848 = vand.u32 %v6582, 4294901760
        %6849 = vmatpush.msra.mxu0 %v6848
        %v6850 = vand.u32 %v6581, 4294901760
        %6851 = vmatpush.msra.mxu0 %v6850
        %v6852 = vand.u32 %v6580, 4294901760
        %6853 = vmatpush.msra.mxu0 %v6852
        %v6854 = vand.u32 %v6579, 4294901760
        %6855 = vmatpush.msra.mxu0 %v6854
        %v6856 = vand.u32 %v6592, 4294901760
        %6857 = vmatmul.f32.gmra.mxu0 %v6856
        %v6858 = vpop.f32.mrf.mxu0
        %v6859 = vadd.f32 %v6826, %v6858
        %v6860 = vand.u32 %v6595, 4294901760
        %6861 = vmatmul.f32.gmra.mxu0 %v6860
        %v6862 = vpop.f32.mrf.mxu0
        %v6863 = vadd.f32 %v6830, %v6862
        %6864 = vdwg.mxu0
        %v6865 = vmul.f32 %v6859, 0.5
        %v6866 = vmul.f32 %v6863, 0.5
        %v6867 = vmul.f32 %v6859, 0.044715
        %v6868 = vmul.f32 %v6863, 0.044715
        %v6869 = vmul.f32 %v6867, %v6859
        %v6870 = vmul.f32 %v6868, %v6863
        %v6871 = vmul.f32 %v6869, %v6859
        %v6872 = vmul.f32 %v6870, %v6863
        %v6873 = vadd.f32 %v6859, %v6871
        %v6874 = vadd.f32 %v6863, %v6872
        %v6875 = vmul.f32 %v6873, 0.7978846
        %v6876 = vmul.f32 %v6874, 0.7978846
        %v6877 = vtanh.pop %v6875
        %v6878 = vtanh.pop %v6876
        %v6879 = vadd.f32 %v6877, 1.0
        %v6880 = vadd.f32 %v6878, 1.0
        %v6881 = vmul.f32 %v6865, %v6879
        %v6882 = vmul.f32 %v6866, %v6880
        %v6883 = vld [vmem:[%s12] sm:$0xff]
        %v6884 = vld [vmem:[%s12 + $0x8] sm:$0xff]
        %v6885 = vld [vmem:[%s12 + $0x10] sm:$0xff]
        %v6886 = vld [vmem:[%s12 + $0x18] sm:$0xff]
        %v6887 = vld [vmem:[%s12 + $0x20] sm:$0xff]
        %v6888 = vld [vmem:[%s12 + $0x28] sm:$0xff]
        %v6889 = vld [vmem:[%s12 + $0x30] sm:$0xff]
        %v6890 = vld [vmem:[%s12 + $0x38] sm:$0xff]
        %v6891 = vld [vmem:[%s13] sm:$0x1]
        %v6893 = vperm.slane %v6891, 0
        %v6896 = vsel %vm470, %v6881, 0
        %v6899 = vsel %vm470, %v6882, 0
        %6901 = vmatpush.msra.mxu0 0.0
        %6902 = vmatpush.msra.mxu0 0.0
        %6903 = vmatpush.msra.mxu0 0.0
        %6904 = vmatpush.msra.mxu0 0.0
        %6905 = vmatpush.msra.mxu0 0.0
        %6906 = vmatpush.msra.mxu0 0.0
        %6907 = vmatpush.msra.mxu0 0.0
        %6908 = vmatpush.msra.mxu0 0.0
        %v6909 = vand.u32 %v6890, 4294901760
        %6910 = vmatpush.msra.mxu0 %v6909
        %v6911 = vand.u32 %v6889, 4294901760
        %6912 = vmatpush.msra.mxu0 %v6911
        %v6913 = vand.u32 %v6888, 4294901760
        %6914 = vmatpush.msra.mxu0 %v6913
        %v6915 = vand.u32 %v6887, 4294901760
        %6916 = vmatpush.msra.mxu0 %v6915
        %v6917 = vand.u32 %v6886, 4294901760
        %6918 = vmatpush.msra.mxu0 %v6917
        %v6919 = vand.u32 %v6885, 4294901760
        %6920 = vmatpush.msra.mxu0 %v6919
        %v6921 = vand.u32 %v6884, 4294901760
        %6922 = vmatpush.msra.mxu0 %v6921
        %v6923 = vand.u32 %v6883, 4294901760
        %6924 = vmatpush.msra.mxu0 %v6923
        %v6925 = vand.u32 %v6896, 4294901760
        %v6926 = vsub.f32 %v6896, %v6925
        %v6927 = vand.u32 %v6926, 4294901760
        %v6928 = vsub.f32 %v6926, %v6927
        %v6929 = vand.u32 %v6928, 4294901760
        %6930 = vmatmul.f32.gmra.mxu0 %v6929
        %v6931 = vpop.f32.mrf.mxu0
        %v6932 = vadd.f32 %v6893, %v6931
        %v6933 = vand.u32 %v6899, 4294901760
        %v6934 = vsub.f32 %v6899, %v6933
        %v6935 = vand.u32 %v6934, 4294901760
        %v6936 = vsub.f32 %v6934, %v6935
        %v6937 = vand.u32 %v6936, 4294901760
        %6938 = vmatmul.f32.gmra.mxu0 %v6937
        %v6939 = vpop.f32.mrf.mxu0
        %v6940 = vadd.f32 %v6893, %v6939
        %6941 = vdwg.mxu0
        %6942 = vmatpush.msra.mxu0 0.0
        %6943 = vmatpush.msra.mxu0 0.0
        %6944 = vmatpush.msra.mxu0 0.0
        %6945 = vmatpush.msra.mxu0 0.0
        %6946 = vmatpush.msra.mxu0 0.0
        %6947 = vmatpush.msra.mxu0 0.0
        %6948 = vmatpush.msra.mxu0 0.0
        %6949 = vmatpush.msra.mxu0 0.0
        %v6950 = vand.u32 %v6890, 4294901760
        %v6951 = vsub.f32 %v6890, %v6950
        %v6952 = vand.u32 %v6951, 4294901760
        %v6953 = vsub.f32 %v6951, %v6952
        %v6954 = vand.u32 %v6953, 4294901760
        %6955 = vmatpush.msra.mxu0 %v6954
        %v6956 = vand.u32 %v6889, 4294901760
        %v6957 = vsub.f32 %v6889, %v6956
        %v6958 = vand.u32 %v6957, 4294901760
        %v6959 = vsub.f32 %v6957, %v6958
        %v6960 = vand.u32 %v6959, 4294901760
        %6961 = vmatpush.msra.mxu0 %v6960
        %v6962 = vand.u32 %v6888, 4294901760
        %v6963 = vsub.f32 %v6888, %v6962
        %v6964 = vand.u32 %v6963, 4294901760
        %v6965 = vsub.f32 %v6963, %v6964
        %v6966 = vand.u32 %v6965, 4294901760
        %6967 = vmatpush.msra.mxu0 %v6966
        %v6968 = vand.u32 %v6887, 4294901760
        %v6969 = vsub.f32 %v6887, %v6968
        %v6970 = vand.u32 %v6969, 4294901760
        %v6971 = vsub.f32 %v6969, %v6970
        %v6972 = vand.u32 %v6971, 4294901760
        %6973 = vmatpush.msra.mxu0 %v6972
        %v6974 = vand.u32 %v6886, 4294901760
        %v6975 = vsub.f32 %v6886, %v6974
        %v6976 = vand.u32 %v6975, 4294901760
        %v6977 = vsub.f32 %v6975, %v6976
        %v6978 = vand.u32 %v6977, 4294901760
        %6979 = vmatpush.msra.mxu0 %v6978
        %v6980 = vand.u32 %v6885, 4294901760
        %v6981 = vsub.f32 %v6885, %v6980
        %v6982 = vand.u32 %v6981, 4294901760
        %v6983 = vsub.f32 %v6981, %v6982
        %v6984 = vand.u32 %v6983, 4294901760
        %6985 = vmatpush.msra.mxu0 %v6984
        %v6986 = vand.u32 %v6884, 4294901760
        %v6987 = vsub.f32 %v6884, %v6986
        %v6988 = vand.u32 %v6987, 4294901760
        %v6989 = vsub.f32 %v6987, %v6988
        %v6990 = vand.u32 %v6989, 4294901760
        %6991 = vmatpush.msra.mxu0 %v6990
        %v6992 = vand.u32 %v6883, 4294901760
        %v6993 = vsub.f32 %v6883, %v6992
        %v6994 = vand.u32 %v6993, 4294901760
        %v6995 = vsub.f32 %v6993, %v6994
        %v6996 = vand.u32 %v6995, 4294901760
        %6997 = vmatpush.msra.mxu0 %v6996
        %v6998 = vand.u32 %v6896, 4294901760
        %6999 = vmatmul.f32.gmra.mxu0 %v6998
        %v7000 = vpop.f32.mrf.mxu0
        %v7001 = vadd.f32 %v6932, %v7000
        %v7002 = vand.u32 %v6899, 4294901760
        %7003 = vmatmul.f32.gmra.mxu0 %v7002
        %v7004 = vpop.f32.mrf.mxu0
        %v7005 = vadd.f32 %v6940, %v7004
        %7006 = vdwg.mxu0
        %7007 = vmatpush.msra.mxu0 0.0
        %7008 = vmatpush.msra.mxu0 0.0
        %7009 = vmatpush.msra.mxu0 0.0
        %7010 = vmatpush.msra.mxu0 0.0
        %7011 = vmatpush.msra.mxu0 0.0
        %7012 = vmatpush.msra.mxu0 0.0
        %7013 = vmatpush.msra.mxu0 0.0
        %7014 = vmatpush.msra.mxu0 0.0
        %v7015 = vand.u32 %v6890, 4294901760
        %v7016 = vsub.f32 %v6890, %v7015
        %7017 = vmatpush.msra.mxu0 %v7016
        %v7018 = vand.u32 %v6889, 4294901760
        %v7019 = vsub.f32 %v6889, %v7018
        %7020 = vmatpush.msra.mxu0 %v7019
        %v7021 = vand.u32 %v6888, 4294901760
        %v7022 = vsub.f32 %v6888, %v7021
        %7023 = vmatpush.msra.mxu0 %v7022
        %v7024 = vand.u32 %v6887, 4294901760
        %v7025 = vsub.f32 %v6887, %v7024
        %7026 = vmatpush.msra.mxu0 %v7025
        %v7027 = vand.u32 %v6886, 4294901760
        %v7028 = vsub.f32 %v6886, %v7027
        %7029 = vmatpush.msra.mxu0 %v7028
        %v7030 = vand.u32 %v6885, 4294901760
        %v7031 = vsub.f32 %v6885, %v7030
        %7032 = vmatpush.msra.mxu0 %v7031
        %v7033 = vand.u32 %v6884, 4294901760
        %v7034 = vsub.f32 %v6884, %v7033
        %7035 = vmatpush.msra.mxu0 %v7034
        %v7036 = vand.u32 %v6883, 4294901760
        %v7037 = vsub.f32 %v6883, %v7036
        %7038 = vmatpush.msra.mxu0 %v7037
        %v7039 = vand.u32 %v6896, 4294901760
        %v7040 = vsub.f32 %v6896, %v7039
        %7041 = vmatmul.f32.gmra.mxu0 %v7040
        %v7042 = vpop.f32.mrf.mxu0
        %v7043 = vadd.f32 %v7001, %v7042
        %v7044 = vand.u32 %v6899, 4294901760
        %v7045 = vsub.f32 %v6899, %v7044
        %7046 = vmatmul.f32.gmra.mxu0 %v7045
        %v7047 = vpop.f32.mrf.mxu0
        %v7048 = vadd.f32 %v7005, %v7047
        %7049 = vdwg.mxu0
        %7050 = vmatpush.msra.mxu0 0.0
        %7051 = vmatpush.msra.mxu0 0.0
        %7052 = vmatpush.msra.mxu0 0.0
        %7053 = vmatpush.msra.mxu0 0.0
        %7054 = vmatpush.msra.mxu0 0.0
        %7055 = vmatpush.msra.mxu0 0.0
        %7056 = vmatpush.msra.mxu0 0.0
        %7057 = vmatpush.msra.mxu0 0.0
        %v7058 = vand.u32 %v6890, 4294901760
        %7059 = vmatpush.msra.mxu0 %v7058
        %v7060 = vand.u32 %v6889, 4294901760
        %7061 = vmatpush.msra.mxu0 %v7060
        %v7062 = vand.u32 %v6888, 4294901760
        %7063 = vmatpush.msra.mxu0 %v7062
        %v7064 = vand.u32 %v6887, 4294901760
        %7065 = vmatpush.msra.mxu0 %v7064
        %v7066 = vand.u32 %v6886, 4294901760
        %7067 = vmatpush.msra.mxu0 %v7066
        %v7068 = vand.u32 %v6885, 4294901760
        %7069 = vmatpush.msra.mxu0 %v7068
        %v7070 = vand.u32 %v6884, 4294901760
        %7071 = vmatpush.msra.mxu0 %v7070
        %v7072 = vand.u32 %v6883, 4294901760
        %7073 = vmatpush.msra.mxu0 %v7072
        %v7074 = vand.u32 %v6896, 4294901760
        %v7075 = vsub.f32 %v6896, %v7074
        %v7076 = vand.u32 %v7075, 4294901760
        %7077 = vmatmul.f32.gmra.mxu0 %v7076
        %v7078 = vpop.f32.mrf.mxu0
        %v7079 = vadd.f32 %v7043, %v7078
        %v7080 = vand.u32 %v6899, 4294901760
        %v7081 = vsub.f32 %v6899, %v7080
        %v7082 = vand.u32 %v7081, 4294901760
        %7083 = vmatmul.f32.gmra.mxu0 %v7082
        %v7084 = vpop.f32.mrf.mxu0
        %v7085 = vadd.f32 %v7048, %v7084
        %7086 = vdwg.mxu0
        %7087 = vmatpush.msra.mxu0 0.0
        %7088 = vmatpush.msra.mxu0 0.0
        %7089 = vmatpush.msra.mxu0 0.0
        %7090 = vmatpush.msra.mxu0 0.0
        %7091 = vmatpush.msra.mxu0 0.0
        %7092 = vmatpush.msra.mxu0 0.0
        %7093 = vmatpush.msra.mxu0 0.0
        %7094 = vmatpush.msra.mxu0 0.0
        %v7095 = vand.u32 %v6890, 4294901760
        %v7096 = vsub.f32 %v6890, %v7095
        %v7097 = vand.u32 %v7096, 4294901760
        %7098 = vmatpush.msra.mxu0 %v7097
        %v7099 = vand.u32 %v6889, 4294901760
        %v7100 = vsub.f32 %v6889, %v7099
        %v7101 = vand.u32 %v7100, 4294901760
        %7102 = vmatpush.msra.mxu0 %v7101
        %v7103 = vand.u32 %v6888, 4294901760
        %v7104 = vsub.f32 %v6888, %v7103
        %v7105 = vand.u32 %v7104, 4294901760
        %7106 = vmatpush.msra.mxu0 %v7105
        %v7107 = vand.u32 %v6887, 4294901760
        %v7108 = vsub.f32 %v6887, %v7107
        %v7109 = vand.u32 %v7108, 4294901760
        %7110 = vmatpush.msra.mxu0 %v7109
        %v7111 = vand.u32 %v6886, 4294901760
        %v7112 = vsub.f32 %v6886, %v7111
        %v7113 = vand.u32 %v7112, 4294901760
        %7114 = vmatpush.msra.mxu0 %v7113
        %v7115 = vand.u32 %v6885, 4294901760
        %v7116 = vsub.f32 %v6885, %v7115
        %v7117 = vand.u32 %v7116, 4294901760
        %7118 = vmatpush.msra.mxu0 %v7117
        %v7119 = vand.u32 %v6884, 4294901760
        %v7120 = vsub.f32 %v6884, %v7119
        %v7121 = vand.u32 %v7120, 4294901760
        %7122 = vmatpush.msra.mxu0 %v7121
        %v7123 = vand.u32 %v6883, 4294901760
        %v7124 = vsub.f32 %v6883, %v7123
        %v7125 = vand.u32 %v7124, 4294901760
        %7126 = vmatpush.msra.mxu0 %v7125
        %v7127 = vand.u32 %v6896, 4294901760
        %7128 = vmatmul.f32.gmra.mxu0 %v7127
        %v7129 = vpop.f32.mrf.mxu0
        %v7130 = vadd.f32 %v7079, %v7129
        %v7131 = vand.u32 %v6899, 4294901760
        %7132 = vmatmul.f32.gmra.mxu0 %v7131
        %v7133 = vpop.f32.mrf.mxu0
        %v7134 = vadd.f32 %v7085, %v7133
        %7135 = vdwg.mxu0
        %7136 = vmatpush.msra.mxu0 0.0
        %7137 = vmatpush.msra.mxu0 0.0
        %7138 = vmatpush.msra.mxu0 0.0
        %7139 = vmatpush.msra.mxu0 0.0
        %7140 = vmatpush.msra.mxu0 0.0
        %7141 = vmatpush.msra.mxu0 0.0
        %7142 = vmatpush.msra.mxu0 0.0
        %7143 = vmatpush.msra.mxu0 0.0
        %v7144 = vand.u32 %v6890, 4294901760
        %7145 = vmatpush.msra.mxu0 %v7144
        %v7146 = vand.u32 %v6889, 4294901760
        %7147 = vmatpush.msra.mxu0 %v7146
        %v7148 = vand.u32 %v6888, 4294901760
        %7149 = vmatpush.msra.mxu0 %v7148
        %v7150 = vand.u32 %v6887, 4294901760
        %7151 = vmatpush.msra.mxu0 %v7150
        %v7152 = vand.u32 %v6886, 4294901760
        %7153 = vmatpush.msra.mxu0 %v7152
        %v7154 = vand.u32 %v6885, 4294901760
        %7155 = vmatpush.msra.mxu0 %v7154
        %v7156 = vand.u32 %v6884, 4294901760
        %7157 = vmatpush.msra.mxu0 %v7156
        %v7158 = vand.u32 %v6883, 4294901760
        %7159 = vmatpush.msra.mxu0 %v7158
        %v7160 = vand.u32 %v6896, 4294901760
        %7161 = vmatmul.f32.gmra.mxu0 %v7160
        %v7162 = vpop.f32.mrf.mxu0
        %v7163 = vadd.f32 %v7130, %v7162
        %v7164 = vand.u32 %v6899, 4294901760
        %7165 = vmatmul.f32.gmra.mxu0 %v7164
        %v7166 = vpop.f32.mrf.mxu0
        %v7167 = vadd.f32 %v7134, %v7166
        %7168 = vdwg.mxu0
        %v7169 = vadd.f32 %v7163, %v6489
        %v7170 = vadd.f32 %v7167, %v6490
        %7171 = vst.msk [vmem:[%s460] sm:$0xff] %vm470, %v7169
        %7172 = vst.msk [vmem:[%s460 + $0x8] sm:$0xff] %vm470, %v7170
        %s7173 = sand.u32 %s335, 1
        %s7174 = scalar_lea.sflag [#allocation3], %s7173
        %s7175 = sand.u32 %s335, 1
        %s7176 = smul.addr %s7175, 16
        %s7177 = scalar_lea.vmem [#allocation2], %s7176
        // Predicated region
        $region77: #{tpu_custom_call.1} parent=75 // pred_check
          %p7178 = pneg %p345
        $region78: #{tpu_custom_call.1} parent=75 // pred_check_branch
          %7180 = sbr.rel (%p7178) target = $region80
        $region79: #{tpu_custom_call.1} parent=75 // pred_region
          %7182 = vsyncadd %s7174, 0
          %s7183 = smul.addr %s28, 2
          %s7184 = smul.addr %s7183, 8
          %s7185 = scalar_lea.hbm %s14, %s7184
          %s7186 = sshll.u32 %s7177, 4
          %s7187 = int_to_ptr.vmem [resolvable:$true] %s7186
          %s7188 = sshll.u32 %s7185, 4
          %s7189 = int_to_ptr.hbm [resolvable:$true] %s7188
          %7194 = dma.vmem_to_hbm [thread:$0]  %s7187, 256, %s7189, %s7174, 128, 128, 8
        $region80: #{tpu_custom_call.1} parent=75 // pred_fallthru
          _
      $region76: #{tpu_custom_call.1} parent=5 // pred_fallthru
        _
      %p7195 = scmp.le.s32.totalorder 2, %s23
      // Predicated region
      $region81: #{tpu_custom_call.1} parent=5 // pred_check
        %p7196 = pneg %p7195
      $region82: #{tpu_custom_call.1} parent=5 // pred_check_branch
        %7198 = sbr.rel (%p7196) target = $region84
      $region83: #{tpu_custom_call.1} parent=5 // pred_region
        %s7199 = ssub.s32 %s23, 2
        // Predicated region
        $region85: #{tpu_custom_call.1} parent=83 // pred_check
          %p7200 = pneg %p351
        $region86: #{tpu_custom_call.1} parent=83 // pred_check_branch
          %7202 = sbr.rel (%p7200) target = $region88
        $region87: #{tpu_custom_call.1} parent=83 // pred_region
          %s7203 = sand.u32 %s336, 1
          %s7204 = scalar_lea.sflag [#allocation3], %s7203
          %s7205 = sand.u32 %s336, 1
          %s7206 = smul.addr %s7205, 16
          %s7207 = scalar_lea.vmem [#allocation2], %s7206
          %7209 = dma.done %s7204, 256
        $region88: #{tpu_custom_call.1} parent=83 // pred_fallthru
          _
      $region84: #{tpu_custom_call.1} parent=5 // pred_fallthru
        _
    $region6: #{tpu_custom_call.1} parent=1 // loop_footer
      %s27 = sadd.s32 1, %s23
    $region7: #{tpu_custom_call.1} parent=1 // loop_footer_branch
      %22 = sbr.rel target = $region3
    $region8: #{tpu_custom_call.1} parent=1 // loop_exit
      _
    %7210 = vsyncpa [#allocation3], 1
    %s7211 = scalar_lea.sflag [#allocation3], 1
    %7212 = vsyncpa %s7211, 1

</llo_original>
